<compile_context>
chip_gen: v6e
topology: v6e:2x2x1
jax: 0.10.0
libtpu: 0.0.40
codegen_flags: <defaults>
</compile_context>

<pallas_src>
import jax
import jax.numpy as jnp
from jax import lax
from jax.experimental import pallas as pl
from jax.experimental.pallas import tpu as pltpu


# ------------------------------ LSTM kernel ---------------------------------

def lstm_kernel(x_ref,         # (tile_t*B, E) bf16, time-major flattened
                wih0_ref,      # (E, 4H) bf16
                b0_ref,        # (1, 4H) f32  (b_ih0 + b_hh0)
                wfused_ref,    # (2H, 8H) bf16: [[whh0, wih1], [0, whh1]]
                b1_ref,        # (1, 4H) f32  (b_ih1 + b_hh1)
                hlast_ref,     # (B, H) bf16 output, written on last grid step
                g0_ref,        # (tile_t*B, 4H) f32 scratch
                h0_ref, c0_ref, h1_ref, c1_ref):  # (B, H) f32 scratch (persist)
    TB = x_ref.shape[0]
    B, H = h0_ref.shape
    tile_t = TB // B

    @pl.when(pl.program_id(0) == 0)
    def _init():
        h0_ref[...] = jnp.zeros_like(h0_ref)
        c0_ref[...] = jnp.zeros_like(c0_ref)
        h1_ref[...] = jnp.zeros_like(h1_ref)
        c1_ref[...] = jnp.zeros_like(c1_ref)

    # Hoisted layer-0 input-side gates for the whole time tile -> VMEM scratch
    # (not a live value across the recurrence loop).
    g0_ref[...] = (jnp.dot(x_ref[...], wih0_ref[...],
                           preferred_element_type=jnp.float32) + b0_ref[...])

    def gates_to_hc(g, c):
        # PyTorch gate order: i, f, g, o
        i = jax.nn.sigmoid(g[:, 0:H])
        f = jax.nn.sigmoid(g[:, H:2 * H])
        gg = jnp.tanh(g[:, 2 * H:3 * H])
        o = jax.nn.sigmoid(g[:, 3 * H:4 * H])
        c_new = f * c + i * gg
        h_new = o * jnp.tanh(c_new)
        return h_new, c_new

    def fused_recur(h0, h1):
        # One (B, 2H) @ (2H, 8H) MXU issue:
        #   z[:, :4H] = h0 @ whh0                 (layer-0 recurrent gates)
        #   z[:, 4H:] = h0 @ wih1 + h1 @ whh1     (layer-1 input + recurrent gates)
        hcat = jnp.concatenate([h0, h1], axis=1).astype(jnp.bfloat16)
        return jnp.dot(hcat, wfused_ref[...], preferred_element_type=jnp.float32)

    base = pl.program_id(0) * tile_t

    def step(t, carry):
        # Invariant at global step s = base + t:
        #   h0 = h0[s-1], c0 = c0[s-1], h1 = h1[s-2], c1 = c1[s-2]
        # Layer-1 lags layer-0 by one step, so the two chains in one iteration
        # are independent (interleaved recurrences).
        h0, c0, h1, c1 = carry
        z = fused_recur(h0, h1)

        # layer-1 step s-1 (skipped for s == 0: there is no step -1)
        g1 = z[:, 4 * H:8 * H] + b1_ref[...]
        h1n, c1n = gates_to_hc(g1, c1)
        valid = (base + t) > 0
        h1 = jnp.where(valid, h1n, h1)
        c1 = jnp.where(valid, c1n, c1)

        # layer-0 step s
        row = pl.multiple_of(t * B, B)
        g0 = g0_ref[pl.ds(row, B), :] + z[:, 0:4 * H]
        h0, c0 = gates_to_hc(g0, c0)
        return h0, c0, h1, c1

    h0, c0, h1, c1 = lax.fori_loop(
        0, tile_t, step,
        (h0_ref[...], c0_ref[...], h1_ref[...], c1_ref[...]),
        unroll=True)

    h0_ref[...] = h0
    c0_ref[...] = c0
    h1_ref[...] = h1
    c1_ref[...] = c1

    # Flush the one-step pipeline lag on the very last grid step and emit the
    # final layer-1 hidden state (== lstm_out[:, -1, :]).
    @pl.when(pl.program_id(0) == pl.num_programs(0) - 1)
    def _finalize():
        z = fused_recur(h0, h1)
        g1 = z[:, 4 * H:8 * H] + b1_ref[...]
        h1f, _ = gates_to_hc(g1, c1)
        hlast_ref[...] = h1f.astype(hlast_ref.dtype)


# ------------------------------- FC kernel ----------------------------------

def fc_kernel(h_ref, wfc_ref, bfc_ref, out_ref):
    out_ref[...] = (jnp.dot(h_ref[...], wfc_ref[...],
                            preferred_element_type=jnp.float32)
                    + bfc_ref[...])


# -------------------------------- wrapper ------------------------------------

def _pick_tile(n, candidates):
    for c in candidates:
        if c <= n and n % c == 0:
            return c
    return n  # fallback: whole axis (always divides; may be non-lane-aligned)


@jax.jit
def product_prediction_forward(x_ids, params):
    """x_ids: (B, T) int32 token ids. Returns logits (B, vocab_size) f32."""
    emb_table = params["embedding"]                      # (V, E) f32
    B, T = x_ids.shape
    V, E = emb_table.shape
    H = params["whh0"].shape[0]

    # Pad batch to a multiple of 16 so bf16 activations/h fill vreg sublanes.
    B_pad = max(16, -(-B // 16) * 16)
    if B_pad != B:
        x_ids = jnp.pad(x_ids, ((0, B_pad - B), (0, 0)))

    # Time-major gather straight into the flattened (T*B_pad, E) bf16 layout the
    # kernel consumes (no post-gather transpose / in-kernel reshape).
    ids_tm = jnp.transpose(x_ids, (1, 0)).reshape(-1)    # (T*B_pad,)
    x_flat = jnp.take(emb_table, ids_tm, axis=0).astype(jnp.bfloat16)

    wih0 = params["wih0"].astype(jnp.bfloat16)
    # Fused per-step recurrence weight: [h0 | h1] @ [[whh0, wih1], [0, whh1]]
    #   -> [h0@whh0 | h0@wih1 + h1@whh1]   (one K=2H MXU matmul per step).
    zeros_h = jnp.zeros((H, 4 * H), jnp.float32)
    w_fused = jnp.concatenate(
        [jnp.concatenate([params["whh0"], params["wih1"]], axis=1),
         jnp.concatenate([zeros_h, params["whh1"]], axis=1)],
        axis=0).astype(jnp.bfloat16)                     # (2H, 8H)
    wfc = params["wfc"].astype(jnp.bfloat16)
    b0, b1, bfc = params["b0"], params["b1"], params["bfc"]

    # tile_t * B_pad >= 256 fills MXU rows on the hoisted input-gate matmul.
    tile_t = _pick_tile(T, (32, 16, 8, 4, 2, 1))
    n_t = T // tile_t

    def full(shape):
        return pl.BlockSpec(shape, lambda i: (0,) * len(shape))

    h_last = pl.pallas_call(
        lstm_kernel,
        out_shape=jax.ShapeDtypeStruct((B_pad, H), jnp.bfloat16),
        grid_spec=pltpu.PrefetchScalarGridSpec(
            num_scalar_prefetch=0,
            grid=(n_t,),
            in_specs=[
                pl.BlockSpec((tile_t * B_pad, E), lambda i: (i, 0)),
                full((E, 4 * H)), full((1, 4 * H)),
                full((2 * H, 8 * H)), full((1, 4 * H)),
            ],
            out_specs=pl.BlockSpec((B_pad, H), lambda i: (0, 0)),
            scratch_shapes=[
                pltpu.VMEM((tile_t * B_pad, 4 * H), jnp.float32),   # g0
                pltpu.VMEM((B_pad, H), jnp.float32),                # h0
                pltpu.VMEM((B_pad, H), jnp.float32),                # c0
                pltpu.VMEM((B_pad, H), jnp.float32),                # h1
                pltpu.VMEM((B_pad, H), jnp.float32),                # c1
            ]),
        compiler_params=pltpu.CompilerParams(
            dimension_semantics=("arbitrary",)),
    )(x_flat, wih0, b0, w_fused, b1)

    # Final Linear, tiled over the vocab axis (lane-dense, parallel grid axis;
    # large tiles because it is HBM-bandwidth-bound on wfc).
    tn = _pick_tile(V, (4096, 2048, 1024, 512, 256, 128))
    logits = pl.pallas_call(
        fc_kernel,
        out_shape=jax.ShapeDtypeStruct((B_pad, V), jnp.float32),
        grid_spec=pltpu.PrefetchScalarGridSpec(
            num_scalar_prefetch=0,
            grid=(V // tn,),
            in_specs=[
                pl.BlockSpec((B_pad, H), lambda j: (0, 0)),
                pl.BlockSpec((H, tn), lambda j: (0, j)),
                pl.BlockSpec((1, tn), lambda j: (0, j)),
            ],
            out_specs=pl.BlockSpec((B_pad, tn), lambda j: (0, j))),
        compiler_params=pltpu.CompilerParams(
            dimension_semantics=("parallel",)),
    )(h_last, wfc, bfc)

    return logits[:B]


# ------------------------------ reference ------------------------------------

def _reference_forward(x_ids, params):
    emb = params["embedding"]
    x = jnp.take(emb, x_ids, axis=0)                     # (B, T, E) f32
    B = x.shape[0]
    H = params["whh0"].shape[0]

    def run_layer(xs, wih, whh, b):
        def step(carry, x_t):
            h, c = carry
            gates = x_t @ wih + h @ whh + b
            i = jax.nn.sigmoid(gates[:, 0:H])
            f = jax.nn.sigmoid(gates[:, H:2 * H])
            g = jnp.tanh(gates[:, 2 * H:3 * H])
            o = jax.nn.sigmoid(gates[:, 3 * H:4 * H])
            c = f * c + i * g
            h = o * jnp.tanh(c)
            return (h, c), h
        init = (jnp.zeros((B, H), jnp.float32), jnp.zeros((B, H), jnp.float32))
        _, hs = jax.lax.scan(step, init, xs)
        return hs

    xs = jnp.transpose(x, (1, 0, 2))
    h0s = run_layer(xs, params["wih0"], params["whh0"], params["b0"])
    h1s = run_layer(h0s, params["wih1"], params["whh1"], params["b1"])
    return h1s[-1] @ params["wfc"] + params["bfc"]


def init_params(key, vocab_size, embed_size, hidden_size):
    ks = jax.random.split(key, 11)
    H = hidden_size
    scale = 1.0 / jnp.sqrt(jnp.float32(H))

    def unif(k, shape):
        return jax.random.uniform(k, shape, jnp.float32, -scale, scale)

    return {
        # nn.Embedding(vocab_size, embed_size): N(0, 1)
        "embedding": jax.random.normal(ks[0], (vocab_size, embed_size),
                                       jnp.float32),
        # LSTM layer 0 (weights stored transposed: (in, 4H) / (H, 4H)),
        # bias_ih + bias_hh folded into a single (1, 4H) bias.
        "wih0": unif(ks[1], (embed_size, 4 * H)),
        "whh0": unif(ks[2], (H, 4 * H)),
        "b0":   unif(ks[3], (1, 4 * H)) + unif(ks[4], (1, 4 * H)),
        # LSTM layer 1
        "wih1": unif(ks[5], (H, 4 * H)),
        "whh1": unif(ks[6], (H, 4 * H)),
        "b1":   unif(ks[7], (1, 4 * H)) + unif(ks[8], (1, 4 * H)),
        # nn.Linear(hidden_size, vocab_size), stored transposed (H, V)
        "wfc": unif(ks[9], (H, vocab_size)),
        "bfc": unif(ks[10], (1, vocab_size)),
    }


if __name__ == "__main__":
    # Small shapes consistent with the module (embed matches the spec's 128;
    # hidden scaled down 256 -> 128 but kept a multiple of 128 so gate slices
    # stay lane-aligned; vocab 256 keeps the FC output lane-dense).
    vocab_size = 256
    embed_size = 128
    hidden_size = 128
    batch = 4          # padded to 16 inside the wrapper
    seq_len = 48       # tile_t = 16 -> 3 time tiles, exercises cross-grid carry

    key = jax.random.PRNGKey(0)
    k_params, k_ids = jax.random.split(key)
    params = init_params(k_params, vocab_size, embed_size, hidden_size)
    x_ids = jax.random.randint(k_ids, (batch, seq_len), 0, vocab_size,
                               dtype=jnp.int32)

    logits = product_prediction_forward(x_ids, params)
    jax.block_until_ready(logits)
    assert logits.shape == (batch, vocab_size)

    ref = _reference_forward(x_ids, params)
    max_err = float(jnp.max(jnp.abs(logits - ref)))
    assert max_err < 0.1, f"max abs error {max_err}"
    print("KERNEL_OK")
</pallas_src>

<mosaic_0001>
module attributes {stable_mosaic.version = 11 : i64} {
  func.func @fc_kernel(%arg0: i32, %arg1: memref<16x128xbf16, #tpu.memory_space<vmem>>, %arg2: memref<128x256xbf16, #tpu.memory_space<vmem>>, %arg3: memref<1x256xf32, #tpu.memory_space<vmem>>, %arg4: memref<16x256xf32, #tpu.memory_space<vmem>>) attributes {dimension_semantics = [#tpu.dimension_semantics<parallel>], iteration_bounds = array<i64: 1>, scalar_prefetch = 0 : i64, scratch_operands = 0 : i64, tpu.core_type = #tpu.core_type<tc>, window_params = [{pipeline_mode = #tpu.pipeline_mode<synchronous>, transform_indices = @transform_0, window_bounds = array<i64: 16, 128>}, {transform_indices = @transform_1, window_bounds = array<i64: 128, 256>}, {transform_indices = @transform_2, window_bounds = array<i64: 1, 256>}, {transform_indices = @transform_3, window_bounds = array<i64: 16, 256>}]} {
    %c0 = arith.constant 0 : index
    %c0_0 = arith.constant 0 : index
    %0 = vector.load %arg1[%c0, %c0_0] : memref<16x128xbf16, #tpu.memory_space<vmem>>, vector<16x128xbf16>
    %c0_1 = arith.constant 0 : index
    %c0_2 = arith.constant 0 : index
    %1 = vector.load %arg2[%c0_1, %c0_2] : memref<128x256xbf16, #tpu.memory_space<vmem>>, vector<128x256xbf16>
    %cst = arith.constant dense<0.000000e+00> : vector<16x256xf32>
    %2 = tpu.matmul %0, %1, %cst {dimension_numbers = #tpu.dot_dimension_numbers<[1], [0], [0], [1], [0, 0, 1, 1], [], []>} : vector<16x128xbf16>, vector<128x256xbf16>, vector<16x256xf32> -> vector<16x256xf32>
    %c0_3 = arith.constant 0 : index
    %c0_4 = arith.constant 0 : index
    %3 = vector.load %arg3[%c0_3, %c0_4] : memref<1x256xf32, #tpu.memory_space<vmem>>, vector<1x256xf32>
    %4 = vector.broadcast %3 : vector<1x256xf32> to vector<16x256xf32>
    %5 = arith.addf %2, %4 : vector<16x256xf32>
    %c0_5 = arith.constant 0 : index
    %c0_6 = arith.constant 0 : index
    %6 = vector.load %arg4[%c0_5, %c0_6] : memref<16x256xf32, #tpu.memory_space<vmem>>, vector<16x256xf32>
    tpu.vector_store %arg4[%c0_5, %c0_6], %5 {strides = array<i32>} : memref<16x256xf32, #tpu.memory_space<vmem>>, vector<16x256xf32>,
    return
  }
  func.func @transform_0(%arg0: i32) -> (i32, i32) {
    %c0_i32 = arith.constant 0 : i32
    %c0_i32_0 = arith.constant 0 : i32
    %c0_i32_1 = arith.constant 0 : i32
    return %c0_i32, %c0_i32_0 : i32, i32
  }
  func.func @transform_1(%arg0: i32) -> (i32, i32) {
    %c0_i32 = arith.constant 0 : i32
    %c0_i32_0 = arith.constant 0 : i32
    return %c0_i32, %arg0 : i32, i32
  }
  func.func @transform_2(%arg0: i32) -> (i32, i32) {
    %c0_i32 = arith.constant 0 : i32
    %c0_i32_0 = arith.constant 0 : i32
    return %c0_i32, %arg0 : i32, i32
  }
  func.func @transform_3(%arg0: i32) -> (i32, i32) {
    %c0_i32 = arith.constant 0 : i32
    %c0_i32_0 = arith.constant 0 : i32
    return %c0_i32, %arg0 : i32, i32
  }
}

module attributes {stable_mosaic.version = 11 : i64} {
  func.func @lstm_kernel(%arg0: i32, %arg1: memref<256x128xbf16, #tpu.memory_space<vmem>>, %arg2: memref<128x512xbf16, #tpu.memory_space<vmem>>, %arg3: memref<1x512xf32, #tpu.memory_space<vmem>>, %arg4: memref<256x1024xbf16, #tpu.memory_space<vmem>>, %arg5: memref<1x512xf32, #tpu.memory_space<vmem>>, %arg6: memref<16x128xbf16, #tpu.memory_space<vmem>>, %arg7: memref<256x512xf32, #tpu.memory_space<vmem>>, %arg8: memref<16x128xf32, #tpu.memory_space<vmem>>, %arg9: memref<16x128xf32, #tpu.memory_space<vmem>>, %arg10: memref<16x128xf32, #tpu.memory_space<vmem>>, %arg11: memref<16x128xf32, #tpu.memory_space<vmem>>) attributes {dimension_semantics = [#tpu.dimension_semantics<arbitrary>], iteration_bounds = array<i64: 3>, scalar_prefetch = 0 : i64, scratch_operands = 5 : i64, tpu.core_type = #tpu.core_type<tc>, window_params = [{transform_indices = @transform_0, window_bounds = array<i64: 256, 128>}, {pipeline_mode = #tpu.pipeline_mode<synchronous>, transform_indices = @transform_1, window_bounds = array<i64: 128, 512>}, {pipeline_mode = #tpu.pipeline_mode<synchronous>, transform_indices = @transform_2, window_bounds = array<i64: 1, 512>}, {pipeline_mode = #tpu.pipeline_mode<synchronous>, transform_indices = @transform_3, window_bounds = array<i64: 256, 1024>}, {pipeline_mode = #tpu.pipeline_mode<synchronous>, transform_indices = @transform_4, window_bounds = array<i64: 1, 512>}, {pipeline_mode = #tpu.pipeline_mode<synchronous>, transform_indices = @transform_5, window_bounds = array<i64: 16, 128>}]} {
    %c0_i32 = arith.constant 0 : i32
    %0 = arith.cmpi eq, %arg0, %c0_i32 : i32
    %1 = arith.extui %0 : i1 to i32
    %c0_i32_0 = arith.constant 0 : i32
    %2 = arith.cmpi ne, %1, %c0_i32_0 : i32
    scf.if %2 {
      %cst_252 = arith.constant 0.000000e+00 : f32
      %1110 = vector.broadcast %cst_252 : f32 to vector<16x128xf32>
      %c0_253 = arith.constant 0 : index
      %c0_254 = arith.constant 0 : index
      %1111 = vector.load %arg8[%c0_253, %c0_254] : memref<16x128xf32, #tpu.memory_space<vmem>>, vector<16x128xf32>
      tpu.vector_store %arg8[%c0_253, %c0_254], %1110 {strides = array<i32>} : memref<16x128xf32, #tpu.memory_space<vmem>>, vector<16x128xf32>,
      %cst_255 = arith.constant 0.000000e+00 : f32
      %1112 = vector.broadcast %cst_255 : f32 to vector<16x128xf32>
      %c0_256 = arith.constant 0 : index
      %c0_257 = arith.constant 0 : index
      %1113 = vector.load %arg9[%c0_256, %c0_257] : memref<16x128xf32, #tpu.memory_space<vmem>>, vector<16x128xf32>
      tpu.vector_store %arg9[%c0_256, %c0_257], %1112 {strides = array<i32>} : memref<16x128xf32, #tpu.memory_space<vmem>>, vector<16x128xf32>,
      %cst_258 = arith.constant 0.000000e+00 : f32
      %1114 = vector.broadcast %cst_258 : f32 to vector<16x128xf32>
      %c0_259 = arith.constant 0 : index
      %c0_260 = arith.constant 0 : index
      %1115 = vector.load %arg10[%c0_259, %c0_260] : memref<16x128xf32, #tpu.memory_space<vmem>>, vector<16x128xf32>
      tpu.vector_store %arg10[%c0_259, %c0_260], %1114 {strides = array<i32>} : memref<16x128xf32, #tpu.memory_space<vmem>>, vector<16x128xf32>,
      %cst_261 = arith.constant 0.000000e+00 : f32
      %1116 = vector.broadcast %cst_261 : f32 to vector<16x128xf32>
      %c0_262 = arith.constant 0 : index
      %c0_263 = arith.constant 0 : index
      %1117 = vector.load %arg11[%c0_262, %c0_263] : memref<16x128xf32, #tpu.memory_space<vmem>>, vector<16x128xf32>
      tpu.vector_store %arg11[%c0_262, %c0_263], %1116 {strides = array<i32>} : memref<16x128xf32, #tpu.memory_space<vmem>>, vector<16x128xf32>,
    } else {
    }
    %c0 = arith.constant 0 : index
    %c0_1 = arith.constant 0 : index
    %3 = vector.load %arg1[%c0, %c0_1] : memref<256x128xbf16, #tpu.memory_space<vmem>>, vector<256x128xbf16>
    %c0_2 = arith.constant 0 : index
    %c0_3 = arith.constant 0 : index
    %4 = vector.load %arg2[%c0_2, %c0_3] : memref<128x512xbf16, #tpu.memory_space<vmem>>, vector<128x512xbf16>
    %cst = arith.constant dense<0.000000e+00> : vector<256x512xf32>
    %5 = tpu.matmul %3, %4, %cst {dimension_numbers = #tpu.dot_dimension_numbers<[1], [0], [0], [1], [0, 0, 1, 1], [], []>} : vector<256x128xbf16>, vector<128x512xbf16>, vector<256x512xf32> -> vector<256x512xf32>
    %c0_4 = arith.constant 0 : index
    %c0_5 = arith.constant 0 : index
    %6 = vector.load %arg3[%c0_4, %c0_5] : memref<1x512xf32, #tpu.memory_space<vmem>>, vector<1x512xf32>
    %7 = vector.broadcast %6 : vector<1x512xf32> to vector<256x512xf32>
    %8 = arith.addf %5, %7 : vector<256x512xf32>
    %c0_6 = arith.constant 0 : index
    %c0_7 = arith.constant 0 : index
    %9 = vector.load %arg7[%c0_6, %c0_7] : memref<256x512xf32, #tpu.memory_space<vmem>>, vector<256x512xf32>
    tpu.vector_store %arg7[%c0_6, %c0_7], %8 {strides = array<i32>} : memref<256x512xf32, #tpu.memory_space<vmem>>, vector<256x512xf32>,
    %c16_i32 = arith.constant 16 : i32
    %10 = arith.muli %arg0, %c16_i32 : i32
    %c0_8 = arith.constant 0 : index
    %c0_9 = arith.constant 0 : index
    %11 = vector.load %arg8[%c0_8, %c0_9] : memref<16x128xf32, #tpu.memory_space<vmem>>, vector<16x128xf32>
    %c0_10 = arith.constant 0 : index
    %c0_11 = arith.constant 0 : index
    %12 = vector.load %arg9[%c0_10, %c0_11] : memref<16x128xf32, #tpu.memory_space<vmem>>, vector<16x128xf32>
    %c0_12 = arith.constant 0 : index
    %c0_13 = arith.constant 0 : index
    %13 = vector.load %arg10[%c0_12, %c0_13] : memref<16x128xf32, #tpu.memory_space<vmem>>, vector<16x128xf32>
    %c0_14 = arith.constant 0 : index
    %c0_15 = arith.constant 0 : index
    %14 = vector.load %arg11[%c0_14, %c0_15] : memref<16x128xf32, #tpu.memory_space<vmem>>, vector<16x128xf32>
    %c0_i32_16 = arith.constant 0 : i32
    %15 = tpu.concatenate %11, %13 in 1 : vector<16x128xf32>, vector<16x128xf32> -> vector<16x256xf32>
    %16 = arith.truncf %15 : vector<16x256xf32> to vector<16x256xbf16>
    %c0_17 = arith.constant 0 : index
    %c0_18 = arith.constant 0 : index
    %17 = vector.load %arg4[%c0_17, %c0_18] : memref<256x1024xbf16, #tpu.memory_space<vmem>>, vector<256x1024xbf16>
    %cst_19 = arith.constant dense<0.000000e+00> : vector<16x1024xf32>
    %18 = tpu.matmul %16, %17, %cst_19 {dimension_numbers = #tpu.dot_dimension_numbers<[1], [0], [0], [1], [0, 0, 1, 1], [], []>} : vector<16x256xbf16>, vector<256x1024xbf16>, vector<16x1024xf32> -> vector<16x1024xf32>
    %19 = vector.extract_strided_slice %18 {offsets = [0, 512], sizes = [16, 512], strides = [1, 1]} : vector<16x1024xf32> to vector<16x512xf32>
    %c0_20 = arith.constant 0 : index
    %c0_21 = arith.constant 0 : index
    %20 = vector.load %arg5[%c0_20, %c0_21] : memref<1x512xf32, #tpu.memory_space<vmem>>, vector<1x512xf32>
    %21 = vector.broadcast %20 : vector<1x512xf32> to vector<16x512xf32>
    %22 = arith.addf %19, %21 : vector<16x512xf32>
    %23 = vector.extract_strided_slice %22 {offsets = [0, 0], sizes = [16, 128], strides = [1, 1]} : vector<16x512xf32> to vector<16x128xf32>
    %24 = arith.negf %23 : vector<16x128xf32>
    %25 = math.exp %24 : vector<16x128xf32>
    %cst_22 = arith.constant 1.000000e+00 : f32
    %26 = vector.broadcast %cst_22 : f32 to vector<16x128xf32>
    %27 = arith.addf %26, %25 : vector<16x128xf32>
    %28 = arith.divf %26, %27 : vector<16x128xf32>
    %29 = vector.extract_strided_slice %22 {offsets = [0, 128], sizes = [16, 128], strides = [1, 1]} : vector<16x512xf32> to vector<16x128xf32>
    %30 = arith.negf %29 : vector<16x128xf32>
    %31 = math.exp %30 : vector<16x128xf32>
    %cst_23 = arith.constant 1.000000e+00 : f32
    %32 = vector.broadcast %cst_23 : f32 to vector<16x128xf32>
    %33 = arith.addf %32, %31 : vector<16x128xf32>
    %34 = arith.divf %32, %33 : vector<16x128xf32>
    %35 = vector.extract_strided_slice %22 {offsets = [0, 256], sizes = [16, 128], strides = [1, 1]} : vector<16x512xf32> to vector<16x128xf32>
    %36 = math.tanh %35 : vector<16x128xf32>
    %37 = vector.extract_strided_slice %22 {offsets = [0, 384], sizes = [16, 128], strides = [1, 1]} : vector<16x512xf32> to vector<16x128xf32>
    %38 = arith.negf %37 : vector<16x128xf32>
    %39 = math.exp %38 : vector<16x128xf32>
    %cst_24 = arith.constant 1.000000e+00 : f32
    %40 = vector.broadcast %cst_24 : f32 to vector<16x128xf32>
    %41 = arith.addf %40, %39 : vector<16x128xf32>
    %42 = arith.divf %40, %41 : vector<16x128xf32>
    %43 = arith.mulf %34, %14 : vector<16x128xf32>
    %44 = arith.mulf %28, %36 : vector<16x128xf32>
    %45 = arith.addf %43, %44 : vector<16x128xf32>
    %46 = math.tanh %45 : vector<16x128xf32>
    %47 = arith.mulf %42, %46 : vector<16x128xf32>
    %48 = arith.addi %10, %c0_i32_16 : i32
    %c0_i32_25 = arith.constant 0 : i32
    %49 = arith.cmpi sgt, %48, %c0_i32_25 : i32
    %50 = arith.select %49, %47, %13 : vector<16x128xf32>
    %51 = arith.select %49, %45, %14 : vector<16x128xf32>
    %c16_i32_26 = arith.constant 16 : i32
    %52 = arith.muli %c0_i32_16, %c16_i32_26 : i32
    %53 = tpu.assume_multiple %52, 16 : i32
    %54 = arith.index_cast %53 : i32 to index
    %c0_27 = arith.constant 0 : index
    %55 = vector.load %arg7[%54, %c0_27] : memref<256x512xf32, #tpu.memory_space<vmem>>, vector<16x512xf32>
    %56 = vector.extract_strided_slice %18 {offsets = [0, 0], sizes = [16, 512], strides = [1, 1]} : vector<16x1024xf32> to vector<16x512xf32>
    %57 = arith.addf %55, %56 : vector<16x512xf32>
    %58 = vector.extract_strided_slice %57 {offsets = [0, 0], sizes = [16, 128], strides = [1, 1]} : vector<16x512xf32> to vector<16x128xf32>
    %59 = arith.negf %58 : vector<16x128xf32>
    %60 = math.exp %59 : vector<16x128xf32>
    %cst_28 = arith.constant 1.000000e+00 : f32
    %61 = vector.broadcast %cst_28 : f32 to vector<16x128xf32>
    %62 = arith.addf %61, %60 : vector<16x128xf32>
    %63 = arith.divf %61, %62 : vector<16x128xf32>
    %64 = vector.extract_strided_slice %57 {offsets = [0, 128], sizes = [16, 128], strides = [1, 1]} : vector<16x512xf32> to vector<16x128xf32>
    %65 = arith.negf %64 : vector<16x128xf32>
    %66 = math.exp %65 : vector<16x128xf32>
    %cst_29 = arith.constant 1.000000e+00 : f32
    %67 = vector.broadcast %cst_29 : f32 to vector<16x128xf32>
    %68 = arith.addf %67, %66 : vector<16x128xf32>
    %69 = arith.divf %67, %68 : vector<16x128xf32>
    %70 = vector.extract_strided_slice %57 {offsets = [0, 256], sizes = [16, 128], strides = [1, 1]} : vector<16x512xf32> to vector<16x128xf32>
    %71 = math.tanh %70 : vector<16x128xf32>
    %72 = vector.extract_strided_slice %57 {offsets = [0, 384], sizes = [16, 128], strides = [1, 1]} : vector<16x512xf32> to vector<16x128xf32>
    %73 = arith.negf %72 : vector<16x128xf32>
    %74 = math.exp %73 : vector<16x128xf32>
    %cst_30 = arith.constant 1.000000e+00 : f32
    %75 = vector.broadcast %cst_30 : f32 to vector<16x128xf32>
    %76 = arith.addf %75, %74 : vector<16x128xf32>
    %77 = arith.divf %75, %76 : vector<16x128xf32>
    %78 = arith.mulf %69, %12 : vector<16x128xf32>
    %79 = arith.mulf %63, %71 : vector<16x128xf32>
    %80 = arith.addf %78, %79 : vector<16x128xf32>
    %81 = math.tanh %80 : vector<16x128xf32>
    %82 = arith.mulf %77, %81 : vector<16x128xf32>
    %c1_i32 = arith.constant 1 : i32
    %83 = tpu.concatenate %82, %50 in 1 : vector<16x128xf32>, vector<16x128xf32> -> vector<16x256xf32>
    %84 = arith.truncf %83 : vector<16x256xf32> to vector<16x256xbf16>
    %c0_31 = arith.constant 0 : index
    %c0_32 = arith.constant 0 : index
    %85 = vector.load %arg4[%c0_31, %c0_32] : memref<256x1024xbf16, #tpu.memory_space<vmem>>, vector<256x1024xbf16>
    %cst_33 = arith.constant dense<0.000000e+00> : vector<16x1024xf32>
    %86 = tpu.matmul %84, %85, %cst_33 {dimension_numbers = #tpu.dot_dimension_numbers<[1], [0], [0], [1], [0, 0, 1, 1], [], []>} : vector<16x256xbf16>, vector<256x1024xbf16>, vector<16x1024xf32> -> vector<16x1024xf32>
    %87 = vector.extract_strided_slice %86 {offsets = [0, 512], sizes = [16, 512], strides = [1, 1]} : vector<16x1024xf32> to vector<16x512xf32>
    %c0_34 = arith.constant 0 : index
    %c0_35 = arith.constant 0 : index
    %88 = vector.load %arg5[%c0_34, %c0_35] : memref<1x512xf32, #tpu.memory_space<vmem>>, vector<1x512xf32>
    %89 = vector.broadcast %88 : vector<1x512xf32> to vector<16x512xf32>
    %90 = arith.addf %87, %89 : vector<16x512xf32>
    %91 = vector.extract_strided_slice %90 {offsets = [0, 0], sizes = [16, 128], strides = [1, 1]} : vector<16x512xf32> to vector<16x128xf32>
    %92 = arith.negf %91 : vector<16x128xf32>
    %93 = math.exp %92 : vector<16x128xf32>
    %cst_36 = arith.constant 1.000000e+00 : f32
    %94 = vector.broadcast %cst_36 : f32 to vector<16x128xf32>
    %95 = arith.addf %94, %93 : vector<16x128xf32>
    %96 = arith.divf %94, %95 : vector<16x128xf32>
    %97 = vector.extract_strided_slice %90 {offsets = [0, 128], sizes = [16, 128], strides = [1, 1]} : vector<16x512xf32> to vector<16x128xf32>
    %98 = arith.negf %97 : vector<16x128xf32>
    %99 = math.exp %98 : vector<16x128xf32>
    %cst_37 = arith.constant 1.000000e+00 : f32
    %100 = vector.broadcast %cst_37 : f32 to vector<16x128xf32>
    %101 = arith.addf %100, %99 : vector<16x128xf32>
    %102 = arith.divf %100, %101 : vector<16x128xf32>
    %103 = vector.extract_strided_slice %90 {offsets = [0, 256], sizes = [16, 128], strides = [1, 1]} : vector<16x512xf32> to vector<16x128xf32>
    %104 = math.tanh %103 : vector<16x128xf32>
    %105 = vector.extract_strided_slice %90 {offsets = [0, 384], sizes = [16, 128], strides = [1, 1]} : vector<16x512xf32> to vector<16x128xf32>
    %106 = arith.negf %105 : vector<16x128xf32>
    %107 = math.exp %106 : vector<16x128xf32>
    %cst_38 = arith.constant 1.000000e+00 : f32
    %108 = vector.broadcast %cst_38 : f32 to vector<16x128xf32>
    %109 = arith.addf %108, %107 : vector<16x128xf32>
    %110 = arith.divf %108, %109 : vector<16x128xf32>
    %111 = arith.mulf %102, %51 : vector<16x128xf32>
    %112 = arith.mulf %96, %104 : vector<16x128xf32>
    %113 = arith.addf %111, %112 : vector<16x128xf32>
    %114 = math.tanh %113 : vector<16x128xf32>
    %115 = arith.mulf %110, %114 : vector<16x128xf32>
    %116 = arith.addi %10, %c1_i32 : i32
    %c0_i32_39 = arith.constant 0 : i32
    %117 = arith.cmpi sgt, %116, %c0_i32_39 : i32
    %118 = arith.select %117, %115, %50 : vector<16x128xf32>
    %119 = arith.select %117, %113, %51 : vector<16x128xf32>
    %c16_i32_40 = arith.constant 16 : i32
    %120 = arith.muli %c1_i32, %c16_i32_40 : i32
    %121 = tpu.assume_multiple %120, 16 : i32
    %122 = arith.index_cast %121 : i32 to index
    %c0_41 = arith.constant 0 : index
    %123 = vector.load %arg7[%122, %c0_41] : memref<256x512xf32, #tpu.memory_space<vmem>>, vector<16x512xf32>
    %124 = vector.extract_strided_slice %86 {offsets = [0, 0], sizes = [16, 512], strides = [1, 1]} : vector<16x1024xf32> to vector<16x512xf32>
    %125 = arith.addf %123, %124 : vector<16x512xf32>
    %126 = vector.extract_strided_slice %125 {offsets = [0, 0], sizes = [16, 128], strides = [1, 1]} : vector<16x512xf32> to vector<16x128xf32>
    %127 = arith.negf %126 : vector<16x128xf32>
    %128 = math.exp %127 : vector<16x128xf32>
    %cst_42 = arith.constant 1.000000e+00 : f32
    %129 = vector.broadcast %cst_42 : f32 to vector<16x128xf32>
    %130 = arith.addf %129, %128 : vector<16x128xf32>
    %131 = arith.divf %129, %130 : vector<16x128xf32>
    %132 = vector.extract_strided_slice %125 {offsets = [0, 128], sizes = [16, 128], strides = [1, 1]} : vector<16x512xf32> to vector<16x128xf32>
    %133 = arith.negf %132 : vector<16x128xf32>
    %134 = math.exp %133 : vector<16x128xf32>
    %cst_43 = arith.constant 1.000000e+00 : f32
    %135 = vector.broadcast %cst_43 : f32 to vector<16x128xf32>
    %136 = arith.addf %135, %134 : vector<16x128xf32>
    %137 = arith.divf %135, %136 : vector<16x128xf32>
    %138 = vector.extract_strided_slice %125 {offsets = [0, 256], sizes = [16, 128], strides = [1, 1]} : vector<16x512xf32> to vector<16x128xf32>
    %139 = math.tanh %138 : vector<16x128xf32>
    %140 = vector.extract_strided_slice %125 {offsets = [0, 384], sizes = [16, 128], strides = [1, 1]} : vector<16x512xf32> to vector<16x128xf32>
    %141 = arith.negf %140 : vector<16x128xf32>
    %142 = math.exp %141 : vector<16x128xf32>
    %cst_44 = arith.constant 1.000000e+00 : f32
    %143 = vector.broadcast %cst_44 : f32 to vector<16x128xf32>
    %144 = arith.addf %143, %142 : vector<16x128xf32>
    %145 = arith.divf %143, %144 : vector<16x128xf32>
    %146 = arith.mulf %137, %80 : vector<16x128xf32>
    %147 = arith.mulf %131, %139 : vector<16x128xf32>
    %148 = arith.addf %146, %147 : vector<16x128xf32>
    %149 = math.tanh %148 : vector<16x128xf32>
    %150 = arith.mulf %145, %149 : vector<16x128xf32>
    %c2_i32 = arith.constant 2 : i32
    %151 = tpu.concatenate %150, %118 in 1 : vector<16x128xf32>, vector<16x128xf32> -> vector<16x256xf32>
    %152 = arith.truncf %151 : vector<16x256xf32> to vector<16x256xbf16>
    %c0_45 = arith.constant 0 : index
    %c0_46 = arith.constant 0 : index
    %153 = vector.load %arg4[%c0_45, %c0_46] : memref<256x1024xbf16, #tpu.memory_space<vmem>>, vector<256x1024xbf16>
    %cst_47 = arith.constant dense<0.000000e+00> : vector<16x1024xf32>
    %154 = tpu.matmul %152, %153, %cst_47 {dimension_numbers = #tpu.dot_dimension_numbers<[1], [0], [0], [1], [0, 0, 1, 1], [], []>} : vector<16x256xbf16>, vector<256x1024xbf16>, vector<16x1024xf32> -> vector<16x1024xf32>
    %155 = vector.extract_strided_slice %154 {offsets = [0, 512], sizes = [16, 512], strides = [1, 1]} : vector<16x1024xf32> to vector<16x512xf32>
    %c0_48 = arith.constant 0 : index
    %c0_49 = arith.constant 0 : index
    %156 = vector.load %arg5[%c0_48, %c0_49] : memref<1x512xf32, #tpu.memory_space<vmem>>, vector<1x512xf32>
    %157 = vector.broadcast %156 : vector<1x512xf32> to vector<16x512xf32>
    %158 = arith.addf %155, %157 : vector<16x512xf32>
    %159 = vector.extract_strided_slice %158 {offsets = [0, 0], sizes = [16, 128], strides = [1, 1]} : vector<16x512xf32> to vector<16x128xf32>
    %160 = arith.negf %159 : vector<16x128xf32>
    %161 = math.exp %160 : vector<16x128xf32>
    %cst_50 = arith.constant 1.000000e+00 : f32
    %162 = vector.broadcast %cst_50 : f32 to vector<16x128xf32>
    %163 = arith.addf %162, %161 : vector<16x128xf32>
    %164 = arith.divf %162, %163 : vector<16x128xf32>
    %165 = vector.extract_strided_slice %158 {offsets = [0, 128], sizes = [16, 128], strides = [1, 1]} : vector<16x512xf32> to vector<16x128xf32>
    %166 = arith.negf %165 : vector<16x128xf32>
    %167 = math.exp %166 : vector<16x128xf32>
    %cst_51 = arith.constant 1.000000e+00 : f32
    %168 = vector.broadcast %cst_51 : f32 to vector<16x128xf32>
    %169 = arith.addf %168, %167 : vector<16x128xf32>
    %170 = arith.divf %168, %169 : vector<16x128xf32>
    %171 = vector.extract_strided_slice %158 {offsets = [0, 256], sizes = [16, 128], strides = [1, 1]} : vector<16x512xf32> to vector<16x128xf32>
    %172 = math.tanh %171 : vector<16x128xf32>
    %173 = vector.extract_strided_slice %158 {offsets = [0, 384], sizes = [16, 128], strides = [1, 1]} : vector<16x512xf32> to vector<16x128xf32>
    %174 = arith.negf %173 : vector<16x128xf32>
    %175 = math.exp %174 : vector<16x128xf32>
    %cst_52 = arith.constant 1.000000e+00 : f32
    %176 = vector.broadcast %cst_52 : f32 to vector<16x128xf32>
    %177 = arith.addf %176, %175 : vector<16x128xf32>
    %178 = arith.divf %176, %177 : vector<16x128xf32>
    %179 = arith.mulf %170, %119 : vector<16x128xf32>
    %180 = arith.mulf %164, %172 : vector<16x128xf32>
    %181 = arith.addf %179, %180 : vector<16x128xf32>
    %182 = math.tanh %181 : vector<16x128xf32>
    %183 = arith.mulf %178, %182 : vector<16x128xf32>
    %184 = arith.addi %10, %c2_i32 : i32
    %c0_i32_53 = arith.constant 0 : i32
    %185 = arith.cmpi sgt, %184, %c0_i32_53 : i32
    %186 = arith.select %185, %183, %118 : vector<16x128xf32>
    %187 = arith.select %185, %181, %119 : vector<16x128xf32>
    %c16_i32_54 = arith.constant 16 : i32
    %188 = arith.muli %c2_i32, %c16_i32_54 : i32
    %189 = tpu.assume_multiple %188, 16 : i32
    %190 = arith.index_cast %189 : i32 to index
    %c0_55 = arith.constant 0 : index
    %191 = vector.load %arg7[%190, %c0_55] : memref<256x512xf32, #tpu.memory_space<vmem>>, vector<16x512xf32>
    %192 = vector.extract_strided_slice %154 {offsets = [0, 0], sizes = [16, 512], strides = [1, 1]} : vector<16x1024xf32> to vector<16x512xf32>
    %193 = arith.addf %191, %192 : vector<16x512xf32>
    %194 = vector.extract_strided_slice %193 {offsets = [0, 0], sizes = [16, 128], strides = [1, 1]} : vector<16x512xf32> to vector<16x128xf32>
    %195 = arith.negf %194 : vector<16x128xf32>
    %196 = math.exp %195 : vector<16x128xf32>
    %cst_56 = arith.constant 1.000000e+00 : f32
    %197 = vector.broadcast %cst_56 : f32 to vector<16x128xf32>
    %198 = arith.addf %197, %196 : vector<16x128xf32>
    %199 = arith.divf %197, %198 : vector<16x128xf32>
    %200 = vector.extract_strided_slice %193 {offsets = [0, 128], sizes = [16, 128], strides = [1, 1]} : vector<16x512xf32> to vector<16x128xf32>
    %201 = arith.negf %200 : vector<16x128xf32>
    %202 = math.exp %201 : vector<16x128xf32>
    %cst_57 = arith.constant 1.000000e+00 : f32
    %203 = vector.broadcast %cst_57 : f32 to vector<16x128xf32>
    %204 = arith.addf %203, %202 : vector<16x128xf32>
    %205 = arith.divf %203, %204 : vector<16x128xf32>
    %206 = vector.extract_strided_slice %193 {offsets = [0, 256], sizes = [16, 128], strides = [1, 1]} : vector<16x512xf32> to vector<16x128xf32>
    %207 = math.tanh %206 : vector<16x128xf32>
    %208 = vector.extract_strided_slice %193 {offsets = [0, 384], sizes = [16, 128], strides = [1, 1]} : vector<16x512xf32> to vector<16x128xf32>
    %209 = arith.negf %208 : vector<16x128xf32>
    %210 = math.exp %209 : vector<16x128xf32>
    %cst_58 = arith.constant 1.000000e+00 : f32
    %211 = vector.broadcast %cst_58 : f32 to vector<16x128xf32>
    %212 = arith.addf %211, %210 : vector<16x128xf32>
    %213 = arith.divf %211, %212 : vector<16x128xf32>
    %214 = arith.mulf %205, %148 : vector<16x128xf32>
    %215 = arith.mulf %199, %207 : vector<16x128xf32>
    %216 = arith.addf %214, %215 : vector<16x128xf32>
    %217 = math.tanh %216 : vector<16x128xf32>
    %218 = arith.mulf %213, %217 : vector<16x128xf32>
    %c3_i32 = arith.constant 3 : i32
    %219 = tpu.concatenate %218, %186 in 1 : vector<16x128xf32>, vector<16x128xf32> -> vector<16x256xf32>
    %220 = arith.truncf %219 : vector<16x256xf32> to vector<16x256xbf16>
    %c0_59 = arith.constant 0 : index
    %c0_60 = arith.constant 0 : index
    %221 = vector.load %arg4[%c0_59, %c0_60] : memref<256x1024xbf16, #tpu.memory_space<vmem>>, vector<256x1024xbf16>
    %cst_61 = arith.constant dense<0.000000e+00> : vector<16x1024xf32>
    %222 = tpu.matmul %220, %221, %cst_61 {dimension_numbers = #tpu.dot_dimension_numbers<[1], [0], [0], [1], [0, 0, 1, 1], [], []>} : vector<16x256xbf16>, vector<256x1024xbf16>, vector<16x1024xf32> -> vector<16x1024xf32>
    %223 = vector.extract_strided_slice %222 {offsets = [0, 512], sizes = [16, 512], strides = [1, 1]} : vector<16x1024xf32> to vector<16x512xf32>
    %c0_62 = arith.constant 0 : index
    %c0_63 = arith.constant 0 : index
    %224 = vector.load %arg5[%c0_62, %c0_63] : memref<1x512xf32, #tpu.memory_space<vmem>>, vector<1x512xf32>
    %225 = vector.broadcast %224 : vector<1x512xf32> to vector<16x512xf32>
    %226 = arith.addf %223, %225 : vector<16x512xf32>
    %227 = vector.extract_strided_slice %226 {offsets = [0, 0], sizes = [16, 128], strides = [1, 1]} : vector<16x512xf32> to vector<16x128xf32>
    %228 = arith.negf %227 : vector<16x128xf32>
    %229 = math.exp %228 : vector<16x128xf32>
    %cst_64 = arith.constant 1.000000e+00 : f32
    %230 = vector.broadcast %cst_64 : f32 to vector<16x128xf32>
    %231 = arith.addf %230, %229 : vector<16x128xf32>
    %232 = arith.divf %230, %231 : vector<16x128xf32>
    %233 = vector.extract_strided_slice %226 {offsets = [0, 128], sizes = [16, 128], strides = [1, 1]} : vector<16x512xf32> to vector<16x128xf32>
    %234 = arith.negf %233 : vector<16x128xf32>
    %235 = math.exp %234 : vector<16x128xf32>
    %cst_65 = arith.constant 1.000000e+00 : f32
    %236 = vector.broadcast %cst_65 : f32 to vector<16x128xf32>
    %237 = arith.addf %236, %235 : vector<16x128xf32>
    %238 = arith.divf %236, %237 : vector<16x128xf32>
    %239 = vector.extract_strided_slice %226 {offsets = [0, 256], sizes = [16, 128], strides = [1, 1]} : vector<16x512xf32> to vector<16x128xf32>
    %240 = math.tanh %239 : vector<16x128xf32>
    %241 = vector.extract_strided_slice %226 {offsets = [0, 384], sizes = [16, 128], strides = [1, 1]} : vector<16x512xf32> to vector<16x128xf32>
    %242 = arith.negf %241 : vector<16x128xf32>
    %243 = math.exp %242 : vector<16x128xf32>
    %cst_66 = arith.constant 1.000000e+00 : f32
    %244 = vector.broadcast %cst_66 : f32 to vector<16x128xf32>
    %245 = arith.addf %244, %243 : vector<16x128xf32>
    %246 = arith.divf %244, %245 : vector<16x128xf32>
    %247 = arith.mulf %238, %187 : vector<16x128xf32>
    %248 = arith.mulf %232, %240 : vector<16x128xf32>
    %249 = arith.addf %247, %248 : vector<16x128xf32>
    %250 = math.tanh %249 : vector<16x128xf32>
    %251 = arith.mulf %246, %250 : vector<16x128xf32>
    %252 = arith.addi %10, %c3_i32 : i32
    %c0_i32_67 = arith.constant 0 : i32
    %253 = arith.cmpi sgt, %252, %c0_i32_67 : i32
    %254 = arith.select %253, %251, %186 : vector<16x128xf32>
    %255 = arith.select %253, %249, %187 : vector<16x128xf32>
    %c16_i32_68 = arith.constant 16 : i32
    %256 = arith.muli %c3_i32, %c16_i32_68 : i32
    %257 = tpu.assume_multiple %256, 16 : i32
    %258 = arith.index_cast %257 : i32 to index
    %c0_69 = arith.constant 0 : index
    %259 = vector.load %arg7[%258, %c0_69] : memref<256x512xf32, #tpu.memory_space<vmem>>, vector<16x512xf32>
    %260 = vector.extract_strided_slice %222 {offsets = [0, 0], sizes = [16, 512], strides = [1, 1]} : vector<16x1024xf32> to vector<16x512xf32>
    %261 = arith.addf %259, %260 : vector<16x512xf32>
    %262 = vector.extract_strided_slice %261 {offsets = [0, 0], sizes = [16, 128], strides = [1, 1]} : vector<16x512xf32> to vector<16x128xf32>
    %263 = arith.negf %262 : vector<16x128xf32>
    %264 = math.exp %263 : vector<16x128xf32>
    %cst_70 = arith.constant 1.000000e+00 : f32
    %265 = vector.broadcast %cst_70 : f32 to vector<16x128xf32>
    %266 = arith.addf %265, %264 : vector<16x128xf32>
    %267 = arith.divf %265, %266 : vector<16x128xf32>
    %268 = vector.extract_strided_slice %261 {offsets = [0, 128], sizes = [16, 128], strides = [1, 1]} : vector<16x512xf32> to vector<16x128xf32>
    %269 = arith.negf %268 : vector<16x128xf32>
    %270 = math.exp %269 : vector<16x128xf32>
    %cst_71 = arith.constant 1.000000e+00 : f32
    %271 = vector.broadcast %cst_71 : f32 to vector<16x128xf32>
    %272 = arith.addf %271, %270 : vector<16x128xf32>
    %273 = arith.divf %271, %272 : vector<16x128xf32>
    %274 = vector.extract_strided_slice %261 {offsets = [0, 256], sizes = [16, 128], strides = [1, 1]} : vector<16x512xf32> to vector<16x128xf32>
    %275 = math.tanh %274 : vector<16x128xf32>
    %276 = vector.extract_strided_slice %261 {offsets = [0, 384], sizes = [16, 128], strides = [1, 1]} : vector<16x512xf32> to vector<16x128xf32>
    %277 = arith.negf %276 : vector<16x128xf32>
    %278 = math.exp %277 : vector<16x128xf32>
    %cst_72 = arith.constant 1.000000e+00 : f32
    %279 = vector.broadcast %cst_72 : f32 to vector<16x128xf32>
    %280 = arith.addf %279, %278 : vector<16x128xf32>
    %281 = arith.divf %279, %280 : vector<16x128xf32>
    %282 = arith.mulf %273, %216 : vector<16x128xf32>
    %283 = arith.mulf %267, %275 : vector<16x128xf32>
    %284 = arith.addf %282, %283 : vector<16x128xf32>
    %285 = math.tanh %284 : vector<16x128xf32>
    %286 = arith.mulf %281, %285 : vector<16x128xf32>
    %c4_i32 = arith.constant 4 : i32
    %287 = tpu.concatenate %286, %254 in 1 : vector<16x128xf32>, vector<16x128xf32> -> vector<16x256xf32>
    %288 = arith.truncf %287 : vector<16x256xf32> to vector<16x256xbf16>
    %c0_73 = arith.constant 0 : index
    %c0_74 = arith.constant 0 : index
    %289 = vector.load %arg4[%c0_73, %c0_74] : memref<256x1024xbf16, #tpu.memory_space<vmem>>, vector<256x1024xbf16>
    %cst_75 = arith.constant dense<0.000000e+00> : vector<16x1024xf32>
    %290 = tpu.matmul %288, %289, %cst_75 {dimension_numbers = #tpu.dot_dimension_numbers<[1], [0], [0], [1], [0, 0, 1, 1], [], []>} : vector<16x256xbf16>, vector<256x1024xbf16>, vector<16x1024xf32> -> vector<16x1024xf32>
    %291 = vector.extract_strided_slice %290 {offsets = [0, 512], sizes = [16, 512], strides = [1, 1]} : vector<16x1024xf32> to vector<16x512xf32>
    %c0_76 = arith.constant 0 : index
    %c0_77 = arith.constant 0 : index
    %292 = vector.load %arg5[%c0_76, %c0_77] : memref<1x512xf32, #tpu.memory_space<vmem>>, vector<1x512xf32>
    %293 = vector.broadcast %292 : vector<1x512xf32> to vector<16x512xf32>
    %294 = arith.addf %291, %293 : vector<16x512xf32>
    %295 = vector.extract_strided_slice %294 {offsets = [0, 0], sizes = [16, 128], strides = [1, 1]} : vector<16x512xf32> to vector<16x128xf32>
    %296 = arith.negf %295 : vector<16x128xf32>
    %297 = math.exp %296 : vector<16x128xf32>
    %cst_78 = arith.constant 1.000000e+00 : f32
    %298 = vector.broadcast %cst_78 : f32 to vector<16x128xf32>
    %299 = arith.addf %298, %297 : vector<16x128xf32>
    %300 = arith.divf %298, %299 : vector<16x128xf32>
    %301 = vector.extract_strided_slice %294 {offsets = [0, 128], sizes = [16, 128], strides = [1, 1]} : vector<16x512xf32> to vector<16x128xf32>
    %302 = arith.negf %301 : vector<16x128xf32>
    %303 = math.exp %302 : vector<16x128xf32>
    %cst_79 = arith.constant 1.000000e+00 : f32
    %304 = vector.broadcast %cst_79 : f32 to vector<16x128xf32>
    %305 = arith.addf %304, %303 : vector<16x128xf32>
    %306 = arith.divf %304, %305 : vector<16x128xf32>
    %307 = vector.extract_strided_slice %294 {offsets = [0, 256], sizes = [16, 128], strides = [1, 1]} : vector<16x512xf32> to vector<16x128xf32>
    %308 = math.tanh %307 : vector<16x128xf32>
    %309 = vector.extract_strided_slice %294 {offsets = [0, 384], sizes = [16, 128], strides = [1, 1]} : vector<16x512xf32> to vector<16x128xf32>
    %310 = arith.negf %309 : vector<16x128xf32>
    %311 = math.exp %310 : vector<16x128xf32>
    %cst_80 = arith.constant 1.000000e+00 : f32
    %312 = vector.broadcast %cst_80 : f32 to vector<16x128xf32>
    %313 = arith.addf %312, %311 : vector<16x128xf32>
    %314 = arith.divf %312, %313 : vector<16x128xf32>
    %315 = arith.mulf %306, %255 : vector<16x128xf32>
    %316 = arith.mulf %300, %308 : vector<16x128xf32>
    %317 = arith.addf %315, %316 : vector<16x128xf32>
    %318 = math.tanh %317 : vector<16x128xf32>
    %319 = arith.mulf %314, %318 : vector<16x128xf32>
    %320 = arith.addi %10, %c4_i32 : i32
    %c0_i32_81 = arith.constant 0 : i32
    %321 = arith.cmpi sgt, %320, %c0_i32_81 : i32
    %322 = arith.select %321, %319, %254 : vector<16x128xf32>
    %323 = arith.select %321, %317, %255 : vector<16x128xf32>
    %c16_i32_82 = arith.constant 16 : i32
    %324 = arith.muli %c4_i32, %c16_i32_82 : i32
    %325 = tpu.assume_multiple %324, 16 : i32
    %326 = arith.index_cast %325 : i32 to index
    %c0_83 = arith.constant 0 : index
    %327 = vector.load %arg7[%326, %c0_83] : memref<256x512xf32, #tpu.memory_space<vmem>>, vector<16x512xf32>
    %328 = vector.extract_strided_slice %290 {offsets = [0, 0], sizes = [16, 512], strides = [1, 1]} : vector<16x1024xf32> to vector<16x512xf32>
    %329 = arith.addf %327, %328 : vector<16x512xf32>
    %330 = vector.extract_strided_slice %329 {offsets = [0, 0], sizes = [16, 128], strides = [1, 1]} : vector<16x512xf32> to vector<16x128xf32>
    %331 = arith.negf %330 : vector<16x128xf32>
    %332 = math.exp %331 : vector<16x128xf32>
    %cst_84 = arith.constant 1.000000e+00 : f32
    %333 = vector.broadcast %cst_84 : f32 to vector<16x128xf32>
    %334 = arith.addf %333, %332 : vector<16x128xf32>
    %335 = arith.divf %333, %334 : vector<16x128xf32>
    %336 = vector.extract_strided_slice %329 {offsets = [0, 128], sizes = [16, 128], strides = [1, 1]} : vector<16x512xf32> to vector<16x128xf32>
    %337 = arith.negf %336 : vector<16x128xf32>
    %338 = math.exp %337 : vector<16x128xf32>
    %cst_85 = arith.constant 1.000000e+00 : f32
    %339 = vector.broadcast %cst_85 : f32 to vector<16x128xf32>
    %340 = arith.addf %339, %338 : vector<16x128xf32>
    %341 = arith.divf %339, %340 : vector<16x128xf32>
    %342 = vector.extract_strided_slice %329 {offsets = [0, 256], sizes = [16, 128], strides = [1, 1]} : vector<16x512xf32> to vector<16x128xf32>
    %343 = math.tanh %342 : vector<16x128xf32>
    %344 = vector.extract_strided_slice %329 {offsets = [0, 384], sizes = [16, 128], strides = [1, 1]} : vector<16x512xf32> to vector<16x128xf32>
    %345 = arith.negf %344 : vector<16x128xf32>
    %346 = math.exp %345 : vector<16x128xf32>
    %cst_86 = arith.constant 1.000000e+00 : f32
    %347 = vector.broadcast %cst_86 : f32 to vector<16x128xf32>
    %348 = arith.addf %347, %346 : vector<16x128xf32>
    %349 = arith.divf %347, %348 : vector<16x128xf32>
    %350 = arith.mulf %341, %284 : vector<16x128xf32>
    %351 = arith.mulf %335, %343 : vector<16x128xf32>
    %352 = arith.addf %350, %351 : vector<16x128xf32>
    %353 = math.tanh %352 : vector<16x128xf32>
    %354 = arith.mulf %349, %353 : vector<16x128xf32>
    %c5_i32 = arith.constant 5 : i32
    %355 = tpu.concatenate %354, %322 in 1 : vector<16x128xf32>, vector<16x128xf32> -> vector<16x256xf32>
    %356 = arith.truncf %355 : vector<16x256xf32> to vector<16x256xbf16>
    %c0_87 = arith.constant 0 : index
    %c0_88 = arith.constant 0 : index
    %357 = vector.load %arg4[%c0_87, %c0_88] : memref<256x1024xbf16, #tpu.memory_space<vmem>>, vector<256x1024xbf16>
    %cst_89 = arith.constant dense<0.000000e+00> : vector<16x1024xf32>
    %358 = tpu.matmul %356, %357, %cst_89 {dimension_numbers = #tpu.dot_dimension_numbers<[1], [0], [0], [1], [0, 0, 1, 1], [], []>} : vector<16x256xbf16>, vector<256x1024xbf16>, vector<16x1024xf32> -> vector<16x1024xf32>
    %359 = vector.extract_strided_slice %358 {offsets = [0, 512], sizes = [16, 512], strides = [1, 1]} : vector<16x1024xf32> to vector<16x512xf32>
    %c0_90 = arith.constant 0 : index
    %c0_91 = arith.constant 0 : index
    %360 = vector.load %arg5[%c0_90, %c0_91] : memref<1x512xf32, #tpu.memory_space<vmem>>, vector<1x512xf32>
    %361 = vector.broadcast %360 : vector<1x512xf32> to vector<16x512xf32>
    %362 = arith.addf %359, %361 : vector<16x512xf32>
    %363 = vector.extract_strided_slice %362 {offsets = [0, 0], sizes = [16, 128], strides = [1, 1]} : vector<16x512xf32> to vector<16x128xf32>
    %364 = arith.negf %363 : vector<16x128xf32>
    %365 = math.exp %364 : vector<16x128xf32>
    %cst_92 = arith.constant 1.000000e+00 : f32
    %366 = vector.broadcast %cst_92 : f32 to vector<16x128xf32>
    %367 = arith.addf %366, %365 : vector<16x128xf32>
    %368 = arith.divf %366, %367 : vector<16x128xf32>
    %369 = vector.extract_strided_slice %362 {offsets = [0, 128], sizes = [16, 128], strides = [1, 1]} : vector<16x512xf32> to vector<16x128xf32>
    %370 = arith.negf %369 : vector<16x128xf32>
    %371 = math.exp %370 : vector<16x128xf32>
    %cst_93 = arith.constant 1.000000e+00 : f32
    %372 = vector.broadcast %cst_93 : f32 to vector<16x128xf32>
    %373 = arith.addf %372, %371 : vector<16x128xf32>
    %374 = arith.divf %372, %373 : vector<16x128xf32>
    %375 = vector.extract_strided_slice %362 {offsets = [0, 256], sizes = [16, 128], strides = [1, 1]} : vector<16x512xf32> to vector<16x128xf32>
    %376 = math.tanh %375 : vector<16x128xf32>
    %377 = vector.extract_strided_slice %362 {offsets = [0, 384], sizes = [16, 128], strides = [1, 1]} : vector<16x512xf32> to vector<16x128xf32>
    %378 = arith.negf %377 : vector<16x128xf32>
    %379 = math.exp %378 : vector<16x128xf32>
    %cst_94 = arith.constant 1.000000e+00 : f32
    %380 = vector.broadcast %cst_94 : f32 to vector<16x128xf32>
    %381 = arith.addf %380, %379 : vector<16x128xf32>
    %382 = arith.divf %380, %381 : vector<16x128xf32>
    %383 = arith.mulf %374, %323 : vector<16x128xf32>
    %384 = arith.mulf %368, %376 : vector<16x128xf32>
    %385 = arith.addf %383, %384 : vector<16x128xf32>
    %386 = math.tanh %385 : vector<16x128xf32>
    %387 = arith.mulf %382, %386 : vector<16x128xf32>
    %388 = arith.addi %10, %c5_i32 : i32
    %c0_i32_95 = arith.constant 0 : i32
    %389 = arith.cmpi sgt, %388, %c0_i32_95 : i32
    %390 = arith.select %389, %387, %322 : vector<16x128xf32>
    %391 = arith.select %389, %385, %323 : vector<16x128xf32>
    %c16_i32_96 = arith.constant 16 : i32
    %392 = arith.muli %c5_i32, %c16_i32_96 : i32
    %393 = tpu.assume_multiple %392, 16 : i32
    %394 = arith.index_cast %393 : i32 to index
    %c0_97 = arith.constant 0 : index
    %395 = vector.load %arg7[%394, %c0_97] : memref<256x512xf32, #tpu.memory_space<vmem>>, vector<16x512xf32>
    %396 = vector.extract_strided_slice %358 {offsets = [0, 0], sizes = [16, 512], strides = [1, 1]} : vector<16x1024xf32> to vector<16x512xf32>
    %397 = arith.addf %395, %396 : vector<16x512xf32>
    %398 = vector.extract_strided_slice %397 {offsets = [0, 0], sizes = [16, 128], strides = [1, 1]} : vector<16x512xf32> to vector<16x128xf32>
    %399 = arith.negf %398 : vector<16x128xf32>
    %400 = math.exp %399 : vector<16x128xf32>
    %cst_98 = arith.constant 1.000000e+00 : f32
    %401 = vector.broadcast %cst_98 : f32 to vector<16x128xf32>
    %402 = arith.addf %401, %400 : vector<16x128xf32>
    %403 = arith.divf %401, %402 : vector<16x128xf32>
    %404 = vector.extract_strided_slice %397 {offsets = [0, 128], sizes = [16, 128], strides = [1, 1]} : vector<16x512xf32> to vector<16x128xf32>
    %405 = arith.negf %404 : vector<16x128xf32>
    %406 = math.exp %405 : vector<16x128xf32>
    %cst_99 = arith.constant 1.000000e+00 : f32
    %407 = vector.broadcast %cst_99 : f32 to vector<16x128xf32>
    %408 = arith.addf %407, %406 : vector<16x128xf32>
    %409 = arith.divf %407, %408 : vector<16x128xf32>
    %410 = vector.extract_strided_slice %397 {offsets = [0, 256], sizes = [16, 128], strides = [1, 1]} : vector<16x512xf32> to vector<16x128xf32>
    %411 = math.tanh %410 : vector<16x128xf32>
    %412 = vector.extract_strided_slice %397 {offsets = [0, 384], sizes = [16, 128], strides = [1, 1]} : vector<16x512xf32> to vector<16x128xf32>
    %413 = arith.negf %412 : vector<16x128xf32>
    %414 = math.exp %413 : vector<16x128xf32>
    %cst_100 = arith.constant 1.000000e+00 : f32
    %415 = vector.broadcast %cst_100 : f32 to vector<16x128xf32>
    %416 = arith.addf %415, %414 : vector<16x128xf32>
    %417 = arith.divf %415, %416 : vector<16x128xf32>
    %418 = arith.mulf %409, %352 : vector<16x128xf32>
    %419 = arith.mulf %403, %411 : vector<16x128xf32>
    %420 = arith.addf %418, %419 : vector<16x128xf32>
    %421 = math.tanh %420 : vector<16x128xf32>
    %422 = arith.mulf %417, %421 : vector<16x128xf32>
    %c6_i32 = arith.constant 6 : i32
    %423 = tpu.concatenate %422, %390 in 1 : vector<16x128xf32>, vector<16x128xf32> -> vector<16x256xf32>
    %424 = arith.truncf %423 : vector<16x256xf32> to vector<16x256xbf16>
    %c0_101 = arith.constant 0 : index
    %c0_102 = arith.constant 0 : index
    %425 = vector.load %arg4[%c0_101, %c0_102] : memref<256x1024xbf16, #tpu.memory_space<vmem>>, vector<256x1024xbf16>
    %cst_103 = arith.constant dense<0.000000e+00> : vector<16x1024xf32>
    %426 = tpu.matmul %424, %425, %cst_103 {dimension_numbers = #tpu.dot_dimension_numbers<[1], [0], [0], [1], [0, 0, 1, 1], [], []>} : vector<16x256xbf16>, vector<256x1024xbf16>, vector<16x1024xf32> -> vector<16x1024xf32>
    %427 = vector.extract_strided_slice %426 {offsets = [0, 512], sizes = [16, 512], strides = [1, 1]} : vector<16x1024xf32> to vector<16x512xf32>
    %c0_104 = arith.constant 0 : index
    %c0_105 = arith.constant 0 : index
    %428 = vector.load %arg5[%c0_104, %c0_105] : memref<1x512xf32, #tpu.memory_space<vmem>>, vector<1x512xf32>
    %429 = vector.broadcast %428 : vector<1x512xf32> to vector<16x512xf32>
    %430 = arith.addf %427, %429 : vector<16x512xf32>
    %431 = vector.extract_strided_slice %430 {offsets = [0, 0], sizes = [16, 128], strides = [1, 1]} : vector<16x512xf32> to vector<16x128xf32>
    %432 = arith.negf %431 : vector<16x128xf32>
    %433 = math.exp %432 : vector<16x128xf32>
    %cst_106 = arith.constant 1.000000e+00 : f32
    %434 = vector.broadcast %cst_106 : f32 to vector<16x128xf32>
    %435 = arith.addf %434, %433 : vector<16x128xf32>
    %436 = arith.divf %434, %435 : vector<16x128xf32>
    %437 = vector.extract_strided_slice %430 {offsets = [0, 128], sizes = [16, 128], strides = [1, 1]} : vector<16x512xf32> to vector<16x128xf32>
    %438 = arith.negf %437 : vector<16x128xf32>
    %439 = math.exp %438 : vector<16x128xf32>
    %cst_107 = arith.constant 1.000000e+00 : f32
    %440 = vector.broadcast %cst_107 : f32 to vector<16x128xf32>
    %441 = arith.addf %440, %439 : vector<16x128xf32>
    %442 = arith.divf %440, %441 : vector<16x128xf32>
    %443 = vector.extract_strided_slice %430 {offsets = [0, 256], sizes = [16, 128], strides = [1, 1]} : vector<16x512xf32> to vector<16x128xf32>
    %444 = math.tanh %443 : vector<16x128xf32>
    %445 = vector.extract_strided_slice %430 {offsets = [0, 384], sizes = [16, 128], strides = [1, 1]} : vector<16x512xf32> to vector<16x128xf32>
    %446 = arith.negf %445 : vector<16x128xf32>
    %447 = math.exp %446 : vector<16x128xf32>
    %cst_108 = arith.constant 1.000000e+00 : f32
    %448 = vector.broadcast %cst_108 : f32 to vector<16x128xf32>
    %449 = arith.addf %448, %447 : vector<16x128xf32>
    %450 = arith.divf %448, %449 : vector<16x128xf32>
    %451 = arith.mulf %442, %391 : vector<16x128xf32>
    %452 = arith.mulf %436, %444 : vector<16x128xf32>
    %453 = arith.addf %451, %452 : vector<16x128xf32>
    %454 = math.tanh %453 : vector<16x128xf32>
    %455 = arith.mulf %450, %454 : vector<16x128xf32>
    %456 = arith.addi %10, %c6_i32 : i32
    %c0_i32_109 = arith.constant 0 : i32
    %457 = arith.cmpi sgt, %456, %c0_i32_109 : i32
    %458 = arith.select %457, %455, %390 : vector<16x128xf32>
    %459 = arith.select %457, %453, %391 : vector<16x128xf32>
    %c16_i32_110 = arith.constant 16 : i32
    %460 = arith.muli %c6_i32, %c16_i32_110 : i32
    %461 = tpu.assume_multiple %460, 16 : i32
    %462 = arith.index_cast %461 : i32 to index
    %c0_111 = arith.constant 0 : index
    %463 = vector.load %arg7[%462, %c0_111] : memref<256x512xf32, #tpu.memory_space<vmem>>, vector<16x512xf32>
    %464 = vector.extract_strided_slice %426 {offsets = [0, 0], sizes = [16, 512], strides = [1, 1]} : vector<16x1024xf32> to vector<16x512xf32>
    %465 = arith.addf %463, %464 : vector<16x512xf32>
    %466 = vector.extract_strided_slice %465 {offsets = [0, 0], sizes = [16, 128], strides = [1, 1]} : vector<16x512xf32> to vector<16x128xf32>
    %467 = arith.negf %466 : vector<16x128xf32>
    %468 = math.exp %467 : vector<16x128xf32>
    %cst_112 = arith.constant 1.000000e+00 : f32
    %469 = vector.broadcast %cst_112 : f32 to vector<16x128xf32>
    %470 = arith.addf %469, %468 : vector<16x128xf32>
    %471 = arith.divf %469, %470 : vector<16x128xf32>
    %472 = vector.extract_strided_slice %465 {offsets = [0, 128], sizes = [16, 128], strides = [1, 1]} : vector<16x512xf32> to vector<16x128xf32>
    %473 = arith.negf %472 : vector<16x128xf32>
    %474 = math.exp %473 : vector<16x128xf32>
    %cst_113 = arith.constant 1.000000e+00 : f32
    %475 = vector.broadcast %cst_113 : f32 to vector<16x128xf32>
    %476 = arith.addf %475, %474 : vector<16x128xf32>
    %477 = arith.divf %475, %476 : vector<16x128xf32>
    %478 = vector.extract_strided_slice %465 {offsets = [0, 256], sizes = [16, 128], strides = [1, 1]} : vector<16x512xf32> to vector<16x128xf32>
    %479 = math.tanh %478 : vector<16x128xf32>
    %480 = vector.extract_strided_slice %465 {offsets = [0, 384], sizes = [16, 128], strides = [1, 1]} : vector<16x512xf32> to vector<16x128xf32>
    %481 = arith.negf %480 : vector<16x128xf32>
    %482 = math.exp %481 : vector<16x128xf32>
    %cst_114 = arith.constant 1.000000e+00 : f32
    %483 = vector.broadcast %cst_114 : f32 to vector<16x128xf32>
    %484 = arith.addf %483, %482 : vector<16x128xf32>
    %485 = arith.divf %483, %484 : vector<16x128xf32>
    %486 = arith.mulf %477, %420 : vector<16x128xf32>
    %487 = arith.mulf %471, %479 : vector<16x128xf32>
    %488 = arith.addf %486, %487 : vector<16x128xf32>
    %489 = math.tanh %488 : vector<16x128xf32>
    %490 = arith.mulf %485, %489 : vector<16x128xf32>
    %c7_i32 = arith.constant 7 : i32
    %491 = tpu.concatenate %490, %458 in 1 : vector<16x128xf32>, vector<16x128xf32> -> vector<16x256xf32>
    %492 = arith.truncf %491 : vector<16x256xf32> to vector<16x256xbf16>
    %c0_115 = arith.constant 0 : index
    %c0_116 = arith.constant 0 : index
    %493 = vector.load %arg4[%c0_115, %c0_116] : memref<256x1024xbf16, #tpu.memory_space<vmem>>, vector<256x1024xbf16>
    %cst_117 = arith.constant dense<0.000000e+00> : vector<16x1024xf32>
    %494 = tpu.matmul %492, %493, %cst_117 {dimension_numbers = #tpu.dot_dimension_numbers<[1], [0], [0], [1], [0, 0, 1, 1], [], []>} : vector<16x256xbf16>, vector<256x1024xbf16>, vector<16x1024xf32> -> vector<16x1024xf32>
    %495 = vector.extract_strided_slice %494 {offsets = [0, 512], sizes = [16, 512], strides = [1, 1]} : vector<16x1024xf32> to vector<16x512xf32>
    %c0_118 = arith.constant 0 : index
    %c0_119 = arith.constant 0 : index
    %496 = vector.load %arg5[%c0_118, %c0_119] : memref<1x512xf32, #tpu.memory_space<vmem>>, vector<1x512xf32>
    %497 = vector.broadcast %496 : vector<1x512xf32> to vector<16x512xf32>
    %498 = arith.addf %495, %497 : vector<16x512xf32>
    %499 = vector.extract_strided_slice %498 {offsets = [0, 0], sizes = [16, 128], strides = [1, 1]} : vector<16x512xf32> to vector<16x128xf32>
    %500 = arith.negf %499 : vector<16x128xf32>
    %501 = math.exp %500 : vector<16x128xf32>
    %cst_120 = arith.constant 1.000000e+00 : f32
    %502 = vector.broadcast %cst_120 : f32 to vector<16x128xf32>
    %503 = arith.addf %502, %501 : vector<16x128xf32>
    %504 = arith.divf %502, %503 : vector<16x128xf32>
    %505 = vector.extract_strided_slice %498 {offsets = [0, 128], sizes = [16, 128], strides = [1, 1]} : vector<16x512xf32> to vector<16x128xf32>
    %506 = arith.negf %505 : vector<16x128xf32>
    %507 = math.exp %506 : vector<16x128xf32>
    %cst_121 = arith.constant 1.000000e+00 : f32
    %508 = vector.broadcast %cst_121 : f32 to vector<16x128xf32>
    %509 = arith.addf %508, %507 : vector<16x128xf32>
    %510 = arith.divf %508, %509 : vector<16x128xf32>
    %511 = vector.extract_strided_slice %498 {offsets = [0, 256], sizes = [16, 128], strides = [1, 1]} : vector<16x512xf32> to vector<16x128xf32>
    %512 = math.tanh %511 : vector<16x128xf32>
    %513 = vector.extract_strided_slice %498 {offsets = [0, 384], sizes = [16, 128], strides = [1, 1]} : vector<16x512xf32> to vector<16x128xf32>
    %514 = arith.negf %513 : vector<16x128xf32>
    %515 = math.exp %514 : vector<16x128xf32>
    %cst_122 = arith.constant 1.000000e+00 : f32
    %516 = vector.broadcast %cst_122 : f32 to vector<16x128xf32>
    %517 = arith.addf %516, %515 : vector<16x128xf32>
    %518 = arith.divf %516, %517 : vector<16x128xf32>
    %519 = arith.mulf %510, %459 : vector<16x128xf32>
    %520 = arith.mulf %504, %512 : vector<16x128xf32>
    %521 = arith.addf %519, %520 : vector<16x128xf32>
    %522 = math.tanh %521 : vector<16x128xf32>
    %523 = arith.mulf %518, %522 : vector<16x128xf32>
    %524 = arith.addi %10, %c7_i32 : i32
    %c0_i32_123 = arith.constant 0 : i32
    %525 = arith.cmpi sgt, %524, %c0_i32_123 : i32
    %526 = arith.select %525, %523, %458 : vector<16x128xf32>
    %527 = arith.select %525, %521, %459 : vector<16x128xf32>
    %c16_i32_124 = arith.constant 16 : i32
    %528 = arith.muli %c7_i32, %c16_i32_124 : i32
    %529 = tpu.assume_multiple %528, 16 : i32
    %530 = arith.index_cast %529 : i32 to index
    %c0_125 = arith.constant 0 : index
    %531 = vector.load %arg7[%530, %c0_125] : memref<256x512xf32, #tpu.memory_space<vmem>>, vector<16x512xf32>
    %532 = vector.extract_strided_slice %494 {offsets = [0, 0], sizes = [16, 512], strides = [1, 1]} : vector<16x1024xf32> to vector<16x512xf32>
    %533 = arith.addf %531, %532 : vector<16x512xf32>
    %534 = vector.extract_strided_slice %533 {offsets = [0, 0], sizes = [16, 128], strides = [1, 1]} : vector<16x512xf32> to vector<16x128xf32>
    %535 = arith.negf %534 : vector<16x128xf32>
    %536 = math.exp %535 : vector<16x128xf32>
    %cst_126 = arith.constant 1.000000e+00 : f32
    %537 = vector.broadcast %cst_126 : f32 to vector<16x128xf32>
    %538 = arith.addf %537, %536 : vector<16x128xf32>
    %539 = arith.divf %537, %538 : vector<16x128xf32>
    %540 = vector.extract_strided_slice %533 {offsets = [0, 128], sizes = [16, 128], strides = [1, 1]} : vector<16x512xf32> to vector<16x128xf32>
    %541 = arith.negf %540 : vector<16x128xf32>
    %542 = math.exp %541 : vector<16x128xf32>
    %cst_127 = arith.constant 1.000000e+00 : f32
    %543 = vector.broadcast %cst_127 : f32 to vector<16x128xf32>
    %544 = arith.addf %543, %542 : vector<16x128xf32>
    %545 = arith.divf %543, %544 : vector<16x128xf32>
    %546 = vector.extract_strided_slice %533 {offsets = [0, 256], sizes = [16, 128], strides = [1, 1]} : vector<16x512xf32> to vector<16x128xf32>
    %547 = math.tanh %546 : vector<16x128xf32>
    %548 = vector.extract_strided_slice %533 {offsets = [0, 384], sizes = [16, 128], strides = [1, 1]} : vector<16x512xf32> to vector<16x128xf32>
    %549 = arith.negf %548 : vector<16x128xf32>
    %550 = math.exp %549 : vector<16x128xf32>
    %cst_128 = arith.constant 1.000000e+00 : f32
    %551 = vector.broadcast %cst_128 : f32 to vector<16x128xf32>
    %552 = arith.addf %551, %550 : vector<16x128xf32>
    %553 = arith.divf %551, %552 : vector<16x128xf32>
    %554 = arith.mulf %545, %488 : vector<16x128xf32>
    %555 = arith.mulf %539, %547 : vector<16x128xf32>
    %556 = arith.addf %554, %555 : vector<16x128xf32>
    %557 = math.tanh %556 : vector<16x128xf32>
    %558 = arith.mulf %553, %557 : vector<16x128xf32>
    %c8_i32 = arith.constant 8 : i32
    %559 = tpu.concatenate %558, %526 in 1 : vector<16x128xf32>, vector<16x128xf32> -> vector<16x256xf32>
    %560 = arith.truncf %559 : vector<16x256xf32> to vector<16x256xbf16>
    %c0_129 = arith.constant 0 : index
    %c0_130 = arith.constant 0 : index
    %561 = vector.load %arg4[%c0_129, %c0_130] : memref<256x1024xbf16, #tpu.memory_space<vmem>>, vector<256x1024xbf16>
    %cst_131 = arith.constant dense<0.000000e+00> : vector<16x1024xf32>
    %562 = tpu.matmul %560, %561, %cst_131 {dimension_numbers = #tpu.dot_dimension_numbers<[1], [0], [0], [1], [0, 0, 1, 1], [], []>} : vector<16x256xbf16>, vector<256x1024xbf16>, vector<16x1024xf32> -> vector<16x1024xf32>
    %563 = vector.extract_strided_slice %562 {offsets = [0, 512], sizes = [16, 512], strides = [1, 1]} : vector<16x1024xf32> to vector<16x512xf32>
    %c0_132 = arith.constant 0 : index
    %c0_133 = arith.constant 0 : index
    %564 = vector.load %arg5[%c0_132, %c0_133] : memref<1x512xf32, #tpu.memory_space<vmem>>, vector<1x512xf32>
    %565 = vector.broadcast %564 : vector<1x512xf32> to vector<16x512xf32>
    %566 = arith.addf %563, %565 : vector<16x512xf32>
    %567 = vector.extract_strided_slice %566 {offsets = [0, 0], sizes = [16, 128], strides = [1, 1]} : vector<16x512xf32> to vector<16x128xf32>
    %568 = arith.negf %567 : vector<16x128xf32>
    %569 = math.exp %568 : vector<16x128xf32>
    %cst_134 = arith.constant 1.000000e+00 : f32
    %570 = vector.broadcast %cst_134 : f32 to vector<16x128xf32>
    %571 = arith.addf %570, %569 : vector<16x128xf32>
    %572 = arith.divf %570, %571 : vector<16x128xf32>
    %573 = vector.extract_strided_slice %566 {offsets = [0, 128], sizes = [16, 128], strides = [1, 1]} : vector<16x512xf32> to vector<16x128xf32>
    %574 = arith.negf %573 : vector<16x128xf32>
    %575 = math.exp %574 : vector<16x128xf32>
    %cst_135 = arith.constant 1.000000e+00 : f32
    %576 = vector.broadcast %cst_135 : f32 to vector<16x128xf32>
    %577 = arith.addf %576, %575 : vector<16x128xf32>
    %578 = arith.divf %576, %577 : vector<16x128xf32>
    %579 = vector.extract_strided_slice %566 {offsets = [0, 256], sizes = [16, 128], strides = [1, 1]} : vector<16x512xf32> to vector<16x128xf32>
    %580 = math.tanh %579 : vector<16x128xf32>
    %581 = vector.extract_strided_slice %566 {offsets = [0, 384], sizes = [16, 128], strides = [1, 1]} : vector<16x512xf32> to vector<16x128xf32>
    %582 = arith.negf %581 : vector<16x128xf32>
    %583 = math.exp %582 : vector<16x128xf32>
    %cst_136 = arith.constant 1.000000e+00 : f32
    %584 = vector.broadcast %cst_136 : f32 to vector<16x128xf32>
    %585 = arith.addf %584, %583 : vector<16x128xf32>
    %586 = arith.divf %584, %585 : vector<16x128xf32>
    %587 = arith.mulf %578, %527 : vector<16x128xf32>
    %588 = arith.mulf %572, %580 : vector<16x128xf32>
    %589 = arith.addf %587, %588 : vector<16x128xf32>
    %590 = math.tanh %589 : vector<16x128xf32>
    %591 = arith.mulf %586, %590 : vector<16x128xf32>
    %592 = arith.addi %10, %c8_i32 : i32
    %c0_i32_137 = arith.constant 0 : i32
    %593 = arith.cmpi sgt, %592, %c0_i32_137 : i32
    %594 = arith.select %593, %591, %526 : vector<16x128xf32>
    %595 = arith.select %593, %589, %527 : vector<16x128xf32>
    %c16_i32_138 = arith.constant 16 : i32
    %596 = arith.muli %c8_i32, %c16_i32_138 : i32
    %597 = tpu.assume_multiple %596, 16 : i32
    %598 = arith.index_cast %597 : i32 to index
    %c0_139 = arith.constant 0 : index
    %599 = vector.load %arg7[%598, %c0_139] : memref<256x512xf32, #tpu.memory_space<vmem>>, vector<16x512xf32>
    %600 = vector.extract_strided_slice %562 {offsets = [0, 0], sizes = [16, 512], strides = [1, 1]} : vector<16x1024xf32> to vector<16x512xf32>
    %601 = arith.addf %599, %600 : vector<16x512xf32>
    %602 = vector.extract_strided_slice %601 {offsets = [0, 0], sizes = [16, 128], strides = [1, 1]} : vector<16x512xf32> to vector<16x128xf32>
    %603 = arith.negf %602 : vector<16x128xf32>
    %604 = math.exp %603 : vector<16x128xf32>
    %cst_140 = arith.constant 1.000000e+00 : f32
    %605 = vector.broadcast %cst_140 : f32 to vector<16x128xf32>
    %606 = arith.addf %605, %604 : vector<16x128xf32>
    %607 = arith.divf %605, %606 : vector<16x128xf32>
    %608 = vector.extract_strided_slice %601 {offsets = [0, 128], sizes = [16, 128], strides = [1, 1]} : vector<16x512xf32> to vector<16x128xf32>
    %609 = arith.negf %608 : vector<16x128xf32>
    %610 = math.exp %609 : vector<16x128xf32>
    %cst_141 = arith.constant 1.000000e+00 : f32
    %611 = vector.broadcast %cst_141 : f32 to vector<16x128xf32>
    %612 = arith.addf %611, %610 : vector<16x128xf32>
    %613 = arith.divf %611, %612 : vector<16x128xf32>
    %614 = vector.extract_strided_slice %601 {offsets = [0, 256], sizes = [16, 128], strides = [1, 1]} : vector<16x512xf32> to vector<16x128xf32>
    %615 = math.tanh %614 : vector<16x128xf32>
    %616 = vector.extract_strided_slice %601 {offsets = [0, 384], sizes = [16, 128], strides = [1, 1]} : vector<16x512xf32> to vector<16x128xf32>
    %617 = arith.negf %616 : vector<16x128xf32>
    %618 = math.exp %617 : vector<16x128xf32>
    %cst_142 = arith.constant 1.000000e+00 : f32
    %619 = vector.broadcast %cst_142 : f32 to vector<16x128xf32>
    %620 = arith.addf %619, %618 : vector<16x128xf32>
    %621 = arith.divf %619, %620 : vector<16x128xf32>
    %622 = arith.mulf %613, %556 : vector<16x128xf32>
    %623 = arith.mulf %607, %615 : vector<16x128xf32>
    %624 = arith.addf %622, %623 : vector<16x128xf32>
    %625 = math.tanh %624 : vector<16x128xf32>
    %626 = arith.mulf %621, %625 : vector<16x128xf32>
    %c9_i32 = arith.constant 9 : i32
    %627 = tpu.concatenate %626, %594 in 1 : vector<16x128xf32>, vector<16x128xf32> -> vector<16x256xf32>
    %628 = arith.truncf %627 : vector<16x256xf32> to vector<16x256xbf16>
    %c0_143 = arith.constant 0 : index
    %c0_144 = arith.constant 0 : index
    %629 = vector.load %arg4[%c0_143, %c0_144] : memref<256x1024xbf16, #tpu.memory_space<vmem>>, vector<256x1024xbf16>
    %cst_145 = arith.constant dense<0.000000e+00> : vector<16x1024xf32>
    %630 = tpu.matmul %628, %629, %cst_145 {dimension_numbers = #tpu.dot_dimension_numbers<[1], [0], [0], [1], [0, 0, 1, 1], [], []>} : vector<16x256xbf16>, vector<256x1024xbf16>, vector<16x1024xf32> -> vector<16x1024xf32>
    %631 = vector.extract_strided_slice %630 {offsets = [0, 512], sizes = [16, 512], strides = [1, 1]} : vector<16x1024xf32> to vector<16x512xf32>
    %c0_146 = arith.constant 0 : index
    %c0_147 = arith.constant 0 : index
    %632 = vector.load %arg5[%c0_146, %c0_147] : memref<1x512xf32, #tpu.memory_space<vmem>>, vector<1x512xf32>
    %633 = vector.broadcast %632 : vector<1x512xf32> to vector<16x512xf32>
    %634 = arith.addf %631, %633 : vector<16x512xf32>
    %635 = vector.extract_strided_slice %634 {offsets = [0, 0], sizes = [16, 128], strides = [1, 1]} : vector<16x512xf32> to vector<16x128xf32>
    %636 = arith.negf %635 : vector<16x128xf32>
    %637 = math.exp %636 : vector<16x128xf32>
    %cst_148 = arith.constant 1.000000e+00 : f32
    %638 = vector.broadcast %cst_148 : f32 to vector<16x128xf32>
    %639 = arith.addf %638, %637 : vector<16x128xf32>
    %640 = arith.divf %638, %639 : vector<16x128xf32>
    %641 = vector.extract_strided_slice %634 {offsets = [0, 128], sizes = [16, 128], strides = [1, 1]} : vector<16x512xf32> to vector<16x128xf32>
    %642 = arith.negf %641 : vector<16x128xf32>
    %643 = math.exp %642 : vector<16x128xf32>
    %cst_149 = arith.constant 1.000000e+00 : f32
    %644 = vector.broadcast %cst_149 : f32 to vector<16x128xf32>
    %645 = arith.addf %644, %643 : vector<16x128xf32>
    %646 = arith.divf %644, %645 : vector<16x128xf32>
    %647 = vector.extract_strided_slice %634 {offsets = [0, 256], sizes = [16, 128], strides = [1, 1]} : vector<16x512xf32> to vector<16x128xf32>
    %648 = math.tanh %647 : vector<16x128xf32>
    %649 = vector.extract_strided_slice %634 {offsets = [0, 384], sizes = [16, 128], strides = [1, 1]} : vector<16x512xf32> to vector<16x128xf32>
    %650 = arith.negf %649 : vector<16x128xf32>
    %651 = math.exp %650 : vector<16x128xf32>
    %cst_150 = arith.constant 1.000000e+00 : f32
    %652 = vector.broadcast %cst_150 : f32 to vector<16x128xf32>
    %653 = arith.addf %652, %651 : vector<16x128xf32>
    %654 = arith.divf %652, %653 : vector<16x128xf32>
    %655 = arith.mulf %646, %595 : vector<16x128xf32>
    %656 = arith.mulf %640, %648 : vector<16x128xf32>
    %657 = arith.addf %655, %656 : vector<16x128xf32>
    %658 = math.tanh %657 : vector<16x128xf32>
    %659 = arith.mulf %654, %658 : vector<16x128xf32>
    %660 = arith.addi %10, %c9_i32 : i32
    %c0_i32_151 = arith.constant 0 : i32
    %661 = arith.cmpi sgt, %660, %c0_i32_151 : i32
    %662 = arith.select %661, %659, %594 : vector<16x128xf32>
    %663 = arith.select %661, %657, %595 : vector<16x128xf32>
    %c16_i32_152 = arith.constant 16 : i32
    %664 = arith.muli %c9_i32, %c16_i32_152 : i32
    %665 = tpu.assume_multiple %664, 16 : i32
    %666 = arith.index_cast %665 : i32 to index
    %c0_153 = arith.constant 0 : index
    %667 = vector.load %arg7[%666, %c0_153] : memref<256x512xf32, #tpu.memory_space<vmem>>, vector<16x512xf32>
    %668 = vector.extract_strided_slice %630 {offsets = [0, 0], sizes = [16, 512], strides = [1, 1]} : vector<16x1024xf32> to vector<16x512xf32>
    %669 = arith.addf %667, %668 : vector<16x512xf32>
    %670 = vector.extract_strided_slice %669 {offsets = [0, 0], sizes = [16, 128], strides = [1, 1]} : vector<16x512xf32> to vector<16x128xf32>
    %671 = arith.negf %670 : vector<16x128xf32>
    %672 = math.exp %671 : vector<16x128xf32>
    %cst_154 = arith.constant 1.000000e+00 : f32
    %673 = vector.broadcast %cst_154 : f32 to vector<16x128xf32>
    %674 = arith.addf %673, %672 : vector<16x128xf32>
    %675 = arith.divf %673, %674 : vector<16x128xf32>
    %676 = vector.extract_strided_slice %669 {offsets = [0, 128], sizes = [16, 128], strides = [1, 1]} : vector<16x512xf32> to vector<16x128xf32>
    %677 = arith.negf %676 : vector<16x128xf32>
    %678 = math.exp %677 : vector<16x128xf32>
    %cst_155 = arith.constant 1.000000e+00 : f32
    %679 = vector.broadcast %cst_155 : f32 to vector<16x128xf32>
    %680 = arith.addf %679, %678 : vector<16x128xf32>
    %681 = arith.divf %679, %680 : vector<16x128xf32>
    %682 = vector.extract_strided_slice %669 {offsets = [0, 256], sizes = [16, 128], strides = [1, 1]} : vector<16x512xf32> to vector<16x128xf32>
    %683 = math.tanh %682 : vector<16x128xf32>
    %684 = vector.extract_strided_slice %669 {offsets = [0, 384], sizes = [16, 128], strides = [1, 1]} : vector<16x512xf32> to vector<16x128xf32>
    %685 = arith.negf %684 : vector<16x128xf32>
    %686 = math.exp %685 : vector<16x128xf32>
    %cst_156 = arith.constant 1.000000e+00 : f32
    %687 = vector.broadcast %cst_156 : f32 to vector<16x128xf32>
    %688 = arith.addf %687, %686 : vector<16x128xf32>
    %689 = arith.divf %687, %688 : vector<16x128xf32>
    %690 = arith.mulf %681, %624 : vector<16x128xf32>
    %691 = arith.mulf %675, %683 : vector<16x128xf32>
    %692 = arith.addf %690, %691 : vector<16x128xf32>
    %693 = math.tanh %692 : vector<16x128xf32>
    %694 = arith.mulf %689, %693 : vector<16x128xf32>
    %c10_i32 = arith.constant 10 : i32
    %695 = tpu.concatenate %694, %662 in 1 : vector<16x128xf32>, vector<16x128xf32> -> vector<16x256xf32>
    %696 = arith.truncf %695 : vector<16x256xf32> to vector<16x256xbf16>
    %c0_157 = arith.constant 0 : index
    %c0_158 = arith.constant 0 : index
    %697 = vector.load %arg4[%c0_157, %c0_158] : memref<256x1024xbf16, #tpu.memory_space<vmem>>, vector<256x1024xbf16>
    %cst_159 = arith.constant dense<0.000000e+00> : vector<16x1024xf32>
    %698 = tpu.matmul %696, %697, %cst_159 {dimension_numbers = #tpu.dot_dimension_numbers<[1], [0], [0], [1], [0, 0, 1, 1], [], []>} : vector<16x256xbf16>, vector<256x1024xbf16>, vector<16x1024xf32> -> vector<16x1024xf32>
    %699 = vector.extract_strided_slice %698 {offsets = [0, 512], sizes = [16, 512], strides = [1, 1]} : vector<16x1024xf32> to vector<16x512xf32>
    %c0_160 = arith.constant 0 : index
    %c0_161 = arith.constant 0 : index
    %700 = vector.load %arg5[%c0_160, %c0_161] : memref<1x512xf32, #tpu.memory_space<vmem>>, vector<1x512xf32>
    %701 = vector.broadcast %700 : vector<1x512xf32> to vector<16x512xf32>
    %702 = arith.addf %699, %701 : vector<16x512xf32>
    %703 = vector.extract_strided_slice %702 {offsets = [0, 0], sizes = [16, 128], strides = [1, 1]} : vector<16x512xf32> to vector<16x128xf32>
    %704 = arith.negf %703 : vector<16x128xf32>
    %705 = math.exp %704 : vector<16x128xf32>
    %cst_162 = arith.constant 1.000000e+00 : f32
    %706 = vector.broadcast %cst_162 : f32 to vector<16x128xf32>
    %707 = arith.addf %706, %705 : vector<16x128xf32>
    %708 = arith.divf %706, %707 : vector<16x128xf32>
    %709 = vector.extract_strided_slice %702 {offsets = [0, 128], sizes = [16, 128], strides = [1, 1]} : vector<16x512xf32> to vector<16x128xf32>
    %710 = arith.negf %709 : vector<16x128xf32>
    %711 = math.exp %710 : vector<16x128xf32>
    %cst_163 = arith.constant 1.000000e+00 : f32
    %712 = vector.broadcast %cst_163 : f32 to vector<16x128xf32>
    %713 = arith.addf %712, %711 : vector<16x128xf32>
    %714 = arith.divf %712, %713 : vector<16x128xf32>
    %715 = vector.extract_strided_slice %702 {offsets = [0, 256], sizes = [16, 128], strides = [1, 1]} : vector<16x512xf32> to vector<16x128xf32>
    %716 = math.tanh %715 : vector<16x128xf32>
    %717 = vector.extract_strided_slice %702 {offsets = [0, 384], sizes = [16, 128], strides = [1, 1]} : vector<16x512xf32> to vector<16x128xf32>
    %718 = arith.negf %717 : vector<16x128xf32>
    %719 = math.exp %718 : vector<16x128xf32>
    %cst_164 = arith.constant 1.000000e+00 : f32
    %720 = vector.broadcast %cst_164 : f32 to vector<16x128xf32>
    %721 = arith.addf %720, %719 : vector<16x128xf32>
    %722 = arith.divf %720, %721 : vector<16x128xf32>
    %723 = arith.mulf %714, %663 : vector<16x128xf32>
    %724 = arith.mulf %708, %716 : vector<16x128xf32>
    %725 = arith.addf %723, %724 : vector<16x128xf32>
    %726 = math.tanh %725 : vector<16x128xf32>
    %727 = arith.mulf %722, %726 : vector<16x128xf32>
    %728 = arith.addi %10, %c10_i32 : i32
    %c0_i32_165 = arith.constant 0 : i32
    %729 = arith.cmpi sgt, %728, %c0_i32_165 : i32
    %730 = arith.select %729, %727, %662 : vector<16x128xf32>
    %731 = arith.select %729, %725, %663 : vector<16x128xf32>
    %c16_i32_166 = arith.constant 16 : i32
    %732 = arith.muli %c10_i32, %c16_i32_166 : i32
    %733 = tpu.assume_multiple %732, 16 : i32
    %734 = arith.index_cast %733 : i32 to index
    %c0_167 = arith.constant 0 : index
    %735 = vector.load %arg7[%734, %c0_167] : memref<256x512xf32, #tpu.memory_space<vmem>>, vector<16x512xf32>
    %736 = vector.extract_strided_slice %698 {offsets = [0, 0], sizes = [16, 512], strides = [1, 1]} : vector<16x1024xf32> to vector<16x512xf32>
    %737 = arith.addf %735, %736 : vector<16x512xf32>
    %738 = vector.extract_strided_slice %737 {offsets = [0, 0], sizes = [16, 128], strides = [1, 1]} : vector<16x512xf32> to vector<16x128xf32>
    %739 = arith.negf %738 : vector<16x128xf32>
    %740 = math.exp %739 : vector<16x128xf32>
    %cst_168 = arith.constant 1.000000e+00 : f32
    %741 = vector.broadcast %cst_168 : f32 to vector<16x128xf32>
    %742 = arith.addf %741, %740 : vector<16x128xf32>
    %743 = arith.divf %741, %742 : vector<16x128xf32>
    %744 = vector.extract_strided_slice %737 {offsets = [0, 128], sizes = [16, 128], strides = [1, 1]} : vector<16x512xf32> to vector<16x128xf32>
    %745 = arith.negf %744 : vector<16x128xf32>
    %746 = math.exp %745 : vector<16x128xf32>
    %cst_169 = arith.constant 1.000000e+00 : f32
    %747 = vector.broadcast %cst_169 : f32 to vector<16x128xf32>
    %748 = arith.addf %747, %746 : vector<16x128xf32>
    %749 = arith.divf %747, %748 : vector<16x128xf32>
    %750 = vector.extract_strided_slice %737 {offsets = [0, 256], sizes = [16, 128], strides = [1, 1]} : vector<16x512xf32> to vector<16x128xf32>
    %751 = math.tanh %750 : vector<16x128xf32>
    %752 = vector.extract_strided_slice %737 {offsets = [0, 384], sizes = [16, 128], strides = [1, 1]} : vector<16x512xf32> to vector<16x128xf32>
    %753 = arith.negf %752 : vector<16x128xf32>
    %754 = math.exp %753 : vector<16x128xf32>
    %cst_170 = arith.constant 1.000000e+00 : f32
    %755 = vector.broadcast %cst_170 : f32 to vector<16x128xf32>
    %756 = arith.addf %755, %754 : vector<16x128xf32>
    %757 = arith.divf %755, %756 : vector<16x128xf32>
    %758 = arith.mulf %749, %692 : vector<16x128xf32>
    %759 = arith.mulf %743, %751 : vector<16x128xf32>
    %760 = arith.addf %758, %759 : vector<16x128xf32>
    %761 = math.tanh %760 : vector<16x128xf32>
    %762 = arith.mulf %757, %761 : vector<16x128xf32>
    %c11_i32 = arith.constant 11 : i32
    %763 = tpu.concatenate %762, %730 in 1 : vector<16x128xf32>, vector<16x128xf32> -> vector<16x256xf32>
    %764 = arith.truncf %763 : vector<16x256xf32> to vector<16x256xbf16>
    %c0_171 = arith.constant 0 : index
    %c0_172 = arith.constant 0 : index
    %765 = vector.load %arg4[%c0_171, %c0_172] : memref<256x1024xbf16, #tpu.memory_space<vmem>>, vector<256x1024xbf16>
    %cst_173 = arith.constant dense<0.000000e+00> : vector<16x1024xf32>
    %766 = tpu.matmul %764, %765, %cst_173 {dimension_numbers = #tpu.dot_dimension_numbers<[1], [0], [0], [1], [0, 0, 1, 1], [], []>} : vector<16x256xbf16>, vector<256x1024xbf16>, vector<16x1024xf32> -> vector<16x1024xf32>
    %767 = vector.extract_strided_slice %766 {offsets = [0, 512], sizes = [16, 512], strides = [1, 1]} : vector<16x1024xf32> to vector<16x512xf32>
    %c0_174 = arith.constant 0 : index
    %c0_175 = arith.constant 0 : index
    %768 = vector.load %arg5[%c0_174, %c0_175] : memref<1x512xf32, #tpu.memory_space<vmem>>, vector<1x512xf32>
    %769 = vector.broadcast %768 : vector<1x512xf32> to vector<16x512xf32>
    %770 = arith.addf %767, %769 : vector<16x512xf32>
    %771 = vector.extract_strided_slice %770 {offsets = [0, 0], sizes = [16, 128], strides = [1, 1]} : vector<16x512xf32> to vector<16x128xf32>
    %772 = arith.negf %771 : vector<16x128xf32>
    %773 = math.exp %772 : vector<16x128xf32>
    %cst_176 = arith.constant 1.000000e+00 : f32
    %774 = vector.broadcast %cst_176 : f32 to vector<16x128xf32>
    %775 = arith.addf %774, %773 : vector<16x128xf32>
    %776 = arith.divf %774, %775 : vector<16x128xf32>
    %777 = vector.extract_strided_slice %770 {offsets = [0, 128], sizes = [16, 128], strides = [1, 1]} : vector<16x512xf32> to vector<16x128xf32>
    %778 = arith.negf %777 : vector<16x128xf32>
    %779 = math.exp %778 : vector<16x128xf32>
    %cst_177 = arith.constant 1.000000e+00 : f32
    %780 = vector.broadcast %cst_177 : f32 to vector<16x128xf32>
    %781 = arith.addf %780, %779 : vector<16x128xf32>
    %782 = arith.divf %780, %781 : vector<16x128xf32>
    %783 = vector.extract_strided_slice %770 {offsets = [0, 256], sizes = [16, 128], strides = [1, 1]} : vector<16x512xf32> to vector<16x128xf32>
    %784 = math.tanh %783 : vector<16x128xf32>
    %785 = vector.extract_strided_slice %770 {offsets = [0, 384], sizes = [16, 128], strides = [1, 1]} : vector<16x512xf32> to vector<16x128xf32>
    %786 = arith.negf %785 : vector<16x128xf32>
    %787 = math.exp %786 : vector<16x128xf32>
    %cst_178 = arith.constant 1.000000e+00 : f32
    %788 = vector.broadcast %cst_178 : f32 to vector<16x128xf32>
    %789 = arith.addf %788, %787 : vector<16x128xf32>
    %790 = arith.divf %788, %789 : vector<16x128xf32>
    %791 = arith.mulf %782, %731 : vector<16x128xf32>
    %792 = arith.mulf %776, %784 : vector<16x128xf32>
    %793 = arith.addf %791, %792 : vector<16x128xf32>
    %794 = math.tanh %793 : vector<16x128xf32>
    %795 = arith.mulf %790, %794 : vector<16x128xf32>
    %796 = arith.addi %10, %c11_i32 : i32
    %c0_i32_179 = arith.constant 0 : i32
    %797 = arith.cmpi sgt, %796, %c0_i32_179 : i32
    %798 = arith.select %797, %795, %730 : vector<16x128xf32>
    %799 = arith.select %797, %793, %731 : vector<16x128xf32>
    %c16_i32_180 = arith.constant 16 : i32
    %800 = arith.muli %c11_i32, %c16_i32_180 : i32
    %801 = tpu.assume_multiple %800, 16 : i32
    %802 = arith.index_cast %801 : i32 to index
    %c0_181 = arith.constant 0 : index
    %803 = vector.load %arg7[%802, %c0_181] : memref<256x512xf32, #tpu.memory_space<vmem>>, vector<16x512xf32>
    %804 = vector.extract_strided_slice %766 {offsets = [0, 0], sizes = [16, 512], strides = [1, 1]} : vector<16x1024xf32> to vector<16x512xf32>
    %805 = arith.addf %803, %804 : vector<16x512xf32>
    %806 = vector.extract_strided_slice %805 {offsets = [0, 0], sizes = [16, 128], strides = [1, 1]} : vector<16x512xf32> to vector<16x128xf32>
    %807 = arith.negf %806 : vector<16x128xf32>
    %808 = math.exp %807 : vector<16x128xf32>
    %cst_182 = arith.constant 1.000000e+00 : f32
    %809 = vector.broadcast %cst_182 : f32 to vector<16x128xf32>
    %810 = arith.addf %809, %808 : vector<16x128xf32>
    %811 = arith.divf %809, %810 : vector<16x128xf32>
    %812 = vector.extract_strided_slice %805 {offsets = [0, 128], sizes = [16, 128], strides = [1, 1]} : vector<16x512xf32> to vector<16x128xf32>
    %813 = arith.negf %812 : vector<16x128xf32>
    %814 = math.exp %813 : vector<16x128xf32>
    %cst_183 = arith.constant 1.000000e+00 : f32
    %815 = vector.broadcast %cst_183 : f32 to vector<16x128xf32>
    %816 = arith.addf %815, %814 : vector<16x128xf32>
    %817 = arith.divf %815, %816 : vector<16x128xf32>
    %818 = vector.extract_strided_slice %805 {offsets = [0, 256], sizes = [16, 128], strides = [1, 1]} : vector<16x512xf32> to vector<16x128xf32>
    %819 = math.tanh %818 : vector<16x128xf32>
    %820 = vector.extract_strided_slice %805 {offsets = [0, 384], sizes = [16, 128], strides = [1, 1]} : vector<16x512xf32> to vector<16x128xf32>
    %821 = arith.negf %820 : vector<16x128xf32>
    %822 = math.exp %821 : vector<16x128xf32>
    %cst_184 = arith.constant 1.000000e+00 : f32
    %823 = vector.broadcast %cst_184 : f32 to vector<16x128xf32>
    %824 = arith.addf %823, %822 : vector<16x128xf32>
    %825 = arith.divf %823, %824 : vector<16x128xf32>
    %826 = arith.mulf %817, %760 : vector<16x128xf32>
    %827 = arith.mulf %811, %819 : vector<16x128xf32>
    %828 = arith.addf %826, %827 : vector<16x128xf32>
    %829 = math.tanh %828 : vector<16x128xf32>
    %830 = arith.mulf %825, %829 : vector<16x128xf32>
    %c12_i32 = arith.constant 12 : i32
    %831 = tpu.concatenate %830, %798 in 1 : vector<16x128xf32>, vector<16x128xf32> -> vector<16x256xf32>
    %832 = arith.truncf %831 : vector<16x256xf32> to vector<16x256xbf16>
    %c0_185 = arith.constant 0 : index
    %c0_186 = arith.constant 0 : index
    %833 = vector.load %arg4[%c0_185, %c0_186] : memref<256x1024xbf16, #tpu.memory_space<vmem>>, vector<256x1024xbf16>
    %cst_187 = arith.constant dense<0.000000e+00> : vector<16x1024xf32>
    %834 = tpu.matmul %832, %833, %cst_187 {dimension_numbers = #tpu.dot_dimension_numbers<[1], [0], [0], [1], [0, 0, 1, 1], [], []>} : vector<16x256xbf16>, vector<256x1024xbf16>, vector<16x1024xf32> -> vector<16x1024xf32>
    %835 = vector.extract_strided_slice %834 {offsets = [0, 512], sizes = [16, 512], strides = [1, 1]} : vector<16x1024xf32> to vector<16x512xf32>
    %c0_188 = arith.constant 0 : index
    %c0_189 = arith.constant 0 : index
    %836 = vector.load %arg5[%c0_188, %c0_189] : memref<1x512xf32, #tpu.memory_space<vmem>>, vector<1x512xf32>
    %837 = vector.broadcast %836 : vector<1x512xf32> to vector<16x512xf32>
    %838 = arith.addf %835, %837 : vector<16x512xf32>
    %839 = vector.extract_strided_slice %838 {offsets = [0, 0], sizes = [16, 128], strides = [1, 1]} : vector<16x512xf32> to vector<16x128xf32>
    %840 = arith.negf %839 : vector<16x128xf32>
    %841 = math.exp %840 : vector<16x128xf32>
    %cst_190 = arith.constant 1.000000e+00 : f32
    %842 = vector.broadcast %cst_190 : f32 to vector<16x128xf32>
    %843 = arith.addf %842, %841 : vector<16x128xf32>
    %844 = arith.divf %842, %843 : vector<16x128xf32>
    %845 = vector.extract_strided_slice %838 {offsets = [0, 128], sizes = [16, 128], strides = [1, 1]} : vector<16x512xf32> to vector<16x128xf32>
    %846 = arith.negf %845 : vector<16x128xf32>
    %847 = math.exp %846 : vector<16x128xf32>
    %cst_191 = arith.constant 1.000000e+00 : f32
    %848 = vector.broadcast %cst_191 : f32 to vector<16x128xf32>
    %849 = arith.addf %848, %847 : vector<16x128xf32>
    %850 = arith.divf %848, %849 : vector<16x128xf32>
    %851 = vector.extract_strided_slice %838 {offsets = [0, 256], sizes = [16, 128], strides = [1, 1]} : vector<16x512xf32> to vector<16x128xf32>
    %852 = math.tanh %851 : vector<16x128xf32>
    %853 = vector.extract_strided_slice %838 {offsets = [0, 384], sizes = [16, 128], strides = [1, 1]} : vector<16x512xf32> to vector<16x128xf32>
    %854 = arith.negf %853 : vector<16x128xf32>
    %855 = math.exp %854 : vector<16x128xf32>
    %cst_192 = arith.constant 1.000000e+00 : f32
    %856 = vector.broadcast %cst_192 : f32 to vector<16x128xf32>
    %857 = arith.addf %856, %855 : vector<16x128xf32>
    %858 = arith.divf %856, %857 : vector<16x128xf32>
    %859 = arith.mulf %850, %799 : vector<16x128xf32>
    %860 = arith.mulf %844, %852 : vector<16x128xf32>
    %861 = arith.addf %859, %860 : vector<16x128xf32>
    %862 = math.tanh %861 : vector<16x128xf32>
    %863 = arith.mulf %858, %862 : vector<16x128xf32>
    %864 = arith.addi %10, %c12_i32 : i32
    %c0_i32_193 = arith.constant 0 : i32
    %865 = arith.cmpi sgt, %864, %c0_i32_193 : i32
    %866 = arith.select %865, %863, %798 : vector<16x128xf32>
    %867 = arith.select %865, %861, %799 : vector<16x128xf32>
    %c16_i32_194 = arith.constant 16 : i32
    %868 = arith.muli %c12_i32, %c16_i32_194 : i32
    %869 = tpu.assume_multiple %868, 16 : i32
    %870 = arith.index_cast %869 : i32 to index
    %c0_195 = arith.constant 0 : index
    %871 = vector.load %arg7[%870, %c0_195] : memref<256x512xf32, #tpu.memory_space<vmem>>, vector<16x512xf32>
    %872 = vector.extract_strided_slice %834 {offsets = [0, 0], sizes = [16, 512], strides = [1, 1]} : vector<16x1024xf32> to vector<16x512xf32>
    %873 = arith.addf %871, %872 : vector<16x512xf32>
    %874 = vector.extract_strided_slice %873 {offsets = [0, 0], sizes = [16, 128], strides = [1, 1]} : vector<16x512xf32> to vector<16x128xf32>
    %875 = arith.negf %874 : vector<16x128xf32>
    %876 = math.exp %875 : vector<16x128xf32>
    %cst_196 = arith.constant 1.000000e+00 : f32
    %877 = vector.broadcast %cst_196 : f32 to vector<16x128xf32>
    %878 = arith.addf %877, %876 : vector<16x128xf32>
    %879 = arith.divf %877, %878 : vector<16x128xf32>
    %880 = vector.extract_strided_slice %873 {offsets = [0, 128], sizes = [16, 128], strides = [1, 1]} : vector<16x512xf32> to vector<16x128xf32>
    %881 = arith.negf %880 : vector<16x128xf32>
    %882 = math.exp %881 : vector<16x128xf32>
    %cst_197 = arith.constant 1.000000e+00 : f32
    %883 = vector.broadcast %cst_197 : f32 to vector<16x128xf32>
    %884 = arith.addf %883, %882 : vector<16x128xf32>
    %885 = arith.divf %883, %884 : vector<16x128xf32>
    %886 = vector.extract_strided_slice %873 {offsets = [0, 256], sizes = [16, 128], strides = [1, 1]} : vector<16x512xf32> to vector<16x128xf32>
    %887 = math.tanh %886 : vector<16x128xf32>
    %888 = vector.extract_strided_slice %873 {offsets = [0, 384], sizes = [16, 128], strides = [1, 1]} : vector<16x512xf32> to vector<16x128xf32>
    %889 = arith.negf %888 : vector<16x128xf32>
    %890 = math.exp %889 : vector<16x128xf32>
    %cst_198 = arith.constant 1.000000e+00 : f32
    %891 = vector.broadcast %cst_198 : f32 to vector<16x128xf32>
    %892 = arith.addf %891, %890 : vector<16x128xf32>
    %893 = arith.divf %891, %892 : vector<16x128xf32>
    %894 = arith.mulf %885, %828 : vector<16x128xf32>
    %895 = arith.mulf %879, %887 : vector<16x128xf32>
    %896 = arith.addf %894, %895 : vector<16x128xf32>
    %897 = math.tanh %896 : vector<16x128xf32>
    %898 = arith.mulf %893, %897 : vector<16x128xf32>
    %c13_i32 = arith.constant 13 : i32
    %899 = tpu.concatenate %898, %866 in 1 : vector<16x128xf32>, vector<16x128xf32> -> vector<16x256xf32>
    %900 = arith.truncf %899 : vector<16x256xf32> to vector<16x256xbf16>
    %c0_199 = arith.constant 0 : index
    %c0_200 = arith.constant 0 : index
    %901 = vector.load %arg4[%c0_199, %c0_200] : memref<256x1024xbf16, #tpu.memory_space<vmem>>, vector<256x1024xbf16>
    %cst_201 = arith.constant dense<0.000000e+00> : vector<16x1024xf32>
    %902 = tpu.matmul %900, %901, %cst_201 {dimension_numbers = #tpu.dot_dimension_numbers<[1], [0], [0], [1], [0, 0, 1, 1], [], []>} : vector<16x256xbf16>, vector<256x1024xbf16>, vector<16x1024xf32> -> vector<16x1024xf32>
    %903 = vector.extract_strided_slice %902 {offsets = [0, 512], sizes = [16, 512], strides = [1, 1]} : vector<16x1024xf32> to vector<16x512xf32>
    %c0_202 = arith.constant 0 : index
    %c0_203 = arith.constant 0 : index
    %904 = vector.load %arg5[%c0_202, %c0_203] : memref<1x512xf32, #tpu.memory_space<vmem>>, vector<1x512xf32>
    %905 = vector.broadcast %904 : vector<1x512xf32> to vector<16x512xf32>
    %906 = arith.addf %903, %905 : vector<16x512xf32>
    %907 = vector.extract_strided_slice %906 {offsets = [0, 0], sizes = [16, 128], strides = [1, 1]} : vector<16x512xf32> to vector<16x128xf32>
    %908 = arith.negf %907 : vector<16x128xf32>
    %909 = math.exp %908 : vector<16x128xf32>
    %cst_204 = arith.constant 1.000000e+00 : f32
    %910 = vector.broadcast %cst_204 : f32 to vector<16x128xf32>
    %911 = arith.addf %910, %909 : vector<16x128xf32>
    %912 = arith.divf %910, %911 : vector<16x128xf32>
    %913 = vector.extract_strided_slice %906 {offsets = [0, 128], sizes = [16, 128], strides = [1, 1]} : vector<16x512xf32> to vector<16x128xf32>
    %914 = arith.negf %913 : vector<16x128xf32>
    %915 = math.exp %914 : vector<16x128xf32>
    %cst_205 = arith.constant 1.000000e+00 : f32
    %916 = vector.broadcast %cst_205 : f32 to vector<16x128xf32>
    %917 = arith.addf %916, %915 : vector<16x128xf32>
    %918 = arith.divf %916, %917 : vector<16x128xf32>
    %919 = vector.extract_strided_slice %906 {offsets = [0, 256], sizes = [16, 128], strides = [1, 1]} : vector<16x512xf32> to vector<16x128xf32>
    %920 = math.tanh %919 : vector<16x128xf32>
    %921 = vector.extract_strided_slice %906 {offsets = [0, 384], sizes = [16, 128], strides = [1, 1]} : vector<16x512xf32> to vector<16x128xf32>
    %922 = arith.negf %921 : vector<16x128xf32>
    %923 = math.exp %922 : vector<16x128xf32>
    %cst_206 = arith.constant 1.000000e+00 : f32
    %924 = vector.broadcast %cst_206 : f32 to vector<16x128xf32>
    %925 = arith.addf %924, %923 : vector<16x128xf32>
    %926 = arith.divf %924, %925 : vector<16x128xf32>
    %927 = arith.mulf %918, %867 : vector<16x128xf32>
    %928 = arith.mulf %912, %920 : vector<16x128xf32>
    %929 = arith.addf %927, %928 : vector<16x128xf32>
    %930 = math.tanh %929 : vector<16x128xf32>
    %931 = arith.mulf %926, %930 : vector<16x128xf32>
    %932 = arith.addi %10, %c13_i32 : i32
    %c0_i32_207 = arith.constant 0 : i32
    %933 = arith.cmpi sgt, %932, %c0_i32_207 : i32
    %934 = arith.select %933, %931, %866 : vector<16x128xf32>
    %935 = arith.select %933, %929, %867 : vector<16x128xf32>
    %c16_i32_208 = arith.constant 16 : i32
    %936 = arith.muli %c13_i32, %c16_i32_208 : i32
    %937 = tpu.assume_multiple %936, 16 : i32
    %938 = arith.index_cast %937 : i32 to index
    %c0_209 = arith.constant 0 : index
    %939 = vector.load %arg7[%938, %c0_209] : memref<256x512xf32, #tpu.memory_space<vmem>>, vector<16x512xf32>
    %940 = vector.extract_strided_slice %902 {offsets = [0, 0], sizes = [16, 512], strides = [1, 1]} : vector<16x1024xf32> to vector<16x512xf32>
    %941 = arith.addf %939, %940 : vector<16x512xf32>
    %942 = vector.extract_strided_slice %941 {offsets = [0, 0], sizes = [16, 128], strides = [1, 1]} : vector<16x512xf32> to vector<16x128xf32>
    %943 = arith.negf %942 : vector<16x128xf32>
    %944 = math.exp %943 : vector<16x128xf32>
    %cst_210 = arith.constant 1.000000e+00 : f32
    %945 = vector.broadcast %cst_210 : f32 to vector<16x128xf32>
    %946 = arith.addf %945, %944 : vector<16x128xf32>
    %947 = arith.divf %945, %946 : vector<16x128xf32>
    %948 = vector.extract_strided_slice %941 {offsets = [0, 128], sizes = [16, 128], strides = [1, 1]} : vector<16x512xf32> to vector<16x128xf32>
    %949 = arith.negf %948 : vector<16x128xf32>
    %950 = math.exp %949 : vector<16x128xf32>
    %cst_211 = arith.constant 1.000000e+00 : f32
    %951 = vector.broadcast %cst_211 : f32 to vector<16x128xf32>
    %952 = arith.addf %951, %950 : vector<16x128xf32>
    %953 = arith.divf %951, %952 : vector<16x128xf32>
    %954 = vector.extract_strided_slice %941 {offsets = [0, 256], sizes = [16, 128], strides = [1, 1]} : vector<16x512xf32> to vector<16x128xf32>
    %955 = math.tanh %954 : vector<16x128xf32>
    %956 = vector.extract_strided_slice %941 {offsets = [0, 384], sizes = [16, 128], strides = [1, 1]} : vector<16x512xf32> to vector<16x128xf32>
    %957 = arith.negf %956 : vector<16x128xf32>
    %958 = math.exp %957 : vector<16x128xf32>
    %cst_212 = arith.constant 1.000000e+00 : f32
    %959 = vector.broadcast %cst_212 : f32 to vector<16x128xf32>
    %960 = arith.addf %959, %958 : vector<16x128xf32>
    %961 = arith.divf %959, %960 : vector<16x128xf32>
    %962 = arith.mulf %953, %896 : vector<16x128xf32>
    %963 = arith.mulf %947, %955 : vector<16x128xf32>
    %964 = arith.addf %962, %963 : vector<16x128xf32>
    %965 = math.tanh %964 : vector<16x128xf32>
    %966 = arith.mulf %961, %965 : vector<16x128xf32>
    %c14_i32 = arith.constant 14 : i32
    %967 = tpu.concatenate %966, %934 in 1 : vector<16x128xf32>, vector<16x128xf32> -> vector<16x256xf32>
    %968 = arith.truncf %967 : vector<16x256xf32> to vector<16x256xbf16>
    %c0_213 = arith.constant 0 : index
    %c0_214 = arith.constant 0 : index
    %969 = vector.load %arg4[%c0_213, %c0_214] : memref<256x1024xbf16, #tpu.memory_space<vmem>>, vector<256x1024xbf16>
    %cst_215 = arith.constant dense<0.000000e+00> : vector<16x1024xf32>
    %970 = tpu.matmul %968, %969, %cst_215 {dimension_numbers = #tpu.dot_dimension_numbers<[1], [0], [0], [1], [0, 0, 1, 1], [], []>} : vector<16x256xbf16>, vector<256x1024xbf16>, vector<16x1024xf32> -> vector<16x1024xf32>
    %971 = vector.extract_strided_slice %970 {offsets = [0, 512], sizes = [16, 512], strides = [1, 1]} : vector<16x1024xf32> to vector<16x512xf32>
    %c0_216 = arith.constant 0 : index
    %c0_217 = arith.constant 0 : index
    %972 = vector.load %arg5[%c0_216, %c0_217] : memref<1x512xf32, #tpu.memory_space<vmem>>, vector<1x512xf32>
    %973 = vector.broadcast %972 : vector<1x512xf32> to vector<16x512xf32>
    %974 = arith.addf %971, %973 : vector<16x512xf32>
    %975 = vector.extract_strided_slice %974 {offsets = [0, 0], sizes = [16, 128], strides = [1, 1]} : vector<16x512xf32> to vector<16x128xf32>
    %976 = arith.negf %975 : vector<16x128xf32>
    %977 = math.exp %976 : vector<16x128xf32>
    %cst_218 = arith.constant 1.000000e+00 : f32
    %978 = vector.broadcast %cst_218 : f32 to vector<16x128xf32>
    %979 = arith.addf %978, %977 : vector<16x128xf32>
    %980 = arith.divf %978, %979 : vector<16x128xf32>
    %981 = vector.extract_strided_slice %974 {offsets = [0, 128], sizes = [16, 128], strides = [1, 1]} : vector<16x512xf32> to vector<16x128xf32>
    %982 = arith.negf %981 : vector<16x128xf32>
    %983 = math.exp %982 : vector<16x128xf32>
    %cst_219 = arith.constant 1.000000e+00 : f32
    %984 = vector.broadcast %cst_219 : f32 to vector<16x128xf32>
    %985 = arith.addf %984, %983 : vector<16x128xf32>
    %986 = arith.divf %984, %985 : vector<16x128xf32>
    %987 = vector.extract_strided_slice %974 {offsets = [0, 256], sizes = [16, 128], strides = [1, 1]} : vector<16x512xf32> to vector<16x128xf32>
    %988 = math.tanh %987 : vector<16x128xf32>
    %989 = vector.extract_strided_slice %974 {offsets = [0, 384], sizes = [16, 128], strides = [1, 1]} : vector<16x512xf32> to vector<16x128xf32>
    %990 = arith.negf %989 : vector<16x128xf32>
    %991 = math.exp %990 : vector<16x128xf32>
    %cst_220 = arith.constant 1.000000e+00 : f32
    %992 = vector.broadcast %cst_220 : f32 to vector<16x128xf32>
    %993 = arith.addf %992, %991 : vector<16x128xf32>
    %994 = arith.divf %992, %993 : vector<16x128xf32>
    %995 = arith.mulf %986, %935 : vector<16x128xf32>
    %996 = arith.mulf %980, %988 : vector<16x128xf32>
    %997 = arith.addf %995, %996 : vector<16x128xf32>
    %998 = math.tanh %997 : vector<16x128xf32>
    %999 = arith.mulf %994, %998 : vector<16x128xf32>
    %1000 = arith.addi %10, %c14_i32 : i32
    %c0_i32_221 = arith.constant 0 : i32
    %1001 = arith.cmpi sgt, %1000, %c0_i32_221 : i32
    %1002 = arith.select %1001, %999, %934 : vector<16x128xf32>
    %1003 = arith.select %1001, %997, %935 : vector<16x128xf32>
    %c16_i32_222 = arith.constant 16 : i32
    %1004 = arith.muli %c14_i32, %c16_i32_222 : i32
    %1005 = tpu.assume_multiple %1004, 16 : i32
    %1006 = arith.index_cast %1005 : i32 to index
    %c0_223 = arith.constant 0 : index
    %1007 = vector.load %arg7[%1006, %c0_223] : memref<256x512xf32, #tpu.memory_space<vmem>>, vector<16x512xf32>
    %1008 = vector.extract_strided_slice %970 {offsets = [0, 0], sizes = [16, 512], strides = [1, 1]} : vector<16x1024xf32> to vector<16x512xf32>
    %1009 = arith.addf %1007, %1008 : vector<16x512xf32>
    %1010 = vector.extract_strided_slice %1009 {offsets = [0, 0], sizes = [16, 128], strides = [1, 1]} : vector<16x512xf32> to vector<16x128xf32>
    %1011 = arith.negf %1010 : vector<16x128xf32>
    %1012 = math.exp %1011 : vector<16x128xf32>
    %cst_224 = arith.constant 1.000000e+00 : f32
    %1013 = vector.broadcast %cst_224 : f32 to vector<16x128xf32>
    %1014 = arith.addf %1013, %1012 : vector<16x128xf32>
    %1015 = arith.divf %1013, %1014 : vector<16x128xf32>
    %1016 = vector.extract_strided_slice %1009 {offsets = [0, 128], sizes = [16, 128], strides = [1, 1]} : vector<16x512xf32> to vector<16x128xf32>
    %1017 = arith.negf %1016 : vector<16x128xf32>
    %1018 = math.exp %1017 : vector<16x128xf32>
    %cst_225 = arith.constant 1.000000e+00 : f32
    %1019 = vector.broadcast %cst_225 : f32 to vector<16x128xf32>
    %1020 = arith.addf %1019, %1018 : vector<16x128xf32>
    %1021 = arith.divf %1019, %1020 : vector<16x128xf32>
    %1022 = vector.extract_strided_slice %1009 {offsets = [0, 256], sizes = [16, 128], strides = [1, 1]} : vector<16x512xf32> to vector<16x128xf32>
    %1023 = math.tanh %1022 : vector<16x128xf32>
    %1024 = vector.extract_strided_slice %1009 {offsets = [0, 384], sizes = [16, 128], strides = [1, 1]} : vector<16x512xf32> to vector<16x128xf32>
    %1025 = arith.negf %1024 : vector<16x128xf32>
    %1026 = math.exp %1025 : vector<16x128xf32>
    %cst_226 = arith.constant 1.000000e+00 : f32
    %1027 = vector.broadcast %cst_226 : f32 to vector<16x128xf32>
    %1028 = arith.addf %1027, %1026 : vector<16x128xf32>
    %1029 = arith.divf %1027, %1028 : vector<16x128xf32>
    %1030 = arith.mulf %1021, %964 : vector<16x128xf32>
    %1031 = arith.mulf %1015, %1023 : vector<16x128xf32>
    %1032 = arith.addf %1030, %1031 : vector<16x128xf32>
    %1033 = math.tanh %1032 : vector<16x128xf32>
    %1034 = arith.mulf %1029, %1033 : vector<16x128xf32>
    %c15_i32 = arith.constant 15 : i32
    %1035 = tpu.concatenate %1034, %1002 in 1 : vector<16x128xf32>, vector<16x128xf32> -> vector<16x256xf32>
    %1036 = arith.truncf %1035 : vector<16x256xf32> to vector<16x256xbf16>
    %c0_227 = arith.constant 0 : index
    %c0_228 = arith.constant 0 : index
    %1037 = vector.load %arg4[%c0_227, %c0_228] : memref<256x1024xbf16, #tpu.memory_space<vmem>>, vector<256x1024xbf16>
    %cst_229 = arith.constant dense<0.000000e+00> : vector<16x1024xf32>
    %1038 = tpu.matmul %1036, %1037, %cst_229 {dimension_numbers = #tpu.dot_dimension_numbers<[1], [0], [0], [1], [0, 0, 1, 1], [], []>} : vector<16x256xbf16>, vector<256x1024xbf16>, vector<16x1024xf32> -> vector<16x1024xf32>
    %1039 = vector.extract_strided_slice %1038 {offsets = [0, 512], sizes = [16, 512], strides = [1, 1]} : vector<16x1024xf32> to vector<16x512xf32>
    %c0_230 = arith.constant 0 : index
    %c0_231 = arith.constant 0 : index
    %1040 = vector.load %arg5[%c0_230, %c0_231] : memref<1x512xf32, #tpu.memory_space<vmem>>, vector<1x512xf32>
    %1041 = vector.broadcast %1040 : vector<1x512xf32> to vector<16x512xf32>
    %1042 = arith.addf %1039, %1041 : vector<16x512xf32>
    %1043 = vector.extract_strided_slice %1042 {offsets = [0, 0], sizes = [16, 128], strides = [1, 1]} : vector<16x512xf32> to vector<16x128xf32>
    %1044 = arith.negf %1043 : vector<16x128xf32>
    %1045 = math.exp %1044 : vector<16x128xf32>
    %cst_232 = arith.constant 1.000000e+00 : f32
    %1046 = vector.broadcast %cst_232 : f32 to vector<16x128xf32>
    %1047 = arith.addf %1046, %1045 : vector<16x128xf32>
    %1048 = arith.divf %1046, %1047 : vector<16x128xf32>
    %1049 = vector.extract_strided_slice %1042 {offsets = [0, 128], sizes = [16, 128], strides = [1, 1]} : vector<16x512xf32> to vector<16x128xf32>
    %1050 = arith.negf %1049 : vector<16x128xf32>
    %1051 = math.exp %1050 : vector<16x128xf32>
    %cst_233 = arith.constant 1.000000e+00 : f32
    %1052 = vector.broadcast %cst_233 : f32 to vector<16x128xf32>
    %1053 = arith.addf %1052, %1051 : vector<16x128xf32>
    %1054 = arith.divf %1052, %1053 : vector<16x128xf32>
    %1055 = vector.extract_strided_slice %1042 {offsets = [0, 256], sizes = [16, 128], strides = [1, 1]} : vector<16x512xf32> to vector<16x128xf32>
    %1056 = math.tanh %1055 : vector<16x128xf32>
    %1057 = vector.extract_strided_slice %1042 {offsets = [0, 384], sizes = [16, 128], strides = [1, 1]} : vector<16x512xf32> to vector<16x128xf32>
    %1058 = arith.negf %1057 : vector<16x128xf32>
    %1059 = math.exp %1058 : vector<16x128xf32>
    %cst_234 = arith.constant 1.000000e+00 : f32
    %1060 = vector.broadcast %cst_234 : f32 to vector<16x128xf32>
    %1061 = arith.addf %1060, %1059 : vector<16x128xf32>
    %1062 = arith.divf %1060, %1061 : vector<16x128xf32>
    %1063 = arith.mulf %1054, %1003 : vector<16x128xf32>
    %1064 = arith.mulf %1048, %1056 : vector<16x128xf32>
    %1065 = arith.addf %1063, %1064 : vector<16x128xf32>
    %1066 = math.tanh %1065 : vector<16x128xf32>
    %1067 = arith.mulf %1062, %1066 : vector<16x128xf32>
    %1068 = arith.addi %10, %c15_i32 : i32
    %c0_i32_235 = arith.constant 0 : i32
    %1069 = arith.cmpi sgt, %1068, %c0_i32_235 : i32
    %1070 = arith.select %1069, %1067, %1002 : vector<16x128xf32>
    %1071 = arith.select %1069, %1065, %1003 : vector<16x128xf32>
    %c16_i32_236 = arith.constant 16 : i32
    %1072 = arith.muli %c15_i32, %c16_i32_236 : i32
    %1073 = tpu.assume_multiple %1072, 16 : i32
    %1074 = arith.index_cast %1073 : i32 to index
    %c0_237 = arith.constant 0 : index
    %1075 = vector.load %arg7[%1074, %c0_237] : memref<256x512xf32, #tpu.memory_space<vmem>>, vector<16x512xf32>
    %1076 = vector.extract_strided_slice %1038 {offsets = [0, 0], sizes = [16, 512], strides = [1, 1]} : vector<16x1024xf32> to vector<16x512xf32>
    %1077 = arith.addf %1075, %1076 : vector<16x512xf32>
    %1078 = vector.extract_strided_slice %1077 {offsets = [0, 0], sizes = [16, 128], strides = [1, 1]} : vector<16x512xf32> to vector<16x128xf32>
    %1079 = arith.negf %1078 : vector<16x128xf32>
    %1080 = math.exp %1079 : vector<16x128xf32>
    %cst_238 = arith.constant 1.000000e+00 : f32
    %1081 = vector.broadcast %cst_238 : f32 to vector<16x128xf32>
    %1082 = arith.addf %1081, %1080 : vector<16x128xf32>
    %1083 = arith.divf %1081, %1082 : vector<16x128xf32>
    %1084 = vector.extract_strided_slice %1077 {offsets = [0, 128], sizes = [16, 128], strides = [1, 1]} : vector<16x512xf32> to vector<16x128xf32>
    %1085 = arith.negf %1084 : vector<16x128xf32>
    %1086 = math.exp %1085 : vector<16x128xf32>
    %cst_239 = arith.constant 1.000000e+00 : f32
    %1087 = vector.broadcast %cst_239 : f32 to vector<16x128xf32>
    %1088 = arith.addf %1087, %1086 : vector<16x128xf32>
    %1089 = arith.divf %1087, %1088 : vector<16x128xf32>
    %1090 = vector.extract_strided_slice %1077 {offsets = [0, 256], sizes = [16, 128], strides = [1, 1]} : vector<16x512xf32> to vector<16x128xf32>
    %1091 = math.tanh %1090 : vector<16x128xf32>
    %1092 = vector.extract_strided_slice %1077 {offsets = [0, 384], sizes = [16, 128], strides = [1, 1]} : vector<16x512xf32> to vector<16x128xf32>
    %1093 = arith.negf %1092 : vector<16x128xf32>
    %1094 = math.exp %1093 : vector<16x128xf32>
    %cst_240 = arith.constant 1.000000e+00 : f32
    %1095 = vector.broadcast %cst_240 : f32 to vector<16x128xf32>
    %1096 = arith.addf %1095, %1094 : vector<16x128xf32>
    %1097 = arith.divf %1095, %1096 : vector<16x128xf32>
    %1098 = arith.mulf %1089, %1032 : vector<16x128xf32>
    %1099 = arith.mulf %1083, %1091 : vector<16x128xf32>
    %1100 = arith.addf %1098, %1099 : vector<16x128xf32>
    %1101 = math.tanh %1100 : vector<16x128xf32>
    %1102 = arith.mulf %1097, %1101 : vector<16x128xf32>
    %c16_i32_241 = arith.constant 16 : i32
    %c0_242 = arith.constant 0 : index
    %c0_243 = arith.constant 0 : index
    %1103 = vector.load %arg8[%c0_242, %c0_243] : memref<16x128xf32, #tpu.memory_space<vmem>>, vector<16x128xf32>
    tpu.vector_store %arg8[%c0_242, %c0_243], %1102 {strides = array<i32>} : memref<16x128xf32, #tpu.memory_space<vmem>>, vector<16x128xf32>,
    %c0_244 = arith.constant 0 : index
    %c0_245 = arith.constant 0 : index
    %1104 = vector.load %arg9[%c0_244, %c0_245] : memref<16x128xf32, #tpu.memory_space<vmem>>, vector<16x128xf32>
    tpu.vector_store %arg9[%c0_244, %c0_245], %1100 {strides = array<i32>} : memref<16x128xf32, #tpu.memory_space<vmem>>, vector<16x128xf32>,
    %c0_246 = arith.constant 0 : index
    %c0_247 = arith.constant 0 : index
    %1105 = vector.load %arg10[%c0_246, %c0_247] : memref<16x128xf32, #tpu.memory_space<vmem>>, vector<16x128xf32>
    tpu.vector_store %arg10[%c0_246, %c0_247], %1070 {strides = array<i32>} : memref<16x128xf32, #tpu.memory_space<vmem>>, vector<16x128xf32>,
    %c0_248 = arith.constant 0 : index
    %c0_249 = arith.constant 0 : index
    %1106 = vector.load %arg11[%c0_248, %c0_249] : memref<16x128xf32, #tpu.memory_space<vmem>>, vector<16x128xf32>
    tpu.vector_store %arg11[%c0_248, %c0_249], %1071 {strides = array<i32>} : memref<16x128xf32, #tpu.memory_space<vmem>>, vector<16x128xf32>,
    %c2_i32_250 = arith.constant 2 : i32
    %1107 = arith.cmpi eq, %arg0, %c2_i32_250 : i32
    %1108 = arith.extui %1107 : i1 to i32
    %c0_i32_251 = arith.constant 0 : i32
    %1109 = arith.cmpi ne, %1108, %c0_i32_251 : i32
    scf.if %1109 {
      %1110 = tpu.concatenate %1102, %1070 in 1 : vector<16x128xf32>, vector<16x128xf32> -> vector<16x256xf32>
      %1111 = arith.truncf %1110 : vector<16x256xf32> to vector<16x256xbf16>
      %c0_252 = arith.constant 0 : index
      %c0_253 = arith.constant 0 : index
      %1112 = vector.load %arg4[%c0_252, %c0_253] : memref<256x1024xbf16, #tpu.memory_space<vmem>>, vector<256x1024xbf16>
      %cst_254 = arith.constant dense<0.000000e+00> : vector<16x1024xf32>
      %1113 = tpu.matmul %1111, %1112, %cst_254 {dimension_numbers = #tpu.dot_dimension_numbers<[1], [0], [0], [1], [0, 0, 1, 1], [], []>} : vector<16x256xbf16>, vector<256x1024xbf16>, vector<16x1024xf32> -> vector<16x1024xf32>
      %1114 = vector.extract_strided_slice %1113 {offsets = [0, 512], sizes = [16, 512], strides = [1, 1]} : vector<16x1024xf32> to vector<16x512xf32>
      %c0_255 = arith.constant 0 : index
      %c0_256 = arith.constant 0 : index
      %1115 = vector.load %arg5[%c0_255, %c0_256] : memref<1x512xf32, #tpu.memory_space<vmem>>, vector<1x512xf32>
      %1116 = vector.broadcast %1115 : vector<1x512xf32> to vector<16x512xf32>
      %1117 = arith.addf %1114, %1116 : vector<16x512xf32>
      %1118 = vector.extract_strided_slice %1117 {offsets = [0, 0], sizes = [16, 128], strides = [1, 1]} : vector<16x512xf32> to vector<16x128xf32>
      %1119 = arith.negf %1118 : vector<16x128xf32>
      %1120 = math.exp %1119 : vector<16x128xf32>
      %cst_257 = arith.constant 1.000000e+00 : f32
      %1121 = vector.broadcast %cst_257 : f32 to vector<16x128xf32>
      %1122 = arith.addf %1121, %1120 : vector<16x128xf32>
      %1123 = arith.divf %1121, %1122 : vector<16x128xf32>
      %1124 = vector.extract_strided_slice %1117 {offsets = [0, 128], sizes = [16, 128], strides = [1, 1]} : vector<16x512xf32> to vector<16x128xf32>
      %1125 = arith.negf %1124 : vector<16x128xf32>
      %1126 = math.exp %1125 : vector<16x128xf32>
      %cst_258 = arith.constant 1.000000e+00 : f32
      %1127 = vector.broadcast %cst_258 : f32 to vector<16x128xf32>
      %1128 = arith.addf %1127, %1126 : vector<16x128xf32>
      %1129 = arith.divf %1127, %1128 : vector<16x128xf32>
      %1130 = vector.extract_strided_slice %1117 {offsets = [0, 256], sizes = [16, 128], strides = [1, 1]} : vector<16x512xf32> to vector<16x128xf32>
      %1131 = math.tanh %1130 : vector<16x128xf32>
      %1132 = vector.extract_strided_slice %1117 {offsets = [0, 384], sizes = [16, 128], strides = [1, 1]} : vector<16x512xf32> to vector<16x128xf32>
      %1133 = arith.negf %1132 : vector<16x128xf32>
      %1134 = math.exp %1133 : vector<16x128xf32>
      %cst_259 = arith.constant 1.000000e+00 : f32
      %1135 = vector.broadcast %cst_259 : f32 to vector<16x128xf32>
      %1136 = arith.addf %1135, %1134 : vector<16x128xf32>
      %1137 = arith.divf %1135, %1136 : vector<16x128xf32>
      %1138 = arith.mulf %1129, %1071 : vector<16x128xf32>
      %1139 = arith.mulf %1123, %1131 : vector<16x128xf32>
      %1140 = arith.addf %1138, %1139 : vector<16x128xf32>
      %1141 = math.tanh %1140 : vector<16x128xf32>
      %1142 = arith.mulf %1137, %1141 : vector<16x128xf32>
      %1143 = arith.truncf %1142 : vector<16x128xf32> to vector<16x128xbf16>
      %c0_260 = arith.constant 0 : index
      %c0_261 = arith.constant 0 : index
      %1144 = vector.load %arg6[%c0_260, %c0_261] : memref<16x128xbf16, #tpu.memory_space<vmem>>, vector<16x128xbf16>
      tpu.vector_store %arg6[%c0_260, %c0_261], %1143 {strides = array<i32>} : memref<16x128xbf16, #tpu.memory_space<vmem>>, vector<16x128xbf16>,
    } else {
    }
    return
  }
  func.func @transform_0(%arg0: i32) -> (i32, i32) {
    %c0_i32 = arith.constant 0 : i32
    %c0_i32_0 = arith.constant 0 : i32
    return %arg0, %c0_i32 : i32, i32
  }
  func.func @transform_1(%arg0: i32) -> (i32, i32) {
    %c0_i32 = arith.constant 0 : i32
    %c0_i32_0 = arith.constant 0 : i32
    %c0_i32_1 = arith.constant 0 : i32
    return %c0_i32, %c0_i32_0 : i32, i32
  }
  func.func @transform_2(%arg0: i32) -> (i32, i32) {
    %c0_i32 = arith.constant 0 : i32
    %c0_i32_0 = arith.constant 0 : i32
    %c0_i32_1 = arith.constant 0 : i32
    return %c0_i32, %c0_i32_0 : i32, i32
  }
  func.func @transform_3(%arg0: i32) -> (i32, i32) {
    %c0_i32 = arith.constant 0 : i32
    %c0_i32_0 = arith.constant 0 : i32
    %c0_i32_1 = arith.constant 0 : i32
    return %c0_i32, %c0_i32_0 : i32, i32
  }
  func.func @transform_4(%arg0: i32) -> (i32, i32) {
    %c0_i32 = arith.constant 0 : i32
    %c0_i32_0 = arith.constant 0 : i32
    %c0_i32_1 = arith.constant 0 : i32
    return %c0_i32, %c0_i32_0 : i32, i32
  }
  func.func @transform_5(%arg0: i32) -> (i32, i32) {
    %c0_i32 = arith.constant 0 : i32
    %c0_i32_0 = arith.constant 0 : i32
    %c0_i32_1 = arith.constant 0 : i32
    return %c0_i32, %c0_i32_0 : i32, i32
  }
}

</mosaic_0001>

<llo_original>
// kernel: product_prediction_forward.3
$region0: #{product_prediction_forward.3}
  #allocation0 [shape = 'u32[]', space=smem, size = 0x4, offset = 0x4, fixed_abs, tag = 'smem constant byte address 0x4 - core index']
  #allocation1 [shape = 'u32[144,128]{1,0:T(1,128)}', space=vmem, size = 0x12000, scoped, tag = 'internal scratch']
  %s0 = inlined_call_operand.vmem [shape: bf16[16,128], index: 0, kind: input, shape index: {}]
  %s1 = inlined_call_operand.vmem [shape: bf16[128,256], index: 1, kind: input, shape index: {}]
  %s2 = inlined_call_operand.vmem [shape: f32[1,256], index: 2, kind: input, shape index: {}]
  %s3 = inlined_call_operand.vmem [shape: f32[16,256], index: 3, kind: output, shape index: {}]
  %s4 = sld [smem:[#allocation0]]
  $region22: #{product_prediction_forward.3} parent=0
    _
  %s6 = ssub.s32 1, %s4
  %s7 = scalar_select 0, %s6, %s4
  // Predicated region
  $region2: #{product_prediction_forward.3} parent=0 // pred_check
    _
  $region3: #{product_prediction_forward.3} parent=0 // pred_check_branch
    %9 = sbr.rel (0) target = $region5
  $region4: #{product_prediction_forward.3} parent=0 // pred_region
    _
  $region5: #{product_prediction_forward.3} parent=0 // pred_fallthru
    _
  // Predicated region
  $region6: #{product_prediction_forward.3} parent=0 // pred_check
    _
  $region7: #{product_prediction_forward.3} parent=0 // pred_check_branch
    %11 = sbr.rel (0) target = $region9
  $region8: #{product_prediction_forward.3} parent=0 // pred_region
    _
  $region9: #{product_prediction_forward.3} parent=0 // pred_fallthru
    _
  // Predicated region
  $region10: #{product_prediction_forward.3} parent=0 // pred_check
    _
  $region11: #{product_prediction_forward.3} parent=0 // pred_check_branch
    %13 = sbr.rel (0) target = $region13
  $region12: #{product_prediction_forward.3} parent=0 // pred_region
    _
  $region13: #{product_prediction_forward.3} parent=0 // pred_fallthru
    _
  %v15 = vld [vmem:[%s0] sm:$0xf]
  %v16 = vld [vmem:[%s0 + $0x4] sm:$0xf]
  %v17 = vld [vmem:[%s1] sm:$0xff]
  %v18 = vld [vmem:[%s1 + $0x8] sm:$0xff]
  %v19 = vld [vmem:[%s1 + $0x10] sm:$0xff]
  %v20 = vld [vmem:[%s1 + $0x18] sm:$0xff]
  %v21 = vld [vmem:[%s1 + $0x20] sm:$0xff]
  %v22 = vld [vmem:[%s1 + $0x28] sm:$0xff]
  %v23 = vld [vmem:[%s1 + $0x30] sm:$0xff]
  %v24 = vld [vmem:[%s1 + $0x38] sm:$0xff]
  %v25 = vld [vmem:[%s1 + $0x40] sm:$0xff]
  %v26 = vld [vmem:[%s1 + $0x48] sm:$0xff]
  %v27 = vld [vmem:[%s1 + $0x50] sm:$0xff]
  %v28 = vld [vmem:[%s1 + $0x58] sm:$0xff]
  %v29 = vld [vmem:[%s1 + $0x60] sm:$0xff]
  %v30 = vld [vmem:[%s1 + $0x68] sm:$0xff]
  %v31 = vld [vmem:[%s1 + $0x70] sm:$0xff]
  %v32 = vld [vmem:[%s1 + $0x78] sm:$0xff]
  %v33 = vld [vmem:[%s2] sm:$0x3]
  %v35 = vlaneseq
  %v36 = vshrl.u32 %v35, 7
  %v37 = vsub.s32 0, %v36
  %v38 = vrot.slane %v33, %v37
  %v39 = vlaneseq
  %v40 = vshrl.u32 %v39, 7
  %v41 = vsub.s32 1, %v40
  %v42 = vrot.slane %v33, %v41
  %v47 = vunpack.c.l.b16 %v15
  %v48 = vunpack.c.l.b16 %v16
  %v49 = vpack.c.b16 %v48, %v47
  %v67 = vunpack.c.l.b16 %v17
  %v68 = vunpack.c.h.b16 %v17
  %v69 = vunpack.c.l.b16 %v18
  %v70 = vunpack.c.h.b16 %v18
  %v71 = vunpack.c.l.b16 %v19
  %v72 = vunpack.c.h.b16 %v19
  %v73 = vunpack.c.l.b16 %v20
  %v74 = vunpack.c.h.b16 %v20
  %v75 = vunpack.c.l.b16 %v21
  %v76 = vunpack.c.h.b16 %v21
  %v77 = vunpack.c.l.b16 %v22
  %v78 = vunpack.c.h.b16 %v22
  %v79 = vunpack.c.l.b16 %v23
  %v80 = vunpack.c.h.b16 %v23
  %v81 = vunpack.c.l.b16 %v24
  %v82 = vunpack.c.h.b16 %v24
  %v83 = vunpack.c.l.b16 %v25
  %v84 = vunpack.c.h.b16 %v25
  %v85 = vunpack.c.l.b16 %v26
  %v86 = vunpack.c.h.b16 %v26
  %v87 = vunpack.c.l.b16 %v27
  %v88 = vunpack.c.h.b16 %v27
  %v89 = vunpack.c.l.b16 %v28
  %v90 = vunpack.c.h.b16 %v28
  %v91 = vunpack.c.l.b16 %v29
  %v92 = vunpack.c.h.b16 %v29
  %v93 = vunpack.c.l.b16 %v30
  %v94 = vunpack.c.h.b16 %v30
  %v95 = vunpack.c.l.b16 %v31
  %v96 = vunpack.c.h.b16 %v31
  %v97 = vunpack.c.l.b16 %v32
  %v98 = vunpack.c.h.b16 %v32
  %v99 = vpack.c.b16 %v69, %v67
  %v100 = vpack.c.b16 %v70, %v68
  %v101 = vpack.c.b16 %v73, %v71
  %v102 = vpack.c.b16 %v74, %v72
  %v103 = vpack.c.b16 %v77, %v75
  %v104 = vpack.c.b16 %v78, %v76
  %v105 = vpack.c.b16 %v81, %v79
  %v106 = vpack.c.b16 %v82, %v80
  %v107 = vpack.c.b16 %v85, %v83
  %v108 = vpack.c.b16 %v86, %v84
  %v109 = vpack.c.b16 %v89, %v87
  %v110 = vpack.c.b16 %v90, %v88
  %v111 = vpack.c.b16 %v93, %v91
  %v112 = vpack.c.b16 %v94, %v92
  %v113 = vpack.c.b16 %v97, %v95
  %v114 = vpack.c.b16 %v98, %v96
  %131 = vmatprep.subr.bf16.mxu0 %v114
  %132 = vmatpush1.bf16.msra.mxu0 %v113
  %133 = vmatprep.subr.bf16.mxu0 %v112
  %134 = vmatpush1.bf16.msra.mxu0 %v111
  %135 = vmatprep.subr.bf16.mxu0 %v110
  %136 = vmatpush1.bf16.msra.mxu0 %v109
  %137 = vmatprep.subr.bf16.mxu0 %v108
  %138 = vmatpush1.bf16.msra.mxu0 %v107
  %139 = vmatprep.subr.bf16.mxu0 %v106
  %140 = vmatpush1.bf16.msra.mxu0 %v105
  %141 = vmatprep.subr.bf16.mxu0 %v104
  %142 = vmatpush1.bf16.msra.mxu0 %v103
  %143 = vmatprep.subr.bf16.mxu0 %v102
  %144 = vmatpush1.bf16.msra.mxu0 %v101
  %145 = vmatprep.subr.bf16.mxu0 %v100
  %146 = vmatpush1.bf16.msra.mxu0 %v99
  %147 = vmatprep.subr.bf16.mxu0 0
  %148 = vmatpush2.bf16.msra.mxu0 0
  %149 = vmatprep.subr.bf16.mxu0 0
  %150 = vmatpush2.bf16.msra.mxu0 0
  %151 = vmatprep.subr.bf16.mxu0 0
  %152 = vmatpush2.bf16.msra.mxu0 0
  %153 = vmatprep.subr.bf16.mxu0 0
  %154 = vmatpush2.bf16.msra.mxu0 0
  %155 = vmatprep.subr.bf16.mxu0 0
  %156 = vmatpush2.bf16.msra.mxu0 0
  %157 = vmatprep.subr.bf16.mxu0 0
  %158 = vmatpush2.bf16.msra.mxu0 0
  %159 = vmatprep.subr.bf16.mxu0 0
  %160 = vmatpush2.bf16.msra.mxu0 0
  %161 = vmatprep.subr.bf16.mxu0 0
  %162 = vmatpush2.bf16.msra.mxu0 0
  %163 = vmatprep.mubr.bf16.mxu0 0
  %164 = vmatmul.mubr.bf16.gmra.mxu0 %v49
  %v165 = vpop.f32.mrf.mxu0
  %v166 = vadd.f32 %v38, %v165
  %v167 = vpop.f32.mrf.mxu0
  %v168 = vadd.f32 %v42, %v167
  %v169 = vpop.f32.mrf.mxu0
  %v170 = vadd.f32 %v38, %v169
  %v171 = vpop.f32.mrf.mxu0
  %v172 = vadd.f32 %v42, %v171
  %173 = vdwg.mxu0
  %174 = vst [vmem:[%s3] sm:$0xff] %v166
  %175 = vst [vmem:[%s3 + $0x8] sm:$0xff] %v168
  %176 = vst [vmem:[%s3 + $0x10] sm:$0xff] %v170
  %177 = vst [vmem:[%s3 + $0x18] sm:$0xff] %v172
  // Predicated region
  $region14: #{product_prediction_forward.3} parent=0 // pred_check
    _
  $region15: #{product_prediction_forward.3} parent=0 // pred_check_branch
    %179 = sbr.rel (0) target = $region17
  $region16: #{product_prediction_forward.3} parent=0 // pred_region
    _
  $region17: #{product_prediction_forward.3} parent=0 // pred_fallthru
    _
  // Predicated region
  $region18: #{product_prediction_forward.3} parent=0 // pred_check
    _
  $region19: #{product_prediction_forward.3} parent=0 // pred_check_branch
    %181 = sbr.rel (0) target = $region21
  $region20: #{product_prediction_forward.3} parent=0 // pred_region
    _
  $region21: #{product_prediction_forward.3} parent=0 // pred_fallthru
    _

// kernel: product_prediction_forward.2
$region0: #{product_prediction_forward.2}
  #allocation0 [shape = 'u32[]', space=smem, size = 0x4, offset = 0x4, fixed_abs, tag = 'smem constant byte address 0x4 - core index']
  #allocation1 [shape = 'u32[144,128]{1,0:T(1,128)}', space=vmem, size = 0x12000, scoped, tag = 'internal scratch']
  #allocation2 [shape = 'f32[256,512]{1,0:T(8,128)}', space=vmem, size = 0x80000, scoped, tag = 'scratch operand']
  #allocation3 [shape = 'f32[16,128]{1,0:T(8,128)}', space=vmem, size = 0x2000, scoped, tag = 'scratch operand']
  #allocation4 [shape = 'f32[16,128]{1,0:T(8,128)}', space=vmem, size = 0x2000, scoped, tag = 'scratch operand']
  #allocation5 [shape = 'f32[16,128]{1,0:T(8,128)}', space=vmem, size = 0x2000, scoped, tag = 'scratch operand']
  #allocation6 [shape = 'f32[16,128]{1,0:T(8,128)}', space=vmem, size = 0x2000, scoped, tag = 'scratch operand']
  %s0 = inlined_call_operand.vmem [shape: bf16[768,128], index: 0, kind: input, shape index: {}]
  %s1 = inlined_call_operand.vmem [shape: bf16[128,512], index: 1, kind: input, shape index: {}]
  %s2 = inlined_call_operand.vmem [shape: f32[1,512], index: 2, kind: input, shape index: {}]
  %s3 = inlined_call_operand.vmem [shape: bf16[256,1024], index: 3, kind: input, shape index: {}]
  %s4 = inlined_call_operand.vmem [shape: f32[1,512], index: 4, kind: input, shape index: {}]
  %s5 = inlined_call_operand.vmem [shape: bf16[16,128], index: 5, kind: output, shape index: {}]
  %s6 = sld [smem:[#allocation0]]
  $region61: #{product_prediction_forward.2} parent=0
    _
  %s8 = ssub.s32 1, %s6
  %s9 = scalar_select 0, %s8, %s6
  loop: start=0, step=1, limit=5
  $region2: #{product_prediction_forward.2} parent=0 // loop_pre_header
    _
  $region3: #{product_prediction_forward.2} parent=0 // loop_header
    %s11 = sphi 0, %s15
    %p12 = scmp.ge.s32.totalorder %s11, 5
    %s21 = sphi 0, %s23
    %s24 = sphi 0, %s21
    %s25 = sphi 0, %s24
    %s41 = sphi 0, %s25
    %s45 = sphi 0, %s45
    %s47 = sphi 0, %s45
    %s48 = sphi 0, %s47
    %s62 = sphi 0, %s48
    %s66 = sphi 0, %s66
    %s68 = sphi 0, %s66
    %s69 = sphi 0, %s68
    %s83 = sphi 0, %s69
    %s87 = sphi 0, %s87
    %s89 = sphi 0, %s87
    %s90 = sphi 0, %s89
    %s104 = sphi 0, %s90
    %s108 = sphi 0, %s108
    %s110 = sphi 0, %s108
    %s111 = sphi 0, %s110
    %s125 = sphi 0, %s111
    %s129 = sphi 0, %s129
    %s131 = sphi 0, %s129
    %s132 = sphi 0, %s131
    %s146 = sphi 0, %s132
  $region4: #{product_prediction_forward.2} parent=0 // loop_header_branch
    %14 = sbr.rel (%p12) target = $region8
  $region5: #{product_prediction_forward.2} parent=0 // loop_body
    %s16 = ssub.s32 %s11, 1
    %s17 = ssub.s32 %s11, 2
    %s18 = sadd.s32 %s11, 1
    %s19 = ssub.s32 %s11, %s18
    %p20 = scmp.eq.s32.totalorder %s19, 0
    %s22 = sadd.s32 %s21, 1
    %s23 = scalar_select %p20, %s21, %s22
    %p26 = pneg %p20
    %p27 = scmp.eq.s32.totalorder %s11, 2
    %p28 = por %p26, %p27
    %p29 = scmp.ne.s32.totalorder %s21, %s24
    %p30 = scmp.eq.s32.totalorder %s11, 0
    %p31 = por %p29, %p30
    %p32 = scmp.ne.s32.totalorder %s21, %s24
    %p33 = scmp.eq.s32.totalorder %s16, 2
    %p34 = por %p32, %p33
    %p35 = scmp.ne.s32.totalorder %s24, %s25
    %p36 = scmp.eq.s32.totalorder %s16, 0
    %p37 = por %p35, %p36
    %p38 = scmp.ne.s32.totalorder %s24, %s25
    %p39 = scmp.eq.s32.totalorder %s17, 2
    %p40 = por %p38, %p39
    %p42 = scmp.ne.s32.totalorder %s25, %s41
    %p43 = scmp.eq.s32.totalorder %s17, 0
    %p44 = por %p42, %p43
    %s46 = sadd.s32 %s45, 1
    %p49 = scmp.eq.s32.totalorder %s11, 2
    %p50 = scmp.ne.s32.totalorder %s45, %s47
    %p51 = scmp.eq.s32.totalorder %s11, 0
    %p52 = por %p50, %p51
    %p53 = scmp.ne.s32.totalorder %s45, %s47
    %p54 = scmp.eq.s32.totalorder %s16, 2
    %p55 = por %p53, %p54
    %p56 = scmp.ne.s32.totalorder %s47, %s48
    %p57 = scmp.eq.s32.totalorder %s16, 0
    %p58 = por %p56, %p57
    %p59 = scmp.ne.s32.totalorder %s47, %s48
    %p60 = scmp.eq.s32.totalorder %s17, 2
    %p61 = por %p59, %p60
    %p63 = scmp.ne.s32.totalorder %s48, %s62
    %p64 = scmp.eq.s32.totalorder %s17, 0
    %p65 = por %p63, %p64
    %s67 = sadd.s32 %s66, 1
    %p70 = scmp.eq.s32.totalorder %s11, 2
    %p71 = scmp.ne.s32.totalorder %s66, %s68
    %p72 = scmp.eq.s32.totalorder %s11, 0
    %p73 = por %p71, %p72
    %p74 = scmp.ne.s32.totalorder %s66, %s68
    %p75 = scmp.eq.s32.totalorder %s16, 2
    %p76 = por %p74, %p75
    %p77 = scmp.ne.s32.totalorder %s68, %s69
    %p78 = scmp.eq.s32.totalorder %s16, 0
    %p79 = por %p77, %p78
    %p80 = scmp.ne.s32.totalorder %s68, %s69
    %p81 = scmp.eq.s32.totalorder %s17, 2
    %p82 = por %p80, %p81
    %p84 = scmp.ne.s32.totalorder %s69, %s83
    %p85 = scmp.eq.s32.totalorder %s17, 0
    %p86 = por %p84, %p85
    %s88 = sadd.s32 %s87, 1
    %p91 = scmp.eq.s32.totalorder %s11, 2
    %p92 = scmp.ne.s32.totalorder %s87, %s89
    %p93 = scmp.eq.s32.totalorder %s11, 0
    %p94 = por %p92, %p93
    %p95 = scmp.ne.s32.totalorder %s87, %s89
    %p96 = scmp.eq.s32.totalorder %s16, 2
    %p97 = por %p95, %p96
    %p98 = scmp.ne.s32.totalorder %s89, %s90
    %p99 = scmp.eq.s32.totalorder %s16, 0
    %p100 = por %p98, %p99
    %p101 = scmp.ne.s32.totalorder %s89, %s90
    %p102 = scmp.eq.s32.totalorder %s17, 2
    %p103 = por %p101, %p102
    %p105 = scmp.ne.s32.totalorder %s90, %s104
    %p106 = scmp.eq.s32.totalorder %s17, 0
    %p107 = por %p105, %p106
    %s109 = sadd.s32 %s108, 1
    %p112 = scmp.eq.s32.totalorder %s11, 2
    %p113 = scmp.ne.s32.totalorder %s108, %s110
    %p114 = scmp.eq.s32.totalorder %s11, 0
    %p115 = por %p113, %p114
    %p116 = scmp.ne.s32.totalorder %s108, %s110
    %p117 = scmp.eq.s32.totalorder %s16, 2
    %p118 = por %p116, %p117
    %p119 = scmp.ne.s32.totalorder %s110, %s111
    %p120 = scmp.eq.s32.totalorder %s16, 0
    %p121 = por %p119, %p120
    %p122 = scmp.ne.s32.totalorder %s110, %s111
    %p123 = scmp.eq.s32.totalorder %s17, 2
    %p124 = por %p122, %p123
    %p126 = scmp.ne.s32.totalorder %s111, %s125
    %p127 = scmp.eq.s32.totalorder %s17, 0
    %p128 = por %p126, %p127
    %s130 = sadd.s32 %s129, 1
    %p133 = scmp.eq.s32.totalorder %s11, 2
    %p134 = scmp.ne.s32.totalorder %s129, %s131
    %p135 = scmp.eq.s32.totalorder %s11, 0
    %p136 = por %p134, %p135
    %p137 = scmp.ne.s32.totalorder %s129, %s131
    %p138 = scmp.eq.s32.totalorder %s16, 2
    %p139 = por %p137, %p138
    %p140 = scmp.ne.s32.totalorder %s131, %s132
    %p141 = scmp.eq.s32.totalorder %s16, 0
    %p142 = por %p140, %p141
    %p143 = scmp.ne.s32.totalorder %s131, %s132
    %p144 = scmp.eq.s32.totalorder %s17, 2
    %p145 = por %p143, %p144
    %p147 = scmp.ne.s32.totalorder %s132, %s146
    %p148 = scmp.eq.s32.totalorder %s17, 0
    %p149 = por %p147, %p148
    %p150 = scmp.le.s32.totalorder 1, %s11
    %p151 = scmp.lt.s32.totalorder %s11, 4
    %p152 = pnand %p150, %p151
    %p153 = pneg %p152
    // Predicated region
    $region9: #{product_prediction_forward.2} parent=5 // pred_check
      _
    $region10: #{product_prediction_forward.2} parent=5 // pred_check_branch
      %155 = sbr.rel (%p152) target = $region12
    $region11: #{product_prediction_forward.2} parent=5 // pred_region
      %s156 = ssub.s32 %s11, 1
      // Predicated region
      $region13: #{product_prediction_forward.2} parent=11 // pred_check
        %p157 = pneg %p58
      $region14: #{product_prediction_forward.2} parent=11 // pred_check_branch
        %159 = sbr.rel (%p157) target = $region16
      $region15: #{product_prediction_forward.2} parent=11 // pred_region
        _
      $region16: #{product_prediction_forward.2} parent=11 // pred_fallthru
        _
      // Predicated region
      $region17: #{product_prediction_forward.2} parent=11 // pred_check
        %p160 = pneg %p79
      $region18: #{product_prediction_forward.2} parent=11 // pred_check_branch
        %162 = sbr.rel (%p160) target = $region20
      $region19: #{product_prediction_forward.2} parent=11 // pred_region
        _
      $region20: #{product_prediction_forward.2} parent=11 // pred_fallthru
        _
      // Predicated region
      $region21: #{product_prediction_forward.2} parent=11 // pred_check
        %p163 = pneg %p100
      $region22: #{product_prediction_forward.2} parent=11 // pred_check_branch
        %165 = sbr.rel (%p163) target = $region24
      $region23: #{product_prediction_forward.2} parent=11 // pred_region
        _
      $region24: #{product_prediction_forward.2} parent=11 // pred_fallthru
        _
      // Predicated region
      $region25: #{product_prediction_forward.2} parent=11 // pred_check
        %p166 = pneg %p121
      $region26: #{product_prediction_forward.2} parent=11 // pred_check_branch
        %168 = sbr.rel (%p166) target = $region28
      $region27: #{product_prediction_forward.2} parent=11 // pred_region
        _
      $region28: #{product_prediction_forward.2} parent=11 // pred_fallthru
        _
    $region12: #{product_prediction_forward.2} parent=5 // pred_fallthru
      _
    %p169 = scmp.lt.s32.totalorder %s11, 3
    // Predicated region
    $region29: #{product_prediction_forward.2} parent=5 // pred_check
      %p170 = pneg %p169
    $region30: #{product_prediction_forward.2} parent=5 // pred_check_branch
      %172 = sbr.rel (%p170) target = $region32
    $region31: #{product_prediction_forward.2} parent=5 // pred_region
      // Predicated region
      $region33: #{product_prediction_forward.2} parent=31 // pred_check
        %p173 = pneg %p31
      $region34: #{product_prediction_forward.2} parent=31 // pred_check_branch
        %175 = sbr.rel (%p173) target = $region36
      $region35: #{product_prediction_forward.2} parent=31 // pred_region
        %s176 = smul.u32 32, %s11
        %p177 = scmp.lt.s32.totalorder %s176, 95
        %s178 = scalar_select %p177, %s176, 95
        %s179 = smul.addr %s178, 4
        %s180 = scalar_lea.vmem %s0, %s179
        %s181 = smul.u32 32, %s11
      $region36: #{product_prediction_forward.2} parent=31 // pred_fallthru
        _
    $region32: #{product_prediction_forward.2} parent=5 // pred_fallthru
      _
    %p182 = scmp.le.s32.totalorder 1, %s11
    %p183 = scmp.lt.s32.totalorder %s11, 4
    %p184 = pnand %p182, %p183
    %p185 = pneg %p184
    // Predicated region
    $region37: #{product_prediction_forward.2} parent=5 // pred_check
      _
    $region38: #{product_prediction_forward.2} parent=5 // pred_check_branch
      %187 = sbr.rel (%p184) target = $region40
    $region39: #{product_prediction_forward.2} parent=5 // pred_region
      %s188 = ssub.s32 %s11, 1
      %s189 = smul.u32 32, %s16
      %p190 = scmp.lt.s32.totalorder %s189, 95
      %s191 = scalar_select %p190, %s189, 95
      %s192 = smul.addr %s191, 4
      %s193 = scalar_lea.vmem %s0, %s192
      %p194 = pneg %p37
      %p195 = pneg %p34
      %p196 = pneg %p58
      %p197 = pneg %p55
      %p198 = pneg %p79
      %p199 = pneg %p76
      %p200 = pneg %p100
      %p201 = pneg %p97
      %p202 = pneg %p121
      %p203 = pneg %p118
      %p204 = pneg %p142
      %p205 = pneg %p139
      %s206 = smul.u32 32, %s16
      %p207 = scmp.lt.s32.totalorder %s206, 95
      %s208 = scalar_select %p207, %s206, 95
      %s209 = smul.addr %s208, 4
      %s210 = scalar_lea.vmem %s0, %s209
      %s211 = smul.u32 32, %s16
      %p213 = scmp.eq.s32.totalorder %s16, 0
      // Predicated region
      $region41: #{product_prediction_forward.2} parent=39 // pred_check
        %p214 = pneg %p213
      $region42: #{product_prediction_forward.2} parent=39 // pred_check_branch
        %216 = sbr.rel (%p214) target = $region44
      $region43: #{product_prediction_forward.2} parent=39 // pred_region
        %217 = vst [vmem:[#allocation3] sm:$0xff] 0.0
        %218 = vst [vmem:[#allocation3 + $0x8] sm:$0xff] 0.0
        %219 = vst [vmem:[#allocation4] sm:$0xff] 0.0
        %220 = vst [vmem:[#allocation4 + $0x8] sm:$0xff] 0.0
        %221 = vst [vmem:[#allocation5] sm:$0xff] 0.0
        %222 = vst [vmem:[#allocation5 + $0x8] sm:$0xff] 0.0
        %223 = vst [vmem:[#allocation6] sm:$0xff] 0.0
        %224 = vst [vmem:[#allocation6 + $0x8] sm:$0xff] 0.0
      $region44: #{product_prediction_forward.2} parent=39 // pred_fallthru
        _
      %v225 = vld [vmem:[%s210] sm:$0xf]
      %v226 = vld [vmem:[%s210 + $0x4] sm:$0xf]
      %v227 = vld [vmem:[%s210 + $0x8] sm:$0xf]
      %v228 = vld [vmem:[%s210 + $0xc] sm:$0xf]
      %v229 = vld [vmem:[%s210 + $0x10] sm:$0xf]
      %v230 = vld [vmem:[%s210 + $0x14] sm:$0xf]
      %v231 = vld [vmem:[%s210 + $0x18] sm:$0xf]
      %v232 = vld [vmem:[%s210 + $0x1c] sm:$0xf]
      %v233 = vld [vmem:[%s210 + $0x20] sm:$0xf]
      %v234 = vld [vmem:[%s210 + $0x24] sm:$0xf]
      %v235 = vld [vmem:[%s210 + $0x28] sm:$0xf]
      %v236 = vld [vmem:[%s210 + $0x2c] sm:$0xf]
      %v237 = vld [vmem:[%s210 + $0x30] sm:$0xf]
      %v238 = vld [vmem:[%s210 + $0x34] sm:$0xf]
      %v239 = vld [vmem:[%s210 + $0x38] sm:$0xf]
      %v240 = vld [vmem:[%s210 + $0x3c] sm:$0xf]
      %v241 = vld [vmem:[%s210 + $0x40] sm:$0xf]
      %v242 = vld [vmem:[%s210 + $0x44] sm:$0xf]
      %v243 = vld [vmem:[%s210 + $0x48] sm:$0xf]
      %v244 = vld [vmem:[%s210 + $0x4c] sm:$0xf]
      %v245 = vld [vmem:[%s210 + $0x50] sm:$0xf]
      %v246 = vld [vmem:[%s210 + $0x54] sm:$0xf]
      %v247 = vld [vmem:[%s210 + $0x58] sm:$0xf]
      %v248 = vld [vmem:[%s210 + $0x5c] sm:$0xf]
      %v249 = vld [vmem:[%s210 + $0x60] sm:$0xf]
      %v250 = vld [vmem:[%s210 + $0x64] sm:$0xf]
      %v251 = vld [vmem:[%s210 + $0x68] sm:$0xf]
      %v252 = vld [vmem:[%s210 + $0x6c] sm:$0xf]
      %v253 = vld [vmem:[%s210 + $0x70] sm:$0xf]
      %v254 = vld [vmem:[%s210 + $0x74] sm:$0xf]
      %v255 = vld [vmem:[%s210 + $0x78] sm:$0xf]
      %v256 = vld [vmem:[%s210 + $0x7c] sm:$0xf]
      %v257 = vld [vmem:[%s1] sm:$0xff]
      %v258 = vld [vmem:[%s1 + $0x8] sm:$0xff]
      %v259 = vld [vmem:[%s1 + $0x10] sm:$0xff]
      %v260 = vld [vmem:[%s1 + $0x18] sm:$0xff]
      %v261 = vld [vmem:[%s1 + $0x20] sm:$0xff]
      %v262 = vld [vmem:[%s1 + $0x28] sm:$0xff]
      %v263 = vld [vmem:[%s1 + $0x30] sm:$0xff]
      %v264 = vld [vmem:[%s1 + $0x38] sm:$0xff]
      %v265 = vld [vmem:[%s1 + $0x40] sm:$0xff]
      %v266 = vld [vmem:[%s1 + $0x48] sm:$0xff]
      %v267 = vld [vmem:[%s1 + $0x50] sm:$0xff]
      %v268 = vld [vmem:[%s1 + $0x58] sm:$0xff]
      %v269 = vld [vmem:[%s1 + $0x60] sm:$0xff]
      %v270 = vld [vmem:[%s1 + $0x68] sm:$0xff]
      %v271 = vld [vmem:[%s1 + $0x70] sm:$0xff]
      %v272 = vld [vmem:[%s1 + $0x78] sm:$0xff]
      %v273 = vld [vmem:[%s1 + $0x80] sm:$0xff]
      %v274 = vld [vmem:[%s1 + $0x88] sm:$0xff]
      %v275 = vld [vmem:[%s1 + $0x90] sm:$0xff]
      %v276 = vld [vmem:[%s1 + $0x98] sm:$0xff]
      %v277 = vld [vmem:[%s1 + $0xa0] sm:$0xff]
      %v278 = vld [vmem:[%s1 + $0xa8] sm:$0xff]
      %v279 = vld [vmem:[%s1 + $0xb0] sm:$0xff]
      %v280 = vld [vmem:[%s1 + $0xb8] sm:$0xff]
      %v281 = vld [vmem:[%s1 + $0xc0] sm:$0xff]
      %v282 = vld [vmem:[%s1 + $0xc8] sm:$0xff]
      %v283 = vld [vmem:[%s1 + $0xd0] sm:$0xff]
      %v284 = vld [vmem:[%s1 + $0xd8] sm:$0xff]
      %v285 = vld [vmem:[%s1 + $0xe0] sm:$0xff]
      %v286 = vld [vmem:[%s1 + $0xe8] sm:$0xff]
      %v287 = vld [vmem:[%s1 + $0xf0] sm:$0xff]
      %v288 = vld [vmem:[%s1 + $0xf8] sm:$0xff]
      %v289 = vld [vmem:[%s2] sm:$0xf]
      %v291 = vlaneseq
      %v292 = vshrl.u32 %v291, 7
      %v293 = vsub.s32 0, %v292
      %v294 = vrot.slane %v289, %v293
      %v295 = vlaneseq
      %v296 = vshrl.u32 %v295, 7
      %v297 = vsub.s32 1, %v296
      %v298 = vrot.slane %v289, %v297
      %v299 = vlaneseq
      %v300 = vshrl.u32 %v299, 7
      %v301 = vsub.s32 2, %v300
      %v302 = vrot.slane %v289, %v301
      %v303 = vlaneseq
      %v304 = vshrl.u32 %v303, 7
      %v305 = vsub.s32 3, %v304
      %v306 = vrot.slane %v289, %v305
      %v343 = vunpack.c.l.b16 %v225
      %v344 = vunpack.c.l.b16 %v226
      %v345 = vunpack.c.l.b16 %v227
      %v346 = vunpack.c.l.b16 %v228
      %v347 = vunpack.c.l.b16 %v229
      %v348 = vunpack.c.l.b16 %v230
      %v349 = vunpack.c.l.b16 %v231
      %v350 = vunpack.c.l.b16 %v232
      %v351 = vunpack.c.l.b16 %v233
      %v352 = vunpack.c.l.b16 %v234
      %v353 = vunpack.c.l.b16 %v235
      %v354 = vunpack.c.l.b16 %v236
      %v355 = vunpack.c.l.b16 %v237
      %v356 = vunpack.c.l.b16 %v238
      %v357 = vunpack.c.l.b16 %v239
      %v358 = vunpack.c.l.b16 %v240
      %v359 = vunpack.c.l.b16 %v241
      %v360 = vunpack.c.l.b16 %v242
      %v361 = vunpack.c.l.b16 %v243
      %v362 = vunpack.c.l.b16 %v244
      %v363 = vunpack.c.l.b16 %v245
      %v364 = vunpack.c.l.b16 %v246
      %v365 = vunpack.c.l.b16 %v247
      %v366 = vunpack.c.l.b16 %v248
      %v367 = vunpack.c.l.b16 %v249
      %v368 = vunpack.c.l.b16 %v250
      %v369 = vunpack.c.l.b16 %v251
      %v370 = vunpack.c.l.b16 %v252
      %v371 = vunpack.c.l.b16 %v253
      %v372 = vunpack.c.l.b16 %v254
      %v373 = vunpack.c.l.b16 %v255
      %v374 = vunpack.c.l.b16 %v256
      %v375 = vpack.c.b16 %v344, %v343
      %v376 = vpack.c.b16 %v346, %v345
      %v377 = vpack.c.b16 %v348, %v347
      %v378 = vpack.c.b16 %v350, %v349
      %v379 = vpack.c.b16 %v352, %v351
      %v380 = vpack.c.b16 %v354, %v353
      %v381 = vpack.c.b16 %v356, %v355
      %v382 = vpack.c.b16 %v358, %v357
      %v383 = vpack.c.b16 %v360, %v359
      %v384 = vpack.c.b16 %v362, %v361
      %v385 = vpack.c.b16 %v364, %v363
      %v386 = vpack.c.b16 %v366, %v365
      %v387 = vpack.c.b16 %v368, %v367
      %v388 = vpack.c.b16 %v370, %v369
      %v389 = vpack.c.b16 %v372, %v371
      %v390 = vpack.c.b16 %v374, %v373
      %v439 = vunpack.c.l.b16 %v257
      %v440 = vunpack.c.h.b16 %v257
      %v441 = vunpack.c.l.b16 %v258
      %v442 = vunpack.c.h.b16 %v258
      %v443 = vunpack.c.l.b16 %v259
      %v444 = vunpack.c.h.b16 %v259
      %v445 = vunpack.c.l.b16 %v260
      %v446 = vunpack.c.h.b16 %v260
      %v447 = vunpack.c.l.b16 %v261
      %v448 = vunpack.c.h.b16 %v261
      %v449 = vunpack.c.l.b16 %v262
      %v450 = vunpack.c.h.b16 %v262
      %v451 = vunpack.c.l.b16 %v263
      %v452 = vunpack.c.h.b16 %v263
      %v453 = vunpack.c.l.b16 %v264
      %v454 = vunpack.c.h.b16 %v264
      %v455 = vunpack.c.l.b16 %v265
      %v456 = vunpack.c.h.b16 %v265
      %v457 = vunpack.c.l.b16 %v266
      %v458 = vunpack.c.h.b16 %v266
      %v459 = vunpack.c.l.b16 %v267
      %v460 = vunpack.c.h.b16 %v267
      %v461 = vunpack.c.l.b16 %v268
      %v462 = vunpack.c.h.b16 %v268
      %v463 = vunpack.c.l.b16 %v269
      %v464 = vunpack.c.h.b16 %v269
      %v465 = vunpack.c.l.b16 %v270
      %v466 = vunpack.c.h.b16 %v270
      %v467 = vunpack.c.l.b16 %v271
      %v468 = vunpack.c.h.b16 %v271
      %v469 = vunpack.c.l.b16 %v272
      %v470 = vunpack.c.h.b16 %v272
      %v471 = vunpack.c.l.b16 %v273
      %v472 = vunpack.c.h.b16 %v273
      %v473 = vunpack.c.l.b16 %v274
      %v474 = vunpack.c.h.b16 %v274
      %v475 = vunpack.c.l.b16 %v275
      %v476 = vunpack.c.h.b16 %v275
      %v477 = vunpack.c.l.b16 %v276
      %v478 = vunpack.c.h.b16 %v276
      %v479 = vunpack.c.l.b16 %v277
      %v480 = vunpack.c.h.b16 %v277
      %v481 = vunpack.c.l.b16 %v278
      %v482 = vunpack.c.h.b16 %v278
      %v483 = vunpack.c.l.b16 %v279
      %v484 = vunpack.c.h.b16 %v279
      %v485 = vunpack.c.l.b16 %v280
      %v486 = vunpack.c.h.b16 %v280
      %v487 = vunpack.c.l.b16 %v281
      %v488 = vunpack.c.h.b16 %v281
      %v489 = vunpack.c.l.b16 %v282
      %v490 = vunpack.c.h.b16 %v282
      %v491 = vunpack.c.l.b16 %v283
      %v492 = vunpack.c.h.b16 %v283
      %v493 = vunpack.c.l.b16 %v284
      %v494 = vunpack.c.h.b16 %v284
      %v495 = vunpack.c.l.b16 %v285
      %v496 = vunpack.c.h.b16 %v285
      %v497 = vunpack.c.l.b16 %v286
      %v498 = vunpack.c.h.b16 %v286
      %v499 = vunpack.c.l.b16 %v287
      %v500 = vunpack.c.h.b16 %v287
      %v501 = vunpack.c.l.b16 %v288
      %v502 = vunpack.c.h.b16 %v288
      %v503 = vpack.c.b16 %v443, %v439
      %v504 = vpack.c.b16 %v444, %v440
      %v505 = vpack.c.b16 %v445, %v441
      %v506 = vpack.c.b16 %v446, %v442
      %v507 = vpack.c.b16 %v451, %v447
      %v508 = vpack.c.b16 %v452, %v448
      %v509 = vpack.c.b16 %v453, %v449
      %v510 = vpack.c.b16 %v454, %v450
      %v511 = vpack.c.b16 %v459, %v455
      %v512 = vpack.c.b16 %v460, %v456
      %v513 = vpack.c.b16 %v461, %v457
      %v514 = vpack.c.b16 %v462, %v458
      %v515 = vpack.c.b16 %v467, %v463
      %v516 = vpack.c.b16 %v468, %v464
      %v517 = vpack.c.b16 %v469, %v465
      %v518 = vpack.c.b16 %v470, %v466
      %v519 = vpack.c.b16 %v475, %v471
      %v520 = vpack.c.b16 %v476, %v472
      %v521 = vpack.c.b16 %v477, %v473
      %v522 = vpack.c.b16 %v478, %v474
      %v523 = vpack.c.b16 %v483, %v479
      %v524 = vpack.c.b16 %v484, %v480
      %v525 = vpack.c.b16 %v485, %v481
      %v526 = vpack.c.b16 %v486, %v482
      %v527 = vpack.c.b16 %v491, %v487
      %v528 = vpack.c.b16 %v492, %v488
      %v529 = vpack.c.b16 %v493, %v489
      %v530 = vpack.c.b16 %v494, %v490
      %v531 = vpack.c.b16 %v499, %v495
      %v532 = vpack.c.b16 %v500, %v496
      %v533 = vpack.c.b16 %v501, %v497
      %v534 = vpack.c.b16 %v502, %v498
      %567 = vmatprep.subr.bf16.mxu0 %v532
      %568 = vmatpush1.bf16.msra.mxu0 %v531
      %569 = vmatprep.subr.bf16.mxu0 %v528
      %570 = vmatpush1.bf16.msra.mxu0 %v527
      %571 = vmatprep.subr.bf16.mxu0 %v524
      %572 = vmatpush1.bf16.msra.mxu0 %v523
      %573 = vmatprep.subr.bf16.mxu0 %v520
      %574 = vmatpush1.bf16.msra.mxu0 %v519
      %575 = vmatprep.subr.bf16.mxu0 %v516
      %576 = vmatpush1.bf16.msra.mxu0 %v515
      %577 = vmatprep.subr.bf16.mxu0 %v512
      %578 = vmatpush1.bf16.msra.mxu0 %v511
      %579 = vmatprep.subr.bf16.mxu0 %v508
      %580 = vmatpush1.bf16.msra.mxu0 %v507
      %581 = vmatprep.subr.bf16.mxu0 %v504
      %582 = vmatpush1.bf16.msra.mxu0 %v503
      %583 = vmatprep.subr.bf16.mxu0 0
      %584 = vmatpush2.bf16.msra.mxu0 0
      %585 = vmatprep.subr.bf16.mxu0 0
      %586 = vmatpush2.bf16.msra.mxu0 0
      %587 = vmatprep.subr.bf16.mxu0 0
      %588 = vmatpush2.bf16.msra.mxu0 0
      %589 = vmatprep.subr.bf16.mxu0 0
      %590 = vmatpush2.bf16.msra.mxu0 0
      %591 = vmatprep.subr.bf16.mxu0 0
      %592 = vmatpush2.bf16.msra.mxu0 0
      %593 = vmatprep.subr.bf16.mxu0 0
      %594 = vmatpush2.bf16.msra.mxu0 0
      %595 = vmatprep.subr.bf16.mxu0 0
      %596 = vmatpush2.bf16.msra.mxu0 0
      %597 = vmatprep.subr.bf16.mxu0 0
      %598 = vmatpush2.bf16.msra.mxu0 0
      %599 = vmatprep.mubr.bf16.mxu0 0
      %600 = vmatmul.mubr.bf16.gmra.mxu0 %v375
      %v601 = vpop.f32.mrf.mxu0
      %v602 = vadd.f32 %v294, %v601
      %v603 = vpop.f32.mrf.mxu0
      %v604 = vadd.f32 %v298, %v603
      %v605 = vpop.f32.mrf.mxu0
      %v606 = vadd.f32 %v294, %v605
      %v607 = vpop.f32.mrf.mxu0
      %v608 = vadd.f32 %v298, %v607
      %609 = vmatprep.mubr.bf16.mxu0 0
      %610 = vmatmul.mubr.bf16.gmra.mxu0 %v376
      %v611 = vpop.f32.mrf.mxu0
      %v612 = vadd.f32 %v294, %v611
      %v613 = vpop.f32.mrf.mxu0
      %v614 = vadd.f32 %v298, %v613
      %v615 = vpop.f32.mrf.mxu0
      %v616 = vadd.f32 %v294, %v615
      %v617 = vpop.f32.mrf.mxu0
      %v618 = vadd.f32 %v298, %v617
      %619 = vmatprep.mubr.bf16.mxu0 0
      %620 = vmatmul.mubr.bf16.gmra.mxu0 %v377
      %v621 = vpop.f32.mrf.mxu0
      %v622 = vadd.f32 %v294, %v621
      %v623 = vpop.f32.mrf.mxu0
      %v624 = vadd.f32 %v298, %v623
      %v625 = vpop.f32.mrf.mxu0
      %v626 = vadd.f32 %v294, %v625
      %v627 = vpop.f32.mrf.mxu0
      %v628 = vadd.f32 %v298, %v627
      %629 = vmatprep.mubr.bf16.mxu0 0
      %630 = vmatmul.mubr.bf16.gmra.mxu0 %v378
      %v631 = vpop.f32.mrf.mxu0
      %v632 = vadd.f32 %v294, %v631
      %v633 = vpop.f32.mrf.mxu0
      %v634 = vadd.f32 %v298, %v633
      %v635 = vpop.f32.mrf.mxu0
      %v636 = vadd.f32 %v294, %v635
      %v637 = vpop.f32.mrf.mxu0
      %v638 = vadd.f32 %v298, %v637
      %639 = vmatprep.mubr.bf16.mxu0 0
      %640 = vmatmul.mubr.bf16.gmra.mxu0 %v379
      %v641 = vpop.f32.mrf.mxu0
      %v642 = vadd.f32 %v294, %v641
      %v643 = vpop.f32.mrf.mxu0
      %v644 = vadd.f32 %v298, %v643
      %v645 = vpop.f32.mrf.mxu0
      %v646 = vadd.f32 %v294, %v645
      %v647 = vpop.f32.mrf.mxu0
      %v648 = vadd.f32 %v298, %v647
      %649 = vmatprep.mubr.bf16.mxu0 0
      %650 = vmatmul.mubr.bf16.gmra.mxu0 %v380
      %v651 = vpop.f32.mrf.mxu0
      %v652 = vadd.f32 %v294, %v651
      %v653 = vpop.f32.mrf.mxu0
      %v654 = vadd.f32 %v298, %v653
      %v655 = vpop.f32.mrf.mxu0
      %v656 = vadd.f32 %v294, %v655
      %v657 = vpop.f32.mrf.mxu0
      %v658 = vadd.f32 %v298, %v657
      %659 = vmatprep.mubr.bf16.mxu0 0
      %660 = vmatmul.mubr.bf16.gmra.mxu0 %v381
      %v661 = vpop.f32.mrf.mxu0
      %v662 = vadd.f32 %v294, %v661
      %v663 = vpop.f32.mrf.mxu0
      %v664 = vadd.f32 %v298, %v663
      %v665 = vpop.f32.mrf.mxu0
      %v666 = vadd.f32 %v294, %v665
      %v667 = vpop.f32.mrf.mxu0
      %v668 = vadd.f32 %v298, %v667
      %669 = vmatprep.mubr.bf16.mxu0 0
      %670 = vmatmul.mubr.bf16.gmra.mxu0 %v382
      %v671 = vpop.f32.mrf.mxu0
      %v672 = vadd.f32 %v294, %v671
      %v673 = vpop.f32.mrf.mxu0
      %v674 = vadd.f32 %v298, %v673
      %v675 = vpop.f32.mrf.mxu0
      %v676 = vadd.f32 %v294, %v675
      %v677 = vpop.f32.mrf.mxu0
      %v678 = vadd.f32 %v298, %v677
      %679 = vmatprep.mubr.bf16.mxu0 0
      %680 = vmatmul.mubr.bf16.gmra.mxu0 %v383
      %v681 = vpop.f32.mrf.mxu0
      %v682 = vadd.f32 %v294, %v681
      %v683 = vpop.f32.mrf.mxu0
      %v684 = vadd.f32 %v298, %v683
      %v685 = vpop.f32.mrf.mxu0
      %v686 = vadd.f32 %v294, %v685
      %v687 = vpop.f32.mrf.mxu0
      %v688 = vadd.f32 %v298, %v687
      %689 = vmatprep.mubr.bf16.mxu0 0
      %690 = vmatmul.mubr.bf16.gmra.mxu0 %v384
      %v691 = vpop.f32.mrf.mxu0
      %v692 = vadd.f32 %v294, %v691
      %v693 = vpop.f32.mrf.mxu0
      %v694 = vadd.f32 %v298, %v693
      %v695 = vpop.f32.mrf.mxu0
      %v696 = vadd.f32 %v294, %v695
      %v697 = vpop.f32.mrf.mxu0
      %v698 = vadd.f32 %v298, %v697
      %699 = vmatprep.mubr.bf16.mxu0 0
      %700 = vmatmul.mubr.bf16.gmra.mxu0 %v385
      %v701 = vpop.f32.mrf.mxu0
      %v702 = vadd.f32 %v294, %v701
      %v703 = vpop.f32.mrf.mxu0
      %v704 = vadd.f32 %v298, %v703
      %v705 = vpop.f32.mrf.mxu0
      %v706 = vadd.f32 %v294, %v705
      %v707 = vpop.f32.mrf.mxu0
      %v708 = vadd.f32 %v298, %v707
      %709 = vmatprep.mubr.bf16.mxu0 0
      %710 = vmatmul.mubr.bf16.gmra.mxu0 %v386
      %v711 = vpop.f32.mrf.mxu0
      %v712 = vadd.f32 %v294, %v711
      %v713 = vpop.f32.mrf.mxu0
      %v714 = vadd.f32 %v298, %v713
      %v715 = vpop.f32.mrf.mxu0
      %v716 = vadd.f32 %v294, %v715
      %v717 = vpop.f32.mrf.mxu0
      %v718 = vadd.f32 %v298, %v717
      %719 = vmatprep.mubr.bf16.mxu0 0
      %720 = vmatmul.mubr.bf16.gmra.mxu0 %v387
      %v721 = vpop.f32.mrf.mxu0
      %v722 = vadd.f32 %v294, %v721
      %v723 = vpop.f32.mrf.mxu0
      %v724 = vadd.f32 %v298, %v723
      %v725 = vpop.f32.mrf.mxu0
      %v726 = vadd.f32 %v294, %v725
      %v727 = vpop.f32.mrf.mxu0
      %v728 = vadd.f32 %v298, %v727
      %729 = vmatprep.mubr.bf16.mxu0 0
      %730 = vmatmul.mubr.bf16.gmra.mxu0 %v388
      %v731 = vpop.f32.mrf.mxu0
      %v732 = vadd.f32 %v294, %v731
      %v733 = vpop.f32.mrf.mxu0
      %v734 = vadd.f32 %v298, %v733
      %v735 = vpop.f32.mrf.mxu0
      %v736 = vadd.f32 %v294, %v735
      %v737 = vpop.f32.mrf.mxu0
      %v738 = vadd.f32 %v298, %v737
      %739 = vmatprep.mubr.bf16.mxu0 0
      %740 = vmatmul.mubr.bf16.gmra.mxu0 %v389
      %v741 = vpop.f32.mrf.mxu0
      %v742 = vadd.f32 %v294, %v741
      %v743 = vpop.f32.mrf.mxu0
      %v744 = vadd.f32 %v298, %v743
      %v745 = vpop.f32.mrf.mxu0
      %v746 = vadd.f32 %v294, %v745
      %v747 = vpop.f32.mrf.mxu0
      %v748 = vadd.f32 %v298, %v747
      %749 = vmatprep.mubr.bf16.mxu0 0
      %750 = vmatmul.mubr.bf16.gmra.mxu0 %v390
      %v751 = vpop.f32.mrf.mxu0
      %v752 = vadd.f32 %v294, %v751
      %v753 = vpop.f32.mrf.mxu0
      %v754 = vadd.f32 %v298, %v753
      %v755 = vpop.f32.mrf.mxu0
      %v756 = vadd.f32 %v294, %v755
      %v757 = vpop.f32.mrf.mxu0
      %v758 = vadd.f32 %v298, %v757
      %759 = vdwg.mxu0
      %760 = vmatprep.subr.bf16.mxu0 %v534
      %761 = vmatpush1.bf16.msra.mxu0 %v533
      %762 = vmatprep.subr.bf16.mxu0 %v530
      %763 = vmatpush1.bf16.msra.mxu0 %v529
      %764 = vmatprep.subr.bf16.mxu0 %v526
      %765 = vmatpush1.bf16.msra.mxu0 %v525
      %766 = vmatprep.subr.bf16.mxu0 %v522
      %767 = vmatpush1.bf16.msra.mxu0 %v521
      %768 = vmatprep.subr.bf16.mxu0 %v518
      %769 = vmatpush1.bf16.msra.mxu0 %v517
      %770 = vmatprep.subr.bf16.mxu0 %v514
      %771 = vmatpush1.bf16.msra.mxu0 %v513
      %772 = vmatprep.subr.bf16.mxu0 %v510
      %773 = vmatpush1.bf16.msra.mxu0 %v509
      %774 = vmatprep.subr.bf16.mxu0 %v506
      %775 = vmatpush1.bf16.msra.mxu0 %v505
      %776 = vmatprep.subr.bf16.mxu0 0
      %777 = vmatpush2.bf16.msra.mxu0 0
      %778 = vmatprep.subr.bf16.mxu0 0
      %779 = vmatpush2.bf16.msra.mxu0 0
      %780 = vmatprep.subr.bf16.mxu0 0
      %781 = vmatpush2.bf16.msra.mxu0 0
      %782 = vmatprep.subr.bf16.mxu0 0
      %783 = vmatpush2.bf16.msra.mxu0 0
      %784 = vmatprep.subr.bf16.mxu0 0
      %785 = vmatpush2.bf16.msra.mxu0 0
      %786 = vmatprep.subr.bf16.mxu0 0
      %787 = vmatpush2.bf16.msra.mxu0 0
      %788 = vmatprep.subr.bf16.mxu0 0
      %789 = vmatpush2.bf16.msra.mxu0 0
      %790 = vmatprep.subr.bf16.mxu0 0
      %791 = vmatpush2.bf16.msra.mxu0 0
      %792 = vmatprep.mubr.bf16.mxu0 0
      %793 = vmatmul.mubr.bf16.gmra.mxu0 %v375
      %v794 = vpop.f32.mrf.mxu0
      %v795 = vadd.f32 %v302, %v794
      %v796 = vpop.f32.mrf.mxu0
      %v797 = vadd.f32 %v306, %v796
      %v798 = vpop.f32.mrf.mxu0
      %v799 = vadd.f32 %v302, %v798
      %v800 = vpop.f32.mrf.mxu0
      %v801 = vadd.f32 %v306, %v800
      %802 = vmatprep.mubr.bf16.mxu0 0
      %803 = vmatmul.mubr.bf16.gmra.mxu0 %v376
      %v804 = vpop.f32.mrf.mxu0
      %v805 = vadd.f32 %v302, %v804
      %v806 = vpop.f32.mrf.mxu0
      %v807 = vadd.f32 %v306, %v806
      %v808 = vpop.f32.mrf.mxu0
      %v809 = vadd.f32 %v302, %v808
      %v810 = vpop.f32.mrf.mxu0
      %v811 = vadd.f32 %v306, %v810
      %812 = vmatprep.mubr.bf16.mxu0 0
      %813 = vmatmul.mubr.bf16.gmra.mxu0 %v377
      %v814 = vpop.f32.mrf.mxu0
      %v815 = vadd.f32 %v302, %v814
      %v816 = vpop.f32.mrf.mxu0
      %v817 = vadd.f32 %v306, %v816
      %v818 = vpop.f32.mrf.mxu0
      %v819 = vadd.f32 %v302, %v818
      %v820 = vpop.f32.mrf.mxu0
      %v821 = vadd.f32 %v306, %v820
      %822 = vmatprep.mubr.bf16.mxu0 0
      %823 = vmatmul.mubr.bf16.gmra.mxu0 %v378
      %v824 = vpop.f32.mrf.mxu0
      %v825 = vadd.f32 %v302, %v824
      %v826 = vpop.f32.mrf.mxu0
      %v827 = vadd.f32 %v306, %v826
      %v828 = vpop.f32.mrf.mxu0
      %v829 = vadd.f32 %v302, %v828
      %v830 = vpop.f32.mrf.mxu0
      %v831 = vadd.f32 %v306, %v830
      %832 = vmatprep.mubr.bf16.mxu0 0
      %833 = vmatmul.mubr.bf16.gmra.mxu0 %v379
      %v834 = vpop.f32.mrf.mxu0
      %v835 = vadd.f32 %v302, %v834
      %v836 = vpop.f32.mrf.mxu0
      %v837 = vadd.f32 %v306, %v836
      %v838 = vpop.f32.mrf.mxu0
      %v839 = vadd.f32 %v302, %v838
      %v840 = vpop.f32.mrf.mxu0
      %v841 = vadd.f32 %v306, %v840
      %842 = vmatprep.mubr.bf16.mxu0 0
      %843 = vmatmul.mubr.bf16.gmra.mxu0 %v380
      %v844 = vpop.f32.mrf.mxu0
      %v845 = vadd.f32 %v302, %v844
      %v846 = vpop.f32.mrf.mxu0
      %v847 = vadd.f32 %v306, %v846
      %v848 = vpop.f32.mrf.mxu0
      %v849 = vadd.f32 %v302, %v848
      %v850 = vpop.f32.mrf.mxu0
      %v851 = vadd.f32 %v306, %v850
      %852 = vmatprep.mubr.bf16.mxu0 0
      %853 = vmatmul.mubr.bf16.gmra.mxu0 %v381
      %v854 = vpop.f32.mrf.mxu0
      %v855 = vadd.f32 %v302, %v854
      %v856 = vpop.f32.mrf.mxu0
      %v857 = vadd.f32 %v306, %v856
      %v858 = vpop.f32.mrf.mxu0
      %v859 = vadd.f32 %v302, %v858
      %v860 = vpop.f32.mrf.mxu0
      %v861 = vadd.f32 %v306, %v860
      %862 = vmatprep.mubr.bf16.mxu0 0
      %863 = vmatmul.mubr.bf16.gmra.mxu0 %v382
      %v864 = vpop.f32.mrf.mxu0
      %v865 = vadd.f32 %v302, %v864
      %v866 = vpop.f32.mrf.mxu0
      %v867 = vadd.f32 %v306, %v866
      %v868 = vpop.f32.mrf.mxu0
      %v869 = vadd.f32 %v302, %v868
      %v870 = vpop.f32.mrf.mxu0
      %v871 = vadd.f32 %v306, %v870
      %872 = vmatprep.mubr.bf16.mxu0 0
      %873 = vmatmul.mubr.bf16.gmra.mxu0 %v383
      %v874 = vpop.f32.mrf.mxu0
      %v875 = vadd.f32 %v302, %v874
      %v876 = vpop.f32.mrf.mxu0
      %v877 = vadd.f32 %v306, %v876
      %v878 = vpop.f32.mrf.mxu0
      %v879 = vadd.f32 %v302, %v878
      %v880 = vpop.f32.mrf.mxu0
      %v881 = vadd.f32 %v306, %v880
      %882 = vmatprep.mubr.bf16.mxu0 0
      %883 = vmatmul.mubr.bf16.gmra.mxu0 %v384
      %v884 = vpop.f32.mrf.mxu0
      %v885 = vadd.f32 %v302, %v884
      %v886 = vpop.f32.mrf.mxu0
      %v887 = vadd.f32 %v306, %v886
      %v888 = vpop.f32.mrf.mxu0
      %v889 = vadd.f32 %v302, %v888
      %v890 = vpop.f32.mrf.mxu0
      %v891 = vadd.f32 %v306, %v890
      %892 = vmatprep.mubr.bf16.mxu0 0
      %893 = vmatmul.mubr.bf16.gmra.mxu0 %v385
      %v894 = vpop.f32.mrf.mxu0
      %v895 = vadd.f32 %v302, %v894
      %v896 = vpop.f32.mrf.mxu0
      %v897 = vadd.f32 %v306, %v896
      %v898 = vpop.f32.mrf.mxu0
      %v899 = vadd.f32 %v302, %v898
      %v900 = vpop.f32.mrf.mxu0
      %v901 = vadd.f32 %v306, %v900
      %902 = vmatprep.mubr.bf16.mxu0 0
      %903 = vmatmul.mubr.bf16.gmra.mxu0 %v386
      %v904 = vpop.f32.mrf.mxu0
      %v905 = vadd.f32 %v302, %v904
      %v906 = vpop.f32.mrf.mxu0
      %v907 = vadd.f32 %v306, %v906
      %v908 = vpop.f32.mrf.mxu0
      %v909 = vadd.f32 %v302, %v908
      %v910 = vpop.f32.mrf.mxu0
      %v911 = vadd.f32 %v306, %v910
      %912 = vmatprep.mubr.bf16.mxu0 0
      %913 = vmatmul.mubr.bf16.gmra.mxu0 %v387
      %v914 = vpop.f32.mrf.mxu0
      %v915 = vadd.f32 %v302, %v914
      %v916 = vpop.f32.mrf.mxu0
      %v917 = vadd.f32 %v306, %v916
      %v918 = vpop.f32.mrf.mxu0
      %v919 = vadd.f32 %v302, %v918
      %v920 = vpop.f32.mrf.mxu0
      %v921 = vadd.f32 %v306, %v920
      %922 = vmatprep.mubr.bf16.mxu0 0
      %923 = vmatmul.mubr.bf16.gmra.mxu0 %v388
      %v924 = vpop.f32.mrf.mxu0
      %v925 = vadd.f32 %v302, %v924
      %v926 = vpop.f32.mrf.mxu0
      %v927 = vadd.f32 %v306, %v926
      %v928 = vpop.f32.mrf.mxu0
      %v929 = vadd.f32 %v302, %v928
      %v930 = vpop.f32.mrf.mxu0
      %v931 = vadd.f32 %v306, %v930
      %932 = vmatprep.mubr.bf16.mxu0 0
      %933 = vmatmul.mubr.bf16.gmra.mxu0 %v389
      %v934 = vpop.f32.mrf.mxu0
      %v935 = vadd.f32 %v302, %v934
      %v936 = vpop.f32.mrf.mxu0
      %v937 = vadd.f32 %v306, %v936
      %v938 = vpop.f32.mrf.mxu0
      %v939 = vadd.f32 %v302, %v938
      %v940 = vpop.f32.mrf.mxu0
      %v941 = vadd.f32 %v306, %v940
      %942 = vmatprep.mubr.bf16.mxu0 0
      %943 = vmatmul.mubr.bf16.gmra.mxu0 %v390
      %v944 = vpop.f32.mrf.mxu0
      %v945 = vadd.f32 %v302, %v944
      %v946 = vpop.f32.mrf.mxu0
      %v947 = vadd.f32 %v306, %v946
      %v948 = vpop.f32.mrf.mxu0
      %v949 = vadd.f32 %v302, %v948
      %v950 = vpop.f32.mrf.mxu0
      %v951 = vadd.f32 %v306, %v950
      %952 = vdwg.mxu0
      %953 = vst [vmem:[#allocation2] sm:$0xff] %v602
      %954 = vst [vmem:[#allocation2 + $0x8] sm:$0xff] %v604
      %955 = vst [vmem:[#allocation2 + $0x10] sm:$0xff] %v795
      %956 = vst [vmem:[#allocation2 + $0x18] sm:$0xff] %v797
      %957 = vst [vmem:[#allocation2 + $0x20] sm:$0xff] %v606
      %958 = vst [vmem:[#allocation2 + $0x28] sm:$0xff] %v608
      %959 = vst [vmem:[#allocation2 + $0x30] sm:$0xff] %v799
      %960 = vst [vmem:[#allocation2 + $0x38] sm:$0xff] %v801
      %961 = vst [vmem:[#allocation2 + $0x40] sm:$0xff] %v612
      %962 = vst [vmem:[#allocation2 + $0x48] sm:$0xff] %v614
      %963 = vst [vmem:[#allocation2 + $0x50] sm:$0xff] %v805
      %964 = vst [vmem:[#allocation2 + $0x58] sm:$0xff] %v807
      %965 = vst [vmem:[#allocation2 + $0x60] sm:$0xff] %v616
      %966 = vst [vmem:[#allocation2 + $0x68] sm:$0xff] %v618
      %967 = vst [vmem:[#allocation2 + $0x70] sm:$0xff] %v809
      %968 = vst [vmem:[#allocation2 + $0x78] sm:$0xff] %v811
      %969 = vst [vmem:[#allocation2 + $0x80] sm:$0xff] %v622
      %970 = vst [vmem:[#allocation2 + $0x88] sm:$0xff] %v624
      %971 = vst [vmem:[#allocation2 + $0x90] sm:$0xff] %v815
      %972 = vst [vmem:[#allocation2 + $0x98] sm:$0xff] %v817
      %973 = vst [vmem:[#allocation2 + $0xa0] sm:$0xff] %v626
      %974 = vst [vmem:[#allocation2 + $0xa8] sm:$0xff] %v628
      %975 = vst [vmem:[#allocation2 + $0xb0] sm:$0xff] %v819
      %976 = vst [vmem:[#allocation2 + $0xb8] sm:$0xff] %v821
      %977 = vst [vmem:[#allocation2 + $0xc0] sm:$0xff] %v632
      %978 = vst [vmem:[#allocation2 + $0xc8] sm:$0xff] %v634
      %979 = vst [vmem:[#allocation2 + $0xd0] sm:$0xff] %v825
      %980 = vst [vmem:[#allocation2 + $0xd8] sm:$0xff] %v827
      %981 = vst [vmem:[#allocation2 + $0xe0] sm:$0xff] %v636
      %982 = vst [vmem:[#allocation2 + $0xe8] sm:$0xff] %v638
      %983 = vst [vmem:[#allocation2 + $0xf0] sm:$0xff] %v829
      %984 = vst [vmem:[#allocation2 + $0xf8] sm:$0xff] %v831
      %985 = vst [vmem:[#allocation2 + $0x100] sm:$0xff] %v642
      %986 = vst [vmem:[#allocation2 + $0x108] sm:$0xff] %v644
      %987 = vst [vmem:[#allocation2 + $0x110] sm:$0xff] %v835
      %988 = vst [vmem:[#allocation2 + $0x118] sm:$0xff] %v837
      %989 = vst [vmem:[#allocation2 + $0x120] sm:$0xff] %v646
      %990 = vst [vmem:[#allocation2 + $0x128] sm:$0xff] %v648
      %991 = vst [vmem:[#allocation2 + $0x130] sm:$0xff] %v839
      %992 = vst [vmem:[#allocation2 + $0x138] sm:$0xff] %v841
      %993 = vst [vmem:[#allocation2 + $0x140] sm:$0xff] %v652
      %994 = vst [vmem:[#allocation2 + $0x148] sm:$0xff] %v654
      %995 = vst [vmem:[#allocation2 + $0x150] sm:$0xff] %v845
      %996 = vst [vmem:[#allocation2 + $0x158] sm:$0xff] %v847
      %997 = vst [vmem:[#allocation2 + $0x160] sm:$0xff] %v656
      %998 = vst [vmem:[#allocation2 + $0x168] sm:$0xff] %v658
      %999 = vst [vmem:[#allocation2 + $0x170] sm:$0xff] %v849
      %1000 = vst [vmem:[#allocation2 + $0x178] sm:$0xff] %v851
      %1001 = vst [vmem:[#allocation2 + $0x180] sm:$0xff] %v662
      %1002 = vst [vmem:[#allocation2 + $0x188] sm:$0xff] %v664
      %1003 = vst [vmem:[#allocation2 + $0x190] sm:$0xff] %v855
      %1004 = vst [vmem:[#allocation2 + $0x198] sm:$0xff] %v857
      %1005 = vst [vmem:[#allocation2 + $0x1a0] sm:$0xff] %v666
      %1006 = vst [vmem:[#allocation2 + $0x1a8] sm:$0xff] %v668
      %1007 = vst [vmem:[#allocation2 + $0x1b0] sm:$0xff] %v859
      %1008 = vst [vmem:[#allocation2 + $0x1b8] sm:$0xff] %v861
      %1009 = vst [vmem:[#allocation2 + $0x1c0] sm:$0xff] %v672
      %1010 = vst [vmem:[#allocation2 + $0x1c8] sm:$0xff] %v674
      %1011 = vst [vmem:[#allocation2 + $0x1d0] sm:$0xff] %v865
      %1012 = vst [vmem:[#allocation2 + $0x1d8] sm:$0xff] %v867
      %1013 = vst [vmem:[#allocation2 + $0x1e0] sm:$0xff] %v676
      %1014 = vst [vmem:[#allocation2 + $0x1e8] sm:$0xff] %v678
      %1015 = vst [vmem:[#allocation2 + $0x1f0] sm:$0xff] %v869
      %1016 = vst [vmem:[#allocation2 + $0x1f8] sm:$0xff] %v871
      %1017 = vst [vmem:[#allocation2 + $0x200] sm:$0xff] %v682
      %1018 = vst [vmem:[#allocation2 + $0x208] sm:$0xff] %v684
      %1019 = vst [vmem:[#allocation2 + $0x210] sm:$0xff] %v875
      %1020 = vst [vmem:[#allocation2 + $0x218] sm:$0xff] %v877
      %1021 = vst [vmem:[#allocation2 + $0x220] sm:$0xff] %v686
      %1022 = vst [vmem:[#allocation2 + $0x228] sm:$0xff] %v688
      %1023 = vst [vmem:[#allocation2 + $0x230] sm:$0xff] %v879
      %1024 = vst [vmem:[#allocation2 + $0x238] sm:$0xff] %v881
      %1025 = vst [vmem:[#allocation2 + $0x240] sm:$0xff] %v692
      %1026 = vst [vmem:[#allocation2 + $0x248] sm:$0xff] %v694
      %1027 = vst [vmem:[#allocation2 + $0x250] sm:$0xff] %v885
      %1028 = vst [vmem:[#allocation2 + $0x258] sm:$0xff] %v887
      %1029 = vst [vmem:[#allocation2 + $0x260] sm:$0xff] %v696
      %1030 = vst [vmem:[#allocation2 + $0x268] sm:$0xff] %v698
      %1031 = vst [vmem:[#allocation2 + $0x270] sm:$0xff] %v889
      %1032 = vst [vmem:[#allocation2 + $0x278] sm:$0xff] %v891
      %1033 = vst [vmem:[#allocation2 + $0x280] sm:$0xff] %v702
      %1034 = vst [vmem:[#allocation2 + $0x288] sm:$0xff] %v704
      %1035 = vst [vmem:[#allocation2 + $0x290] sm:$0xff] %v895
      %1036 = vst [vmem:[#allocation2 + $0x298] sm:$0xff] %v897
      %1037 = vst [vmem:[#allocation2 + $0x2a0] sm:$0xff] %v706
      %1038 = vst [vmem:[#allocation2 + $0x2a8] sm:$0xff] %v708
      %1039 = vst [vmem:[#allocation2 + $0x2b0] sm:$0xff] %v899
      %1040 = vst [vmem:[#allocation2 + $0x2b8] sm:$0xff] %v901
      %1041 = vst [vmem:[#allocation2 + $0x2c0] sm:$0xff] %v712
      %1042 = vst [vmem:[#allocation2 + $0x2c8] sm:$0xff] %v714
      %1043 = vst [vmem:[#allocation2 + $0x2d0] sm:$0xff] %v905
      %1044 = vst [vmem:[#allocation2 + $0x2d8] sm:$0xff] %v907
      %1045 = vst [vmem:[#allocation2 + $0x2e0] sm:$0xff] %v716
      %1046 = vst [vmem:[#allocation2 + $0x2e8] sm:$0xff] %v718
      %1047 = vst [vmem:[#allocation2 + $0x2f0] sm:$0xff] %v909
      %1048 = vst [vmem:[#allocation2 + $0x2f8] sm:$0xff] %v911
      %1049 = vst [vmem:[#allocation2 + $0x300] sm:$0xff] %v722
      %1050 = vst [vmem:[#allocation2 + $0x308] sm:$0xff] %v724
      %1051 = vst [vmem:[#allocation2 + $0x310] sm:$0xff] %v915
      %1052 = vst [vmem:[#allocation2 + $0x318] sm:$0xff] %v917
      %1053 = vst [vmem:[#allocation2 + $0x320] sm:$0xff] %v726
      %1054 = vst [vmem:[#allocation2 + $0x328] sm:$0xff] %v728
      %1055 = vst [vmem:[#allocation2 + $0x330] sm:$0xff] %v919
      %1056 = vst [vmem:[#allocation2 + $0x338] sm:$0xff] %v921
      %1057 = vst [vmem:[#allocation2 + $0x340] sm:$0xff] %v732
      %1058 = vst [vmem:[#allocation2 + $0x348] sm:$0xff] %v734
      %1059 = vst [vmem:[#allocation2 + $0x350] sm:$0xff] %v925
      %1060 = vst [vmem:[#allocation2 + $0x358] sm:$0xff] %v927
      %1061 = vst [vmem:[#allocation2 + $0x360] sm:$0xff] %v736
      %1062 = vst [vmem:[#allocation2 + $0x368] sm:$0xff] %v738
      %1063 = vst [vmem:[#allocation2 + $0x370] sm:$0xff] %v929
      %1064 = vst [vmem:[#allocation2 + $0x378] sm:$0xff] %v931
      %1065 = vst [vmem:[#allocation2 + $0x380] sm:$0xff] %v742
      %1066 = vst [vmem:[#allocation2 + $0x388] sm:$0xff] %v744
      %1067 = vst [vmem:[#allocation2 + $0x390] sm:$0xff] %v935
      %1068 = vst [vmem:[#allocation2 + $0x398] sm:$0xff] %v937
      %1069 = vst [vmem:[#allocation2 + $0x3a0] sm:$0xff] %v746
      %1070 = vst [vmem:[#allocation2 + $0x3a8] sm:$0xff] %v748
      %1071 = vst [vmem:[#allocation2 + $0x3b0] sm:$0xff] %v939
      %1072 = vst [vmem:[#allocation2 + $0x3b8] sm:$0xff] %v941
      %1073 = vst [vmem:[#allocation2 + $0x3c0] sm:$0xff] %v752
      %1074 = vst [vmem:[#allocation2 + $0x3c8] sm:$0xff] %v754
      %1075 = vst [vmem:[#allocation2 + $0x3d0] sm:$0xff] %v945
      %1076 = vst [vmem:[#allocation2 + $0x3d8] sm:$0xff] %v947
      %1077 = vst [vmem:[#allocation2 + $0x3e0] sm:$0xff] %v756
      %1078 = vst [vmem:[#allocation2 + $0x3e8] sm:$0xff] %v758
      %1079 = vst [vmem:[#allocation2 + $0x3f0] sm:$0xff] %v949
      %1080 = vst [vmem:[#allocation2 + $0x3f8] sm:$0xff] %v951
      %s1081 = smul.u32 %s16, 16
      %v1082 = vld [vmem:[#allocation3] sm:$0xff]
      %v1083 = vld [vmem:[#allocation3 + $0x8] sm:$0xff]
      %v1084 = vld [vmem:[#allocation4] sm:$0xff]
      %v1085 = vld [vmem:[#allocation4 + $0x8] sm:$0xff]
      %v1086 = vld [vmem:[#allocation5] sm:$0xff]
      %v1087 = vld [vmem:[#allocation5 + $0x8] sm:$0xff]
      %v1088 = vld [vmem:[#allocation6] sm:$0xff]
      %v1089 = vld [vmem:[#allocation6 + $0x8] sm:$0xff]
      %v1090 = vpack.c.bf16 %v1083, %v1082
      %v1091 = vpack.c.bf16 %v1087, %v1086
      %v1092 = vld [vmem:[%s3] sm:$0xff]
      %v1093 = vld [vmem:[%s3 + $0x8] sm:$0xff]
      %v1094 = vld [vmem:[%s3 + $0x10] sm:$0xff]
      %v1095 = vld [vmem:[%s3 + $0x18] sm:$0xff]
      %v1096 = vld [vmem:[%s3 + $0x20] sm:$0xff]
      %v1097 = vld [vmem:[%s3 + $0x28] sm:$0xff]
      %v1098 = vld [vmem:[%s3 + $0x30] sm:$0xff]
      %v1099 = vld [vmem:[%s3 + $0x38] sm:$0xff]
      %v1100 = vld [vmem:[%s3 + $0x40] sm:$0xff]
      %v1101 = vld [vmem:[%s3 + $0x48] sm:$0xff]
      %v1102 = vld [vmem:[%s3 + $0x50] sm:$0xff]
      %v1103 = vld [vmem:[%s3 + $0x58] sm:$0xff]
      %v1104 = vld [vmem:[%s3 + $0x60] sm:$0xff]
      %v1105 = vld [vmem:[%s3 + $0x68] sm:$0xff]
      %v1106 = vld [vmem:[%s3 + $0x70] sm:$0xff]
      %v1107 = vld [vmem:[%s3 + $0x78] sm:$0xff]
      %v1108 = vld [vmem:[%s3 + $0x80] sm:$0xff]
      %v1109 = vld [vmem:[%s3 + $0x88] sm:$0xff]
      %v1110 = vld [vmem:[%s3 + $0x90] sm:$0xff]
      %v1111 = vld [vmem:[%s3 + $0x98] sm:$0xff]
      %v1112 = vld [vmem:[%s3 + $0xa0] sm:$0xff]
      %v1113 = vld [vmem:[%s3 + $0xa8] sm:$0xff]
      %v1114 = vld [vmem:[%s3 + $0xb0] sm:$0xff]
      %v1115 = vld [vmem:[%s3 + $0xb8] sm:$0xff]
      %v1116 = vld [vmem:[%s3 + $0xc0] sm:$0xff]
      %v1117 = vld [vmem:[%s3 + $0xc8] sm:$0xff]
      %v1118 = vld [vmem:[%s3 + $0xd0] sm:$0xff]
      %v1119 = vld [vmem:[%s3 + $0xd8] sm:$0xff]
      %v1120 = vld [vmem:[%s3 + $0xe0] sm:$0xff]
      %v1121 = vld [vmem:[%s3 + $0xe8] sm:$0xff]
      %v1122 = vld [vmem:[%s3 + $0xf0] sm:$0xff]
      %v1123 = vld [vmem:[%s3 + $0xf8] sm:$0xff]
      %v1124 = vld [vmem:[%s3 + $0x100] sm:$0xff]
      %v1125 = vld [vmem:[%s3 + $0x108] sm:$0xff]
      %v1126 = vld [vmem:[%s3 + $0x110] sm:$0xff]
      %v1127 = vld [vmem:[%s3 + $0x118] sm:$0xff]
      %v1128 = vld [vmem:[%s3 + $0x120] sm:$0xff]
      %v1129 = vld [vmem:[%s3 + $0x128] sm:$0xff]
      %v1130 = vld [vmem:[%s3 + $0x130] sm:$0xff]
      %v1131 = vld [vmem:[%s3 + $0x138] sm:$0xff]
      %v1132 = vld [vmem:[%s3 + $0x140] sm:$0xff]
      %v1133 = vld [vmem:[%s3 + $0x148] sm:$0xff]
      %v1134 = vld [vmem:[%s3 + $0x150] sm:$0xff]
      %v1135 = vld [vmem:[%s3 + $0x158] sm:$0xff]
      %v1136 = vld [vmem:[%s3 + $0x160] sm:$0xff]
      %v1137 = vld [vmem:[%s3 + $0x168] sm:$0xff]
      %v1138 = vld [vmem:[%s3 + $0x170] sm:$0xff]
      %v1139 = vld [vmem:[%s3 + $0x178] sm:$0xff]
      %v1140 = vld [vmem:[%s3 + $0x180] sm:$0xff]
      %v1141 = vld [vmem:[%s3 + $0x188] sm:$0xff]
      %v1142 = vld [vmem:[%s3 + $0x190] sm:$0xff]
      %v1143 = vld [vmem:[%s3 + $0x198] sm:$0xff]
      %v1144 = vld [vmem:[%s3 + $0x1a0] sm:$0xff]
      %v1145 = vld [vmem:[%s3 + $0x1a8] sm:$0xff]
      %v1146 = vld [vmem:[%s3 + $0x1b0] sm:$0xff]
      %v1147 = vld [vmem:[%s3 + $0x1b8] sm:$0xff]
      %v1148 = vld [vmem:[%s3 + $0x1c0] sm:$0xff]
      %v1149 = vld [vmem:[%s3 + $0x1c8] sm:$0xff]
      %v1150 = vld [vmem:[%s3 + $0x1d0] sm:$0xff]
      %v1151 = vld [vmem:[%s3 + $0x1d8] sm:$0xff]
      %v1152 = vld [vmem:[%s3 + $0x1e0] sm:$0xff]
      %v1153 = vld [vmem:[%s3 + $0x1e8] sm:$0xff]
      %v1154 = vld [vmem:[%s3 + $0x1f0] sm:$0xff]
      %v1155 = vld [vmem:[%s3 + $0x1f8] sm:$0xff]
      %v1156 = vld [vmem:[%s3 + $0x200] sm:$0xff]
      %v1157 = vld [vmem:[%s3 + $0x208] sm:$0xff]
      %v1158 = vld [vmem:[%s3 + $0x210] sm:$0xff]
      %v1159 = vld [vmem:[%s3 + $0x218] sm:$0xff]
      %v1160 = vld [vmem:[%s3 + $0x220] sm:$0xff]
      %v1161 = vld [vmem:[%s3 + $0x228] sm:$0xff]
      %v1162 = vld [vmem:[%s3 + $0x230] sm:$0xff]
      %v1163 = vld [vmem:[%s3 + $0x238] sm:$0xff]
      %v1164 = vld [vmem:[%s3 + $0x240] sm:$0xff]
      %v1165 = vld [vmem:[%s3 + $0x248] sm:$0xff]
      %v1166 = vld [vmem:[%s3 + $0x250] sm:$0xff]
      %v1167 = vld [vmem:[%s3 + $0x258] sm:$0xff]
      %v1168 = vld [vmem:[%s3 + $0x260] sm:$0xff]
      %v1169 = vld [vmem:[%s3 + $0x268] sm:$0xff]
      %v1170 = vld [vmem:[%s3 + $0x270] sm:$0xff]
      %v1171 = vld [vmem:[%s3 + $0x278] sm:$0xff]
      %v1172 = vld [vmem:[%s3 + $0x280] sm:$0xff]
      %v1173 = vld [vmem:[%s3 + $0x288] sm:$0xff]
      %v1174 = vld [vmem:[%s3 + $0x290] sm:$0xff]
      %v1175 = vld [vmem:[%s3 + $0x298] sm:$0xff]
      %v1176 = vld [vmem:[%s3 + $0x2a0] sm:$0xff]
      %v1177 = vld [vmem:[%s3 + $0x2a8] sm:$0xff]
      %v1178 = vld [vmem:[%s3 + $0x2b0] sm:$0xff]
      %v1179 = vld [vmem:[%s3 + $0x2b8] sm:$0xff]
      %v1180 = vld [vmem:[%s3 + $0x2c0] sm:$0xff]
      %v1181 = vld [vmem:[%s3 + $0x2c8] sm:$0xff]
      %v1182 = vld [vmem:[%s3 + $0x2d0] sm:$0xff]
      %v1183 = vld [vmem:[%s3 + $0x2d8] sm:$0xff]
      %v1184 = vld [vmem:[%s3 + $0x2e0] sm:$0xff]
      %v1185 = vld [vmem:[%s3 + $0x2e8] sm:$0xff]
      %v1186 = vld [vmem:[%s3 + $0x2f0] sm:$0xff]
      %v1187 = vld [vmem:[%s3 + $0x2f8] sm:$0xff]
      %v1188 = vld [vmem:[%s3 + $0x300] sm:$0xff]
      %v1189 = vld [vmem:[%s3 + $0x308] sm:$0xff]
      %v1190 = vld [vmem:[%s3 + $0x310] sm:$0xff]
      %v1191 = vld [vmem:[%s3 + $0x318] sm:$0xff]
      %v1192 = vld [vmem:[%s3 + $0x320] sm:$0xff]
      %v1193 = vld [vmem:[%s3 + $0x328] sm:$0xff]
      %v1194 = vld [vmem:[%s3 + $0x330] sm:$0xff]
      %v1195 = vld [vmem:[%s3 + $0x338] sm:$0xff]
      %v1196 = vld [vmem:[%s3 + $0x340] sm:$0xff]
      %v1197 = vld [vmem:[%s3 + $0x348] sm:$0xff]
      %v1198 = vld [vmem:[%s3 + $0x350] sm:$0xff]
      %v1199 = vld [vmem:[%s3 + $0x358] sm:$0xff]
      %v1200 = vld [vmem:[%s3 + $0x360] sm:$0xff]
      %v1201 = vld [vmem:[%s3 + $0x368] sm:$0xff]
      %v1202 = vld [vmem:[%s3 + $0x370] sm:$0xff]
      %v1203 = vld [vmem:[%s3 + $0x378] sm:$0xff]
      %v1204 = vld [vmem:[%s3 + $0x380] sm:$0xff]
      %v1205 = vld [vmem:[%s3 + $0x388] sm:$0xff]
      %v1206 = vld [vmem:[%s3 + $0x390] sm:$0xff]
      %v1207 = vld [vmem:[%s3 + $0x398] sm:$0xff]
      %v1208 = vld [vmem:[%s3 + $0x3a0] sm:$0xff]
      %v1209 = vld [vmem:[%s3 + $0x3a8] sm:$0xff]
      %v1210 = vld [vmem:[%s3 + $0x3b0] sm:$0xff]
      %v1211 = vld [vmem:[%s3 + $0x3b8] sm:$0xff]
      %v1212 = vld [vmem:[%s3 + $0x3c0] sm:$0xff]
      %v1213 = vld [vmem:[%s3 + $0x3c8] sm:$0xff]
      %v1214 = vld [vmem:[%s3 + $0x3d0] sm:$0xff]
      %v1215 = vld [vmem:[%s3 + $0x3d8] sm:$0xff]
      %v1216 = vld [vmem:[%s3 + $0x3e0] sm:$0xff]
      %v1217 = vld [vmem:[%s3 + $0x3e8] sm:$0xff]
      %v1218 = vld [vmem:[%s3 + $0x3f0] sm:$0xff]
      %v1219 = vld [vmem:[%s3 + $0x3f8] sm:$0xff]
      %v1348 = vunpack.c.l.b16 %v1092
      %v1349 = vunpack.c.h.b16 %v1092
      %v1350 = vunpack.c.l.b16 %v1093
      %v1351 = vunpack.c.h.b16 %v1093
      %v1352 = vunpack.c.l.b16 %v1094
      %v1353 = vunpack.c.h.b16 %v1094
      %v1354 = vunpack.c.l.b16 %v1095
      %v1355 = vunpack.c.h.b16 %v1095
      %v1356 = vunpack.c.l.b16 %v1096
      %v1357 = vunpack.c.h.b16 %v1096
      %v1358 = vunpack.c.l.b16 %v1097
      %v1359 = vunpack.c.h.b16 %v1097
      %v1360 = vunpack.c.l.b16 %v1098
      %v1361 = vunpack.c.h.b16 %v1098
      %v1362 = vunpack.c.l.b16 %v1099
      %v1363 = vunpack.c.h.b16 %v1099
      %v1364 = vunpack.c.l.b16 %v1100
      %v1365 = vunpack.c.h.b16 %v1100
      %v1366 = vunpack.c.l.b16 %v1101
      %v1367 = vunpack.c.h.b16 %v1101
      %v1368 = vunpack.c.l.b16 %v1102
      %v1369 = vunpack.c.h.b16 %v1102
      %v1370 = vunpack.c.l.b16 %v1103
      %v1371 = vunpack.c.h.b16 %v1103
      %v1372 = vunpack.c.l.b16 %v1104
      %v1373 = vunpack.c.h.b16 %v1104
      %v1374 = vunpack.c.l.b16 %v1105
      %v1375 = vunpack.c.h.b16 %v1105
      %v1376 = vunpack.c.l.b16 %v1106
      %v1377 = vunpack.c.h.b16 %v1106
      %v1378 = vunpack.c.l.b16 %v1107
      %v1379 = vunpack.c.h.b16 %v1107
      %v1380 = vunpack.c.l.b16 %v1108
      %v1381 = vunpack.c.h.b16 %v1108
      %v1382 = vunpack.c.l.b16 %v1109
      %v1383 = vunpack.c.h.b16 %v1109
      %v1384 = vunpack.c.l.b16 %v1110
      %v1385 = vunpack.c.h.b16 %v1110
      %v1386 = vunpack.c.l.b16 %v1111
      %v1387 = vunpack.c.h.b16 %v1111
      %v1388 = vunpack.c.l.b16 %v1112
      %v1389 = vunpack.c.h.b16 %v1112
      %v1390 = vunpack.c.l.b16 %v1113
      %v1391 = vunpack.c.h.b16 %v1113
      %v1392 = vunpack.c.l.b16 %v1114
      %v1393 = vunpack.c.h.b16 %v1114
      %v1394 = vunpack.c.l.b16 %v1115
      %v1395 = vunpack.c.h.b16 %v1115
      %v1396 = vunpack.c.l.b16 %v1116
      %v1397 = vunpack.c.h.b16 %v1116
      %v1398 = vunpack.c.l.b16 %v1117
      %v1399 = vunpack.c.h.b16 %v1117
      %v1400 = vunpack.c.l.b16 %v1118
      %v1401 = vunpack.c.h.b16 %v1118
      %v1402 = vunpack.c.l.b16 %v1119
      %v1403 = vunpack.c.h.b16 %v1119
      %v1404 = vunpack.c.l.b16 %v1120
      %v1405 = vunpack.c.h.b16 %v1120
      %v1406 = vunpack.c.l.b16 %v1121
      %v1407 = vunpack.c.h.b16 %v1121
      %v1408 = vunpack.c.l.b16 %v1122
      %v1409 = vunpack.c.h.b16 %v1122
      %v1410 = vunpack.c.l.b16 %v1123
      %v1411 = vunpack.c.h.b16 %v1123
      %v1412 = vunpack.c.l.b16 %v1124
      %v1413 = vunpack.c.h.b16 %v1124
      %v1414 = vunpack.c.l.b16 %v1125
      %v1415 = vunpack.c.h.b16 %v1125
      %v1416 = vunpack.c.l.b16 %v1126
      %v1417 = vunpack.c.h.b16 %v1126
      %v1418 = vunpack.c.l.b16 %v1127
      %v1419 = vunpack.c.h.b16 %v1127
      %v1420 = vunpack.c.l.b16 %v1128
      %v1421 = vunpack.c.h.b16 %v1128
      %v1422 = vunpack.c.l.b16 %v1129
      %v1423 = vunpack.c.h.b16 %v1129
      %v1424 = vunpack.c.l.b16 %v1130
      %v1425 = vunpack.c.h.b16 %v1130
      %v1426 = vunpack.c.l.b16 %v1131
      %v1427 = vunpack.c.h.b16 %v1131
      %v1428 = vunpack.c.l.b16 %v1132
      %v1429 = vunpack.c.h.b16 %v1132
      %v1430 = vunpack.c.l.b16 %v1133
      %v1431 = vunpack.c.h.b16 %v1133
      %v1432 = vunpack.c.l.b16 %v1134
      %v1433 = vunpack.c.h.b16 %v1134
      %v1434 = vunpack.c.l.b16 %v1135
      %v1435 = vunpack.c.h.b16 %v1135
      %v1436 = vunpack.c.l.b16 %v1136
      %v1437 = vunpack.c.h.b16 %v1136
      %v1438 = vunpack.c.l.b16 %v1137
      %v1439 = vunpack.c.h.b16 %v1137
      %v1440 = vunpack.c.l.b16 %v1138
      %v1441 = vunpack.c.h.b16 %v1138
      %v1442 = vunpack.c.l.b16 %v1139
      %v1443 = vunpack.c.h.b16 %v1139
      %v1444 = vunpack.c.l.b16 %v1140
      %v1445 = vunpack.c.h.b16 %v1140
      %v1446 = vunpack.c.l.b16 %v1141
      %v1447 = vunpack.c.h.b16 %v1141
      %v1448 = vunpack.c.l.b16 %v1142
      %v1449 = vunpack.c.h.b16 %v1142
      %v1450 = vunpack.c.l.b16 %v1143
      %v1451 = vunpack.c.h.b16 %v1143
      %v1452 = vunpack.c.l.b16 %v1144
      %v1453 = vunpack.c.h.b16 %v1144
      %v1454 = vunpack.c.l.b16 %v1145
      %v1455 = vunpack.c.h.b16 %v1145
      %v1456 = vunpack.c.l.b16 %v1146
      %v1457 = vunpack.c.h.b16 %v1146
      %v1458 = vunpack.c.l.b16 %v1147
      %v1459 = vunpack.c.h.b16 %v1147
      %v1460 = vunpack.c.l.b16 %v1148
      %v1461 = vunpack.c.h.b16 %v1148
      %v1462 = vunpack.c.l.b16 %v1149
      %v1463 = vunpack.c.h.b16 %v1149
      %v1464 = vunpack.c.l.b16 %v1150
      %v1465 = vunpack.c.h.b16 %v1150
      %v1466 = vunpack.c.l.b16 %v1151
      %v1467 = vunpack.c.h.b16 %v1151
      %v1468 = vunpack.c.l.b16 %v1152
      %v1469 = vunpack.c.h.b16 %v1152
      %v1470 = vunpack.c.l.b16 %v1153
      %v1471 = vunpack.c.h.b16 %v1153
      %v1472 = vunpack.c.l.b16 %v1154
      %v1473 = vunpack.c.h.b16 %v1154
      %v1474 = vunpack.c.l.b16 %v1155
      %v1475 = vunpack.c.h.b16 %v1155
      %v1476 = vunpack.c.l.b16 %v1156
      %v1477 = vunpack.c.h.b16 %v1156
      %v1478 = vunpack.c.l.b16 %v1157
      %v1479 = vunpack.c.h.b16 %v1157
      %v1480 = vunpack.c.l.b16 %v1158
      %v1481 = vunpack.c.h.b16 %v1158
      %v1482 = vunpack.c.l.b16 %v1159
      %v1483 = vunpack.c.h.b16 %v1159
      %v1484 = vunpack.c.l.b16 %v1160
      %v1485 = vunpack.c.h.b16 %v1160
      %v1486 = vunpack.c.l.b16 %v1161
      %v1487 = vunpack.c.h.b16 %v1161
      %v1488 = vunpack.c.l.b16 %v1162
      %v1489 = vunpack.c.h.b16 %v1162
      %v1490 = vunpack.c.l.b16 %v1163
      %v1491 = vunpack.c.h.b16 %v1163
      %v1492 = vunpack.c.l.b16 %v1164
      %v1493 = vunpack.c.h.b16 %v1164
      %v1494 = vunpack.c.l.b16 %v1165
      %v1495 = vunpack.c.h.b16 %v1165
      %v1496 = vunpack.c.l.b16 %v1166
      %v1497 = vunpack.c.h.b16 %v1166
      %v1498 = vunpack.c.l.b16 %v1167
      %v1499 = vunpack.c.h.b16 %v1167
      %v1500 = vunpack.c.l.b16 %v1168
      %v1501 = vunpack.c.h.b16 %v1168
      %v1502 = vunpack.c.l.b16 %v1169
      %v1503 = vunpack.c.h.b16 %v1169
      %v1504 = vunpack.c.l.b16 %v1170
      %v1505 = vunpack.c.h.b16 %v1170
      %v1506 = vunpack.c.l.b16 %v1171
      %v1507 = vunpack.c.h.b16 %v1171
      %v1508 = vunpack.c.l.b16 %v1172
      %v1509 = vunpack.c.h.b16 %v1172
      %v1510 = vunpack.c.l.b16 %v1173
      %v1511 = vunpack.c.h.b16 %v1173
      %v1512 = vunpack.c.l.b16 %v1174
      %v1513 = vunpack.c.h.b16 %v1174
      %v1514 = vunpack.c.l.b16 %v1175
      %v1515 = vunpack.c.h.b16 %v1175
      %v1516 = vunpack.c.l.b16 %v1176
      %v1517 = vunpack.c.h.b16 %v1176
      %v1518 = vunpack.c.l.b16 %v1177
      %v1519 = vunpack.c.h.b16 %v1177
      %v1520 = vunpack.c.l.b16 %v1178
      %v1521 = vunpack.c.h.b16 %v1178
      %v1522 = vunpack.c.l.b16 %v1179
      %v1523 = vunpack.c.h.b16 %v1179
      %v1524 = vunpack.c.l.b16 %v1180
      %v1525 = vunpack.c.h.b16 %v1180
      %v1526 = vunpack.c.l.b16 %v1181
      %v1527 = vunpack.c.h.b16 %v1181
      %v1528 = vunpack.c.l.b16 %v1182
      %v1529 = vunpack.c.h.b16 %v1182
      %v1530 = vunpack.c.l.b16 %v1183
      %v1531 = vunpack.c.h.b16 %v1183
      %v1532 = vunpack.c.l.b16 %v1184
      %v1533 = vunpack.c.h.b16 %v1184
      %v1534 = vunpack.c.l.b16 %v1185
      %v1535 = vunpack.c.h.b16 %v1185
      %v1536 = vunpack.c.l.b16 %v1186
      %v1537 = vunpack.c.h.b16 %v1186
      %v1538 = vunpack.c.l.b16 %v1187
      %v1539 = vunpack.c.h.b16 %v1187
      %v1540 = vunpack.c.l.b16 %v1188
      %v1541 = vunpack.c.h.b16 %v1188
      %v1542 = vunpack.c.l.b16 %v1189
      %v1543 = vunpack.c.h.b16 %v1189
      %v1544 = vunpack.c.l.b16 %v1190
      %v1545 = vunpack.c.h.b16 %v1190
      %v1546 = vunpack.c.l.b16 %v1191
      %v1547 = vunpack.c.h.b16 %v1191
      %v1548 = vunpack.c.l.b16 %v1192
      %v1549 = vunpack.c.h.b16 %v1192
      %v1550 = vunpack.c.l.b16 %v1193
      %v1551 = vunpack.c.h.b16 %v1193
      %v1552 = vunpack.c.l.b16 %v1194
      %v1553 = vunpack.c.h.b16 %v1194
      %v1554 = vunpack.c.l.b16 %v1195
      %v1555 = vunpack.c.h.b16 %v1195
      %v1556 = vunpack.c.l.b16 %v1196
      %v1557 = vunpack.c.h.b16 %v1196
      %v1558 = vunpack.c.l.b16 %v1197
      %v1559 = vunpack.c.h.b16 %v1197
      %v1560 = vunpack.c.l.b16 %v1198
      %v1561 = vunpack.c.h.b16 %v1198
      %v1562 = vunpack.c.l.b16 %v1199
      %v1563 = vunpack.c.h.b16 %v1199
      %v1564 = vunpack.c.l.b16 %v1200
      %v1565 = vunpack.c.h.b16 %v1200
      %v1566 = vunpack.c.l.b16 %v1201
      %v1567 = vunpack.c.h.b16 %v1201
      %v1568 = vunpack.c.l.b16 %v1202
      %v1569 = vunpack.c.h.b16 %v1202
      %v1570 = vunpack.c.l.b16 %v1203
      %v1571 = vunpack.c.h.b16 %v1203
      %v1572 = vunpack.c.l.b16 %v1204
      %v1573 = vunpack.c.h.b16 %v1204
      %v1574 = vunpack.c.l.b16 %v1205
      %v1575 = vunpack.c.h.b16 %v1205
      %v1576 = vunpack.c.l.b16 %v1206
      %v1577 = vunpack.c.h.b16 %v1206
      %v1578 = vunpack.c.l.b16 %v1207
      %v1579 = vunpack.c.h.b16 %v1207
      %v1580 = vunpack.c.l.b16 %v1208
      %v1581 = vunpack.c.h.b16 %v1208
      %v1582 = vunpack.c.l.b16 %v1209
      %v1583 = vunpack.c.h.b16 %v1209
      %v1584 = vunpack.c.l.b16 %v1210
      %v1585 = vunpack.c.h.b16 %v1210
      %v1586 = vunpack.c.l.b16 %v1211
      %v1587 = vunpack.c.h.b16 %v1211
      %v1588 = vunpack.c.l.b16 %v1212
      %v1589 = vunpack.c.h.b16 %v1212
      %v1590 = vunpack.c.l.b16 %v1213
      %v1591 = vunpack.c.h.b16 %v1213
      %v1592 = vunpack.c.l.b16 %v1214
      %v1593 = vunpack.c.h.b16 %v1214
      %v1594 = vunpack.c.l.b16 %v1215
      %v1595 = vunpack.c.h.b16 %v1215
      %v1596 = vunpack.c.l.b16 %v1216
      %v1597 = vunpack.c.h.b16 %v1216
      %v1598 = vunpack.c.l.b16 %v1217
      %v1599 = vunpack.c.h.b16 %v1217
      %v1600 = vunpack.c.l.b16 %v1218
      %v1601 = vunpack.c.h.b16 %v1218
      %v1602 = vunpack.c.l.b16 %v1219
      %v1603 = vunpack.c.h.b16 %v1219
      %v1604 = vpack.c.b16 %v1356, %v1348
      %v1605 = vpack.c.b16 %v1357, %v1349
      %v1606 = vpack.c.b16 %v1358, %v1350
      %v1607 = vpack.c.b16 %v1359, %v1351
      %v1608 = vpack.c.b16 %v1360, %v1352
      %v1609 = vpack.c.b16 %v1361, %v1353
      %v1610 = vpack.c.b16 %v1362, %v1354
      %v1611 = vpack.c.b16 %v1363, %v1355
      %v1612 = vpack.c.b16 %v1372, %v1364
      %v1613 = vpack.c.b16 %v1373, %v1365
      %v1614 = vpack.c.b16 %v1374, %v1366
      %v1615 = vpack.c.b16 %v1375, %v1367
      %v1616 = vpack.c.b16 %v1376, %v1368
      %v1617 = vpack.c.b16 %v1377, %v1369
      %v1618 = vpack.c.b16 %v1378, %v1370
      %v1619 = vpack.c.b16 %v1379, %v1371
      %v1620 = vpack.c.b16 %v1388, %v1380
      %v1621 = vpack.c.b16 %v1389, %v1381
      %v1622 = vpack.c.b16 %v1390, %v1382
      %v1623 = vpack.c.b16 %v1391, %v1383
      %v1624 = vpack.c.b16 %v1392, %v1384
      %v1625 = vpack.c.b16 %v1393, %v1385
      %v1626 = vpack.c.b16 %v1394, %v1386
      %v1627 = vpack.c.b16 %v1395, %v1387
      %v1628 = vpack.c.b16 %v1404, %v1396
      %v1629 = vpack.c.b16 %v1405, %v1397
      %v1630 = vpack.c.b16 %v1406, %v1398
      %v1631 = vpack.c.b16 %v1407, %v1399
      %v1632 = vpack.c.b16 %v1408, %v1400
      %v1633 = vpack.c.b16 %v1409, %v1401
      %v1634 = vpack.c.b16 %v1410, %v1402
      %v1635 = vpack.c.b16 %v1411, %v1403
      %v1636 = vpack.c.b16 %v1420, %v1412
      %v1637 = vpack.c.b16 %v1421, %v1413
      %v1638 = vpack.c.b16 %v1422, %v1414
      %v1639 = vpack.c.b16 %v1423, %v1415
      %v1640 = vpack.c.b16 %v1424, %v1416
      %v1641 = vpack.c.b16 %v1425, %v1417
      %v1642 = vpack.c.b16 %v1426, %v1418
      %v1643 = vpack.c.b16 %v1427, %v1419
      %v1644 = vpack.c.b16 %v1436, %v1428
      %v1645 = vpack.c.b16 %v1437, %v1429
      %v1646 = vpack.c.b16 %v1438, %v1430
      %v1647 = vpack.c.b16 %v1439, %v1431
      %v1648 = vpack.c.b16 %v1440, %v1432
      %v1649 = vpack.c.b16 %v1441, %v1433
      %v1650 = vpack.c.b16 %v1442, %v1434
      %v1651 = vpack.c.b16 %v1443, %v1435
      %v1652 = vpack.c.b16 %v1452, %v1444
      %v1653 = vpack.c.b16 %v1453, %v1445
      %v1654 = vpack.c.b16 %v1454, %v1446
      %v1655 = vpack.c.b16 %v1455, %v1447
      %v1656 = vpack.c.b16 %v1456, %v1448
      %v1657 = vpack.c.b16 %v1457, %v1449
      %v1658 = vpack.c.b16 %v1458, %v1450
      %v1659 = vpack.c.b16 %v1459, %v1451
      %v1660 = vpack.c.b16 %v1468, %v1460
      %v1661 = vpack.c.b16 %v1469, %v1461
      %v1662 = vpack.c.b16 %v1470, %v1462
      %v1663 = vpack.c.b16 %v1471, %v1463
      %v1664 = vpack.c.b16 %v1472, %v1464
      %v1665 = vpack.c.b16 %v1473, %v1465
      %v1666 = vpack.c.b16 %v1474, %v1466
      %v1667 = vpack.c.b16 %v1475, %v1467
      %v1668 = vpack.c.b16 %v1484, %v1476
      %v1669 = vpack.c.b16 %v1485, %v1477
      %v1670 = vpack.c.b16 %v1486, %v1478
      %v1671 = vpack.c.b16 %v1487, %v1479
      %v1672 = vpack.c.b16 %v1488, %v1480
      %v1673 = vpack.c.b16 %v1489, %v1481
      %v1674 = vpack.c.b16 %v1490, %v1482
      %v1675 = vpack.c.b16 %v1491, %v1483
      %v1676 = vpack.c.b16 %v1500, %v1492
      %v1677 = vpack.c.b16 %v1501, %v1493
      %v1678 = vpack.c.b16 %v1502, %v1494
      %v1679 = vpack.c.b16 %v1503, %v1495
      %v1680 = vpack.c.b16 %v1504, %v1496
      %v1681 = vpack.c.b16 %v1505, %v1497
      %v1682 = vpack.c.b16 %v1506, %v1498
      %v1683 = vpack.c.b16 %v1507, %v1499
      %v1684 = vpack.c.b16 %v1516, %v1508
      %v1685 = vpack.c.b16 %v1517, %v1509
      %v1686 = vpack.c.b16 %v1518, %v1510
      %v1687 = vpack.c.b16 %v1519, %v1511
      %v1688 = vpack.c.b16 %v1520, %v1512
      %v1689 = vpack.c.b16 %v1521, %v1513
      %v1690 = vpack.c.b16 %v1522, %v1514
      %v1691 = vpack.c.b16 %v1523, %v1515
      %v1692 = vpack.c.b16 %v1532, %v1524
      %v1693 = vpack.c.b16 %v1533, %v1525
      %v1694 = vpack.c.b16 %v1534, %v1526
      %v1695 = vpack.c.b16 %v1535, %v1527
      %v1696 = vpack.c.b16 %v1536, %v1528
      %v1697 = vpack.c.b16 %v1537, %v1529
      %v1698 = vpack.c.b16 %v1538, %v1530
      %v1699 = vpack.c.b16 %v1539, %v1531
      %v1700 = vpack.c.b16 %v1548, %v1540
      %v1701 = vpack.c.b16 %v1549, %v1541
      %v1702 = vpack.c.b16 %v1550, %v1542
      %v1703 = vpack.c.b16 %v1551, %v1543
      %v1704 = vpack.c.b16 %v1552, %v1544
      %v1705 = vpack.c.b16 %v1553, %v1545
      %v1706 = vpack.c.b16 %v1554, %v1546
      %v1707 = vpack.c.b16 %v1555, %v1547
      %v1708 = vpack.c.b16 %v1564, %v1556
      %v1709 = vpack.c.b16 %v1565, %v1557
      %v1710 = vpack.c.b16 %v1566, %v1558
      %v1711 = vpack.c.b16 %v1567, %v1559
      %v1712 = vpack.c.b16 %v1568, %v1560
      %v1713 = vpack.c.b16 %v1569, %v1561
      %v1714 = vpack.c.b16 %v1570, %v1562
      %v1715 = vpack.c.b16 %v1571, %v1563
      %v1716 = vpack.c.b16 %v1580, %v1572
      %v1717 = vpack.c.b16 %v1581, %v1573
      %v1718 = vpack.c.b16 %v1582, %v1574
      %v1719 = vpack.c.b16 %v1583, %v1575
      %v1720 = vpack.c.b16 %v1584, %v1576
      %v1721 = vpack.c.b16 %v1585, %v1577
      %v1722 = vpack.c.b16 %v1586, %v1578
      %v1723 = vpack.c.b16 %v1587, %v1579
      %v1724 = vpack.c.b16 %v1596, %v1588
      %v1725 = vpack.c.b16 %v1597, %v1589
      %v1726 = vpack.c.b16 %v1598, %v1590
      %v1727 = vpack.c.b16 %v1599, %v1591
      %v1728 = vpack.c.b16 %v1600, %v1592
      %v1729 = vpack.c.b16 %v1601, %v1593
      %v1730 = vpack.c.b16 %v1602, %v1594
      %v1731 = vpack.c.b16 %v1603, %v1595
      %1860 = vmatprep.subr.bf16.mxu0 %v1661
      %1861 = vmatpush1.bf16.msra.mxu0 %v1660
      %1862 = vmatprep.subr.bf16.mxu0 %v1653
      %1863 = vmatpush1.bf16.msra.mxu0 %v1652
      %1864 = vmatprep.subr.bf16.mxu0 %v1645
      %1865 = vmatpush1.bf16.msra.mxu0 %v1644
      %1866 = vmatprep.subr.bf16.mxu0 %v1637
      %1867 = vmatpush1.bf16.msra.mxu0 %v1636
      %1868 = vmatprep.subr.bf16.mxu0 %v1629
      %1869 = vmatpush1.bf16.msra.mxu0 %v1628
      %1870 = vmatprep.subr.bf16.mxu0 %v1621
      %1871 = vmatpush1.bf16.msra.mxu0 %v1620
      %1872 = vmatprep.subr.bf16.mxu0 %v1613
      %1873 = vmatpush1.bf16.msra.mxu0 %v1612
      %1874 = vmatprep.subr.bf16.mxu0 %v1605
      %1875 = vmatpush1.bf16.msra.mxu0 %v1604
      %1876 = vmatprep.subr.bf16.mxu0 %v1725
      %1877 = vmatpush2.bf16.msra.mxu0 %v1724
      %1878 = vmatprep.subr.bf16.mxu0 %v1717
      %1879 = vmatpush2.bf16.msra.mxu0 %v1716
      %1880 = vmatprep.subr.bf16.mxu0 %v1709
      %1881 = vmatpush2.bf16.msra.mxu0 %v1708
      %1882 = vmatprep.subr.bf16.mxu0 %v1701
      %1883 = vmatpush2.bf16.msra.mxu0 %v1700
      %1884 = vmatprep.subr.bf16.mxu0 %v1693
      %1885 = vmatpush2.bf16.msra.mxu0 %v1692
      %1886 = vmatprep.subr.bf16.mxu0 %v1685
      %1887 = vmatpush2.bf16.msra.mxu0 %v1684
      %1888 = vmatprep.subr.bf16.mxu0 %v1677
      %1889 = vmatpush2.bf16.msra.mxu0 %v1676
      %1890 = vmatprep.subr.bf16.mxu0 %v1669
      %1891 = vmatpush2.bf16.msra.mxu0 %v1668
      %1892 = vmatprep.mubr.bf16.mxu0 %v1091
      %1893 = vmatmul.mubr.bf16.gmra.mxu0 %v1090
      %v1894 = vpop.f32.mrf.mxu0
      %v1895 = vadd.f32 0.0, %v1894
      %v1896 = vpop.f32.mrf.mxu0
      %v1897 = vadd.f32 0.0, %v1896
      %v1898 = vpop.f32.mrf.mxu0
      %v1899 = vadd.f32 0.0, %v1898
      %v1900 = vpop.f32.mrf.mxu0
      %v1901 = vadd.f32 0.0, %v1900
      %1902 = vdwg.mxu0
      %1903 = vmatprep.subr.bf16.mxu0 %v1663
      %1904 = vmatpush1.bf16.msra.mxu0 %v1662
      %1905 = vmatprep.subr.bf16.mxu0 %v1655
      %1906 = vmatpush1.bf16.msra.mxu0 %v1654
      %1907 = vmatprep.subr.bf16.mxu0 %v1647
      %1908 = vmatpush1.bf16.msra.mxu0 %v1646
      %1909 = vmatprep.subr.bf16.mxu0 %v1639
      %1910 = vmatpush1.bf16.msra.mxu0 %v1638
      %1911 = vmatprep.subr.bf16.mxu0 %v1631
      %1912 = vmatpush1.bf16.msra.mxu0 %v1630
      %1913 = vmatprep.subr.bf16.mxu0 %v1623
      %1914 = vmatpush1.bf16.msra.mxu0 %v1622
      %1915 = vmatprep.subr.bf16.mxu0 %v1615
      %1916 = vmatpush1.bf16.msra.mxu0 %v1614
      %1917 = vmatprep.subr.bf16.mxu0 %v1607
      %1918 = vmatpush1.bf16.msra.mxu0 %v1606
      %1919 = vmatprep.subr.bf16.mxu0 %v1727
      %1920 = vmatpush2.bf16.msra.mxu0 %v1726
      %1921 = vmatprep.subr.bf16.mxu0 %v1719
      %1922 = vmatpush2.bf16.msra.mxu0 %v1718
      %1923 = vmatprep.subr.bf16.mxu0 %v1711
      %1924 = vmatpush2.bf16.msra.mxu0 %v1710
      %1925 = vmatprep.subr.bf16.mxu0 %v1703
      %1926 = vmatpush2.bf16.msra.mxu0 %v1702
      %1927 = vmatprep.subr.bf16.mxu0 %v1695
      %1928 = vmatpush2.bf16.msra.mxu0 %v1694
      %1929 = vmatprep.subr.bf16.mxu0 %v1687
      %1930 = vmatpush2.bf16.msra.mxu0 %v1686
      %1931 = vmatprep.subr.bf16.mxu0 %v1679
      %1932 = vmatpush2.bf16.msra.mxu0 %v1678
      %1933 = vmatprep.subr.bf16.mxu0 %v1671
      %1934 = vmatpush2.bf16.msra.mxu0 %v1670
      %1935 = vmatprep.mubr.bf16.mxu0 %v1091
      %1936 = vmatmul.mubr.bf16.gmra.mxu0 %v1090
      %v1937 = vpop.f32.mrf.mxu0
      %v1938 = vadd.f32 0.0, %v1937
      %v1939 = vpop.f32.mrf.mxu0
      %v1940 = vadd.f32 0.0, %v1939
      %v1941 = vpop.f32.mrf.mxu0
      %v1942 = vadd.f32 0.0, %v1941
      %v1943 = vpop.f32.mrf.mxu0
      %v1944 = vadd.f32 0.0, %v1943
      %1945 = vdwg.mxu0
      %1946 = vmatprep.subr.bf16.mxu0 %v1665
      %1947 = vmatpush1.bf16.msra.mxu0 %v1664
      %1948 = vmatprep.subr.bf16.mxu0 %v1657
      %1949 = vmatpush1.bf16.msra.mxu0 %v1656
      %1950 = vmatprep.subr.bf16.mxu0 %v1649
      %1951 = vmatpush1.bf16.msra.mxu0 %v1648
      %1952 = vmatprep.subr.bf16.mxu0 %v1641
      %1953 = vmatpush1.bf16.msra.mxu0 %v1640
      %1954 = vmatprep.subr.bf16.mxu0 %v1633
      %1955 = vmatpush1.bf16.msra.mxu0 %v1632
      %1956 = vmatprep.subr.bf16.mxu0 %v1625
      %1957 = vmatpush1.bf16.msra.mxu0 %v1624
      %1958 = vmatprep.subr.bf16.mxu0 %v1617
      %1959 = vmatpush1.bf16.msra.mxu0 %v1616
      %1960 = vmatprep.subr.bf16.mxu0 %v1609
      %1961 = vmatpush1.bf16.msra.mxu0 %v1608
      %1962 = vmatprep.subr.bf16.mxu0 %v1729
      %1963 = vmatpush2.bf16.msra.mxu0 %v1728
      %1964 = vmatprep.subr.bf16.mxu0 %v1721
      %1965 = vmatpush2.bf16.msra.mxu0 %v1720
      %1966 = vmatprep.subr.bf16.mxu0 %v1713
      %1967 = vmatpush2.bf16.msra.mxu0 %v1712
      %1968 = vmatprep.subr.bf16.mxu0 %v1705
      %1969 = vmatpush2.bf16.msra.mxu0 %v1704
      %1970 = vmatprep.subr.bf16.mxu0 %v1697
      %1971 = vmatpush2.bf16.msra.mxu0 %v1696
      %1972 = vmatprep.subr.bf16.mxu0 %v1689
      %1973 = vmatpush2.bf16.msra.mxu0 %v1688
      %1974 = vmatprep.subr.bf16.mxu0 %v1681
      %1975 = vmatpush2.bf16.msra.mxu0 %v1680
      %1976 = vmatprep.subr.bf16.mxu0 %v1673
      %1977 = vmatpush2.bf16.msra.mxu0 %v1672
      %1978 = vmatprep.mubr.bf16.mxu0 %v1091
      %1979 = vmatmul.mubr.bf16.gmra.mxu0 %v1090
      %v1980 = vpop.f32.mrf.mxu0
      %v1981 = vadd.f32 0.0, %v1980
      %v1982 = vpop.f32.mrf.mxu0
      %v1983 = vadd.f32 0.0, %v1982
      %v1984 = vpop.f32.mrf.mxu0
      %v1985 = vadd.f32 0.0, %v1984
      %v1986 = vpop.f32.mrf.mxu0
      %v1987 = vadd.f32 0.0, %v1986
      %1988 = vdwg.mxu0
      %1989 = vmatprep.subr.bf16.mxu0 %v1667
      %1990 = vmatpush1.bf16.msra.mxu0 %v1666
      %1991 = vmatprep.subr.bf16.mxu0 %v1659
      %1992 = vmatpush1.bf16.msra.mxu0 %v1658
      %1993 = vmatprep.subr.bf16.mxu0 %v1651
      %1994 = vmatpush1.bf16.msra.mxu0 %v1650
      %1995 = vmatprep.subr.bf16.mxu0 %v1643
      %1996 = vmatpush1.bf16.msra.mxu0 %v1642
      %1997 = vmatprep.subr.bf16.mxu0 %v1635
      %1998 = vmatpush1.bf16.msra.mxu0 %v1634
      %1999 = vmatprep.subr.bf16.mxu0 %v1627
      %2000 = vmatpush1.bf16.msra.mxu0 %v1626
      %2001 = vmatprep.subr.bf16.mxu0 %v1619
      %2002 = vmatpush1.bf16.msra.mxu0 %v1618
      %2003 = vmatprep.subr.bf16.mxu0 %v1611
      %2004 = vmatpush1.bf16.msra.mxu0 %v1610
      %2005 = vmatprep.subr.bf16.mxu0 %v1731
      %2006 = vmatpush2.bf16.msra.mxu0 %v1730
      %2007 = vmatprep.subr.bf16.mxu0 %v1723
      %2008 = vmatpush2.bf16.msra.mxu0 %v1722
      %2009 = vmatprep.subr.bf16.mxu0 %v1715
      %2010 = vmatpush2.bf16.msra.mxu0 %v1714
      %2011 = vmatprep.subr.bf16.mxu0 %v1707
      %2012 = vmatpush2.bf16.msra.mxu0 %v1706
      %2013 = vmatprep.subr.bf16.mxu0 %v1699
      %2014 = vmatpush2.bf16.msra.mxu0 %v1698
      %2015 = vmatprep.subr.bf16.mxu0 %v1691
      %2016 = vmatpush2.bf16.msra.mxu0 %v1690
      %2017 = vmatprep.subr.bf16.mxu0 %v1683
      %2018 = vmatpush2.bf16.msra.mxu0 %v1682
      %2019 = vmatprep.subr.bf16.mxu0 %v1675
      %2020 = vmatpush2.bf16.msra.mxu0 %v1674
      %2021 = vmatprep.mubr.bf16.mxu0 %v1091
      %2022 = vmatmul.mubr.bf16.gmra.mxu0 %v1090
      %v2023 = vpop.f32.mrf.mxu0
      %v2024 = vadd.f32 0.0, %v2023
      %v2025 = vpop.f32.mrf.mxu0
      %v2026 = vadd.f32 0.0, %v2025
      %v2027 = vpop.f32.mrf.mxu0
      %v2028 = vadd.f32 0.0, %v2027
      %v2029 = vpop.f32.mrf.mxu0
      %v2030 = vadd.f32 0.0, %v2029
      %2031 = vdwg.mxu0
      %v2032 = vld [vmem:[%s4] sm:$0xf]
      %v2034 = vlaneseq
      %v2035 = vshrl.u32 %v2034, 7
      %v2036 = vsub.s32 0, %v2035
      %v2037 = vrot.slane %v2032, %v2036
      %v2038 = vlaneseq
      %v2039 = vshrl.u32 %v2038, 7
      %v2040 = vsub.s32 1, %v2039
      %v2041 = vrot.slane %v2032, %v2040
      %v2042 = vlaneseq
      %v2043 = vshrl.u32 %v2042, 7
      %v2044 = vsub.s32 2, %v2043
      %v2045 = vrot.slane %v2032, %v2044
      %v2046 = vlaneseq
      %v2047 = vshrl.u32 %v2046, 7
      %v2048 = vsub.s32 3, %v2047
      %v2049 = vrot.slane %v2032, %v2048
      %v2054 = vadd.f32 %v1981, %v2037
      %v2055 = vadd.f32 %v1983, %v2041
      %v2056 = vadd.f32 %v2024, %v2045
      %v2057 = vadd.f32 %v2026, %v2049
      %v2058 = vadd.f32 %v1985, %v2037
      %v2059 = vadd.f32 %v1987, %v2041
      %v2060 = vadd.f32 %v2028, %v2045
      %v2061 = vadd.f32 %v2030, %v2049
      %v2062 = vxor.u32 %v2054, 2147483648
      %v2063 = vxor.u32 %v2058, 2147483648
      %v2064 = vmul.f32 %v2062, 1.442695
      %v2065 = vpow.pop %v2064
      %v2066 = vmul.f32 %v2063, 1.442695
      %v2067 = vpow.pop %v2066
      %v2068 = vadd.f32 %v2065, 1.0
      %v2069 = vadd.f32 %v2067, 1.0
      %v2070 = vrcp.pop %v2068
      %v2071 = vmul.f32 1.0, %v2070
      %v2072 = vrcp.pop %v2069
      %v2073 = vmul.f32 1.0, %v2072
      %v2074 = vxor.u32 %v2055, 2147483648
      %v2075 = vxor.u32 %v2059, 2147483648
      %v2076 = vmul.f32 %v2074, 1.442695
      %v2077 = vpow.pop %v2076
      %v2078 = vmul.f32 %v2075, 1.442695
      %v2079 = vpow.pop %v2078
      %v2080 = vadd.f32 %v2077, 1.0
      %v2081 = vadd.f32 %v2079, 1.0
      %v2082 = vrcp.pop %v2080
      %v2083 = vmul.f32 1.0, %v2082
      %v2084 = vrcp.pop %v2081
      %v2085 = vmul.f32 1.0, %v2084
      %v2086 = vtanh.pop %v2056
      %v2087 = vtanh.pop %v2060
      %v2088 = vxor.u32 %v2057, 2147483648
      %v2089 = vxor.u32 %v2061, 2147483648
      %v2090 = vmul.f32 %v2088, 1.442695
      %v2091 = vpow.pop %v2090
      %v2092 = vmul.f32 %v2089, 1.442695
      %v2093 = vpow.pop %v2092
      %v2094 = vadd.f32 %v2091, 1.0
      %v2095 = vadd.f32 %v2093, 1.0
      %v2096 = vrcp.pop %v2094
      %v2097 = vmul.f32 1.0, %v2096
      %v2098 = vrcp.pop %v2095
      %v2099 = vmul.f32 1.0, %v2098
      %v2100 = vmul.f32 %v2083, %v1088
      %v2101 = vmul.f32 %v2085, %v1089
      %v2102 = vmul.f32 %v2071, %v2086
      %v2103 = vmul.f32 %v2073, %v2087
      %v2104 = vadd.f32 %v2100, %v2102
      %v2105 = vadd.f32 %v2101, %v2103
      %v2106 = vtanh.pop %v2104
      %v2107 = vtanh.pop %v2105
      %v2108 = vmul.f32 %v2097, %v2106
      %v2109 = vmul.f32 %v2099, %v2107
      %p2110 = scmp.gt.s32.totalorder %s1081, 0
      %s2111 = scalar_select %p2110, 1, 0
      %v2112 = vstv %s2111
      %vm2113 = vcmp.eq.s32.totalorder %v2112, 1
      %v2114 = vsel %vm2113, %v2108, %v1086
      %v2115 = vsel %vm2113, %v2109, %v1087
      %v2116 = vsel %vm2113, %v2104, %v1088
      %v2117 = vsel %vm2113, %v2105, %v1089
      %s2118 = smul.u32 0, 4
      %s2119 = smul.addr %s2118, 8
      %s2120 = scalar_lea.vmem [#allocation2], %s2119
      %v2121 = vld [vmem:[%s2120] sm:$0xff]
      %v2122 = vld [vmem:[%s2120 + $0x8] sm:$0xff]
      %v2123 = vld [vmem:[%s2120 + $0x10] sm:$0xff]
      %v2124 = vld [vmem:[%s2120 + $0x18] sm:$0xff]
      %v2125 = vld [vmem:[%s2120 + $0x20] sm:$0xff]
      %v2126 = vld [vmem:[%s2120 + $0x28] sm:$0xff]
      %v2127 = vld [vmem:[%s2120 + $0x30] sm:$0xff]
      %v2128 = vld [vmem:[%s2120 + $0x38] sm:$0xff]
      %v2129 = vadd.f32 %v2121, %v1895
      %v2130 = vadd.f32 %v2122, %v1897
      %v2131 = vadd.f32 %v2123, %v1938
      %v2132 = vadd.f32 %v2124, %v1940
      %v2133 = vadd.f32 %v2125, %v1899
      %v2134 = vadd.f32 %v2126, %v1901
      %v2135 = vadd.f32 %v2127, %v1942
      %v2136 = vadd.f32 %v2128, %v1944
      %v2137 = vxor.u32 %v2129, 2147483648
      %v2138 = vxor.u32 %v2133, 2147483648
      %v2139 = vmul.f32 %v2137, 1.442695
      %v2140 = vpow.pop %v2139
      %v2141 = vmul.f32 %v2138, 1.442695
      %v2142 = vpow.pop %v2141
      %v2143 = vadd.f32 %v2140, 1.0
      %v2144 = vadd.f32 %v2142, 1.0
      %v2145 = vrcp.pop %v2143
      %v2146 = vmul.f32 1.0, %v2145
      %v2147 = vrcp.pop %v2144
      %v2148 = vmul.f32 1.0, %v2147
      %v2149 = vxor.u32 %v2130, 2147483648
      %v2150 = vxor.u32 %v2134, 2147483648
      %v2151 = vmul.f32 %v2149, 1.442695
      %v2152 = vpow.pop %v2151
      %v2153 = vmul.f32 %v2150, 1.442695
      %v2154 = vpow.pop %v2153
      %v2155 = vadd.f32 %v2152, 1.0
      %v2156 = vadd.f32 %v2154, 1.0
      %v2157 = vrcp.pop %v2155
      %v2158 = vmul.f32 1.0, %v2157
      %v2159 = vrcp.pop %v2156
      %v2160 = vmul.f32 1.0, %v2159
      %v2161 = vtanh.pop %v2131
      %v2162 = vtanh.pop %v2135
      %v2163 = vxor.u32 %v2132, 2147483648
      %v2164 = vxor.u32 %v2136, 2147483648
      %v2165 = vmul.f32 %v2163, 1.442695
      %v2166 = vpow.pop %v2165
      %v2167 = vmul.f32 %v2164, 1.442695
      %v2168 = vpow.pop %v2167
      %v2169 = vadd.f32 %v2166, 1.0
      %v2170 = vadd.f32 %v2168, 1.0
      %v2171 = vrcp.pop %v2169
      %v2172 = vmul.f32 1.0, %v2171
      %v2173 = vrcp.pop %v2170
      %v2174 = vmul.f32 1.0, %v2173
      %v2175 = vmul.f32 %v2158, %v1084
      %v2176 = vmul.f32 %v2160, %v1085
      %v2177 = vmul.f32 %v2146, %v2161
      %v2178 = vmul.f32 %v2148, %v2162
      %v2179 = vadd.f32 %v2175, %v2177
      %v2180 = vadd.f32 %v2176, %v2178
      %v2181 = vtanh.pop %v2179
      %v2182 = vtanh.pop %v2180
      %v2183 = vmul.f32 %v2172, %v2181
      %v2184 = vmul.f32 %v2174, %v2182
      %v2185 = vpack.c.bf16 %v2184, %v2183
      %v2186 = vpack.c.bf16 %v2115, %v2114
      %2187 = vmatprep.subr.bf16.mxu0 %v1661
      %2188 = vmatpush1.bf16.msra.mxu0 %v1660
      %2189 = vmatprep.subr.bf16.mxu0 %v1653
      %2190 = vmatpush1.bf16.msra.mxu0 %v1652
      %2191 = vmatprep.subr.bf16.mxu0 %v1645
      %2192 = vmatpush1.bf16.msra.mxu0 %v1644
      %2193 = vmatprep.subr.bf16.mxu0 %v1637
      %2194 = vmatpush1.bf16.msra.mxu0 %v1636
      %2195 = vmatprep.subr.bf16.mxu0 %v1629
      %2196 = vmatpush1.bf16.msra.mxu0 %v1628
      %2197 = vmatprep.subr.bf16.mxu0 %v1621
      %2198 = vmatpush1.bf16.msra.mxu0 %v1620
      %2199 = vmatprep.subr.bf16.mxu0 %v1613
      %2200 = vmatpush1.bf16.msra.mxu0 %v1612
      %2201 = vmatprep.subr.bf16.mxu0 %v1605
      %2202 = vmatpush1.bf16.msra.mxu0 %v1604
      %2203 = vmatprep.subr.bf16.mxu0 %v1725
      %2204 = vmatpush2.bf16.msra.mxu0 %v1724
      %2205 = vmatprep.subr.bf16.mxu0 %v1717
      %2206 = vmatpush2.bf16.msra.mxu0 %v1716
      %2207 = vmatprep.subr.bf16.mxu0 %v1709
      %2208 = vmatpush2.bf16.msra.mxu0 %v1708
      %2209 = vmatprep.subr.bf16.mxu0 %v1701
      %2210 = vmatpush2.bf16.msra.mxu0 %v1700
      %2211 = vmatprep.subr.bf16.mxu0 %v1693
      %2212 = vmatpush2.bf16.msra.mxu0 %v1692
      %2213 = vmatprep.subr.bf16.mxu0 %v1685
      %2214 = vmatpush2.bf16.msra.mxu0 %v1684
      %2215 = vmatprep.subr.bf16.mxu0 %v1677
      %2216 = vmatpush2.bf16.msra.mxu0 %v1676
      %2217 = vmatprep.subr.bf16.mxu0 %v1669
      %2218 = vmatpush2.bf16.msra.mxu0 %v1668
      %2219 = vmatprep.mubr.bf16.mxu0 %v2186
      %2220 = vmatmul.mubr.bf16.gmra.mxu0 %v2185
      %v2221 = vpop.f32.mrf.mxu0
      %v2222 = vadd.f32 0.0, %v2221
      %v2223 = vpop.f32.mrf.mxu0
      %v2224 = vadd.f32 0.0, %v2223
      %v2225 = vpop.f32.mrf.mxu0
      %v2226 = vadd.f32 0.0, %v2225
      %v2227 = vpop.f32.mrf.mxu0
      %v2228 = vadd.f32 0.0, %v2227
      %2229 = vdwg.mxu0
      %2230 = vmatprep.subr.bf16.mxu0 %v1663
      %2231 = vmatpush1.bf16.msra.mxu0 %v1662
      %2232 = vmatprep.subr.bf16.mxu0 %v1655
      %2233 = vmatpush1.bf16.msra.mxu0 %v1654
      %2234 = vmatprep.subr.bf16.mxu0 %v1647
      %2235 = vmatpush1.bf16.msra.mxu0 %v1646
      %2236 = vmatprep.subr.bf16.mxu0 %v1639
      %2237 = vmatpush1.bf16.msra.mxu0 %v1638
      %2238 = vmatprep.subr.bf16.mxu0 %v1631
      %2239 = vmatpush1.bf16.msra.mxu0 %v1630
      %2240 = vmatprep.subr.bf16.mxu0 %v1623
      %2241 = vmatpush1.bf16.msra.mxu0 %v1622
      %2242 = vmatprep.subr.bf16.mxu0 %v1615
      %2243 = vmatpush1.bf16.msra.mxu0 %v1614
      %2244 = vmatprep.subr.bf16.mxu0 %v1607
      %2245 = vmatpush1.bf16.msra.mxu0 %v1606
      %2246 = vmatprep.subr.bf16.mxu0 %v1727
      %2247 = vmatpush2.bf16.msra.mxu0 %v1726
      %2248 = vmatprep.subr.bf16.mxu0 %v1719
      %2249 = vmatpush2.bf16.msra.mxu0 %v1718
      %2250 = vmatprep.subr.bf16.mxu0 %v1711
      %2251 = vmatpush2.bf16.msra.mxu0 %v1710
      %2252 = vmatprep.subr.bf16.mxu0 %v1703
      %2253 = vmatpush2.bf16.msra.mxu0 %v1702
      %2254 = vmatprep.subr.bf16.mxu0 %v1695
      %2255 = vmatpush2.bf16.msra.mxu0 %v1694
      %2256 = vmatprep.subr.bf16.mxu0 %v1687
      %2257 = vmatpush2.bf16.msra.mxu0 %v1686
      %2258 = vmatprep.subr.bf16.mxu0 %v1679
      %2259 = vmatpush2.bf16.msra.mxu0 %v1678
      %2260 = vmatprep.subr.bf16.mxu0 %v1671
      %2261 = vmatpush2.bf16.msra.mxu0 %v1670
      %2262 = vmatprep.mubr.bf16.mxu0 %v2186
      %2263 = vmatmul.mubr.bf16.gmra.mxu0 %v2185
      %v2264 = vpop.f32.mrf.mxu0
      %v2265 = vadd.f32 0.0, %v2264
      %v2266 = vpop.f32.mrf.mxu0
      %v2267 = vadd.f32 0.0, %v2266
      %v2268 = vpop.f32.mrf.mxu0
      %v2269 = vadd.f32 0.0, %v2268
      %v2270 = vpop.f32.mrf.mxu0
      %v2271 = vadd.f32 0.0, %v2270
      %2272 = vdwg.mxu0
      %2273 = vmatprep.subr.bf16.mxu0 %v1665
      %2274 = vmatpush1.bf16.msra.mxu0 %v1664
      %2275 = vmatprep.subr.bf16.mxu0 %v1657
      %2276 = vmatpush1.bf16.msra.mxu0 %v1656
      %2277 = vmatprep.subr.bf16.mxu0 %v1649
      %2278 = vmatpush1.bf16.msra.mxu0 %v1648
      %2279 = vmatprep.subr.bf16.mxu0 %v1641
      %2280 = vmatpush1.bf16.msra.mxu0 %v1640
      %2281 = vmatprep.subr.bf16.mxu0 %v1633
      %2282 = vmatpush1.bf16.msra.mxu0 %v1632
      %2283 = vmatprep.subr.bf16.mxu0 %v1625
      %2284 = vmatpush1.bf16.msra.mxu0 %v1624
      %2285 = vmatprep.subr.bf16.mxu0 %v1617
      %2286 = vmatpush1.bf16.msra.mxu0 %v1616
      %2287 = vmatprep.subr.bf16.mxu0 %v1609
      %2288 = vmatpush1.bf16.msra.mxu0 %v1608
      %2289 = vmatprep.subr.bf16.mxu0 %v1729
      %2290 = vmatpush2.bf16.msra.mxu0 %v1728
      %2291 = vmatprep.subr.bf16.mxu0 %v1721
      %2292 = vmatpush2.bf16.msra.mxu0 %v1720
      %2293 = vmatprep.subr.bf16.mxu0 %v1713
      %2294 = vmatpush2.bf16.msra.mxu0 %v1712
      %2295 = vmatprep.subr.bf16.mxu0 %v1705
      %2296 = vmatpush2.bf16.msra.mxu0 %v1704
      %2297 = vmatprep.subr.bf16.mxu0 %v1697
      %2298 = vmatpush2.bf16.msra.mxu0 %v1696
      %2299 = vmatprep.subr.bf16.mxu0 %v1689
      %2300 = vmatpush2.bf16.msra.mxu0 %v1688
      %2301 = vmatprep.subr.bf16.mxu0 %v1681
      %2302 = vmatpush2.bf16.msra.mxu0 %v1680
      %2303 = vmatprep.subr.bf16.mxu0 %v1673
      %2304 = vmatpush2.bf16.msra.mxu0 %v1672
      %2305 = vmatprep.mubr.bf16.mxu0 %v2186
      %2306 = vmatmul.mubr.bf16.gmra.mxu0 %v2185
      %v2307 = vpop.f32.mrf.mxu0
      %v2308 = vadd.f32 0.0, %v2307
      %v2309 = vpop.f32.mrf.mxu0
      %v2310 = vadd.f32 0.0, %v2309
      %v2311 = vpop.f32.mrf.mxu0
      %v2312 = vadd.f32 0.0, %v2311
      %v2313 = vpop.f32.mrf.mxu0
      %v2314 = vadd.f32 0.0, %v2313
      %2315 = vdwg.mxu0
      %2316 = vmatprep.subr.bf16.mxu0 %v1667
      %2317 = vmatpush1.bf16.msra.mxu0 %v1666
      %2318 = vmatprep.subr.bf16.mxu0 %v1659
      %2319 = vmatpush1.bf16.msra.mxu0 %v1658
      %2320 = vmatprep.subr.bf16.mxu0 %v1651
      %2321 = vmatpush1.bf16.msra.mxu0 %v1650
      %2322 = vmatprep.subr.bf16.mxu0 %v1643
      %2323 = vmatpush1.bf16.msra.mxu0 %v1642
      %2324 = vmatprep.subr.bf16.mxu0 %v1635
      %2325 = vmatpush1.bf16.msra.mxu0 %v1634
      %2326 = vmatprep.subr.bf16.mxu0 %v1627
      %2327 = vmatpush1.bf16.msra.mxu0 %v1626
      %2328 = vmatprep.subr.bf16.mxu0 %v1619
      %2329 = vmatpush1.bf16.msra.mxu0 %v1618
      %2330 = vmatprep.subr.bf16.mxu0 %v1611
      %2331 = vmatpush1.bf16.msra.mxu0 %v1610
      %2332 = vmatprep.subr.bf16.mxu0 %v1731
      %2333 = vmatpush2.bf16.msra.mxu0 %v1730
      %2334 = vmatprep.subr.bf16.mxu0 %v1723
      %2335 = vmatpush2.bf16.msra.mxu0 %v1722
      %2336 = vmatprep.subr.bf16.mxu0 %v1715
      %2337 = vmatpush2.bf16.msra.mxu0 %v1714
      %2338 = vmatprep.subr.bf16.mxu0 %v1707
      %2339 = vmatpush2.bf16.msra.mxu0 %v1706
      %2340 = vmatprep.subr.bf16.mxu0 %v1699
      %2341 = vmatpush2.bf16.msra.mxu0 %v1698
      %2342 = vmatprep.subr.bf16.mxu0 %v1691
      %2343 = vmatpush2.bf16.msra.mxu0 %v1690
      %2344 = vmatprep.subr.bf16.mxu0 %v1683
      %2345 = vmatpush2.bf16.msra.mxu0 %v1682
      %2346 = vmatprep.subr.bf16.mxu0 %v1675
      %2347 = vmatpush2.bf16.msra.mxu0 %v1674
      %2348 = vmatprep.mubr.bf16.mxu0 %v2186
      %2349 = vmatmul.mubr.bf16.gmra.mxu0 %v2185
      %v2350 = vpop.f32.mrf.mxu0
      %v2351 = vadd.f32 0.0, %v2350
      %v2352 = vpop.f32.mrf.mxu0
      %v2353 = vadd.f32 0.0, %v2352
      %v2354 = vpop.f32.mrf.mxu0
      %v2355 = vadd.f32 0.0, %v2354
      %v2356 = vpop.f32.mrf.mxu0
      %v2357 = vadd.f32 0.0, %v2356
      %2358 = vdwg.mxu0
      %v2359 = vadd.f32 %v2308, %v2037
      %v2360 = vadd.f32 %v2310, %v2041
      %v2361 = vadd.f32 %v2351, %v2045
      %v2362 = vadd.f32 %v2353, %v2049
      %v2363 = vadd.f32 %v2312, %v2037
      %v2364 = vadd.f32 %v2314, %v2041
      %v2365 = vadd.f32 %v2355, %v2045
      %v2366 = vadd.f32 %v2357, %v2049
      %v2367 = vxor.u32 %v2359, 2147483648
      %v2368 = vxor.u32 %v2363, 2147483648
      %v2369 = vmul.f32 %v2367, 1.442695
      %v2370 = vpow.pop %v2369
      %v2371 = vmul.f32 %v2368, 1.442695
      %v2372 = vpow.pop %v2371
      %v2373 = vadd.f32 %v2370, 1.0
      %v2374 = vadd.f32 %v2372, 1.0
      %v2375 = vrcp.pop %v2373
      %v2376 = vmul.f32 1.0, %v2375
      %v2377 = vrcp.pop %v2374
      %v2378 = vmul.f32 1.0, %v2377
      %v2379 = vxor.u32 %v2360, 2147483648
      %v2380 = vxor.u32 %v2364, 2147483648
      %v2381 = vmul.f32 %v2379, 1.442695
      %v2382 = vpow.pop %v2381
      %v2383 = vmul.f32 %v2380, 1.442695
      %v2384 = vpow.pop %v2383
      %v2385 = vadd.f32 %v2382, 1.0
      %v2386 = vadd.f32 %v2384, 1.0
      %v2387 = vrcp.pop %v2385
      %v2388 = vmul.f32 1.0, %v2387
      %v2389 = vrcp.pop %v2386
      %v2390 = vmul.f32 1.0, %v2389
      %v2391 = vtanh.pop %v2361
      %v2392 = vtanh.pop %v2365
      %v2393 = vxor.u32 %v2362, 2147483648
      %v2394 = vxor.u32 %v2366, 2147483648
      %v2395 = vmul.f32 %v2393, 1.442695
      %v2396 = vpow.pop %v2395
      %v2397 = vmul.f32 %v2394, 1.442695
      %v2398 = vpow.pop %v2397
      %v2399 = vadd.f32 %v2396, 1.0
      %v2400 = vadd.f32 %v2398, 1.0
      %v2401 = vrcp.pop %v2399
      %v2402 = vmul.f32 1.0, %v2401
      %v2403 = vrcp.pop %v2400
      %v2404 = vmul.f32 1.0, %v2403
      %v2405 = vmul.f32 %v2388, %v2116
      %v2406 = vmul.f32 %v2390, %v2117
      %v2407 = vmul.f32 %v2376, %v2391
      %v2408 = vmul.f32 %v2378, %v2392
      %v2409 = vadd.f32 %v2405, %v2407
      %v2410 = vadd.f32 %v2406, %v2408
      %v2411 = vtanh.pop %v2409
      %v2412 = vtanh.pop %v2410
      %v2413 = vmul.f32 %v2402, %v2411
      %v2414 = vmul.f32 %v2404, %v2412
      %s2415 = sadd.s32 %s1081, 1
      %p2416 = scmp.gt.s32.totalorder %s2415, 0
      %s2417 = scalar_select %p2416, 1, 0
      %v2418 = vstv %s2417
      %vm2419 = vcmp.eq.s32.totalorder %v2418, 1
      %v2420 = vsel %vm2419, %v2413, %v2114
      %v2421 = vsel %vm2419, %v2414, %v2115
      %v2422 = vsel %vm2419, %v2409, %v2116
      %v2423 = vsel %vm2419, %v2410, %v2117
      %s2424 = smul.u32 2, 4
      %s2425 = smul.addr %s2424, 8
      %s2426 = scalar_lea.vmem [#allocation2], %s2425
      %v2427 = vld [vmem:[%s2426] sm:$0xff]
      %v2428 = vld [vmem:[%s2426 + $0x8] sm:$0xff]
      %v2429 = vld [vmem:[%s2426 + $0x10] sm:$0xff]
      %v2430 = vld [vmem:[%s2426 + $0x18] sm:$0xff]
      %v2431 = vld [vmem:[%s2426 + $0x20] sm:$0xff]
      %v2432 = vld [vmem:[%s2426 + $0x28] sm:$0xff]
      %v2433 = vld [vmem:[%s2426 + $0x30] sm:$0xff]
      %v2434 = vld [vmem:[%s2426 + $0x38] sm:$0xff]
      %v2435 = vadd.f32 %v2427, %v2222
      %v2436 = vadd.f32 %v2428, %v2224
      %v2437 = vadd.f32 %v2429, %v2265
      %v2438 = vadd.f32 %v2430, %v2267
      %v2439 = vadd.f32 %v2431, %v2226
      %v2440 = vadd.f32 %v2432, %v2228
      %v2441 = vadd.f32 %v2433, %v2269
      %v2442 = vadd.f32 %v2434, %v2271
      %v2443 = vxor.u32 %v2435, 2147483648
      %v2444 = vxor.u32 %v2439, 2147483648
      %v2445 = vmul.f32 %v2443, 1.442695
      %v2446 = vpow.pop %v2445
      %v2447 = vmul.f32 %v2444, 1.442695
      %v2448 = vpow.pop %v2447
      %v2449 = vadd.f32 %v2446, 1.0
      %v2450 = vadd.f32 %v2448, 1.0
      %v2451 = vrcp.pop %v2449
      %v2452 = vmul.f32 1.0, %v2451
      %v2453 = vrcp.pop %v2450
      %v2454 = vmul.f32 1.0, %v2453
      %v2455 = vxor.u32 %v2436, 2147483648
      %v2456 = vxor.u32 %v2440, 2147483648
      %v2457 = vmul.f32 %v2455, 1.442695
      %v2458 = vpow.pop %v2457
      %v2459 = vmul.f32 %v2456, 1.442695
      %v2460 = vpow.pop %v2459
      %v2461 = vadd.f32 %v2458, 1.0
      %v2462 = vadd.f32 %v2460, 1.0
      %v2463 = vrcp.pop %v2461
      %v2464 = vmul.f32 1.0, %v2463
      %v2465 = vrcp.pop %v2462
      %v2466 = vmul.f32 1.0, %v2465
      %v2467 = vtanh.pop %v2437
      %v2468 = vtanh.pop %v2441
      %v2469 = vxor.u32 %v2438, 2147483648
      %v2470 = vxor.u32 %v2442, 2147483648
      %v2471 = vmul.f32 %v2469, 1.442695
      %v2472 = vpow.pop %v2471
      %v2473 = vmul.f32 %v2470, 1.442695
      %v2474 = vpow.pop %v2473
      %v2475 = vadd.f32 %v2472, 1.0
      %v2476 = vadd.f32 %v2474, 1.0
      %v2477 = vrcp.pop %v2475
      %v2478 = vmul.f32 1.0, %v2477
      %v2479 = vrcp.pop %v2476
      %v2480 = vmul.f32 1.0, %v2479
      %v2481 = vmul.f32 %v2464, %v2179
      %v2482 = vmul.f32 %v2466, %v2180
      %v2483 = vmul.f32 %v2452, %v2467
      %v2484 = vmul.f32 %v2454, %v2468
      %v2485 = vadd.f32 %v2481, %v2483
      %v2486 = vadd.f32 %v2482, %v2484
      %v2487 = vtanh.pop %v2485
      %v2488 = vtanh.pop %v2486
      %v2489 = vmul.f32 %v2478, %v2487
      %v2490 = vmul.f32 %v2480, %v2488
      %v2491 = vpack.c.bf16 %v2490, %v2489
      %v2492 = vpack.c.bf16 %v2421, %v2420
      %2493 = vmatprep.subr.bf16.mxu0 %v1661
      %2494 = vmatpush1.bf16.msra.mxu0 %v1660
      %2495 = vmatprep.subr.bf16.mxu0 %v1653
      %2496 = vmatpush1.bf16.msra.mxu0 %v1652
      %2497 = vmatprep.subr.bf16.mxu0 %v1645
      %2498 = vmatpush1.bf16.msra.mxu0 %v1644
      %2499 = vmatprep.subr.bf16.mxu0 %v1637
      %2500 = vmatpush1.bf16.msra.mxu0 %v1636
      %2501 = vmatprep.subr.bf16.mxu0 %v1629
      %2502 = vmatpush1.bf16.msra.mxu0 %v1628
      %2503 = vmatprep.subr.bf16.mxu0 %v1621
      %2504 = vmatpush1.bf16.msra.mxu0 %v1620
      %2505 = vmatprep.subr.bf16.mxu0 %v1613
      %2506 = vmatpush1.bf16.msra.mxu0 %v1612
      %2507 = vmatprep.subr.bf16.mxu0 %v1605
      %2508 = vmatpush1.bf16.msra.mxu0 %v1604
      %2509 = vmatprep.subr.bf16.mxu0 %v1725
      %2510 = vmatpush2.bf16.msra.mxu0 %v1724
      %2511 = vmatprep.subr.bf16.mxu0 %v1717
      %2512 = vmatpush2.bf16.msra.mxu0 %v1716
      %2513 = vmatprep.subr.bf16.mxu0 %v1709
      %2514 = vmatpush2.bf16.msra.mxu0 %v1708
      %2515 = vmatprep.subr.bf16.mxu0 %v1701
      %2516 = vmatpush2.bf16.msra.mxu0 %v1700
      %2517 = vmatprep.subr.bf16.mxu0 %v1693
      %2518 = vmatpush2.bf16.msra.mxu0 %v1692
      %2519 = vmatprep.subr.bf16.mxu0 %v1685
      %2520 = vmatpush2.bf16.msra.mxu0 %v1684
      %2521 = vmatprep.subr.bf16.mxu0 %v1677
      %2522 = vmatpush2.bf16.msra.mxu0 %v1676
      %2523 = vmatprep.subr.bf16.mxu0 %v1669
      %2524 = vmatpush2.bf16.msra.mxu0 %v1668
      %2525 = vmatprep.mubr.bf16.mxu0 %v2492
      %2526 = vmatmul.mubr.bf16.gmra.mxu0 %v2491
      %v2527 = vpop.f32.mrf.mxu0
      %v2528 = vadd.f32 0.0, %v2527
      %v2529 = vpop.f32.mrf.mxu0
      %v2530 = vadd.f32 0.0, %v2529
      %v2531 = vpop.f32.mrf.mxu0
      %v2532 = vadd.f32 0.0, %v2531
      %v2533 = vpop.f32.mrf.mxu0
      %v2534 = vadd.f32 0.0, %v2533
      %2535 = vdwg.mxu0
      %2536 = vmatprep.subr.bf16.mxu0 %v1663
      %2537 = vmatpush1.bf16.msra.mxu0 %v1662
      %2538 = vmatprep.subr.bf16.mxu0 %v1655
      %2539 = vmatpush1.bf16.msra.mxu0 %v1654
      %2540 = vmatprep.subr.bf16.mxu0 %v1647
      %2541 = vmatpush1.bf16.msra.mxu0 %v1646
      %2542 = vmatprep.subr.bf16.mxu0 %v1639
      %2543 = vmatpush1.bf16.msra.mxu0 %v1638
      %2544 = vmatprep.subr.bf16.mxu0 %v1631
      %2545 = vmatpush1.bf16.msra.mxu0 %v1630
      %2546 = vmatprep.subr.bf16.mxu0 %v1623
      %2547 = vmatpush1.bf16.msra.mxu0 %v1622
      %2548 = vmatprep.subr.bf16.mxu0 %v1615
      %2549 = vmatpush1.bf16.msra.mxu0 %v1614
      %2550 = vmatprep.subr.bf16.mxu0 %v1607
      %2551 = vmatpush1.bf16.msra.mxu0 %v1606
      %2552 = vmatprep.subr.bf16.mxu0 %v1727
      %2553 = vmatpush2.bf16.msra.mxu0 %v1726
      %2554 = vmatprep.subr.bf16.mxu0 %v1719
      %2555 = vmatpush2.bf16.msra.mxu0 %v1718
      %2556 = vmatprep.subr.bf16.mxu0 %v1711
      %2557 = vmatpush2.bf16.msra.mxu0 %v1710
      %2558 = vmatprep.subr.bf16.mxu0 %v1703
      %2559 = vmatpush2.bf16.msra.mxu0 %v1702
      %2560 = vmatprep.subr.bf16.mxu0 %v1695
      %2561 = vmatpush2.bf16.msra.mxu0 %v1694
      %2562 = vmatprep.subr.bf16.mxu0 %v1687
      %2563 = vmatpush2.bf16.msra.mxu0 %v1686
      %2564 = vmatprep.subr.bf16.mxu0 %v1679
      %2565 = vmatpush2.bf16.msra.mxu0 %v1678
      %2566 = vmatprep.subr.bf16.mxu0 %v1671
      %2567 = vmatpush2.bf16.msra.mxu0 %v1670
      %2568 = vmatprep.mubr.bf16.mxu0 %v2492
      %2569 = vmatmul.mubr.bf16.gmra.mxu0 %v2491
      %v2570 = vpop.f32.mrf.mxu0
      %v2571 = vadd.f32 0.0, %v2570
      %v2572 = vpop.f32.mrf.mxu0
      %v2573 = vadd.f32 0.0, %v2572
      %v2574 = vpop.f32.mrf.mxu0
      %v2575 = vadd.f32 0.0, %v2574
      %v2576 = vpop.f32.mrf.mxu0
      %v2577 = vadd.f32 0.0, %v2576
      %2578 = vdwg.mxu0
      %2579 = vmatprep.subr.bf16.mxu0 %v1665
      %2580 = vmatpush1.bf16.msra.mxu0 %v1664
      %2581 = vmatprep.subr.bf16.mxu0 %v1657
      %2582 = vmatpush1.bf16.msra.mxu0 %v1656
      %2583 = vmatprep.subr.bf16.mxu0 %v1649
      %2584 = vmatpush1.bf16.msra.mxu0 %v1648
      %2585 = vmatprep.subr.bf16.mxu0 %v1641
      %2586 = vmatpush1.bf16.msra.mxu0 %v1640
      %2587 = vmatprep.subr.bf16.mxu0 %v1633
      %2588 = vmatpush1.bf16.msra.mxu0 %v1632
      %2589 = vmatprep.subr.bf16.mxu0 %v1625
      %2590 = vmatpush1.bf16.msra.mxu0 %v1624
      %2591 = vmatprep.subr.bf16.mxu0 %v1617
      %2592 = vmatpush1.bf16.msra.mxu0 %v1616
      %2593 = vmatprep.subr.bf16.mxu0 %v1609
      %2594 = vmatpush1.bf16.msra.mxu0 %v1608
      %2595 = vmatprep.subr.bf16.mxu0 %v1729
      %2596 = vmatpush2.bf16.msra.mxu0 %v1728
      %2597 = vmatprep.subr.bf16.mxu0 %v1721
      %2598 = vmatpush2.bf16.msra.mxu0 %v1720
      %2599 = vmatprep.subr.bf16.mxu0 %v1713
      %2600 = vmatpush2.bf16.msra.mxu0 %v1712
      %2601 = vmatprep.subr.bf16.mxu0 %v1705
      %2602 = vmatpush2.bf16.msra.mxu0 %v1704
      %2603 = vmatprep.subr.bf16.mxu0 %v1697
      %2604 = vmatpush2.bf16.msra.mxu0 %v1696
      %2605 = vmatprep.subr.bf16.mxu0 %v1689
      %2606 = vmatpush2.bf16.msra.mxu0 %v1688
      %2607 = vmatprep.subr.bf16.mxu0 %v1681
      %2608 = vmatpush2.bf16.msra.mxu0 %v1680
      %2609 = vmatprep.subr.bf16.mxu0 %v1673
      %2610 = vmatpush2.bf16.msra.mxu0 %v1672
      %2611 = vmatprep.mubr.bf16.mxu0 %v2492
      %2612 = vmatmul.mubr.bf16.gmra.mxu0 %v2491
      %v2613 = vpop.f32.mrf.mxu0
      %v2614 = vadd.f32 0.0, %v2613
      %v2615 = vpop.f32.mrf.mxu0
      %v2616 = vadd.f32 0.0, %v2615
      %v2617 = vpop.f32.mrf.mxu0
      %v2618 = vadd.f32 0.0, %v2617
      %v2619 = vpop.f32.mrf.mxu0
      %v2620 = vadd.f32 0.0, %v2619
      %2621 = vdwg.mxu0
      %2622 = vmatprep.subr.bf16.mxu0 %v1667
      %2623 = vmatpush1.bf16.msra.mxu0 %v1666
      %2624 = vmatprep.subr.bf16.mxu0 %v1659
      %2625 = vmatpush1.bf16.msra.mxu0 %v1658
      %2626 = vmatprep.subr.bf16.mxu0 %v1651
      %2627 = vmatpush1.bf16.msra.mxu0 %v1650
      %2628 = vmatprep.subr.bf16.mxu0 %v1643
      %2629 = vmatpush1.bf16.msra.mxu0 %v1642
      %2630 = vmatprep.subr.bf16.mxu0 %v1635
      %2631 = vmatpush1.bf16.msra.mxu0 %v1634
      %2632 = vmatprep.subr.bf16.mxu0 %v1627
      %2633 = vmatpush1.bf16.msra.mxu0 %v1626
      %2634 = vmatprep.subr.bf16.mxu0 %v1619
      %2635 = vmatpush1.bf16.msra.mxu0 %v1618
      %2636 = vmatprep.subr.bf16.mxu0 %v1611
      %2637 = vmatpush1.bf16.msra.mxu0 %v1610
      %2638 = vmatprep.subr.bf16.mxu0 %v1731
      %2639 = vmatpush2.bf16.msra.mxu0 %v1730
      %2640 = vmatprep.subr.bf16.mxu0 %v1723
      %2641 = vmatpush2.bf16.msra.mxu0 %v1722
      %2642 = vmatprep.subr.bf16.mxu0 %v1715
      %2643 = vmatpush2.bf16.msra.mxu0 %v1714
      %2644 = vmatprep.subr.bf16.mxu0 %v1707
      %2645 = vmatpush2.bf16.msra.mxu0 %v1706
      %2646 = vmatprep.subr.bf16.mxu0 %v1699
      %2647 = vmatpush2.bf16.msra.mxu0 %v1698
      %2648 = vmatprep.subr.bf16.mxu0 %v1691
      %2649 = vmatpush2.bf16.msra.mxu0 %v1690
      %2650 = vmatprep.subr.bf16.mxu0 %v1683
      %2651 = vmatpush2.bf16.msra.mxu0 %v1682
      %2652 = vmatprep.subr.bf16.mxu0 %v1675
      %2653 = vmatpush2.bf16.msra.mxu0 %v1674
      %2654 = vmatprep.mubr.bf16.mxu0 %v2492
      %2655 = vmatmul.mubr.bf16.gmra.mxu0 %v2491
      %v2656 = vpop.f32.mrf.mxu0
      %v2657 = vadd.f32 0.0, %v2656
      %v2658 = vpop.f32.mrf.mxu0
      %v2659 = vadd.f32 0.0, %v2658
      %v2660 = vpop.f32.mrf.mxu0
      %v2661 = vadd.f32 0.0, %v2660
      %v2662 = vpop.f32.mrf.mxu0
      %v2663 = vadd.f32 0.0, %v2662
      %2664 = vdwg.mxu0
      %v2665 = vadd.f32 %v2614, %v2037
      %v2666 = vadd.f32 %v2616, %v2041
      %v2667 = vadd.f32 %v2657, %v2045
      %v2668 = vadd.f32 %v2659, %v2049
      %v2669 = vadd.f32 %v2618, %v2037
      %v2670 = vadd.f32 %v2620, %v2041
      %v2671 = vadd.f32 %v2661, %v2045
      %v2672 = vadd.f32 %v2663, %v2049
      %v2673 = vxor.u32 %v2665, 2147483648
      %v2674 = vxor.u32 %v2669, 2147483648
      %v2675 = vmul.f32 %v2673, 1.442695
      %v2676 = vpow.pop %v2675
      %v2677 = vmul.f32 %v2674, 1.442695
      %v2678 = vpow.pop %v2677
      %v2679 = vadd.f32 %v2676, 1.0
      %v2680 = vadd.f32 %v2678, 1.0
      %v2681 = vrcp.pop %v2679
      %v2682 = vmul.f32 1.0, %v2681
      %v2683 = vrcp.pop %v2680
      %v2684 = vmul.f32 1.0, %v2683
      %v2685 = vxor.u32 %v2666, 2147483648
      %v2686 = vxor.u32 %v2670, 2147483648
      %v2687 = vmul.f32 %v2685, 1.442695
      %v2688 = vpow.pop %v2687
      %v2689 = vmul.f32 %v2686, 1.442695
      %v2690 = vpow.pop %v2689
      %v2691 = vadd.f32 %v2688, 1.0
      %v2692 = vadd.f32 %v2690, 1.0
      %v2693 = vrcp.pop %v2691
      %v2694 = vmul.f32 1.0, %v2693
      %v2695 = vrcp.pop %v2692
      %v2696 = vmul.f32 1.0, %v2695
      %v2697 = vtanh.pop %v2667
      %v2698 = vtanh.pop %v2671
      %v2699 = vxor.u32 %v2668, 2147483648
      %v2700 = vxor.u32 %v2672, 2147483648
      %v2701 = vmul.f32 %v2699, 1.442695
      %v2702 = vpow.pop %v2701
      %v2703 = vmul.f32 %v2700, 1.442695
      %v2704 = vpow.pop %v2703
      %v2705 = vadd.f32 %v2702, 1.0
      %v2706 = vadd.f32 %v2704, 1.0
      %v2707 = vrcp.pop %v2705
      %v2708 = vmul.f32 1.0, %v2707
      %v2709 = vrcp.pop %v2706
      %v2710 = vmul.f32 1.0, %v2709
      %v2711 = vmul.f32 %v2694, %v2422
      %v2712 = vmul.f32 %v2696, %v2423
      %v2713 = vmul.f32 %v2682, %v2697
      %v2714 = vmul.f32 %v2684, %v2698
      %v2715 = vadd.f32 %v2711, %v2713
      %v2716 = vadd.f32 %v2712, %v2714
      %v2717 = vtanh.pop %v2715
      %v2718 = vtanh.pop %v2716
      %v2719 = vmul.f32 %v2708, %v2717
      %v2720 = vmul.f32 %v2710, %v2718
      %s2721 = sadd.s32 %s1081, 2
      %p2722 = scmp.gt.s32.totalorder %s2721, 0
      %s2723 = scalar_select %p2722, 1, 0
      %v2724 = vstv %s2723
      %vm2725 = vcmp.eq.s32.totalorder %v2724, 1
      %v2726 = vsel %vm2725, %v2719, %v2420
      %v2727 = vsel %vm2725, %v2720, %v2421
      %v2728 = vsel %vm2725, %v2715, %v2422
      %v2729 = vsel %vm2725, %v2716, %v2423
      %s2730 = smul.u32 4, 4
      %s2731 = smul.addr %s2730, 8
      %s2732 = scalar_lea.vmem [#allocation2], %s2731
      %v2733 = vld [vmem:[%s2732] sm:$0xff]
      %v2734 = vld [vmem:[%s2732 + $0x8] sm:$0xff]
      %v2735 = vld [vmem:[%s2732 + $0x10] sm:$0xff]
      %v2736 = vld [vmem:[%s2732 + $0x18] sm:$0xff]
      %v2737 = vld [vmem:[%s2732 + $0x20] sm:$0xff]
      %v2738 = vld [vmem:[%s2732 + $0x28] sm:$0xff]
      %v2739 = vld [vmem:[%s2732 + $0x30] sm:$0xff]
      %v2740 = vld [vmem:[%s2732 + $0x38] sm:$0xff]
      %v2741 = vadd.f32 %v2733, %v2528
      %v2742 = vadd.f32 %v2734, %v2530
      %v2743 = vadd.f32 %v2735, %v2571
      %v2744 = vadd.f32 %v2736, %v2573
      %v2745 = vadd.f32 %v2737, %v2532
      %v2746 = vadd.f32 %v2738, %v2534
      %v2747 = vadd.f32 %v2739, %v2575
      %v2748 = vadd.f32 %v2740, %v2577
      %v2749 = vxor.u32 %v2741, 2147483648
      %v2750 = vxor.u32 %v2745, 2147483648
      %v2751 = vmul.f32 %v2749, 1.442695
      %v2752 = vpow.pop %v2751
      %v2753 = vmul.f32 %v2750, 1.442695
      %v2754 = vpow.pop %v2753
      %v2755 = vadd.f32 %v2752, 1.0
      %v2756 = vadd.f32 %v2754, 1.0
      %v2757 = vrcp.pop %v2755
      %v2758 = vmul.f32 1.0, %v2757
      %v2759 = vrcp.pop %v2756
      %v2760 = vmul.f32 1.0, %v2759
      %v2761 = vxor.u32 %v2742, 2147483648
      %v2762 = vxor.u32 %v2746, 2147483648
      %v2763 = vmul.f32 %v2761, 1.442695
      %v2764 = vpow.pop %v2763
      %v2765 = vmul.f32 %v2762, 1.442695
      %v2766 = vpow.pop %v2765
      %v2767 = vadd.f32 %v2764, 1.0
      %v2768 = vadd.f32 %v2766, 1.0
      %v2769 = vrcp.pop %v2767
      %v2770 = vmul.f32 1.0, %v2769
      %v2771 = vrcp.pop %v2768
      %v2772 = vmul.f32 1.0, %v2771
      %v2773 = vtanh.pop %v2743
      %v2774 = vtanh.pop %v2747
      %v2775 = vxor.u32 %v2744, 2147483648
      %v2776 = vxor.u32 %v2748, 2147483648
      %v2777 = vmul.f32 %v2775, 1.442695
      %v2778 = vpow.pop %v2777
      %v2779 = vmul.f32 %v2776, 1.442695
      %v2780 = vpow.pop %v2779
      %v2781 = vadd.f32 %v2778, 1.0
      %v2782 = vadd.f32 %v2780, 1.0
      %v2783 = vrcp.pop %v2781
      %v2784 = vmul.f32 1.0, %v2783
      %v2785 = vrcp.pop %v2782
      %v2786 = vmul.f32 1.0, %v2785
      %v2787 = vmul.f32 %v2770, %v2485
      %v2788 = vmul.f32 %v2772, %v2486
      %v2789 = vmul.f32 %v2758, %v2773
      %v2790 = vmul.f32 %v2760, %v2774
      %v2791 = vadd.f32 %v2787, %v2789
      %v2792 = vadd.f32 %v2788, %v2790
      %v2793 = vtanh.pop %v2791
      %v2794 = vtanh.pop %v2792
      %v2795 = vmul.f32 %v2784, %v2793
      %v2796 = vmul.f32 %v2786, %v2794
      %v2797 = vpack.c.bf16 %v2796, %v2795
      %v2798 = vpack.c.bf16 %v2727, %v2726
      %2799 = vmatprep.subr.bf16.mxu0 %v1661
      %2800 = vmatpush1.bf16.msra.mxu0 %v1660
      %2801 = vmatprep.subr.bf16.mxu0 %v1653
      %2802 = vmatpush1.bf16.msra.mxu0 %v1652
      %2803 = vmatprep.subr.bf16.mxu0 %v1645
      %2804 = vmatpush1.bf16.msra.mxu0 %v1644
      %2805 = vmatprep.subr.bf16.mxu0 %v1637
      %2806 = vmatpush1.bf16.msra.mxu0 %v1636
      %2807 = vmatprep.subr.bf16.mxu0 %v1629
      %2808 = vmatpush1.bf16.msra.mxu0 %v1628
      %2809 = vmatprep.subr.bf16.mxu0 %v1621
      %2810 = vmatpush1.bf16.msra.mxu0 %v1620
      %2811 = vmatprep.subr.bf16.mxu0 %v1613
      %2812 = vmatpush1.bf16.msra.mxu0 %v1612
      %2813 = vmatprep.subr.bf16.mxu0 %v1605
      %2814 = vmatpush1.bf16.msra.mxu0 %v1604
      %2815 = vmatprep.subr.bf16.mxu0 %v1725
      %2816 = vmatpush2.bf16.msra.mxu0 %v1724
      %2817 = vmatprep.subr.bf16.mxu0 %v1717
      %2818 = vmatpush2.bf16.msra.mxu0 %v1716
      %2819 = vmatprep.subr.bf16.mxu0 %v1709
      %2820 = vmatpush2.bf16.msra.mxu0 %v1708
      %2821 = vmatprep.subr.bf16.mxu0 %v1701
      %2822 = vmatpush2.bf16.msra.mxu0 %v1700
      %2823 = vmatprep.subr.bf16.mxu0 %v1693
      %2824 = vmatpush2.bf16.msra.mxu0 %v1692
      %2825 = vmatprep.subr.bf16.mxu0 %v1685
      %2826 = vmatpush2.bf16.msra.mxu0 %v1684
      %2827 = vmatprep.subr.bf16.mxu0 %v1677
      %2828 = vmatpush2.bf16.msra.mxu0 %v1676
      %2829 = vmatprep.subr.bf16.mxu0 %v1669
      %2830 = vmatpush2.bf16.msra.mxu0 %v1668
      %2831 = vmatprep.mubr.bf16.mxu0 %v2798
      %2832 = vmatmul.mubr.bf16.gmra.mxu0 %v2797
      %v2833 = vpop.f32.mrf.mxu0
      %v2834 = vadd.f32 0.0, %v2833
      %v2835 = vpop.f32.mrf.mxu0
      %v2836 = vadd.f32 0.0, %v2835
      %v2837 = vpop.f32.mrf.mxu0
      %v2838 = vadd.f32 0.0, %v2837
      %v2839 = vpop.f32.mrf.mxu0
      %v2840 = vadd.f32 0.0, %v2839
      %2841 = vdwg.mxu0
      %2842 = vmatprep.subr.bf16.mxu0 %v1663
      %2843 = vmatpush1.bf16.msra.mxu0 %v1662
      %2844 = vmatprep.subr.bf16.mxu0 %v1655
      %2845 = vmatpush1.bf16.msra.mxu0 %v1654
      %2846 = vmatprep.subr.bf16.mxu0 %v1647
      %2847 = vmatpush1.bf16.msra.mxu0 %v1646
      %2848 = vmatprep.subr.bf16.mxu0 %v1639
      %2849 = vmatpush1.bf16.msra.mxu0 %v1638
      %2850 = vmatprep.subr.bf16.mxu0 %v1631
      %2851 = vmatpush1.bf16.msra.mxu0 %v1630
      %2852 = vmatprep.subr.bf16.mxu0 %v1623
      %2853 = vmatpush1.bf16.msra.mxu0 %v1622
      %2854 = vmatprep.subr.bf16.mxu0 %v1615
      %2855 = vmatpush1.bf16.msra.mxu0 %v1614
      %2856 = vmatprep.subr.bf16.mxu0 %v1607
      %2857 = vmatpush1.bf16.msra.mxu0 %v1606
      %2858 = vmatprep.subr.bf16.mxu0 %v1727
      %2859 = vmatpush2.bf16.msra.mxu0 %v1726
      %2860 = vmatprep.subr.bf16.mxu0 %v1719
      %2861 = vmatpush2.bf16.msra.mxu0 %v1718
      %2862 = vmatprep.subr.bf16.mxu0 %v1711
      %2863 = vmatpush2.bf16.msra.mxu0 %v1710
      %2864 = vmatprep.subr.bf16.mxu0 %v1703
      %2865 = vmatpush2.bf16.msra.mxu0 %v1702
      %2866 = vmatprep.subr.bf16.mxu0 %v1695
      %2867 = vmatpush2.bf16.msra.mxu0 %v1694
      %2868 = vmatprep.subr.bf16.mxu0 %v1687
      %2869 = vmatpush2.bf16.msra.mxu0 %v1686
      %2870 = vmatprep.subr.bf16.mxu0 %v1679
      %2871 = vmatpush2.bf16.msra.mxu0 %v1678
      %2872 = vmatprep.subr.bf16.mxu0 %v1671
      %2873 = vmatpush2.bf16.msra.mxu0 %v1670
      %2874 = vmatprep.mubr.bf16.mxu0 %v2798
      %2875 = vmatmul.mubr.bf16.gmra.mxu0 %v2797
      %v2876 = vpop.f32.mrf.mxu0
      %v2877 = vadd.f32 0.0, %v2876
      %v2878 = vpop.f32.mrf.mxu0
      %v2879 = vadd.f32 0.0, %v2878
      %v2880 = vpop.f32.mrf.mxu0
      %v2881 = vadd.f32 0.0, %v2880
      %v2882 = vpop.f32.mrf.mxu0
      %v2883 = vadd.f32 0.0, %v2882
      %2884 = vdwg.mxu0
      %2885 = vmatprep.subr.bf16.mxu0 %v1665
      %2886 = vmatpush1.bf16.msra.mxu0 %v1664
      %2887 = vmatprep.subr.bf16.mxu0 %v1657
      %2888 = vmatpush1.bf16.msra.mxu0 %v1656
      %2889 = vmatprep.subr.bf16.mxu0 %v1649
      %2890 = vmatpush1.bf16.msra.mxu0 %v1648
      %2891 = vmatprep.subr.bf16.mxu0 %v1641
      %2892 = vmatpush1.bf16.msra.mxu0 %v1640
      %2893 = vmatprep.subr.bf16.mxu0 %v1633
      %2894 = vmatpush1.bf16.msra.mxu0 %v1632
      %2895 = vmatprep.subr.bf16.mxu0 %v1625
      %2896 = vmatpush1.bf16.msra.mxu0 %v1624
      %2897 = vmatprep.subr.bf16.mxu0 %v1617
      %2898 = vmatpush1.bf16.msra.mxu0 %v1616
      %2899 = vmatprep.subr.bf16.mxu0 %v1609
      %2900 = vmatpush1.bf16.msra.mxu0 %v1608
      %2901 = vmatprep.subr.bf16.mxu0 %v1729
      %2902 = vmatpush2.bf16.msra.mxu0 %v1728
      %2903 = vmatprep.subr.bf16.mxu0 %v1721
      %2904 = vmatpush2.bf16.msra.mxu0 %v1720
      %2905 = vmatprep.subr.bf16.mxu0 %v1713
      %2906 = vmatpush2.bf16.msra.mxu0 %v1712
      %2907 = vmatprep.subr.bf16.mxu0 %v1705
      %2908 = vmatpush2.bf16.msra.mxu0 %v1704
      %2909 = vmatprep.subr.bf16.mxu0 %v1697
      %2910 = vmatpush2.bf16.msra.mxu0 %v1696
      %2911 = vmatprep.subr.bf16.mxu0 %v1689
      %2912 = vmatpush2.bf16.msra.mxu0 %v1688
      %2913 = vmatprep.subr.bf16.mxu0 %v1681
      %2914 = vmatpush2.bf16.msra.mxu0 %v1680
      %2915 = vmatprep.subr.bf16.mxu0 %v1673
      %2916 = vmatpush2.bf16.msra.mxu0 %v1672
      %2917 = vmatprep.mubr.bf16.mxu0 %v2798
      %2918 = vmatmul.mubr.bf16.gmra.mxu0 %v2797
      %v2919 = vpop.f32.mrf.mxu0
      %v2920 = vadd.f32 0.0, %v2919
      %v2921 = vpop.f32.mrf.mxu0
      %v2922 = vadd.f32 0.0, %v2921
      %v2923 = vpop.f32.mrf.mxu0
      %v2924 = vadd.f32 0.0, %v2923
      %v2925 = vpop.f32.mrf.mxu0
      %v2926 = vadd.f32 0.0, %v2925
      %2927 = vdwg.mxu0
      %2928 = vmatprep.subr.bf16.mxu0 %v1667
      %2929 = vmatpush1.bf16.msra.mxu0 %v1666
      %2930 = vmatprep.subr.bf16.mxu0 %v1659
      %2931 = vmatpush1.bf16.msra.mxu0 %v1658
      %2932 = vmatprep.subr.bf16.mxu0 %v1651
      %2933 = vmatpush1.bf16.msra.mxu0 %v1650
      %2934 = vmatprep.subr.bf16.mxu0 %v1643
      %2935 = vmatpush1.bf16.msra.mxu0 %v1642
      %2936 = vmatprep.subr.bf16.mxu0 %v1635
      %2937 = vmatpush1.bf16.msra.mxu0 %v1634
      %2938 = vmatprep.subr.bf16.mxu0 %v1627
      %2939 = vmatpush1.bf16.msra.mxu0 %v1626
      %2940 = vmatprep.subr.bf16.mxu0 %v1619
      %2941 = vmatpush1.bf16.msra.mxu0 %v1618
      %2942 = vmatprep.subr.bf16.mxu0 %v1611
      %2943 = vmatpush1.bf16.msra.mxu0 %v1610
      %2944 = vmatprep.subr.bf16.mxu0 %v1731
      %2945 = vmatpush2.bf16.msra.mxu0 %v1730
      %2946 = vmatprep.subr.bf16.mxu0 %v1723
      %2947 = vmatpush2.bf16.msra.mxu0 %v1722
      %2948 = vmatprep.subr.bf16.mxu0 %v1715
      %2949 = vmatpush2.bf16.msra.mxu0 %v1714
      %2950 = vmatprep.subr.bf16.mxu0 %v1707
      %2951 = vmatpush2.bf16.msra.mxu0 %v1706
      %2952 = vmatprep.subr.bf16.mxu0 %v1699
      %2953 = vmatpush2.bf16.msra.mxu0 %v1698
      %2954 = vmatprep.subr.bf16.mxu0 %v1691
      %2955 = vmatpush2.bf16.msra.mxu0 %v1690
      %2956 = vmatprep.subr.bf16.mxu0 %v1683
      %2957 = vmatpush2.bf16.msra.mxu0 %v1682
      %2958 = vmatprep.subr.bf16.mxu0 %v1675
      %2959 = vmatpush2.bf16.msra.mxu0 %v1674
      %2960 = vmatprep.mubr.bf16.mxu0 %v2798
      %2961 = vmatmul.mubr.bf16.gmra.mxu0 %v2797
      %v2962 = vpop.f32.mrf.mxu0
      %v2963 = vadd.f32 0.0, %v2962
      %v2964 = vpop.f32.mrf.mxu0
      %v2965 = vadd.f32 0.0, %v2964
      %v2966 = vpop.f32.mrf.mxu0
      %v2967 = vadd.f32 0.0, %v2966
      %v2968 = vpop.f32.mrf.mxu0
      %v2969 = vadd.f32 0.0, %v2968
      %2970 = vdwg.mxu0
      %v2971 = vadd.f32 %v2920, %v2037
      %v2972 = vadd.f32 %v2922, %v2041
      %v2973 = vadd.f32 %v2963, %v2045
      %v2974 = vadd.f32 %v2965, %v2049
      %v2975 = vadd.f32 %v2924, %v2037
      %v2976 = vadd.f32 %v2926, %v2041
      %v2977 = vadd.f32 %v2967, %v2045
      %v2978 = vadd.f32 %v2969, %v2049
      %v2979 = vxor.u32 %v2971, 2147483648
      %v2980 = vxor.u32 %v2975, 2147483648
      %v2981 = vmul.f32 %v2979, 1.442695
      %v2982 = vpow.pop %v2981
      %v2983 = vmul.f32 %v2980, 1.442695
      %v2984 = vpow.pop %v2983
      %v2985 = vadd.f32 %v2982, 1.0
      %v2986 = vadd.f32 %v2984, 1.0
      %v2987 = vrcp.pop %v2985
      %v2988 = vmul.f32 1.0, %v2987
      %v2989 = vrcp.pop %v2986
      %v2990 = vmul.f32 1.0, %v2989
      %v2991 = vxor.u32 %v2972, 2147483648
      %v2992 = vxor.u32 %v2976, 2147483648
      %v2993 = vmul.f32 %v2991, 1.442695
      %v2994 = vpow.pop %v2993
      %v2995 = vmul.f32 %v2992, 1.442695
      %v2996 = vpow.pop %v2995
      %v2997 = vadd.f32 %v2994, 1.0
      %v2998 = vadd.f32 %v2996, 1.0
      %v2999 = vrcp.pop %v2997
      %v3000 = vmul.f32 1.0, %v2999
      %v3001 = vrcp.pop %v2998
      %v3002 = vmul.f32 1.0, %v3001
      %v3003 = vtanh.pop %v2973
      %v3004 = vtanh.pop %v2977
      %v3005 = vxor.u32 %v2974, 2147483648
      %v3006 = vxor.u32 %v2978, 2147483648
      %v3007 = vmul.f32 %v3005, 1.442695
      %v3008 = vpow.pop %v3007
      %v3009 = vmul.f32 %v3006, 1.442695
      %v3010 = vpow.pop %v3009
      %v3011 = vadd.f32 %v3008, 1.0
      %v3012 = vadd.f32 %v3010, 1.0
      %v3013 = vrcp.pop %v3011
      %v3014 = vmul.f32 1.0, %v3013
      %v3015 = vrcp.pop %v3012
      %v3016 = vmul.f32 1.0, %v3015
      %v3017 = vmul.f32 %v3000, %v2728
      %v3018 = vmul.f32 %v3002, %v2729
      %v3019 = vmul.f32 %v2988, %v3003
      %v3020 = vmul.f32 %v2990, %v3004
      %v3021 = vadd.f32 %v3017, %v3019
      %v3022 = vadd.f32 %v3018, %v3020
      %v3023 = vtanh.pop %v3021
      %v3024 = vtanh.pop %v3022
      %v3025 = vmul.f32 %v3014, %v3023
      %v3026 = vmul.f32 %v3016, %v3024
      %s3027 = sadd.s32 %s1081, 3
      %p3028 = scmp.gt.s32.totalorder %s3027, 0
      %s3029 = scalar_select %p3028, 1, 0
      %v3030 = vstv %s3029
      %vm3031 = vcmp.eq.s32.totalorder %v3030, 1
      %v3032 = vsel %vm3031, %v3025, %v2726
      %v3033 = vsel %vm3031, %v3026, %v2727
      %v3034 = vsel %vm3031, %v3021, %v2728
      %v3035 = vsel %vm3031, %v3022, %v2729
      %s3036 = smul.u32 6, 4
      %s3037 = smul.addr %s3036, 8
      %s3038 = scalar_lea.vmem [#allocation2], %s3037
      %v3039 = vld [vmem:[%s3038] sm:$0xff]
      %v3040 = vld [vmem:[%s3038 + $0x8] sm:$0xff]
      %v3041 = vld [vmem:[%s3038 + $0x10] sm:$0xff]
      %v3042 = vld [vmem:[%s3038 + $0x18] sm:$0xff]
      %v3043 = vld [vmem:[%s3038 + $0x20] sm:$0xff]
      %v3044 = vld [vmem:[%s3038 + $0x28] sm:$0xff]
      %v3045 = vld [vmem:[%s3038 + $0x30] sm:$0xff]
      %v3046 = vld [vmem:[%s3038 + $0x38] sm:$0xff]
      %v3047 = vadd.f32 %v3039, %v2834
      %v3048 = vadd.f32 %v3040, %v2836
      %v3049 = vadd.f32 %v3041, %v2877
      %v3050 = vadd.f32 %v3042, %v2879
      %v3051 = vadd.f32 %v3043, %v2838
      %v3052 = vadd.f32 %v3044, %v2840
      %v3053 = vadd.f32 %v3045, %v2881
      %v3054 = vadd.f32 %v3046, %v2883
      %v3055 = vxor.u32 %v3047, 2147483648
      %v3056 = vxor.u32 %v3051, 2147483648
      %v3057 = vmul.f32 %v3055, 1.442695
      %v3058 = vpow.pop %v3057
      %v3059 = vmul.f32 %v3056, 1.442695
      %v3060 = vpow.pop %v3059
      %v3061 = vadd.f32 %v3058, 1.0
      %v3062 = vadd.f32 %v3060, 1.0
      %v3063 = vrcp.pop %v3061
      %v3064 = vmul.f32 1.0, %v3063
      %v3065 = vrcp.pop %v3062
      %v3066 = vmul.f32 1.0, %v3065
      %v3067 = vxor.u32 %v3048, 2147483648
      %v3068 = vxor.u32 %v3052, 2147483648
      %v3069 = vmul.f32 %v3067, 1.442695
      %v3070 = vpow.pop %v3069
      %v3071 = vmul.f32 %v3068, 1.442695
      %v3072 = vpow.pop %v3071
      %v3073 = vadd.f32 %v3070, 1.0
      %v3074 = vadd.f32 %v3072, 1.0
      %v3075 = vrcp.pop %v3073
      %v3076 = vmul.f32 1.0, %v3075
      %v3077 = vrcp.pop %v3074
      %v3078 = vmul.f32 1.0, %v3077
      %v3079 = vtanh.pop %v3049
      %v3080 = vtanh.pop %v3053
      %v3081 = vxor.u32 %v3050, 2147483648
      %v3082 = vxor.u32 %v3054, 2147483648
      %v3083 = vmul.f32 %v3081, 1.442695
      %v3084 = vpow.pop %v3083
      %v3085 = vmul.f32 %v3082, 1.442695
      %v3086 = vpow.pop %v3085
      %v3087 = vadd.f32 %v3084, 1.0
      %v3088 = vadd.f32 %v3086, 1.0
      %v3089 = vrcp.pop %v3087
      %v3090 = vmul.f32 1.0, %v3089
      %v3091 = vrcp.pop %v3088
      %v3092 = vmul.f32 1.0, %v3091
      %v3093 = vmul.f32 %v3076, %v2791
      %v3094 = vmul.f32 %v3078, %v2792
      %v3095 = vmul.f32 %v3064, %v3079
      %v3096 = vmul.f32 %v3066, %v3080
      %v3097 = vadd.f32 %v3093, %v3095
      %v3098 = vadd.f32 %v3094, %v3096
      %v3099 = vtanh.pop %v3097
      %v3100 = vtanh.pop %v3098
      %v3101 = vmul.f32 %v3090, %v3099
      %v3102 = vmul.f32 %v3092, %v3100
      %v3103 = vpack.c.bf16 %v3102, %v3101
      %v3104 = vpack.c.bf16 %v3033, %v3032
      %3105 = vmatprep.subr.bf16.mxu0 %v1661
      %3106 = vmatpush1.bf16.msra.mxu0 %v1660
      %3107 = vmatprep.subr.bf16.mxu0 %v1653
      %3108 = vmatpush1.bf16.msra.mxu0 %v1652
      %3109 = vmatprep.subr.bf16.mxu0 %v1645
      %3110 = vmatpush1.bf16.msra.mxu0 %v1644
      %3111 = vmatprep.subr.bf16.mxu0 %v1637
      %3112 = vmatpush1.bf16.msra.mxu0 %v1636
      %3113 = vmatprep.subr.bf16.mxu0 %v1629
      %3114 = vmatpush1.bf16.msra.mxu0 %v1628
      %3115 = vmatprep.subr.bf16.mxu0 %v1621
      %3116 = vmatpush1.bf16.msra.mxu0 %v1620
      %3117 = vmatprep.subr.bf16.mxu0 %v1613
      %3118 = vmatpush1.bf16.msra.mxu0 %v1612
      %3119 = vmatprep.subr.bf16.mxu0 %v1605
      %3120 = vmatpush1.bf16.msra.mxu0 %v1604
      %3121 = vmatprep.subr.bf16.mxu0 %v1725
      %3122 = vmatpush2.bf16.msra.mxu0 %v1724
      %3123 = vmatprep.subr.bf16.mxu0 %v1717
      %3124 = vmatpush2.bf16.msra.mxu0 %v1716
      %3125 = vmatprep.subr.bf16.mxu0 %v1709
      %3126 = vmatpush2.bf16.msra.mxu0 %v1708
      %3127 = vmatprep.subr.bf16.mxu0 %v1701
      %3128 = vmatpush2.bf16.msra.mxu0 %v1700
      %3129 = vmatprep.subr.bf16.mxu0 %v1693
      %3130 = vmatpush2.bf16.msra.mxu0 %v1692
      %3131 = vmatprep.subr.bf16.mxu0 %v1685
      %3132 = vmatpush2.bf16.msra.mxu0 %v1684
      %3133 = vmatprep.subr.bf16.mxu0 %v1677
      %3134 = vmatpush2.bf16.msra.mxu0 %v1676
      %3135 = vmatprep.subr.bf16.mxu0 %v1669
      %3136 = vmatpush2.bf16.msra.mxu0 %v1668
      %3137 = vmatprep.mubr.bf16.mxu0 %v3104
      %3138 = vmatmul.mubr.bf16.gmra.mxu0 %v3103
      %v3139 = vpop.f32.mrf.mxu0
      %v3140 = vadd.f32 0.0, %v3139
      %v3141 = vpop.f32.mrf.mxu0
      %v3142 = vadd.f32 0.0, %v3141
      %v3143 = vpop.f32.mrf.mxu0
      %v3144 = vadd.f32 0.0, %v3143
      %v3145 = vpop.f32.mrf.mxu0
      %v3146 = vadd.f32 0.0, %v3145
      %3147 = vdwg.mxu0
      %3148 = vmatprep.subr.bf16.mxu0 %v1663
      %3149 = vmatpush1.bf16.msra.mxu0 %v1662
      %3150 = vmatprep.subr.bf16.mxu0 %v1655
      %3151 = vmatpush1.bf16.msra.mxu0 %v1654
      %3152 = vmatprep.subr.bf16.mxu0 %v1647
      %3153 = vmatpush1.bf16.msra.mxu0 %v1646
      %3154 = vmatprep.subr.bf16.mxu0 %v1639
      %3155 = vmatpush1.bf16.msra.mxu0 %v1638
      %3156 = vmatprep.subr.bf16.mxu0 %v1631
      %3157 = vmatpush1.bf16.msra.mxu0 %v1630
      %3158 = vmatprep.subr.bf16.mxu0 %v1623
      %3159 = vmatpush1.bf16.msra.mxu0 %v1622
      %3160 = vmatprep.subr.bf16.mxu0 %v1615
      %3161 = vmatpush1.bf16.msra.mxu0 %v1614
      %3162 = vmatprep.subr.bf16.mxu0 %v1607
      %3163 = vmatpush1.bf16.msra.mxu0 %v1606
      %3164 = vmatprep.subr.bf16.mxu0 %v1727
      %3165 = vmatpush2.bf16.msra.mxu0 %v1726
      %3166 = vmatprep.subr.bf16.mxu0 %v1719
      %3167 = vmatpush2.bf16.msra.mxu0 %v1718
      %3168 = vmatprep.subr.bf16.mxu0 %v1711
      %3169 = vmatpush2.bf16.msra.mxu0 %v1710
      %3170 = vmatprep.subr.bf16.mxu0 %v1703
      %3171 = vmatpush2.bf16.msra.mxu0 %v1702
      %3172 = vmatprep.subr.bf16.mxu0 %v1695
      %3173 = vmatpush2.bf16.msra.mxu0 %v1694
      %3174 = vmatprep.subr.bf16.mxu0 %v1687
      %3175 = vmatpush2.bf16.msra.mxu0 %v1686
      %3176 = vmatprep.subr.bf16.mxu0 %v1679
      %3177 = vmatpush2.bf16.msra.mxu0 %v1678
      %3178 = vmatprep.subr.bf16.mxu0 %v1671
      %3179 = vmatpush2.bf16.msra.mxu0 %v1670
      %3180 = vmatprep.mubr.bf16.mxu0 %v3104
      %3181 = vmatmul.mubr.bf16.gmra.mxu0 %v3103
      %v3182 = vpop.f32.mrf.mxu0
      %v3183 = vadd.f32 0.0, %v3182
      %v3184 = vpop.f32.mrf.mxu0
      %v3185 = vadd.f32 0.0, %v3184
      %v3186 = vpop.f32.mrf.mxu0
      %v3187 = vadd.f32 0.0, %v3186
      %v3188 = vpop.f32.mrf.mxu0
      %v3189 = vadd.f32 0.0, %v3188
      %3190 = vdwg.mxu0
      %3191 = vmatprep.subr.bf16.mxu0 %v1665
      %3192 = vmatpush1.bf16.msra.mxu0 %v1664
      %3193 = vmatprep.subr.bf16.mxu0 %v1657
      %3194 = vmatpush1.bf16.msra.mxu0 %v1656
      %3195 = vmatprep.subr.bf16.mxu0 %v1649
      %3196 = vmatpush1.bf16.msra.mxu0 %v1648
      %3197 = vmatprep.subr.bf16.mxu0 %v1641
      %3198 = vmatpush1.bf16.msra.mxu0 %v1640
      %3199 = vmatprep.subr.bf16.mxu0 %v1633
      %3200 = vmatpush1.bf16.msra.mxu0 %v1632
      %3201 = vmatprep.subr.bf16.mxu0 %v1625
      %3202 = vmatpush1.bf16.msra.mxu0 %v1624
      %3203 = vmatprep.subr.bf16.mxu0 %v1617
      %3204 = vmatpush1.bf16.msra.mxu0 %v1616
      %3205 = vmatprep.subr.bf16.mxu0 %v1609
      %3206 = vmatpush1.bf16.msra.mxu0 %v1608
      %3207 = vmatprep.subr.bf16.mxu0 %v1729
      %3208 = vmatpush2.bf16.msra.mxu0 %v1728
      %3209 = vmatprep.subr.bf16.mxu0 %v1721
      %3210 = vmatpush2.bf16.msra.mxu0 %v1720
      %3211 = vmatprep.subr.bf16.mxu0 %v1713
      %3212 = vmatpush2.bf16.msra.mxu0 %v1712
      %3213 = vmatprep.subr.bf16.mxu0 %v1705
      %3214 = vmatpush2.bf16.msra.mxu0 %v1704
      %3215 = vmatprep.subr.bf16.mxu0 %v1697
      %3216 = vmatpush2.bf16.msra.mxu0 %v1696
      %3217 = vmatprep.subr.bf16.mxu0 %v1689
      %3218 = vmatpush2.bf16.msra.mxu0 %v1688
      %3219 = vmatprep.subr.bf16.mxu0 %v1681
      %3220 = vmatpush2.bf16.msra.mxu0 %v1680
      %3221 = vmatprep.subr.bf16.mxu0 %v1673
      %3222 = vmatpush2.bf16.msra.mxu0 %v1672
      %3223 = vmatprep.mubr.bf16.mxu0 %v3104
      %3224 = vmatmul.mubr.bf16.gmra.mxu0 %v3103
      %v3225 = vpop.f32.mrf.mxu0
      %v3226 = vadd.f32 0.0, %v3225
      %v3227 = vpop.f32.mrf.mxu0
      %v3228 = vadd.f32 0.0, %v3227
      %v3229 = vpop.f32.mrf.mxu0
      %v3230 = vadd.f32 0.0, %v3229
      %v3231 = vpop.f32.mrf.mxu0
      %v3232 = vadd.f32 0.0, %v3231
      %3233 = vdwg.mxu0
      %3234 = vmatprep.subr.bf16.mxu0 %v1667
      %3235 = vmatpush1.bf16.msra.mxu0 %v1666
      %3236 = vmatprep.subr.bf16.mxu0 %v1659
      %3237 = vmatpush1.bf16.msra.mxu0 %v1658
      %3238 = vmatprep.subr.bf16.mxu0 %v1651
      %3239 = vmatpush1.bf16.msra.mxu0 %v1650
      %3240 = vmatprep.subr.bf16.mxu0 %v1643
      %3241 = vmatpush1.bf16.msra.mxu0 %v1642
      %3242 = vmatprep.subr.bf16.mxu0 %v1635
      %3243 = vmatpush1.bf16.msra.mxu0 %v1634
      %3244 = vmatprep.subr.bf16.mxu0 %v1627
      %3245 = vmatpush1.bf16.msra.mxu0 %v1626
      %3246 = vmatprep.subr.bf16.mxu0 %v1619
      %3247 = vmatpush1.bf16.msra.mxu0 %v1618
      %3248 = vmatprep.subr.bf16.mxu0 %v1611
      %3249 = vmatpush1.bf16.msra.mxu0 %v1610
      %3250 = vmatprep.subr.bf16.mxu0 %v1731
      %3251 = vmatpush2.bf16.msra.mxu0 %v1730
      %3252 = vmatprep.subr.bf16.mxu0 %v1723
      %3253 = vmatpush2.bf16.msra.mxu0 %v1722
      %3254 = vmatprep.subr.bf16.mxu0 %v1715
      %3255 = vmatpush2.bf16.msra.mxu0 %v1714
      %3256 = vmatprep.subr.bf16.mxu0 %v1707
      %3257 = vmatpush2.bf16.msra.mxu0 %v1706
      %3258 = vmatprep.subr.bf16.mxu0 %v1699
      %3259 = vmatpush2.bf16.msra.mxu0 %v1698
      %3260 = vmatprep.subr.bf16.mxu0 %v1691
      %3261 = vmatpush2.bf16.msra.mxu0 %v1690
      %3262 = vmatprep.subr.bf16.mxu0 %v1683
      %3263 = vmatpush2.bf16.msra.mxu0 %v1682
      %3264 = vmatprep.subr.bf16.mxu0 %v1675
      %3265 = vmatpush2.bf16.msra.mxu0 %v1674
      %3266 = vmatprep.mubr.bf16.mxu0 %v3104
      %3267 = vmatmul.mubr.bf16.gmra.mxu0 %v3103
      %v3268 = vpop.f32.mrf.mxu0
      %v3269 = vadd.f32 0.0, %v3268
      %v3270 = vpop.f32.mrf.mxu0
      %v3271 = vadd.f32 0.0, %v3270
      %v3272 = vpop.f32.mrf.mxu0
      %v3273 = vadd.f32 0.0, %v3272
      %v3274 = vpop.f32.mrf.mxu0
      %v3275 = vadd.f32 0.0, %v3274
      %3276 = vdwg.mxu0
      %v3277 = vadd.f32 %v3226, %v2037
      %v3278 = vadd.f32 %v3228, %v2041
      %v3279 = vadd.f32 %v3269, %v2045
      %v3280 = vadd.f32 %v3271, %v2049
      %v3281 = vadd.f32 %v3230, %v2037
      %v3282 = vadd.f32 %v3232, %v2041
      %v3283 = vadd.f32 %v3273, %v2045
      %v3284 = vadd.f32 %v3275, %v2049
      %v3285 = vxor.u32 %v3277, 2147483648
      %v3286 = vxor.u32 %v3281, 2147483648
      %v3287 = vmul.f32 %v3285, 1.442695
      %v3288 = vpow.pop %v3287
      %v3289 = vmul.f32 %v3286, 1.442695
      %v3290 = vpow.pop %v3289
      %v3291 = vadd.f32 %v3288, 1.0
      %v3292 = vadd.f32 %v3290, 1.0
      %v3293 = vrcp.pop %v3291
      %v3294 = vmul.f32 1.0, %v3293
      %v3295 = vrcp.pop %v3292
      %v3296 = vmul.f32 1.0, %v3295
      %v3297 = vxor.u32 %v3278, 2147483648
      %v3298 = vxor.u32 %v3282, 2147483648
      %v3299 = vmul.f32 %v3297, 1.442695
      %v3300 = vpow.pop %v3299
      %v3301 = vmul.f32 %v3298, 1.442695
      %v3302 = vpow.pop %v3301
      %v3303 = vadd.f32 %v3300, 1.0
      %v3304 = vadd.f32 %v3302, 1.0
      %v3305 = vrcp.pop %v3303
      %v3306 = vmul.f32 1.0, %v3305
      %v3307 = vrcp.pop %v3304
      %v3308 = vmul.f32 1.0, %v3307
      %v3309 = vtanh.pop %v3279
      %v3310 = vtanh.pop %v3283
      %v3311 = vxor.u32 %v3280, 2147483648
      %v3312 = vxor.u32 %v3284, 2147483648
      %v3313 = vmul.f32 %v3311, 1.442695
      %v3314 = vpow.pop %v3313
      %v3315 = vmul.f32 %v3312, 1.442695
      %v3316 = vpow.pop %v3315
      %v3317 = vadd.f32 %v3314, 1.0
      %v3318 = vadd.f32 %v3316, 1.0
      %v3319 = vrcp.pop %v3317
      %v3320 = vmul.f32 1.0, %v3319
      %v3321 = vrcp.pop %v3318
      %v3322 = vmul.f32 1.0, %v3321
      %v3323 = vmul.f32 %v3306, %v3034
      %v3324 = vmul.f32 %v3308, %v3035
      %v3325 = vmul.f32 %v3294, %v3309
      %v3326 = vmul.f32 %v3296, %v3310
      %v3327 = vadd.f32 %v3323, %v3325
      %v3328 = vadd.f32 %v3324, %v3326
      %v3329 = vtanh.pop %v3327
      %v3330 = vtanh.pop %v3328
      %v3331 = vmul.f32 %v3320, %v3329
      %v3332 = vmul.f32 %v3322, %v3330
      %s3333 = sadd.s32 %s1081, 4
      %p3334 = scmp.gt.s32.totalorder %s3333, 0
      %s3335 = scalar_select %p3334, 1, 0
      %v3336 = vstv %s3335
      %vm3337 = vcmp.eq.s32.totalorder %v3336, 1
      %v3338 = vsel %vm3337, %v3331, %v3032
      %v3339 = vsel %vm3337, %v3332, %v3033
      %v3340 = vsel %vm3337, %v3327, %v3034
      %v3341 = vsel %vm3337, %v3328, %v3035
      %s3342 = smul.u32 8, 4
      %s3343 = smul.addr %s3342, 8
      %s3344 = scalar_lea.vmem [#allocation2], %s3343
      %v3345 = vld [vmem:[%s3344] sm:$0xff]
      %v3346 = vld [vmem:[%s3344 + $0x8] sm:$0xff]
      %v3347 = vld [vmem:[%s3344 + $0x10] sm:$0xff]
      %v3348 = vld [vmem:[%s3344 + $0x18] sm:$0xff]
      %v3349 = vld [vmem:[%s3344 + $0x20] sm:$0xff]
      %v3350 = vld [vmem:[%s3344 + $0x28] sm:$0xff]
      %v3351 = vld [vmem:[%s3344 + $0x30] sm:$0xff]
      %v3352 = vld [vmem:[%s3344 + $0x38] sm:$0xff]
      %v3353 = vadd.f32 %v3345, %v3140
      %v3354 = vadd.f32 %v3346, %v3142
      %v3355 = vadd.f32 %v3347, %v3183
      %v3356 = vadd.f32 %v3348, %v3185
      %v3357 = vadd.f32 %v3349, %v3144
      %v3358 = vadd.f32 %v3350, %v3146
      %v3359 = vadd.f32 %v3351, %v3187
      %v3360 = vadd.f32 %v3352, %v3189
      %v3361 = vxor.u32 %v3353, 2147483648
      %v3362 = vxor.u32 %v3357, 2147483648
      %v3363 = vmul.f32 %v3361, 1.442695
      %v3364 = vpow.pop %v3363
      %v3365 = vmul.f32 %v3362, 1.442695
      %v3366 = vpow.pop %v3365
      %v3367 = vadd.f32 %v3364, 1.0
      %v3368 = vadd.f32 %v3366, 1.0
      %v3369 = vrcp.pop %v3367
      %v3370 = vmul.f32 1.0, %v3369
      %v3371 = vrcp.pop %v3368
      %v3372 = vmul.f32 1.0, %v3371
      %v3373 = vxor.u32 %v3354, 2147483648
      %v3374 = vxor.u32 %v3358, 2147483648
      %v3375 = vmul.f32 %v3373, 1.442695
      %v3376 = vpow.pop %v3375
      %v3377 = vmul.f32 %v3374, 1.442695
      %v3378 = vpow.pop %v3377
      %v3379 = vadd.f32 %v3376, 1.0
      %v3380 = vadd.f32 %v3378, 1.0
      %v3381 = vrcp.pop %v3379
      %v3382 = vmul.f32 1.0, %v3381
      %v3383 = vrcp.pop %v3380
      %v3384 = vmul.f32 1.0, %v3383
      %v3385 = vtanh.pop %v3355
      %v3386 = vtanh.pop %v3359
      %v3387 = vxor.u32 %v3356, 2147483648
      %v3388 = vxor.u32 %v3360, 2147483648
      %v3389 = vmul.f32 %v3387, 1.442695
      %v3390 = vpow.pop %v3389
      %v3391 = vmul.f32 %v3388, 1.442695
      %v3392 = vpow.pop %v3391
      %v3393 = vadd.f32 %v3390, 1.0
      %v3394 = vadd.f32 %v3392, 1.0
      %v3395 = vrcp.pop %v3393
      %v3396 = vmul.f32 1.0, %v3395
      %v3397 = vrcp.pop %v3394
      %v3398 = vmul.f32 1.0, %v3397
      %v3399 = vmul.f32 %v3382, %v3097
      %v3400 = vmul.f32 %v3384, %v3098
      %v3401 = vmul.f32 %v3370, %v3385
      %v3402 = vmul.f32 %v3372, %v3386
      %v3403 = vadd.f32 %v3399, %v3401
      %v3404 = vadd.f32 %v3400, %v3402
      %v3405 = vtanh.pop %v3403
      %v3406 = vtanh.pop %v3404
      %v3407 = vmul.f32 %v3396, %v3405
      %v3408 = vmul.f32 %v3398, %v3406
      %v3409 = vpack.c.bf16 %v3408, %v3407
      %v3410 = vpack.c.bf16 %v3339, %v3338
      %3411 = vmatprep.subr.bf16.mxu0 %v1661
      %3412 = vmatpush1.bf16.msra.mxu0 %v1660
      %3413 = vmatprep.subr.bf16.mxu0 %v1653
      %3414 = vmatpush1.bf16.msra.mxu0 %v1652
      %3415 = vmatprep.subr.bf16.mxu0 %v1645
      %3416 = vmatpush1.bf16.msra.mxu0 %v1644
      %3417 = vmatprep.subr.bf16.mxu0 %v1637
      %3418 = vmatpush1.bf16.msra.mxu0 %v1636
      %3419 = vmatprep.subr.bf16.mxu0 %v1629
      %3420 = vmatpush1.bf16.msra.mxu0 %v1628
      %3421 = vmatprep.subr.bf16.mxu0 %v1621
      %3422 = vmatpush1.bf16.msra.mxu0 %v1620
      %3423 = vmatprep.subr.bf16.mxu0 %v1613
      %3424 = vmatpush1.bf16.msra.mxu0 %v1612
      %3425 = vmatprep.subr.bf16.mxu0 %v1605
      %3426 = vmatpush1.bf16.msra.mxu0 %v1604
      %3427 = vmatprep.subr.bf16.mxu0 %v1725
      %3428 = vmatpush2.bf16.msra.mxu0 %v1724
      %3429 = vmatprep.subr.bf16.mxu0 %v1717
      %3430 = vmatpush2.bf16.msra.mxu0 %v1716
      %3431 = vmatprep.subr.bf16.mxu0 %v1709
      %3432 = vmatpush2.bf16.msra.mxu0 %v1708
      %3433 = vmatprep.subr.bf16.mxu0 %v1701
      %3434 = vmatpush2.bf16.msra.mxu0 %v1700
      %3435 = vmatprep.subr.bf16.mxu0 %v1693
      %3436 = vmatpush2.bf16.msra.mxu0 %v1692
      %3437 = vmatprep.subr.bf16.mxu0 %v1685
      %3438 = vmatpush2.bf16.msra.mxu0 %v1684
      %3439 = vmatprep.subr.bf16.mxu0 %v1677
      %3440 = vmatpush2.bf16.msra.mxu0 %v1676
      %3441 = vmatprep.subr.bf16.mxu0 %v1669
      %3442 = vmatpush2.bf16.msra.mxu0 %v1668
      %3443 = vmatprep.mubr.bf16.mxu0 %v3410
      %3444 = vmatmul.mubr.bf16.gmra.mxu0 %v3409
      %v3445 = vpop.f32.mrf.mxu0
      %v3446 = vadd.f32 0.0, %v3445
      %v3447 = vpop.f32.mrf.mxu0
      %v3448 = vadd.f32 0.0, %v3447
      %v3449 = vpop.f32.mrf.mxu0
      %v3450 = vadd.f32 0.0, %v3449
      %v3451 = vpop.f32.mrf.mxu0
      %v3452 = vadd.f32 0.0, %v3451
      %3453 = vdwg.mxu0
      %3454 = vmatprep.subr.bf16.mxu0 %v1663
      %3455 = vmatpush1.bf16.msra.mxu0 %v1662
      %3456 = vmatprep.subr.bf16.mxu0 %v1655
      %3457 = vmatpush1.bf16.msra.mxu0 %v1654
      %3458 = vmatprep.subr.bf16.mxu0 %v1647
      %3459 = vmatpush1.bf16.msra.mxu0 %v1646
      %3460 = vmatprep.subr.bf16.mxu0 %v1639
      %3461 = vmatpush1.bf16.msra.mxu0 %v1638
      %3462 = vmatprep.subr.bf16.mxu0 %v1631
      %3463 = vmatpush1.bf16.msra.mxu0 %v1630
      %3464 = vmatprep.subr.bf16.mxu0 %v1623
      %3465 = vmatpush1.bf16.msra.mxu0 %v1622
      %3466 = vmatprep.subr.bf16.mxu0 %v1615
      %3467 = vmatpush1.bf16.msra.mxu0 %v1614
      %3468 = vmatprep.subr.bf16.mxu0 %v1607
      %3469 = vmatpush1.bf16.msra.mxu0 %v1606
      %3470 = vmatprep.subr.bf16.mxu0 %v1727
      %3471 = vmatpush2.bf16.msra.mxu0 %v1726
      %3472 = vmatprep.subr.bf16.mxu0 %v1719
      %3473 = vmatpush2.bf16.msra.mxu0 %v1718
      %3474 = vmatprep.subr.bf16.mxu0 %v1711
      %3475 = vmatpush2.bf16.msra.mxu0 %v1710
      %3476 = vmatprep.subr.bf16.mxu0 %v1703
      %3477 = vmatpush2.bf16.msra.mxu0 %v1702
      %3478 = vmatprep.subr.bf16.mxu0 %v1695
      %3479 = vmatpush2.bf16.msra.mxu0 %v1694
      %3480 = vmatprep.subr.bf16.mxu0 %v1687
      %3481 = vmatpush2.bf16.msra.mxu0 %v1686
      %3482 = vmatprep.subr.bf16.mxu0 %v1679
      %3483 = vmatpush2.bf16.msra.mxu0 %v1678
      %3484 = vmatprep.subr.bf16.mxu0 %v1671
      %3485 = vmatpush2.bf16.msra.mxu0 %v1670
      %3486 = vmatprep.mubr.bf16.mxu0 %v3410
      %3487 = vmatmul.mubr.bf16.gmra.mxu0 %v3409
      %v3488 = vpop.f32.mrf.mxu0
      %v3489 = vadd.f32 0.0, %v3488
      %v3490 = vpop.f32.mrf.mxu0
      %v3491 = vadd.f32 0.0, %v3490
      %v3492 = vpop.f32.mrf.mxu0
      %v3493 = vadd.f32 0.0, %v3492
      %v3494 = vpop.f32.mrf.mxu0
      %v3495 = vadd.f32 0.0, %v3494
      %3496 = vdwg.mxu0
      %3497 = vmatprep.subr.bf16.mxu0 %v1665
      %3498 = vmatpush1.bf16.msra.mxu0 %v1664
      %3499 = vmatprep.subr.bf16.mxu0 %v1657
      %3500 = vmatpush1.bf16.msra.mxu0 %v1656
      %3501 = vmatprep.subr.bf16.mxu0 %v1649
      %3502 = vmatpush1.bf16.msra.mxu0 %v1648
      %3503 = vmatprep.subr.bf16.mxu0 %v1641
      %3504 = vmatpush1.bf16.msra.mxu0 %v1640
      %3505 = vmatprep.subr.bf16.mxu0 %v1633
      %3506 = vmatpush1.bf16.msra.mxu0 %v1632
      %3507 = vmatprep.subr.bf16.mxu0 %v1625
      %3508 = vmatpush1.bf16.msra.mxu0 %v1624
      %3509 = vmatprep.subr.bf16.mxu0 %v1617
      %3510 = vmatpush1.bf16.msra.mxu0 %v1616
      %3511 = vmatprep.subr.bf16.mxu0 %v1609
      %3512 = vmatpush1.bf16.msra.mxu0 %v1608
      %3513 = vmatprep.subr.bf16.mxu0 %v1729
      %3514 = vmatpush2.bf16.msra.mxu0 %v1728
      %3515 = vmatprep.subr.bf16.mxu0 %v1721
      %3516 = vmatpush2.bf16.msra.mxu0 %v1720
      %3517 = vmatprep.subr.bf16.mxu0 %v1713
      %3518 = vmatpush2.bf16.msra.mxu0 %v1712
      %3519 = vmatprep.subr.bf16.mxu0 %v1705
      %3520 = vmatpush2.bf16.msra.mxu0 %v1704
      %3521 = vmatprep.subr.bf16.mxu0 %v1697
      %3522 = vmatpush2.bf16.msra.mxu0 %v1696
      %3523 = vmatprep.subr.bf16.mxu0 %v1689
      %3524 = vmatpush2.bf16.msra.mxu0 %v1688
      %3525 = vmatprep.subr.bf16.mxu0 %v1681
      %3526 = vmatpush2.bf16.msra.mxu0 %v1680
      %3527 = vmatprep.subr.bf16.mxu0 %v1673
      %3528 = vmatpush2.bf16.msra.mxu0 %v1672
      %3529 = vmatprep.mubr.bf16.mxu0 %v3410
      %3530 = vmatmul.mubr.bf16.gmra.mxu0 %v3409
      %v3531 = vpop.f32.mrf.mxu0
      %v3532 = vadd.f32 0.0, %v3531
      %v3533 = vpop.f32.mrf.mxu0
      %v3534 = vadd.f32 0.0, %v3533
      %v3535 = vpop.f32.mrf.mxu0
      %v3536 = vadd.f32 0.0, %v3535
      %v3537 = vpop.f32.mrf.mxu0
      %v3538 = vadd.f32 0.0, %v3537
      %3539 = vdwg.mxu0
      %3540 = vmatprep.subr.bf16.mxu0 %v1667
      %3541 = vmatpush1.bf16.msra.mxu0 %v1666
      %3542 = vmatprep.subr.bf16.mxu0 %v1659
      %3543 = vmatpush1.bf16.msra.mxu0 %v1658
      %3544 = vmatprep.subr.bf16.mxu0 %v1651
      %3545 = vmatpush1.bf16.msra.mxu0 %v1650
      %3546 = vmatprep.subr.bf16.mxu0 %v1643
      %3547 = vmatpush1.bf16.msra.mxu0 %v1642
      %3548 = vmatprep.subr.bf16.mxu0 %v1635
      %3549 = vmatpush1.bf16.msra.mxu0 %v1634
      %3550 = vmatprep.subr.bf16.mxu0 %v1627
      %3551 = vmatpush1.bf16.msra.mxu0 %v1626
      %3552 = vmatprep.subr.bf16.mxu0 %v1619
      %3553 = vmatpush1.bf16.msra.mxu0 %v1618
      %3554 = vmatprep.subr.bf16.mxu0 %v1611
      %3555 = vmatpush1.bf16.msra.mxu0 %v1610
      %3556 = vmatprep.subr.bf16.mxu0 %v1731
      %3557 = vmatpush2.bf16.msra.mxu0 %v1730
      %3558 = vmatprep.subr.bf16.mxu0 %v1723
      %3559 = vmatpush2.bf16.msra.mxu0 %v1722
      %3560 = vmatprep.subr.bf16.mxu0 %v1715
      %3561 = vmatpush2.bf16.msra.mxu0 %v1714
      %3562 = vmatprep.subr.bf16.mxu0 %v1707
      %3563 = vmatpush2.bf16.msra.mxu0 %v1706
      %3564 = vmatprep.subr.bf16.mxu0 %v1699
      %3565 = vmatpush2.bf16.msra.mxu0 %v1698
      %3566 = vmatprep.subr.bf16.mxu0 %v1691
      %3567 = vmatpush2.bf16.msra.mxu0 %v1690
      %3568 = vmatprep.subr.bf16.mxu0 %v1683
      %3569 = vmatpush2.bf16.msra.mxu0 %v1682
      %3570 = vmatprep.subr.bf16.mxu0 %v1675
      %3571 = vmatpush2.bf16.msra.mxu0 %v1674
      %3572 = vmatprep.mubr.bf16.mxu0 %v3410
      %3573 = vmatmul.mubr.bf16.gmra.mxu0 %v3409
      %v3574 = vpop.f32.mrf.mxu0
      %v3575 = vadd.f32 0.0, %v3574
      %v3576 = vpop.f32.mrf.mxu0
      %v3577 = vadd.f32 0.0, %v3576
      %v3578 = vpop.f32.mrf.mxu0
      %v3579 = vadd.f32 0.0, %v3578
      %v3580 = vpop.f32.mrf.mxu0
      %v3581 = vadd.f32 0.0, %v3580
      %3582 = vdwg.mxu0
      %v3583 = vadd.f32 %v3532, %v2037
      %v3584 = vadd.f32 %v3534, %v2041
      %v3585 = vadd.f32 %v3575, %v2045
      %v3586 = vadd.f32 %v3577, %v2049
      %v3587 = vadd.f32 %v3536, %v2037
      %v3588 = vadd.f32 %v3538, %v2041
      %v3589 = vadd.f32 %v3579, %v2045
      %v3590 = vadd.f32 %v3581, %v2049
      %v3591 = vxor.u32 %v3583, 2147483648
      %v3592 = vxor.u32 %v3587, 2147483648
      %v3593 = vmul.f32 %v3591, 1.442695
      %v3594 = vpow.pop %v3593
      %v3595 = vmul.f32 %v3592, 1.442695
      %v3596 = vpow.pop %v3595
      %v3597 = vadd.f32 %v3594, 1.0
      %v3598 = vadd.f32 %v3596, 1.0
      %v3599 = vrcp.pop %v3597
      %v3600 = vmul.f32 1.0, %v3599
      %v3601 = vrcp.pop %v3598
      %v3602 = vmul.f32 1.0, %v3601
      %v3603 = vxor.u32 %v3584, 2147483648
      %v3604 = vxor.u32 %v3588, 2147483648
      %v3605 = vmul.f32 %v3603, 1.442695
      %v3606 = vpow.pop %v3605
      %v3607 = vmul.f32 %v3604, 1.442695
      %v3608 = vpow.pop %v3607
      %v3609 = vadd.f32 %v3606, 1.0
      %v3610 = vadd.f32 %v3608, 1.0
      %v3611 = vrcp.pop %v3609
      %v3612 = vmul.f32 1.0, %v3611
      %v3613 = vrcp.pop %v3610
      %v3614 = vmul.f32 1.0, %v3613
      %v3615 = vtanh.pop %v3585
      %v3616 = vtanh.pop %v3589
      %v3617 = vxor.u32 %v3586, 2147483648
      %v3618 = vxor.u32 %v3590, 2147483648
      %v3619 = vmul.f32 %v3617, 1.442695
      %v3620 = vpow.pop %v3619
      %v3621 = vmul.f32 %v3618, 1.442695
      %v3622 = vpow.pop %v3621
      %v3623 = vadd.f32 %v3620, 1.0
      %v3624 = vadd.f32 %v3622, 1.0
      %v3625 = vrcp.pop %v3623
      %v3626 = vmul.f32 1.0, %v3625
      %v3627 = vrcp.pop %v3624
      %v3628 = vmul.f32 1.0, %v3627
      %v3629 = vmul.f32 %v3612, %v3340
      %v3630 = vmul.f32 %v3614, %v3341
      %v3631 = vmul.f32 %v3600, %v3615
      %v3632 = vmul.f32 %v3602, %v3616
      %v3633 = vadd.f32 %v3629, %v3631
      %v3634 = vadd.f32 %v3630, %v3632
      %v3635 = vtanh.pop %v3633
      %v3636 = vtanh.pop %v3634
      %v3637 = vmul.f32 %v3626, %v3635
      %v3638 = vmul.f32 %v3628, %v3636
      %s3639 = sadd.s32 %s1081, 5
      %p3640 = scmp.gt.s32.totalorder %s3639, 0
      %s3641 = scalar_select %p3640, 1, 0
      %v3642 = vstv %s3641
      %vm3643 = vcmp.eq.s32.totalorder %v3642, 1
      %v3644 = vsel %vm3643, %v3637, %v3338
      %v3645 = vsel %vm3643, %v3638, %v3339
      %v3646 = vsel %vm3643, %v3633, %v3340
      %v3647 = vsel %vm3643, %v3634, %v3341
      %s3648 = smul.u32 10, 4
      %s3649 = smul.addr %s3648, 8
      %s3650 = scalar_lea.vmem [#allocation2], %s3649
      %v3651 = vld [vmem:[%s3650] sm:$0xff]
      %v3652 = vld [vmem:[%s3650 + $0x8] sm:$0xff]
      %v3653 = vld [vmem:[%s3650 + $0x10] sm:$0xff]
      %v3654 = vld [vmem:[%s3650 + $0x18] sm:$0xff]
      %v3655 = vld [vmem:[%s3650 + $0x20] sm:$0xff]
      %v3656 = vld [vmem:[%s3650 + $0x28] sm:$0xff]
      %v3657 = vld [vmem:[%s3650 + $0x30] sm:$0xff]
      %v3658 = vld [vmem:[%s3650 + $0x38] sm:$0xff]
      %v3659 = vadd.f32 %v3651, %v3446
      %v3660 = vadd.f32 %v3652, %v3448
      %v3661 = vadd.f32 %v3653, %v3489
      %v3662 = vadd.f32 %v3654, %v3491
      %v3663 = vadd.f32 %v3655, %v3450
      %v3664 = vadd.f32 %v3656, %v3452
      %v3665 = vadd.f32 %v3657, %v3493
      %v3666 = vadd.f32 %v3658, %v3495
      %v3667 = vxor.u32 %v3659, 2147483648
      %v3668 = vxor.u32 %v3663, 2147483648
      %v3669 = vmul.f32 %v3667, 1.442695
      %v3670 = vpow.pop %v3669
      %v3671 = vmul.f32 %v3668, 1.442695
      %v3672 = vpow.pop %v3671
      %v3673 = vadd.f32 %v3670, 1.0
      %v3674 = vadd.f32 %v3672, 1.0
      %v3675 = vrcp.pop %v3673
      %v3676 = vmul.f32 1.0, %v3675
      %v3677 = vrcp.pop %v3674
      %v3678 = vmul.f32 1.0, %v3677
      %v3679 = vxor.u32 %v3660, 2147483648
      %v3680 = vxor.u32 %v3664, 2147483648
      %v3681 = vmul.f32 %v3679, 1.442695
      %v3682 = vpow.pop %v3681
      %v3683 = vmul.f32 %v3680, 1.442695
      %v3684 = vpow.pop %v3683
      %v3685 = vadd.f32 %v3682, 1.0
      %v3686 = vadd.f32 %v3684, 1.0
      %v3687 = vrcp.pop %v3685
      %v3688 = vmul.f32 1.0, %v3687
      %v3689 = vrcp.pop %v3686
      %v3690 = vmul.f32 1.0, %v3689
      %v3691 = vtanh.pop %v3661
      %v3692 = vtanh.pop %v3665
      %v3693 = vxor.u32 %v3662, 2147483648
      %v3694 = vxor.u32 %v3666, 2147483648
      %v3695 = vmul.f32 %v3693, 1.442695
      %v3696 = vpow.pop %v3695
      %v3697 = vmul.f32 %v3694, 1.442695
      %v3698 = vpow.pop %v3697
      %v3699 = vadd.f32 %v3696, 1.0
      %v3700 = vadd.f32 %v3698, 1.0
      %v3701 = vrcp.pop %v3699
      %v3702 = vmul.f32 1.0, %v3701
      %v3703 = vrcp.pop %v3700
      %v3704 = vmul.f32 1.0, %v3703
      %v3705 = vmul.f32 %v3688, %v3403
      %v3706 = vmul.f32 %v3690, %v3404
      %v3707 = vmul.f32 %v3676, %v3691
      %v3708 = vmul.f32 %v3678, %v3692
      %v3709 = vadd.f32 %v3705, %v3707
      %v3710 = vadd.f32 %v3706, %v3708
      %v3711 = vtanh.pop %v3709
      %v3712 = vtanh.pop %v3710
      %v3713 = vmul.f32 %v3702, %v3711
      %v3714 = vmul.f32 %v3704, %v3712
      %v3715 = vpack.c.bf16 %v3714, %v3713
      %v3716 = vpack.c.bf16 %v3645, %v3644
      %3717 = vmatprep.subr.bf16.mxu0 %v1661
      %3718 = vmatpush1.bf16.msra.mxu0 %v1660
      %3719 = vmatprep.subr.bf16.mxu0 %v1653
      %3720 = vmatpush1.bf16.msra.mxu0 %v1652
      %3721 = vmatprep.subr.bf16.mxu0 %v1645
      %3722 = vmatpush1.bf16.msra.mxu0 %v1644
      %3723 = vmatprep.subr.bf16.mxu0 %v1637
      %3724 = vmatpush1.bf16.msra.mxu0 %v1636
      %3725 = vmatprep.subr.bf16.mxu0 %v1629
      %3726 = vmatpush1.bf16.msra.mxu0 %v1628
      %3727 = vmatprep.subr.bf16.mxu0 %v1621
      %3728 = vmatpush1.bf16.msra.mxu0 %v1620
      %3729 = vmatprep.subr.bf16.mxu0 %v1613
      %3730 = vmatpush1.bf16.msra.mxu0 %v1612
      %3731 = vmatprep.subr.bf16.mxu0 %v1605
      %3732 = vmatpush1.bf16.msra.mxu0 %v1604
      %3733 = vmatprep.subr.bf16.mxu0 %v1725
      %3734 = vmatpush2.bf16.msra.mxu0 %v1724
      %3735 = vmatprep.subr.bf16.mxu0 %v1717
      %3736 = vmatpush2.bf16.msra.mxu0 %v1716
      %3737 = vmatprep.subr.bf16.mxu0 %v1709
      %3738 = vmatpush2.bf16.msra.mxu0 %v1708
      %3739 = vmatprep.subr.bf16.mxu0 %v1701
      %3740 = vmatpush2.bf16.msra.mxu0 %v1700
      %3741 = vmatprep.subr.bf16.mxu0 %v1693
      %3742 = vmatpush2.bf16.msra.mxu0 %v1692
      %3743 = vmatprep.subr.bf16.mxu0 %v1685
      %3744 = vmatpush2.bf16.msra.mxu0 %v1684
      %3745 = vmatprep.subr.bf16.mxu0 %v1677
      %3746 = vmatpush2.bf16.msra.mxu0 %v1676
      %3747 = vmatprep.subr.bf16.mxu0 %v1669
      %3748 = vmatpush2.bf16.msra.mxu0 %v1668
      %3749 = vmatprep.mubr.bf16.mxu0 %v3716
      %3750 = vmatmul.mubr.bf16.gmra.mxu0 %v3715
      %v3751 = vpop.f32.mrf.mxu0
      %v3752 = vadd.f32 0.0, %v3751
      %v3753 = vpop.f32.mrf.mxu0
      %v3754 = vadd.f32 0.0, %v3753
      %v3755 = vpop.f32.mrf.mxu0
      %v3756 = vadd.f32 0.0, %v3755
      %v3757 = vpop.f32.mrf.mxu0
      %v3758 = vadd.f32 0.0, %v3757
      %3759 = vdwg.mxu0
      %3760 = vmatprep.subr.bf16.mxu0 %v1663
      %3761 = vmatpush1.bf16.msra.mxu0 %v1662
      %3762 = vmatprep.subr.bf16.mxu0 %v1655
      %3763 = vmatpush1.bf16.msra.mxu0 %v1654
      %3764 = vmatprep.subr.bf16.mxu0 %v1647
      %3765 = vmatpush1.bf16.msra.mxu0 %v1646
      %3766 = vmatprep.subr.bf16.mxu0 %v1639
      %3767 = vmatpush1.bf16.msra.mxu0 %v1638
      %3768 = vmatprep.subr.bf16.mxu0 %v1631
      %3769 = vmatpush1.bf16.msra.mxu0 %v1630
      %3770 = vmatprep.subr.bf16.mxu0 %v1623
      %3771 = vmatpush1.bf16.msra.mxu0 %v1622
      %3772 = vmatprep.subr.bf16.mxu0 %v1615
      %3773 = vmatpush1.bf16.msra.mxu0 %v1614
      %3774 = vmatprep.subr.bf16.mxu0 %v1607
      %3775 = vmatpush1.bf16.msra.mxu0 %v1606
      %3776 = vmatprep.subr.bf16.mxu0 %v1727
      %3777 = vmatpush2.bf16.msra.mxu0 %v1726
      %3778 = vmatprep.subr.bf16.mxu0 %v1719
      %3779 = vmatpush2.bf16.msra.mxu0 %v1718
      %3780 = vmatprep.subr.bf16.mxu0 %v1711
      %3781 = vmatpush2.bf16.msra.mxu0 %v1710
      %3782 = vmatprep.subr.bf16.mxu0 %v1703
      %3783 = vmatpush2.bf16.msra.mxu0 %v1702
      %3784 = vmatprep.subr.bf16.mxu0 %v1695
      %3785 = vmatpush2.bf16.msra.mxu0 %v1694
      %3786 = vmatprep.subr.bf16.mxu0 %v1687
      %3787 = vmatpush2.bf16.msra.mxu0 %v1686
      %3788 = vmatprep.subr.bf16.mxu0 %v1679
      %3789 = vmatpush2.bf16.msra.mxu0 %v1678
      %3790 = vmatprep.subr.bf16.mxu0 %v1671
      %3791 = vmatpush2.bf16.msra.mxu0 %v1670
      %3792 = vmatprep.mubr.bf16.mxu0 %v3716
      %3793 = vmatmul.mubr.bf16.gmra.mxu0 %v3715
      %v3794 = vpop.f32.mrf.mxu0
      %v3795 = vadd.f32 0.0, %v3794
      %v3796 = vpop.f32.mrf.mxu0
      %v3797 = vadd.f32 0.0, %v3796
      %v3798 = vpop.f32.mrf.mxu0
      %v3799 = vadd.f32 0.0, %v3798
      %v3800 = vpop.f32.mrf.mxu0
      %v3801 = vadd.f32 0.0, %v3800
      %3802 = vdwg.mxu0
      %3803 = vmatprep.subr.bf16.mxu0 %v1665
      %3804 = vmatpush1.bf16.msra.mxu0 %v1664
      %3805 = vmatprep.subr.bf16.mxu0 %v1657
      %3806 = vmatpush1.bf16.msra.mxu0 %v1656
      %3807 = vmatprep.subr.bf16.mxu0 %v1649
      %3808 = vmatpush1.bf16.msra.mxu0 %v1648
      %3809 = vmatprep.subr.bf16.mxu0 %v1641
      %3810 = vmatpush1.bf16.msra.mxu0 %v1640
      %3811 = vmatprep.subr.bf16.mxu0 %v1633
      %3812 = vmatpush1.bf16.msra.mxu0 %v1632
      %3813 = vmatprep.subr.bf16.mxu0 %v1625
      %3814 = vmatpush1.bf16.msra.mxu0 %v1624
      %3815 = vmatprep.subr.bf16.mxu0 %v1617
      %3816 = vmatpush1.bf16.msra.mxu0 %v1616
      %3817 = vmatprep.subr.bf16.mxu0 %v1609
      %3818 = vmatpush1.bf16.msra.mxu0 %v1608
      %3819 = vmatprep.subr.bf16.mxu0 %v1729
      %3820 = vmatpush2.bf16.msra.mxu0 %v1728
      %3821 = vmatprep.subr.bf16.mxu0 %v1721
      %3822 = vmatpush2.bf16.msra.mxu0 %v1720
      %3823 = vmatprep.subr.bf16.mxu0 %v1713
      %3824 = vmatpush2.bf16.msra.mxu0 %v1712
      %3825 = vmatprep.subr.bf16.mxu0 %v1705
      %3826 = vmatpush2.bf16.msra.mxu0 %v1704
      %3827 = vmatprep.subr.bf16.mxu0 %v1697
      %3828 = vmatpush2.bf16.msra.mxu0 %v1696
      %3829 = vmatprep.subr.bf16.mxu0 %v1689
      %3830 = vmatpush2.bf16.msra.mxu0 %v1688
      %3831 = vmatprep.subr.bf16.mxu0 %v1681
      %3832 = vmatpush2.bf16.msra.mxu0 %v1680
      %3833 = vmatprep.subr.bf16.mxu0 %v1673
      %3834 = vmatpush2.bf16.msra.mxu0 %v1672
      %3835 = vmatprep.mubr.bf16.mxu0 %v3716
      %3836 = vmatmul.mubr.bf16.gmra.mxu0 %v3715
      %v3837 = vpop.f32.mrf.mxu0
      %v3838 = vadd.f32 0.0, %v3837
      %v3839 = vpop.f32.mrf.mxu0
      %v3840 = vadd.f32 0.0, %v3839
      %v3841 = vpop.f32.mrf.mxu0
      %v3842 = vadd.f32 0.0, %v3841
      %v3843 = vpop.f32.mrf.mxu0
      %v3844 = vadd.f32 0.0, %v3843
      %3845 = vdwg.mxu0
      %3846 = vmatprep.subr.bf16.mxu0 %v1667
      %3847 = vmatpush1.bf16.msra.mxu0 %v1666
      %3848 = vmatprep.subr.bf16.mxu0 %v1659
      %3849 = vmatpush1.bf16.msra.mxu0 %v1658
      %3850 = vmatprep.subr.bf16.mxu0 %v1651
      %3851 = vmatpush1.bf16.msra.mxu0 %v1650
      %3852 = vmatprep.subr.bf16.mxu0 %v1643
      %3853 = vmatpush1.bf16.msra.mxu0 %v1642
      %3854 = vmatprep.subr.bf16.mxu0 %v1635
      %3855 = vmatpush1.bf16.msra.mxu0 %v1634
      %3856 = vmatprep.subr.bf16.mxu0 %v1627
      %3857 = vmatpush1.bf16.msra.mxu0 %v1626
      %3858 = vmatprep.subr.bf16.mxu0 %v1619
      %3859 = vmatpush1.bf16.msra.mxu0 %v1618
      %3860 = vmatprep.subr.bf16.mxu0 %v1611
      %3861 = vmatpush1.bf16.msra.mxu0 %v1610
      %3862 = vmatprep.subr.bf16.mxu0 %v1731
      %3863 = vmatpush2.bf16.msra.mxu0 %v1730
      %3864 = vmatprep.subr.bf16.mxu0 %v1723
      %3865 = vmatpush2.bf16.msra.mxu0 %v1722
      %3866 = vmatprep.subr.bf16.mxu0 %v1715
      %3867 = vmatpush2.bf16.msra.mxu0 %v1714
      %3868 = vmatprep.subr.bf16.mxu0 %v1707
      %3869 = vmatpush2.bf16.msra.mxu0 %v1706
      %3870 = vmatprep.subr.bf16.mxu0 %v1699
      %3871 = vmatpush2.bf16.msra.mxu0 %v1698
      %3872 = vmatprep.subr.bf16.mxu0 %v1691
      %3873 = vmatpush2.bf16.msra.mxu0 %v1690
      %3874 = vmatprep.subr.bf16.mxu0 %v1683
      %3875 = vmatpush2.bf16.msra.mxu0 %v1682
      %3876 = vmatprep.subr.bf16.mxu0 %v1675
      %3877 = vmatpush2.bf16.msra.mxu0 %v1674
      %3878 = vmatprep.mubr.bf16.mxu0 %v3716
      %3879 = vmatmul.mubr.bf16.gmra.mxu0 %v3715
      %v3880 = vpop.f32.mrf.mxu0
      %v3881 = vadd.f32 0.0, %v3880
      %v3882 = vpop.f32.mrf.mxu0
      %v3883 = vadd.f32 0.0, %v3882
      %v3884 = vpop.f32.mrf.mxu0
      %v3885 = vadd.f32 0.0, %v3884
      %v3886 = vpop.f32.mrf.mxu0
      %v3887 = vadd.f32 0.0, %v3886
      %3888 = vdwg.mxu0
      %v3889 = vadd.f32 %v3838, %v2037
      %v3890 = vadd.f32 %v3840, %v2041
      %v3891 = vadd.f32 %v3881, %v2045
      %v3892 = vadd.f32 %v3883, %v2049
      %v3893 = vadd.f32 %v3842, %v2037
      %v3894 = vadd.f32 %v3844, %v2041
      %v3895 = vadd.f32 %v3885, %v2045
      %v3896 = vadd.f32 %v3887, %v2049
      %v3897 = vxor.u32 %v3889, 2147483648
      %v3898 = vxor.u32 %v3893, 2147483648
      %v3899 = vmul.f32 %v3897, 1.442695
      %v3900 = vpow.pop %v3899
      %v3901 = vmul.f32 %v3898, 1.442695
      %v3902 = vpow.pop %v3901
      %v3903 = vadd.f32 %v3900, 1.0
      %v3904 = vadd.f32 %v3902, 1.0
      %v3905 = vrcp.pop %v3903
      %v3906 = vmul.f32 1.0, %v3905
      %v3907 = vrcp.pop %v3904
      %v3908 = vmul.f32 1.0, %v3907
      %v3909 = vxor.u32 %v3890, 2147483648
      %v3910 = vxor.u32 %v3894, 2147483648
      %v3911 = vmul.f32 %v3909, 1.442695
      %v3912 = vpow.pop %v3911
      %v3913 = vmul.f32 %v3910, 1.442695
      %v3914 = vpow.pop %v3913
      %v3915 = vadd.f32 %v3912, 1.0
      %v3916 = vadd.f32 %v3914, 1.0
      %v3917 = vrcp.pop %v3915
      %v3918 = vmul.f32 1.0, %v3917
      %v3919 = vrcp.pop %v3916
      %v3920 = vmul.f32 1.0, %v3919
      %v3921 = vtanh.pop %v3891
      %v3922 = vtanh.pop %v3895
      %v3923 = vxor.u32 %v3892, 2147483648
      %v3924 = vxor.u32 %v3896, 2147483648
      %v3925 = vmul.f32 %v3923, 1.442695
      %v3926 = vpow.pop %v3925
      %v3927 = vmul.f32 %v3924, 1.442695
      %v3928 = vpow.pop %v3927
      %v3929 = vadd.f32 %v3926, 1.0
      %v3930 = vadd.f32 %v3928, 1.0
      %v3931 = vrcp.pop %v3929
      %v3932 = vmul.f32 1.0, %v3931
      %v3933 = vrcp.pop %v3930
      %v3934 = vmul.f32 1.0, %v3933
      %v3935 = vmul.f32 %v3918, %v3646
      %v3936 = vmul.f32 %v3920, %v3647
      %v3937 = vmul.f32 %v3906, %v3921
      %v3938 = vmul.f32 %v3908, %v3922
      %v3939 = vadd.f32 %v3935, %v3937
      %v3940 = vadd.f32 %v3936, %v3938
      %v3941 = vtanh.pop %v3939
      %v3942 = vtanh.pop %v3940
      %v3943 = vmul.f32 %v3932, %v3941
      %v3944 = vmul.f32 %v3934, %v3942
      %s3945 = sadd.s32 %s1081, 6
      %p3946 = scmp.gt.s32.totalorder %s3945, 0
      %s3947 = scalar_select %p3946, 1, 0
      %v3948 = vstv %s3947
      %vm3949 = vcmp.eq.s32.totalorder %v3948, 1
      %v3950 = vsel %vm3949, %v3943, %v3644
      %v3951 = vsel %vm3949, %v3944, %v3645
      %v3952 = vsel %vm3949, %v3939, %v3646
      %v3953 = vsel %vm3949, %v3940, %v3647
      %s3954 = smul.u32 12, 4
      %s3955 = smul.addr %s3954, 8
      %s3956 = scalar_lea.vmem [#allocation2], %s3955
      %v3957 = vld [vmem:[%s3956] sm:$0xff]
      %v3958 = vld [vmem:[%s3956 + $0x8] sm:$0xff]
      %v3959 = vld [vmem:[%s3956 + $0x10] sm:$0xff]
      %v3960 = vld [vmem:[%s3956 + $0x18] sm:$0xff]
      %v3961 = vld [vmem:[%s3956 + $0x20] sm:$0xff]
      %v3962 = vld [vmem:[%s3956 + $0x28] sm:$0xff]
      %v3963 = vld [vmem:[%s3956 + $0x30] sm:$0xff]
      %v3964 = vld [vmem:[%s3956 + $0x38] sm:$0xff]
      %v3965 = vadd.f32 %v3957, %v3752
      %v3966 = vadd.f32 %v3958, %v3754
      %v3967 = vadd.f32 %v3959, %v3795
      %v3968 = vadd.f32 %v3960, %v3797
      %v3969 = vadd.f32 %v3961, %v3756
      %v3970 = vadd.f32 %v3962, %v3758
      %v3971 = vadd.f32 %v3963, %v3799
      %v3972 = vadd.f32 %v3964, %v3801
      %v3973 = vxor.u32 %v3965, 2147483648
      %v3974 = vxor.u32 %v3969, 2147483648
      %v3975 = vmul.f32 %v3973, 1.442695
      %v3976 = vpow.pop %v3975
      %v3977 = vmul.f32 %v3974, 1.442695
      %v3978 = vpow.pop %v3977
      %v3979 = vadd.f32 %v3976, 1.0
      %v3980 = vadd.f32 %v3978, 1.0
      %v3981 = vrcp.pop %v3979
      %v3982 = vmul.f32 1.0, %v3981
      %v3983 = vrcp.pop %v3980
      %v3984 = vmul.f32 1.0, %v3983
      %v3985 = vxor.u32 %v3966, 2147483648
      %v3986 = vxor.u32 %v3970, 2147483648
      %v3987 = vmul.f32 %v3985, 1.442695
      %v3988 = vpow.pop %v3987
      %v3989 = vmul.f32 %v3986, 1.442695
      %v3990 = vpow.pop %v3989
      %v3991 = vadd.f32 %v3988, 1.0
      %v3992 = vadd.f32 %v3990, 1.0
      %v3993 = vrcp.pop %v3991
      %v3994 = vmul.f32 1.0, %v3993
      %v3995 = vrcp.pop %v3992
      %v3996 = vmul.f32 1.0, %v3995
      %v3997 = vtanh.pop %v3967
      %v3998 = vtanh.pop %v3971
      %v3999 = vxor.u32 %v3968, 2147483648
      %v4000 = vxor.u32 %v3972, 2147483648
      %v4001 = vmul.f32 %v3999, 1.442695
      %v4002 = vpow.pop %v4001
      %v4003 = vmul.f32 %v4000, 1.442695
      %v4004 = vpow.pop %v4003
      %v4005 = vadd.f32 %v4002, 1.0
      %v4006 = vadd.f32 %v4004, 1.0
      %v4007 = vrcp.pop %v4005
      %v4008 = vmul.f32 1.0, %v4007
      %v4009 = vrcp.pop %v4006
      %v4010 = vmul.f32 1.0, %v4009
      %v4011 = vmul.f32 %v3994, %v3709
      %v4012 = vmul.f32 %v3996, %v3710
      %v4013 = vmul.f32 %v3982, %v3997
      %v4014 = vmul.f32 %v3984, %v3998
      %v4015 = vadd.f32 %v4011, %v4013
      %v4016 = vadd.f32 %v4012, %v4014
      %v4017 = vtanh.pop %v4015
      %v4018 = vtanh.pop %v4016
      %v4019 = vmul.f32 %v4008, %v4017
      %v4020 = vmul.f32 %v4010, %v4018
      %v4021 = vpack.c.bf16 %v4020, %v4019
      %v4022 = vpack.c.bf16 %v3951, %v3950
      %4023 = vmatprep.subr.bf16.mxu0 %v1661
      %4024 = vmatpush1.bf16.msra.mxu0 %v1660
      %4025 = vmatprep.subr.bf16.mxu0 %v1653
      %4026 = vmatpush1.bf16.msra.mxu0 %v1652
      %4027 = vmatprep.subr.bf16.mxu0 %v1645
      %4028 = vmatpush1.bf16.msra.mxu0 %v1644
      %4029 = vmatprep.subr.bf16.mxu0 %v1637
      %4030 = vmatpush1.bf16.msra.mxu0 %v1636
      %4031 = vmatprep.subr.bf16.mxu0 %v1629
      %4032 = vmatpush1.bf16.msra.mxu0 %v1628
      %4033 = vmatprep.subr.bf16.mxu0 %v1621
      %4034 = vmatpush1.bf16.msra.mxu0 %v1620
      %4035 = vmatprep.subr.bf16.mxu0 %v1613
      %4036 = vmatpush1.bf16.msra.mxu0 %v1612
      %4037 = vmatprep.subr.bf16.mxu0 %v1605
      %4038 = vmatpush1.bf16.msra.mxu0 %v1604
      %4039 = vmatprep.subr.bf16.mxu0 %v1725
      %4040 = vmatpush2.bf16.msra.mxu0 %v1724
      %4041 = vmatprep.subr.bf16.mxu0 %v1717
      %4042 = vmatpush2.bf16.msra.mxu0 %v1716
      %4043 = vmatprep.subr.bf16.mxu0 %v1709
      %4044 = vmatpush2.bf16.msra.mxu0 %v1708
      %4045 = vmatprep.subr.bf16.mxu0 %v1701
      %4046 = vmatpush2.bf16.msra.mxu0 %v1700
      %4047 = vmatprep.subr.bf16.mxu0 %v1693
      %4048 = vmatpush2.bf16.msra.mxu0 %v1692
      %4049 = vmatprep.subr.bf16.mxu0 %v1685
      %4050 = vmatpush2.bf16.msra.mxu0 %v1684
      %4051 = vmatprep.subr.bf16.mxu0 %v1677
      %4052 = vmatpush2.bf16.msra.mxu0 %v1676
      %4053 = vmatprep.subr.bf16.mxu0 %v1669
      %4054 = vmatpush2.bf16.msra.mxu0 %v1668
      %4055 = vmatprep.mubr.bf16.mxu0 %v4022
      %4056 = vmatmul.mubr.bf16.gmra.mxu0 %v4021
      %v4057 = vpop.f32.mrf.mxu0
      %v4058 = vadd.f32 0.0, %v4057
      %v4059 = vpop.f32.mrf.mxu0
      %v4060 = vadd.f32 0.0, %v4059
      %v4061 = vpop.f32.mrf.mxu0
      %v4062 = vadd.f32 0.0, %v4061
      %v4063 = vpop.f32.mrf.mxu0
      %v4064 = vadd.f32 0.0, %v4063
      %4065 = vdwg.mxu0
      %4066 = vmatprep.subr.bf16.mxu0 %v1663
      %4067 = vmatpush1.bf16.msra.mxu0 %v1662
      %4068 = vmatprep.subr.bf16.mxu0 %v1655
      %4069 = vmatpush1.bf16.msra.mxu0 %v1654
      %4070 = vmatprep.subr.bf16.mxu0 %v1647
      %4071 = vmatpush1.bf16.msra.mxu0 %v1646
      %4072 = vmatprep.subr.bf16.mxu0 %v1639
      %4073 = vmatpush1.bf16.msra.mxu0 %v1638
      %4074 = vmatprep.subr.bf16.mxu0 %v1631
      %4075 = vmatpush1.bf16.msra.mxu0 %v1630
      %4076 = vmatprep.subr.bf16.mxu0 %v1623
      %4077 = vmatpush1.bf16.msra.mxu0 %v1622
      %4078 = vmatprep.subr.bf16.mxu0 %v1615
      %4079 = vmatpush1.bf16.msra.mxu0 %v1614
      %4080 = vmatprep.subr.bf16.mxu0 %v1607
      %4081 = vmatpush1.bf16.msra.mxu0 %v1606
      %4082 = vmatprep.subr.bf16.mxu0 %v1727
      %4083 = vmatpush2.bf16.msra.mxu0 %v1726
      %4084 = vmatprep.subr.bf16.mxu0 %v1719
      %4085 = vmatpush2.bf16.msra.mxu0 %v1718
      %4086 = vmatprep.subr.bf16.mxu0 %v1711
      %4087 = vmatpush2.bf16.msra.mxu0 %v1710
      %4088 = vmatprep.subr.bf16.mxu0 %v1703
      %4089 = vmatpush2.bf16.msra.mxu0 %v1702
      %4090 = vmatprep.subr.bf16.mxu0 %v1695
      %4091 = vmatpush2.bf16.msra.mxu0 %v1694
      %4092 = vmatprep.subr.bf16.mxu0 %v1687
      %4093 = vmatpush2.bf16.msra.mxu0 %v1686
      %4094 = vmatprep.subr.bf16.mxu0 %v1679
      %4095 = vmatpush2.bf16.msra.mxu0 %v1678
      %4096 = vmatprep.subr.bf16.mxu0 %v1671
      %4097 = vmatpush2.bf16.msra.mxu0 %v1670
      %4098 = vmatprep.mubr.bf16.mxu0 %v4022
      %4099 = vmatmul.mubr.bf16.gmra.mxu0 %v4021
      %v4100 = vpop.f32.mrf.mxu0
      %v4101 = vadd.f32 0.0, %v4100
      %v4102 = vpop.f32.mrf.mxu0
      %v4103 = vadd.f32 0.0, %v4102
      %v4104 = vpop.f32.mrf.mxu0
      %v4105 = vadd.f32 0.0, %v4104
      %v4106 = vpop.f32.mrf.mxu0
      %v4107 = vadd.f32 0.0, %v4106
      %4108 = vdwg.mxu0
      %4109 = vmatprep.subr.bf16.mxu0 %v1665
      %4110 = vmatpush1.bf16.msra.mxu0 %v1664
      %4111 = vmatprep.subr.bf16.mxu0 %v1657
      %4112 = vmatpush1.bf16.msra.mxu0 %v1656
      %4113 = vmatprep.subr.bf16.mxu0 %v1649
      %4114 = vmatpush1.bf16.msra.mxu0 %v1648
      %4115 = vmatprep.subr.bf16.mxu0 %v1641
      %4116 = vmatpush1.bf16.msra.mxu0 %v1640
      %4117 = vmatprep.subr.bf16.mxu0 %v1633
      %4118 = vmatpush1.bf16.msra.mxu0 %v1632
      %4119 = vmatprep.subr.bf16.mxu0 %v1625
      %4120 = vmatpush1.bf16.msra.mxu0 %v1624
      %4121 = vmatprep.subr.bf16.mxu0 %v1617
      %4122 = vmatpush1.bf16.msra.mxu0 %v1616
      %4123 = vmatprep.subr.bf16.mxu0 %v1609
      %4124 = vmatpush1.bf16.msra.mxu0 %v1608
      %4125 = vmatprep.subr.bf16.mxu0 %v1729
      %4126 = vmatpush2.bf16.msra.mxu0 %v1728
      %4127 = vmatprep.subr.bf16.mxu0 %v1721
      %4128 = vmatpush2.bf16.msra.mxu0 %v1720
      %4129 = vmatprep.subr.bf16.mxu0 %v1713
      %4130 = vmatpush2.bf16.msra.mxu0 %v1712
      %4131 = vmatprep.subr.bf16.mxu0 %v1705
      %4132 = vmatpush2.bf16.msra.mxu0 %v1704
      %4133 = vmatprep.subr.bf16.mxu0 %v1697
      %4134 = vmatpush2.bf16.msra.mxu0 %v1696
      %4135 = vmatprep.subr.bf16.mxu0 %v1689
      %4136 = vmatpush2.bf16.msra.mxu0 %v1688
      %4137 = vmatprep.subr.bf16.mxu0 %v1681
      %4138 = vmatpush2.bf16.msra.mxu0 %v1680
      %4139 = vmatprep.subr.bf16.mxu0 %v1673
      %4140 = vmatpush2.bf16.msra.mxu0 %v1672
      %4141 = vmatprep.mubr.bf16.mxu0 %v4022
      %4142 = vmatmul.mubr.bf16.gmra.mxu0 %v4021
      %v4143 = vpop.f32.mrf.mxu0
      %v4144 = vadd.f32 0.0, %v4143
      %v4145 = vpop.f32.mrf.mxu0
      %v4146 = vadd.f32 0.0, %v4145
      %v4147 = vpop.f32.mrf.mxu0
      %v4148 = vadd.f32 0.0, %v4147
      %v4149 = vpop.f32.mrf.mxu0
      %v4150 = vadd.f32 0.0, %v4149
      %4151 = vdwg.mxu0
      %4152 = vmatprep.subr.bf16.mxu0 %v1667
      %4153 = vmatpush1.bf16.msra.mxu0 %v1666
      %4154 = vmatprep.subr.bf16.mxu0 %v1659
      %4155 = vmatpush1.bf16.msra.mxu0 %v1658
      %4156 = vmatprep.subr.bf16.mxu0 %v1651
      %4157 = vmatpush1.bf16.msra.mxu0 %v1650
      %4158 = vmatprep.subr.bf16.mxu0 %v1643
      %4159 = vmatpush1.bf16.msra.mxu0 %v1642
      %4160 = vmatprep.subr.bf16.mxu0 %v1635
      %4161 = vmatpush1.bf16.msra.mxu0 %v1634
      %4162 = vmatprep.subr.bf16.mxu0 %v1627
      %4163 = vmatpush1.bf16.msra.mxu0 %v1626
      %4164 = vmatprep.subr.bf16.mxu0 %v1619
      %4165 = vmatpush1.bf16.msra.mxu0 %v1618
      %4166 = vmatprep.subr.bf16.mxu0 %v1611
      %4167 = vmatpush1.bf16.msra.mxu0 %v1610
      %4168 = vmatprep.subr.bf16.mxu0 %v1731
      %4169 = vmatpush2.bf16.msra.mxu0 %v1730
      %4170 = vmatprep.subr.bf16.mxu0 %v1723
      %4171 = vmatpush2.bf16.msra.mxu0 %v1722
      %4172 = vmatprep.subr.bf16.mxu0 %v1715
      %4173 = vmatpush2.bf16.msra.mxu0 %v1714
      %4174 = vmatprep.subr.bf16.mxu0 %v1707
      %4175 = vmatpush2.bf16.msra.mxu0 %v1706
      %4176 = vmatprep.subr.bf16.mxu0 %v1699
      %4177 = vmatpush2.bf16.msra.mxu0 %v1698
      %4178 = vmatprep.subr.bf16.mxu0 %v1691
      %4179 = vmatpush2.bf16.msra.mxu0 %v1690
      %4180 = vmatprep.subr.bf16.mxu0 %v1683
      %4181 = vmatpush2.bf16.msra.mxu0 %v1682
      %4182 = vmatprep.subr.bf16.mxu0 %v1675
      %4183 = vmatpush2.bf16.msra.mxu0 %v1674
      %4184 = vmatprep.mubr.bf16.mxu0 %v4022
      %4185 = vmatmul.mubr.bf16.gmra.mxu0 %v4021
      %v4186 = vpop.f32.mrf.mxu0
      %v4187 = vadd.f32 0.0, %v4186
      %v4188 = vpop.f32.mrf.mxu0
      %v4189 = vadd.f32 0.0, %v4188
      %v4190 = vpop.f32.mrf.mxu0
      %v4191 = vadd.f32 0.0, %v4190
      %v4192 = vpop.f32.mrf.mxu0
      %v4193 = vadd.f32 0.0, %v4192
      %4194 = vdwg.mxu0
      %v4195 = vadd.f32 %v4144, %v2037
      %v4196 = vadd.f32 %v4146, %v2041
      %v4197 = vadd.f32 %v4187, %v2045
      %v4198 = vadd.f32 %v4189, %v2049
      %v4199 = vadd.f32 %v4148, %v2037
      %v4200 = vadd.f32 %v4150, %v2041
      %v4201 = vadd.f32 %v4191, %v2045
      %v4202 = vadd.f32 %v4193, %v2049
      %v4203 = vxor.u32 %v4195, 2147483648
      %v4204 = vxor.u32 %v4199, 2147483648
      %v4205 = vmul.f32 %v4203, 1.442695
      %v4206 = vpow.pop %v4205
      %v4207 = vmul.f32 %v4204, 1.442695
      %v4208 = vpow.pop %v4207
      %v4209 = vadd.f32 %v4206, 1.0
      %v4210 = vadd.f32 %v4208, 1.0
      %v4211 = vrcp.pop %v4209
      %v4212 = vmul.f32 1.0, %v4211
      %v4213 = vrcp.pop %v4210
      %v4214 = vmul.f32 1.0, %v4213
      %v4215 = vxor.u32 %v4196, 2147483648
      %v4216 = vxor.u32 %v4200, 2147483648
      %v4217 = vmul.f32 %v4215, 1.442695
      %v4218 = vpow.pop %v4217
      %v4219 = vmul.f32 %v4216, 1.442695
      %v4220 = vpow.pop %v4219
      %v4221 = vadd.f32 %v4218, 1.0
      %v4222 = vadd.f32 %v4220, 1.0
      %v4223 = vrcp.pop %v4221
      %v4224 = vmul.f32 1.0, %v4223
      %v4225 = vrcp.pop %v4222
      %v4226 = vmul.f32 1.0, %v4225
      %v4227 = vtanh.pop %v4197
      %v4228 = vtanh.pop %v4201
      %v4229 = vxor.u32 %v4198, 2147483648
      %v4230 = vxor.u32 %v4202, 2147483648
      %v4231 = vmul.f32 %v4229, 1.442695
      %v4232 = vpow.pop %v4231
      %v4233 = vmul.f32 %v4230, 1.442695
      %v4234 = vpow.pop %v4233
      %v4235 = vadd.f32 %v4232, 1.0
      %v4236 = vadd.f32 %v4234, 1.0
      %v4237 = vrcp.pop %v4235
      %v4238 = vmul.f32 1.0, %v4237
      %v4239 = vrcp.pop %v4236
      %v4240 = vmul.f32 1.0, %v4239
      %v4241 = vmul.f32 %v4224, %v3952
      %v4242 = vmul.f32 %v4226, %v3953
      %v4243 = vmul.f32 %v4212, %v4227
      %v4244 = vmul.f32 %v4214, %v4228
      %v4245 = vadd.f32 %v4241, %v4243
      %v4246 = vadd.f32 %v4242, %v4244
      %v4247 = vtanh.pop %v4245
      %v4248 = vtanh.pop %v4246
      %v4249 = vmul.f32 %v4238, %v4247
      %v4250 = vmul.f32 %v4240, %v4248
      %s4251 = sadd.s32 %s1081, 7
      %p4252 = scmp.gt.s32.totalorder %s4251, 0
      %s4253 = scalar_select %p4252, 1, 0
      %v4254 = vstv %s4253
      %vm4255 = vcmp.eq.s32.totalorder %v4254, 1
      %v4256 = vsel %vm4255, %v4249, %v3950
      %v4257 = vsel %vm4255, %v4250, %v3951
      %v4258 = vsel %vm4255, %v4245, %v3952
      %v4259 = vsel %vm4255, %v4246, %v3953
      %s4260 = smul.u32 14, 4
      %s4261 = smul.addr %s4260, 8
      %s4262 = scalar_lea.vmem [#allocation2], %s4261
      %v4263 = vld [vmem:[%s4262] sm:$0xff]
      %v4264 = vld [vmem:[%s4262 + $0x8] sm:$0xff]
      %v4265 = vld [vmem:[%s4262 + $0x10] sm:$0xff]
      %v4266 = vld [vmem:[%s4262 + $0x18] sm:$0xff]
      %v4267 = vld [vmem:[%s4262 + $0x20] sm:$0xff]
      %v4268 = vld [vmem:[%s4262 + $0x28] sm:$0xff]
      %v4269 = vld [vmem:[%s4262 + $0x30] sm:$0xff]
      %v4270 = vld [vmem:[%s4262 + $0x38] sm:$0xff]
      %v4271 = vadd.f32 %v4263, %v4058
      %v4272 = vadd.f32 %v4264, %v4060
      %v4273 = vadd.f32 %v4265, %v4101
      %v4274 = vadd.f32 %v4266, %v4103
      %v4275 = vadd.f32 %v4267, %v4062
      %v4276 = vadd.f32 %v4268, %v4064
      %v4277 = vadd.f32 %v4269, %v4105
      %v4278 = vadd.f32 %v4270, %v4107
      %v4279 = vxor.u32 %v4271, 2147483648
      %v4280 = vxor.u32 %v4275, 2147483648
      %v4281 = vmul.f32 %v4279, 1.442695
      %v4282 = vpow.pop %v4281
      %v4283 = vmul.f32 %v4280, 1.442695
      %v4284 = vpow.pop %v4283
      %v4285 = vadd.f32 %v4282, 1.0
      %v4286 = vadd.f32 %v4284, 1.0
      %v4287 = vrcp.pop %v4285
      %v4288 = vmul.f32 1.0, %v4287
      %v4289 = vrcp.pop %v4286
      %v4290 = vmul.f32 1.0, %v4289
      %v4291 = vxor.u32 %v4272, 2147483648
      %v4292 = vxor.u32 %v4276, 2147483648
      %v4293 = vmul.f32 %v4291, 1.442695
      %v4294 = vpow.pop %v4293
      %v4295 = vmul.f32 %v4292, 1.442695
      %v4296 = vpow.pop %v4295
      %v4297 = vadd.f32 %v4294, 1.0
      %v4298 = vadd.f32 %v4296, 1.0
      %v4299 = vrcp.pop %v4297
      %v4300 = vmul.f32 1.0, %v4299
      %v4301 = vrcp.pop %v4298
      %v4302 = vmul.f32 1.0, %v4301
      %v4303 = vtanh.pop %v4273
      %v4304 = vtanh.pop %v4277
      %v4305 = vxor.u32 %v4274, 2147483648
      %v4306 = vxor.u32 %v4278, 2147483648
      %v4307 = vmul.f32 %v4305, 1.442695
      %v4308 = vpow.pop %v4307
      %v4309 = vmul.f32 %v4306, 1.442695
      %v4310 = vpow.pop %v4309
      %v4311 = vadd.f32 %v4308, 1.0
      %v4312 = vadd.f32 %v4310, 1.0
      %v4313 = vrcp.pop %v4311
      %v4314 = vmul.f32 1.0, %v4313
      %v4315 = vrcp.pop %v4312
      %v4316 = vmul.f32 1.0, %v4315
      %v4317 = vmul.f32 %v4300, %v4015
      %v4318 = vmul.f32 %v4302, %v4016
      %v4319 = vmul.f32 %v4288, %v4303
      %v4320 = vmul.f32 %v4290, %v4304
      %v4321 = vadd.f32 %v4317, %v4319
      %v4322 = vadd.f32 %v4318, %v4320
      %v4323 = vtanh.pop %v4321
      %v4324 = vtanh.pop %v4322
      %v4325 = vmul.f32 %v4314, %v4323
      %v4326 = vmul.f32 %v4316, %v4324
      %v4327 = vpack.c.bf16 %v4326, %v4325
      %v4328 = vpack.c.bf16 %v4257, %v4256
      %4329 = vmatprep.subr.bf16.mxu0 %v1661
      %4330 = vmatpush1.bf16.msra.mxu0 %v1660
      %4331 = vmatprep.subr.bf16.mxu0 %v1653
      %4332 = vmatpush1.bf16.msra.mxu0 %v1652
      %4333 = vmatprep.subr.bf16.mxu0 %v1645
      %4334 = vmatpush1.bf16.msra.mxu0 %v1644
      %4335 = vmatprep.subr.bf16.mxu0 %v1637
      %4336 = vmatpush1.bf16.msra.mxu0 %v1636
      %4337 = vmatprep.subr.bf16.mxu0 %v1629
      %4338 = vmatpush1.bf16.msra.mxu0 %v1628
      %4339 = vmatprep.subr.bf16.mxu0 %v1621
      %4340 = vmatpush1.bf16.msra.mxu0 %v1620
      %4341 = vmatprep.subr.bf16.mxu0 %v1613
      %4342 = vmatpush1.bf16.msra.mxu0 %v1612
      %4343 = vmatprep.subr.bf16.mxu0 %v1605
      %4344 = vmatpush1.bf16.msra.mxu0 %v1604
      %4345 = vmatprep.subr.bf16.mxu0 %v1725
      %4346 = vmatpush2.bf16.msra.mxu0 %v1724
      %4347 = vmatprep.subr.bf16.mxu0 %v1717
      %4348 = vmatpush2.bf16.msra.mxu0 %v1716
      %4349 = vmatprep.subr.bf16.mxu0 %v1709
      %4350 = vmatpush2.bf16.msra.mxu0 %v1708
      %4351 = vmatprep.subr.bf16.mxu0 %v1701
      %4352 = vmatpush2.bf16.msra.mxu0 %v1700
      %4353 = vmatprep.subr.bf16.mxu0 %v1693
      %4354 = vmatpush2.bf16.msra.mxu0 %v1692
      %4355 = vmatprep.subr.bf16.mxu0 %v1685
      %4356 = vmatpush2.bf16.msra.mxu0 %v1684
      %4357 = vmatprep.subr.bf16.mxu0 %v1677
      %4358 = vmatpush2.bf16.msra.mxu0 %v1676
      %4359 = vmatprep.subr.bf16.mxu0 %v1669
      %4360 = vmatpush2.bf16.msra.mxu0 %v1668
      %4361 = vmatprep.mubr.bf16.mxu0 %v4328
      %4362 = vmatmul.mubr.bf16.gmra.mxu0 %v4327
      %v4363 = vpop.f32.mrf.mxu0
      %v4364 = vadd.f32 0.0, %v4363
      %v4365 = vpop.f32.mrf.mxu0
      %v4366 = vadd.f32 0.0, %v4365
      %v4367 = vpop.f32.mrf.mxu0
      %v4368 = vadd.f32 0.0, %v4367
      %v4369 = vpop.f32.mrf.mxu0
      %v4370 = vadd.f32 0.0, %v4369
      %4371 = vdwg.mxu0
      %4372 = vmatprep.subr.bf16.mxu0 %v1663
      %4373 = vmatpush1.bf16.msra.mxu0 %v1662
      %4374 = vmatprep.subr.bf16.mxu0 %v1655
      %4375 = vmatpush1.bf16.msra.mxu0 %v1654
      %4376 = vmatprep.subr.bf16.mxu0 %v1647
      %4377 = vmatpush1.bf16.msra.mxu0 %v1646
      %4378 = vmatprep.subr.bf16.mxu0 %v1639
      %4379 = vmatpush1.bf16.msra.mxu0 %v1638
      %4380 = vmatprep.subr.bf16.mxu0 %v1631
      %4381 = vmatpush1.bf16.msra.mxu0 %v1630
      %4382 = vmatprep.subr.bf16.mxu0 %v1623
      %4383 = vmatpush1.bf16.msra.mxu0 %v1622
      %4384 = vmatprep.subr.bf16.mxu0 %v1615
      %4385 = vmatpush1.bf16.msra.mxu0 %v1614
      %4386 = vmatprep.subr.bf16.mxu0 %v1607
      %4387 = vmatpush1.bf16.msra.mxu0 %v1606
      %4388 = vmatprep.subr.bf16.mxu0 %v1727
      %4389 = vmatpush2.bf16.msra.mxu0 %v1726
      %4390 = vmatprep.subr.bf16.mxu0 %v1719
      %4391 = vmatpush2.bf16.msra.mxu0 %v1718
      %4392 = vmatprep.subr.bf16.mxu0 %v1711
      %4393 = vmatpush2.bf16.msra.mxu0 %v1710
      %4394 = vmatprep.subr.bf16.mxu0 %v1703
      %4395 = vmatpush2.bf16.msra.mxu0 %v1702
      %4396 = vmatprep.subr.bf16.mxu0 %v1695
      %4397 = vmatpush2.bf16.msra.mxu0 %v1694
      %4398 = vmatprep.subr.bf16.mxu0 %v1687
      %4399 = vmatpush2.bf16.msra.mxu0 %v1686
      %4400 = vmatprep.subr.bf16.mxu0 %v1679
      %4401 = vmatpush2.bf16.msra.mxu0 %v1678
      %4402 = vmatprep.subr.bf16.mxu0 %v1671
      %4403 = vmatpush2.bf16.msra.mxu0 %v1670
      %4404 = vmatprep.mubr.bf16.mxu0 %v4328
      %4405 = vmatmul.mubr.bf16.gmra.mxu0 %v4327
      %v4406 = vpop.f32.mrf.mxu0
      %v4407 = vadd.f32 0.0, %v4406
      %v4408 = vpop.f32.mrf.mxu0
      %v4409 = vadd.f32 0.0, %v4408
      %v4410 = vpop.f32.mrf.mxu0
      %v4411 = vadd.f32 0.0, %v4410
      %v4412 = vpop.f32.mrf.mxu0
      %v4413 = vadd.f32 0.0, %v4412
      %4414 = vdwg.mxu0
      %4415 = vmatprep.subr.bf16.mxu0 %v1665
      %4416 = vmatpush1.bf16.msra.mxu0 %v1664
      %4417 = vmatprep.subr.bf16.mxu0 %v1657
      %4418 = vmatpush1.bf16.msra.mxu0 %v1656
      %4419 = vmatprep.subr.bf16.mxu0 %v1649
      %4420 = vmatpush1.bf16.msra.mxu0 %v1648
      %4421 = vmatprep.subr.bf16.mxu0 %v1641
      %4422 = vmatpush1.bf16.msra.mxu0 %v1640
      %4423 = vmatprep.subr.bf16.mxu0 %v1633
      %4424 = vmatpush1.bf16.msra.mxu0 %v1632
      %4425 = vmatprep.subr.bf16.mxu0 %v1625
      %4426 = vmatpush1.bf16.msra.mxu0 %v1624
      %4427 = vmatprep.subr.bf16.mxu0 %v1617
      %4428 = vmatpush1.bf16.msra.mxu0 %v1616
      %4429 = vmatprep.subr.bf16.mxu0 %v1609
      %4430 = vmatpush1.bf16.msra.mxu0 %v1608
      %4431 = vmatprep.subr.bf16.mxu0 %v1729
      %4432 = vmatpush2.bf16.msra.mxu0 %v1728
      %4433 = vmatprep.subr.bf16.mxu0 %v1721
      %4434 = vmatpush2.bf16.msra.mxu0 %v1720
      %4435 = vmatprep.subr.bf16.mxu0 %v1713
      %4436 = vmatpush2.bf16.msra.mxu0 %v1712
      %4437 = vmatprep.subr.bf16.mxu0 %v1705
      %4438 = vmatpush2.bf16.msra.mxu0 %v1704
      %4439 = vmatprep.subr.bf16.mxu0 %v1697
      %4440 = vmatpush2.bf16.msra.mxu0 %v1696
      %4441 = vmatprep.subr.bf16.mxu0 %v1689
      %4442 = vmatpush2.bf16.msra.mxu0 %v1688
      %4443 = vmatprep.subr.bf16.mxu0 %v1681
      %4444 = vmatpush2.bf16.msra.mxu0 %v1680
      %4445 = vmatprep.subr.bf16.mxu0 %v1673
      %4446 = vmatpush2.bf16.msra.mxu0 %v1672
      %4447 = vmatprep.mubr.bf16.mxu0 %v4328
      %4448 = vmatmul.mubr.bf16.gmra.mxu0 %v4327
      %v4449 = vpop.f32.mrf.mxu0
      %v4450 = vadd.f32 0.0, %v4449
      %v4451 = vpop.f32.mrf.mxu0
      %v4452 = vadd.f32 0.0, %v4451
      %v4453 = vpop.f32.mrf.mxu0
      %v4454 = vadd.f32 0.0, %v4453
      %v4455 = vpop.f32.mrf.mxu0
      %v4456 = vadd.f32 0.0, %v4455
      %4457 = vdwg.mxu0
      %4458 = vmatprep.subr.bf16.mxu0 %v1667
      %4459 = vmatpush1.bf16.msra.mxu0 %v1666
      %4460 = vmatprep.subr.bf16.mxu0 %v1659
      %4461 = vmatpush1.bf16.msra.mxu0 %v1658
      %4462 = vmatprep.subr.bf16.mxu0 %v1651
      %4463 = vmatpush1.bf16.msra.mxu0 %v1650
      %4464 = vmatprep.subr.bf16.mxu0 %v1643
      %4465 = vmatpush1.bf16.msra.mxu0 %v1642
      %4466 = vmatprep.subr.bf16.mxu0 %v1635
      %4467 = vmatpush1.bf16.msra.mxu0 %v1634
      %4468 = vmatprep.subr.bf16.mxu0 %v1627
      %4469 = vmatpush1.bf16.msra.mxu0 %v1626
      %4470 = vmatprep.subr.bf16.mxu0 %v1619
      %4471 = vmatpush1.bf16.msra.mxu0 %v1618
      %4472 = vmatprep.subr.bf16.mxu0 %v1611
      %4473 = vmatpush1.bf16.msra.mxu0 %v1610
      %4474 = vmatprep.subr.bf16.mxu0 %v1731
      %4475 = vmatpush2.bf16.msra.mxu0 %v1730
      %4476 = vmatprep.subr.bf16.mxu0 %v1723
      %4477 = vmatpush2.bf16.msra.mxu0 %v1722
      %4478 = vmatprep.subr.bf16.mxu0 %v1715
      %4479 = vmatpush2.bf16.msra.mxu0 %v1714
      %4480 = vmatprep.subr.bf16.mxu0 %v1707
      %4481 = vmatpush2.bf16.msra.mxu0 %v1706
      %4482 = vmatprep.subr.bf16.mxu0 %v1699
      %4483 = vmatpush2.bf16.msra.mxu0 %v1698
      %4484 = vmatprep.subr.bf16.mxu0 %v1691
      %4485 = vmatpush2.bf16.msra.mxu0 %v1690
      %4486 = vmatprep.subr.bf16.mxu0 %v1683
      %4487 = vmatpush2.bf16.msra.mxu0 %v1682
      %4488 = vmatprep.subr.bf16.mxu0 %v1675
      %4489 = vmatpush2.bf16.msra.mxu0 %v1674
      %4490 = vmatprep.mubr.bf16.mxu0 %v4328
      %4491 = vmatmul.mubr.bf16.gmra.mxu0 %v4327
      %v4492 = vpop.f32.mrf.mxu0
      %v4493 = vadd.f32 0.0, %v4492
      %v4494 = vpop.f32.mrf.mxu0
      %v4495 = vadd.f32 0.0, %v4494
      %v4496 = vpop.f32.mrf.mxu0
      %v4497 = vadd.f32 0.0, %v4496
      %v4498 = vpop.f32.mrf.mxu0
      %v4499 = vadd.f32 0.0, %v4498
      %4500 = vdwg.mxu0
      %v4501 = vadd.f32 %v4450, %v2037
      %v4502 = vadd.f32 %v4452, %v2041
      %v4503 = vadd.f32 %v4493, %v2045
      %v4504 = vadd.f32 %v4495, %v2049
      %v4505 = vadd.f32 %v4454, %v2037
      %v4506 = vadd.f32 %v4456, %v2041
      %v4507 = vadd.f32 %v4497, %v2045
      %v4508 = vadd.f32 %v4499, %v2049
      %v4509 = vxor.u32 %v4501, 2147483648
      %v4510 = vxor.u32 %v4505, 2147483648
      %v4511 = vmul.f32 %v4509, 1.442695
      %v4512 = vpow.pop %v4511
      %v4513 = vmul.f32 %v4510, 1.442695
      %v4514 = vpow.pop %v4513
      %v4515 = vadd.f32 %v4512, 1.0
      %v4516 = vadd.f32 %v4514, 1.0
      %v4517 = vrcp.pop %v4515
      %v4518 = vmul.f32 1.0, %v4517
      %v4519 = vrcp.pop %v4516
      %v4520 = vmul.f32 1.0, %v4519
      %v4521 = vxor.u32 %v4502, 2147483648
      %v4522 = vxor.u32 %v4506, 2147483648
      %v4523 = vmul.f32 %v4521, 1.442695
      %v4524 = vpow.pop %v4523
      %v4525 = vmul.f32 %v4522, 1.442695
      %v4526 = vpow.pop %v4525
      %v4527 = vadd.f32 %v4524, 1.0
      %v4528 = vadd.f32 %v4526, 1.0
      %v4529 = vrcp.pop %v4527
      %v4530 = vmul.f32 1.0, %v4529
      %v4531 = vrcp.pop %v4528
      %v4532 = vmul.f32 1.0, %v4531
      %v4533 = vtanh.pop %v4503
      %v4534 = vtanh.pop %v4507
      %v4535 = vxor.u32 %v4504, 2147483648
      %v4536 = vxor.u32 %v4508, 2147483648
      %v4537 = vmul.f32 %v4535, 1.442695
      %v4538 = vpow.pop %v4537
      %v4539 = vmul.f32 %v4536, 1.442695
      %v4540 = vpow.pop %v4539
      %v4541 = vadd.f32 %v4538, 1.0
      %v4542 = vadd.f32 %v4540, 1.0
      %v4543 = vrcp.pop %v4541
      %v4544 = vmul.f32 1.0, %v4543
      %v4545 = vrcp.pop %v4542
      %v4546 = vmul.f32 1.0, %v4545
      %v4547 = vmul.f32 %v4530, %v4258
      %v4548 = vmul.f32 %v4532, %v4259
      %v4549 = vmul.f32 %v4518, %v4533
      %v4550 = vmul.f32 %v4520, %v4534
      %v4551 = vadd.f32 %v4547, %v4549
      %v4552 = vadd.f32 %v4548, %v4550
      %v4553 = vtanh.pop %v4551
      %v4554 = vtanh.pop %v4552
      %v4555 = vmul.f32 %v4544, %v4553
      %v4556 = vmul.f32 %v4546, %v4554
      %s4557 = sadd.s32 %s1081, 8
      %p4558 = scmp.gt.s32.totalorder %s4557, 0
      %s4559 = scalar_select %p4558, 1, 0
      %v4560 = vstv %s4559
      %vm4561 = vcmp.eq.s32.totalorder %v4560, 1
      %v4562 = vsel %vm4561, %v4555, %v4256
      %v4563 = vsel %vm4561, %v4556, %v4257
      %v4564 = vsel %vm4561, %v4551, %v4258
      %v4565 = vsel %vm4561, %v4552, %v4259
      %s4566 = smul.u32 16, 4
      %s4567 = smul.addr %s4566, 8
      %s4568 = scalar_lea.vmem [#allocation2], %s4567
      %v4569 = vld [vmem:[%s4568] sm:$0xff]
      %v4570 = vld [vmem:[%s4568 + $0x8] sm:$0xff]
      %v4571 = vld [vmem:[%s4568 + $0x10] sm:$0xff]
      %v4572 = vld [vmem:[%s4568 + $0x18] sm:$0xff]
      %v4573 = vld [vmem:[%s4568 + $0x20] sm:$0xff]
      %v4574 = vld [vmem:[%s4568 + $0x28] sm:$0xff]
      %v4575 = vld [vmem:[%s4568 + $0x30] sm:$0xff]
      %v4576 = vld [vmem:[%s4568 + $0x38] sm:$0xff]
      %v4577 = vadd.f32 %v4569, %v4364
      %v4578 = vadd.f32 %v4570, %v4366
      %v4579 = vadd.f32 %v4571, %v4407
      %v4580 = vadd.f32 %v4572, %v4409
      %v4581 = vadd.f32 %v4573, %v4368
      %v4582 = vadd.f32 %v4574, %v4370
      %v4583 = vadd.f32 %v4575, %v4411
      %v4584 = vadd.f32 %v4576, %v4413
      %v4585 = vxor.u32 %v4577, 2147483648
      %v4586 = vxor.u32 %v4581, 2147483648
      %v4587 = vmul.f32 %v4585, 1.442695
      %v4588 = vpow.pop %v4587
      %v4589 = vmul.f32 %v4586, 1.442695
      %v4590 = vpow.pop %v4589
      %v4591 = vadd.f32 %v4588, 1.0
      %v4592 = vadd.f32 %v4590, 1.0
      %v4593 = vrcp.pop %v4591
      %v4594 = vmul.f32 1.0, %v4593
      %v4595 = vrcp.pop %v4592
      %v4596 = vmul.f32 1.0, %v4595
      %v4597 = vxor.u32 %v4578, 2147483648
      %v4598 = vxor.u32 %v4582, 2147483648
      %v4599 = vmul.f32 %v4597, 1.442695
      %v4600 = vpow.pop %v4599
      %v4601 = vmul.f32 %v4598, 1.442695
      %v4602 = vpow.pop %v4601
      %v4603 = vadd.f32 %v4600, 1.0
      %v4604 = vadd.f32 %v4602, 1.0
      %v4605 = vrcp.pop %v4603
      %v4606 = vmul.f32 1.0, %v4605
      %v4607 = vrcp.pop %v4604
      %v4608 = vmul.f32 1.0, %v4607
      %v4609 = vtanh.pop %v4579
      %v4610 = vtanh.pop %v4583
      %v4611 = vxor.u32 %v4580, 2147483648
      %v4612 = vxor.u32 %v4584, 2147483648
      %v4613 = vmul.f32 %v4611, 1.442695
      %v4614 = vpow.pop %v4613
      %v4615 = vmul.f32 %v4612, 1.442695
      %v4616 = vpow.pop %v4615
      %v4617 = vadd.f32 %v4614, 1.0
      %v4618 = vadd.f32 %v4616, 1.0
      %v4619 = vrcp.pop %v4617
      %v4620 = vmul.f32 1.0, %v4619
      %v4621 = vrcp.pop %v4618
      %v4622 = vmul.f32 1.0, %v4621
      %v4623 = vmul.f32 %v4606, %v4321
      %v4624 = vmul.f32 %v4608, %v4322
      %v4625 = vmul.f32 %v4594, %v4609
      %v4626 = vmul.f32 %v4596, %v4610
      %v4627 = vadd.f32 %v4623, %v4625
      %v4628 = vadd.f32 %v4624, %v4626
      %v4629 = vtanh.pop %v4627
      %v4630 = vtanh.pop %v4628
      %v4631 = vmul.f32 %v4620, %v4629
      %v4632 = vmul.f32 %v4622, %v4630
      %v4633 = vpack.c.bf16 %v4632, %v4631
      %v4634 = vpack.c.bf16 %v4563, %v4562
      %4635 = vmatprep.subr.bf16.mxu0 %v1661
      %4636 = vmatpush1.bf16.msra.mxu0 %v1660
      %4637 = vmatprep.subr.bf16.mxu0 %v1653
      %4638 = vmatpush1.bf16.msra.mxu0 %v1652
      %4639 = vmatprep.subr.bf16.mxu0 %v1645
      %4640 = vmatpush1.bf16.msra.mxu0 %v1644
      %4641 = vmatprep.subr.bf16.mxu0 %v1637
      %4642 = vmatpush1.bf16.msra.mxu0 %v1636
      %4643 = vmatprep.subr.bf16.mxu0 %v1629
      %4644 = vmatpush1.bf16.msra.mxu0 %v1628
      %4645 = vmatprep.subr.bf16.mxu0 %v1621
      %4646 = vmatpush1.bf16.msra.mxu0 %v1620
      %4647 = vmatprep.subr.bf16.mxu0 %v1613
      %4648 = vmatpush1.bf16.msra.mxu0 %v1612
      %4649 = vmatprep.subr.bf16.mxu0 %v1605
      %4650 = vmatpush1.bf16.msra.mxu0 %v1604
      %4651 = vmatprep.subr.bf16.mxu0 %v1725
      %4652 = vmatpush2.bf16.msra.mxu0 %v1724
      %4653 = vmatprep.subr.bf16.mxu0 %v1717
      %4654 = vmatpush2.bf16.msra.mxu0 %v1716
      %4655 = vmatprep.subr.bf16.mxu0 %v1709
      %4656 = vmatpush2.bf16.msra.mxu0 %v1708
      %4657 = vmatprep.subr.bf16.mxu0 %v1701
      %4658 = vmatpush2.bf16.msra.mxu0 %v1700
      %4659 = vmatprep.subr.bf16.mxu0 %v1693
      %4660 = vmatpush2.bf16.msra.mxu0 %v1692
      %4661 = vmatprep.subr.bf16.mxu0 %v1685
      %4662 = vmatpush2.bf16.msra.mxu0 %v1684
      %4663 = vmatprep.subr.bf16.mxu0 %v1677
      %4664 = vmatpush2.bf16.msra.mxu0 %v1676
      %4665 = vmatprep.subr.bf16.mxu0 %v1669
      %4666 = vmatpush2.bf16.msra.mxu0 %v1668
      %4667 = vmatprep.mubr.bf16.mxu0 %v4634
      %4668 = vmatmul.mubr.bf16.gmra.mxu0 %v4633
      %v4669 = vpop.f32.mrf.mxu0
      %v4670 = vadd.f32 0.0, %v4669
      %v4671 = vpop.f32.mrf.mxu0
      %v4672 = vadd.f32 0.0, %v4671
      %v4673 = vpop.f32.mrf.mxu0
      %v4674 = vadd.f32 0.0, %v4673
      %v4675 = vpop.f32.mrf.mxu0
      %v4676 = vadd.f32 0.0, %v4675
      %4677 = vdwg.mxu0
      %4678 = vmatprep.subr.bf16.mxu0 %v1663
      %4679 = vmatpush1.bf16.msra.mxu0 %v1662
      %4680 = vmatprep.subr.bf16.mxu0 %v1655
      %4681 = vmatpush1.bf16.msra.mxu0 %v1654
      %4682 = vmatprep.subr.bf16.mxu0 %v1647
      %4683 = vmatpush1.bf16.msra.mxu0 %v1646
      %4684 = vmatprep.subr.bf16.mxu0 %v1639
      %4685 = vmatpush1.bf16.msra.mxu0 %v1638
      %4686 = vmatprep.subr.bf16.mxu0 %v1631
      %4687 = vmatpush1.bf16.msra.mxu0 %v1630
      %4688 = vmatprep.subr.bf16.mxu0 %v1623
      %4689 = vmatpush1.bf16.msra.mxu0 %v1622
      %4690 = vmatprep.subr.bf16.mxu0 %v1615
      %4691 = vmatpush1.bf16.msra.mxu0 %v1614
      %4692 = vmatprep.subr.bf16.mxu0 %v1607
      %4693 = vmatpush1.bf16.msra.mxu0 %v1606
      %4694 = vmatprep.subr.bf16.mxu0 %v1727
      %4695 = vmatpush2.bf16.msra.mxu0 %v1726
      %4696 = vmatprep.subr.bf16.mxu0 %v1719
      %4697 = vmatpush2.bf16.msra.mxu0 %v1718
      %4698 = vmatprep.subr.bf16.mxu0 %v1711
      %4699 = vmatpush2.bf16.msra.mxu0 %v1710
      %4700 = vmatprep.subr.bf16.mxu0 %v1703
      %4701 = vmatpush2.bf16.msra.mxu0 %v1702
      %4702 = vmatprep.subr.bf16.mxu0 %v1695
      %4703 = vmatpush2.bf16.msra.mxu0 %v1694
      %4704 = vmatprep.subr.bf16.mxu0 %v1687
      %4705 = vmatpush2.bf16.msra.mxu0 %v1686
      %4706 = vmatprep.subr.bf16.mxu0 %v1679
      %4707 = vmatpush2.bf16.msra.mxu0 %v1678
      %4708 = vmatprep.subr.bf16.mxu0 %v1671
      %4709 = vmatpush2.bf16.msra.mxu0 %v1670
      %4710 = vmatprep.mubr.bf16.mxu0 %v4634
      %4711 = vmatmul.mubr.bf16.gmra.mxu0 %v4633
      %v4712 = vpop.f32.mrf.mxu0
      %v4713 = vadd.f32 0.0, %v4712
      %v4714 = vpop.f32.mrf.mxu0
      %v4715 = vadd.f32 0.0, %v4714
      %v4716 = vpop.f32.mrf.mxu0
      %v4717 = vadd.f32 0.0, %v4716
      %v4718 = vpop.f32.mrf.mxu0
      %v4719 = vadd.f32 0.0, %v4718
      %4720 = vdwg.mxu0
      %4721 = vmatprep.subr.bf16.mxu0 %v1665
      %4722 = vmatpush1.bf16.msra.mxu0 %v1664
      %4723 = vmatprep.subr.bf16.mxu0 %v1657
      %4724 = vmatpush1.bf16.msra.mxu0 %v1656
      %4725 = vmatprep.subr.bf16.mxu0 %v1649
      %4726 = vmatpush1.bf16.msra.mxu0 %v1648
      %4727 = vmatprep.subr.bf16.mxu0 %v1641
      %4728 = vmatpush1.bf16.msra.mxu0 %v1640
      %4729 = vmatprep.subr.bf16.mxu0 %v1633
      %4730 = vmatpush1.bf16.msra.mxu0 %v1632
      %4731 = vmatprep.subr.bf16.mxu0 %v1625
      %4732 = vmatpush1.bf16.msra.mxu0 %v1624
      %4733 = vmatprep.subr.bf16.mxu0 %v1617
      %4734 = vmatpush1.bf16.msra.mxu0 %v1616
      %4735 = vmatprep.subr.bf16.mxu0 %v1609
      %4736 = vmatpush1.bf16.msra.mxu0 %v1608
      %4737 = vmatprep.subr.bf16.mxu0 %v1729
      %4738 = vmatpush2.bf16.msra.mxu0 %v1728
      %4739 = vmatprep.subr.bf16.mxu0 %v1721
      %4740 = vmatpush2.bf16.msra.mxu0 %v1720
      %4741 = vmatprep.subr.bf16.mxu0 %v1713
      %4742 = vmatpush2.bf16.msra.mxu0 %v1712
      %4743 = vmatprep.subr.bf16.mxu0 %v1705
      %4744 = vmatpush2.bf16.msra.mxu0 %v1704
      %4745 = vmatprep.subr.bf16.mxu0 %v1697
      %4746 = vmatpush2.bf16.msra.mxu0 %v1696
      %4747 = vmatprep.subr.bf16.mxu0 %v1689
      %4748 = vmatpush2.bf16.msra.mxu0 %v1688
      %4749 = vmatprep.subr.bf16.mxu0 %v1681
      %4750 = vmatpush2.bf16.msra.mxu0 %v1680
      %4751 = vmatprep.subr.bf16.mxu0 %v1673
      %4752 = vmatpush2.bf16.msra.mxu0 %v1672
      %4753 = vmatprep.mubr.bf16.mxu0 %v4634
      %4754 = vmatmul.mubr.bf16.gmra.mxu0 %v4633
      %v4755 = vpop.f32.mrf.mxu0
      %v4756 = vadd.f32 0.0, %v4755
      %v4757 = vpop.f32.mrf.mxu0
      %v4758 = vadd.f32 0.0, %v4757
      %v4759 = vpop.f32.mrf.mxu0
      %v4760 = vadd.f32 0.0, %v4759
      %v4761 = vpop.f32.mrf.mxu0
      %v4762 = vadd.f32 0.0, %v4761
      %4763 = vdwg.mxu0
      %4764 = vmatprep.subr.bf16.mxu0 %v1667
      %4765 = vmatpush1.bf16.msra.mxu0 %v1666
      %4766 = vmatprep.subr.bf16.mxu0 %v1659
      %4767 = vmatpush1.bf16.msra.mxu0 %v1658
      %4768 = vmatprep.subr.bf16.mxu0 %v1651
      %4769 = vmatpush1.bf16.msra.mxu0 %v1650
      %4770 = vmatprep.subr.bf16.mxu0 %v1643
      %4771 = vmatpush1.bf16.msra.mxu0 %v1642
      %4772 = vmatprep.subr.bf16.mxu0 %v1635
      %4773 = vmatpush1.bf16.msra.mxu0 %v1634
      %4774 = vmatprep.subr.bf16.mxu0 %v1627
      %4775 = vmatpush1.bf16.msra.mxu0 %v1626
      %4776 = vmatprep.subr.bf16.mxu0 %v1619
      %4777 = vmatpush1.bf16.msra.mxu0 %v1618
      %4778 = vmatprep.subr.bf16.mxu0 %v1611
      %4779 = vmatpush1.bf16.msra.mxu0 %v1610
      %4780 = vmatprep.subr.bf16.mxu0 %v1731
      %4781 = vmatpush2.bf16.msra.mxu0 %v1730
      %4782 = vmatprep.subr.bf16.mxu0 %v1723
      %4783 = vmatpush2.bf16.msra.mxu0 %v1722
      %4784 = vmatprep.subr.bf16.mxu0 %v1715
      %4785 = vmatpush2.bf16.msra.mxu0 %v1714
      %4786 = vmatprep.subr.bf16.mxu0 %v1707
      %4787 = vmatpush2.bf16.msra.mxu0 %v1706
      %4788 = vmatprep.subr.bf16.mxu0 %v1699
      %4789 = vmatpush2.bf16.msra.mxu0 %v1698
      %4790 = vmatprep.subr.bf16.mxu0 %v1691
      %4791 = vmatpush2.bf16.msra.mxu0 %v1690
      %4792 = vmatprep.subr.bf16.mxu0 %v1683
      %4793 = vmatpush2.bf16.msra.mxu0 %v1682
      %4794 = vmatprep.subr.bf16.mxu0 %v1675
      %4795 = vmatpush2.bf16.msra.mxu0 %v1674
      %4796 = vmatprep.mubr.bf16.mxu0 %v4634
      %4797 = vmatmul.mubr.bf16.gmra.mxu0 %v4633
      %v4798 = vpop.f32.mrf.mxu0
      %v4799 = vadd.f32 0.0, %v4798
      %v4800 = vpop.f32.mrf.mxu0
      %v4801 = vadd.f32 0.0, %v4800
      %v4802 = vpop.f32.mrf.mxu0
      %v4803 = vadd.f32 0.0, %v4802
      %v4804 = vpop.f32.mrf.mxu0
      %v4805 = vadd.f32 0.0, %v4804
      %4806 = vdwg.mxu0
      %v4807 = vadd.f32 %v4756, %v2037
      %v4808 = vadd.f32 %v4758, %v2041
      %v4809 = vadd.f32 %v4799, %v2045
      %v4810 = vadd.f32 %v4801, %v2049
      %v4811 = vadd.f32 %v4760, %v2037
      %v4812 = vadd.f32 %v4762, %v2041
      %v4813 = vadd.f32 %v4803, %v2045
      %v4814 = vadd.f32 %v4805, %v2049
      %v4815 = vxor.u32 %v4807, 2147483648
      %v4816 = vxor.u32 %v4811, 2147483648
      %v4817 = vmul.f32 %v4815, 1.442695
      %v4818 = vpow.pop %v4817
      %v4819 = vmul.f32 %v4816, 1.442695
      %v4820 = vpow.pop %v4819
      %v4821 = vadd.f32 %v4818, 1.0
      %v4822 = vadd.f32 %v4820, 1.0
      %v4823 = vrcp.pop %v4821
      %v4824 = vmul.f32 1.0, %v4823
      %v4825 = vrcp.pop %v4822
      %v4826 = vmul.f32 1.0, %v4825
      %v4827 = vxor.u32 %v4808, 2147483648
      %v4828 = vxor.u32 %v4812, 2147483648
      %v4829 = vmul.f32 %v4827, 1.442695
      %v4830 = vpow.pop %v4829
      %v4831 = vmul.f32 %v4828, 1.442695
      %v4832 = vpow.pop %v4831
      %v4833 = vadd.f32 %v4830, 1.0
      %v4834 = vadd.f32 %v4832, 1.0
      %v4835 = vrcp.pop %v4833
      %v4836 = vmul.f32 1.0, %v4835
      %v4837 = vrcp.pop %v4834
      %v4838 = vmul.f32 1.0, %v4837
      %v4839 = vtanh.pop %v4809
      %v4840 = vtanh.pop %v4813
      %v4841 = vxor.u32 %v4810, 2147483648
      %v4842 = vxor.u32 %v4814, 2147483648
      %v4843 = vmul.f32 %v4841, 1.442695
      %v4844 = vpow.pop %v4843
      %v4845 = vmul.f32 %v4842, 1.442695
      %v4846 = vpow.pop %v4845
      %v4847 = vadd.f32 %v4844, 1.0
      %v4848 = vadd.f32 %v4846, 1.0
      %v4849 = vrcp.pop %v4847
      %v4850 = vmul.f32 1.0, %v4849
      %v4851 = vrcp.pop %v4848
      %v4852 = vmul.f32 1.0, %v4851
      %v4853 = vmul.f32 %v4836, %v4564
      %v4854 = vmul.f32 %v4838, %v4565
      %v4855 = vmul.f32 %v4824, %v4839
      %v4856 = vmul.f32 %v4826, %v4840
      %v4857 = vadd.f32 %v4853, %v4855
      %v4858 = vadd.f32 %v4854, %v4856
      %v4859 = vtanh.pop %v4857
      %v4860 = vtanh.pop %v4858
      %v4861 = vmul.f32 %v4850, %v4859
      %v4862 = vmul.f32 %v4852, %v4860
      %s4863 = sadd.s32 %s1081, 9
      %p4864 = scmp.gt.s32.totalorder %s4863, 0
      %s4865 = scalar_select %p4864, 1, 0
      %v4866 = vstv %s4865
      %vm4867 = vcmp.eq.s32.totalorder %v4866, 1
      %v4868 = vsel %vm4867, %v4861, %v4562
      %v4869 = vsel %vm4867, %v4862, %v4563
      %v4870 = vsel %vm4867, %v4857, %v4564
      %v4871 = vsel %vm4867, %v4858, %v4565
      %s4872 = smul.u32 18, 4
      %s4873 = smul.addr %s4872, 8
      %s4874 = scalar_lea.vmem [#allocation2], %s4873
      %v4875 = vld [vmem:[%s4874] sm:$0xff]
      %v4876 = vld [vmem:[%s4874 + $0x8] sm:$0xff]
      %v4877 = vld [vmem:[%s4874 + $0x10] sm:$0xff]
      %v4878 = vld [vmem:[%s4874 + $0x18] sm:$0xff]
      %v4879 = vld [vmem:[%s4874 + $0x20] sm:$0xff]
      %v4880 = vld [vmem:[%s4874 + $0x28] sm:$0xff]
      %v4881 = vld [vmem:[%s4874 + $0x30] sm:$0xff]
      %v4882 = vld [vmem:[%s4874 + $0x38] sm:$0xff]
      %v4883 = vadd.f32 %v4875, %v4670
      %v4884 = vadd.f32 %v4876, %v4672
      %v4885 = vadd.f32 %v4877, %v4713
      %v4886 = vadd.f32 %v4878, %v4715
      %v4887 = vadd.f32 %v4879, %v4674
      %v4888 = vadd.f32 %v4880, %v4676
      %v4889 = vadd.f32 %v4881, %v4717
      %v4890 = vadd.f32 %v4882, %v4719
      %v4891 = vxor.u32 %v4883, 2147483648
      %v4892 = vxor.u32 %v4887, 2147483648
      %v4893 = vmul.f32 %v4891, 1.442695
      %v4894 = vpow.pop %v4893
      %v4895 = vmul.f32 %v4892, 1.442695
      %v4896 = vpow.pop %v4895
      %v4897 = vadd.f32 %v4894, 1.0
      %v4898 = vadd.f32 %v4896, 1.0
      %v4899 = vrcp.pop %v4897
      %v4900 = vmul.f32 1.0, %v4899
      %v4901 = vrcp.pop %v4898
      %v4902 = vmul.f32 1.0, %v4901
      %v4903 = vxor.u32 %v4884, 2147483648
      %v4904 = vxor.u32 %v4888, 2147483648
      %v4905 = vmul.f32 %v4903, 1.442695
      %v4906 = vpow.pop %v4905
      %v4907 = vmul.f32 %v4904, 1.442695
      %v4908 = vpow.pop %v4907
      %v4909 = vadd.f32 %v4906, 1.0
      %v4910 = vadd.f32 %v4908, 1.0
      %v4911 = vrcp.pop %v4909
      %v4912 = vmul.f32 1.0, %v4911
      %v4913 = vrcp.pop %v4910
      %v4914 = vmul.f32 1.0, %v4913
      %v4915 = vtanh.pop %v4885
      %v4916 = vtanh.pop %v4889
      %v4917 = vxor.u32 %v4886, 2147483648
      %v4918 = vxor.u32 %v4890, 2147483648
      %v4919 = vmul.f32 %v4917, 1.442695
      %v4920 = vpow.pop %v4919
      %v4921 = vmul.f32 %v4918, 1.442695
      %v4922 = vpow.pop %v4921
      %v4923 = vadd.f32 %v4920, 1.0
      %v4924 = vadd.f32 %v4922, 1.0
      %v4925 = vrcp.pop %v4923
      %v4926 = vmul.f32 1.0, %v4925
      %v4927 = vrcp.pop %v4924
      %v4928 = vmul.f32 1.0, %v4927
      %v4929 = vmul.f32 %v4912, %v4627
      %v4930 = vmul.f32 %v4914, %v4628
      %v4931 = vmul.f32 %v4900, %v4915
      %v4932 = vmul.f32 %v4902, %v4916
      %v4933 = vadd.f32 %v4929, %v4931
      %v4934 = vadd.f32 %v4930, %v4932
      %v4935 = vtanh.pop %v4933
      %v4936 = vtanh.pop %v4934
      %v4937 = vmul.f32 %v4926, %v4935
      %v4938 = vmul.f32 %v4928, %v4936
      %v4939 = vpack.c.bf16 %v4938, %v4937
      %v4940 = vpack.c.bf16 %v4869, %v4868
      %4941 = vmatprep.subr.bf16.mxu0 %v1661
      %4942 = vmatpush1.bf16.msra.mxu0 %v1660
      %4943 = vmatprep.subr.bf16.mxu0 %v1653
      %4944 = vmatpush1.bf16.msra.mxu0 %v1652
      %4945 = vmatprep.subr.bf16.mxu0 %v1645
      %4946 = vmatpush1.bf16.msra.mxu0 %v1644
      %4947 = vmatprep.subr.bf16.mxu0 %v1637
      %4948 = vmatpush1.bf16.msra.mxu0 %v1636
      %4949 = vmatprep.subr.bf16.mxu0 %v1629
      %4950 = vmatpush1.bf16.msra.mxu0 %v1628
      %4951 = vmatprep.subr.bf16.mxu0 %v1621
      %4952 = vmatpush1.bf16.msra.mxu0 %v1620
      %4953 = vmatprep.subr.bf16.mxu0 %v1613
      %4954 = vmatpush1.bf16.msra.mxu0 %v1612
      %4955 = vmatprep.subr.bf16.mxu0 %v1605
      %4956 = vmatpush1.bf16.msra.mxu0 %v1604
      %4957 = vmatprep.subr.bf16.mxu0 %v1725
      %4958 = vmatpush2.bf16.msra.mxu0 %v1724
      %4959 = vmatprep.subr.bf16.mxu0 %v1717
      %4960 = vmatpush2.bf16.msra.mxu0 %v1716
      %4961 = vmatprep.subr.bf16.mxu0 %v1709
      %4962 = vmatpush2.bf16.msra.mxu0 %v1708
      %4963 = vmatprep.subr.bf16.mxu0 %v1701
      %4964 = vmatpush2.bf16.msra.mxu0 %v1700
      %4965 = vmatprep.subr.bf16.mxu0 %v1693
      %4966 = vmatpush2.bf16.msra.mxu0 %v1692
      %4967 = vmatprep.subr.bf16.mxu0 %v1685
      %4968 = vmatpush2.bf16.msra.mxu0 %v1684
      %4969 = vmatprep.subr.bf16.mxu0 %v1677
      %4970 = vmatpush2.bf16.msra.mxu0 %v1676
      %4971 = vmatprep.subr.bf16.mxu0 %v1669
      %4972 = vmatpush2.bf16.msra.mxu0 %v1668
      %4973 = vmatprep.mubr.bf16.mxu0 %v4940
      %4974 = vmatmul.mubr.bf16.gmra.mxu0 %v4939
      %v4975 = vpop.f32.mrf.mxu0
      %v4976 = vadd.f32 0.0, %v4975
      %v4977 = vpop.f32.mrf.mxu0
      %v4978 = vadd.f32 0.0, %v4977
      %v4979 = vpop.f32.mrf.mxu0
      %v4980 = vadd.f32 0.0, %v4979
      %v4981 = vpop.f32.mrf.mxu0
      %v4982 = vadd.f32 0.0, %v4981
      %4983 = vdwg.mxu0
      %4984 = vmatprep.subr.bf16.mxu0 %v1663
      %4985 = vmatpush1.bf16.msra.mxu0 %v1662
      %4986 = vmatprep.subr.bf16.mxu0 %v1655
      %4987 = vmatpush1.bf16.msra.mxu0 %v1654
      %4988 = vmatprep.subr.bf16.mxu0 %v1647
      %4989 = vmatpush1.bf16.msra.mxu0 %v1646
      %4990 = vmatprep.subr.bf16.mxu0 %v1639
      %4991 = vmatpush1.bf16.msra.mxu0 %v1638
      %4992 = vmatprep.subr.bf16.mxu0 %v1631
      %4993 = vmatpush1.bf16.msra.mxu0 %v1630
      %4994 = vmatprep.subr.bf16.mxu0 %v1623
      %4995 = vmatpush1.bf16.msra.mxu0 %v1622
      %4996 = vmatprep.subr.bf16.mxu0 %v1615
      %4997 = vmatpush1.bf16.msra.mxu0 %v1614
      %4998 = vmatprep.subr.bf16.mxu0 %v1607
      %4999 = vmatpush1.bf16.msra.mxu0 %v1606
      %5000 = vmatprep.subr.bf16.mxu0 %v1727
      %5001 = vmatpush2.bf16.msra.mxu0 %v1726
      %5002 = vmatprep.subr.bf16.mxu0 %v1719
      %5003 = vmatpush2.bf16.msra.mxu0 %v1718
      %5004 = vmatprep.subr.bf16.mxu0 %v1711
      %5005 = vmatpush2.bf16.msra.mxu0 %v1710
      %5006 = vmatprep.subr.bf16.mxu0 %v1703
      %5007 = vmatpush2.bf16.msra.mxu0 %v1702
      %5008 = vmatprep.subr.bf16.mxu0 %v1695
      %5009 = vmatpush2.bf16.msra.mxu0 %v1694
      %5010 = vmatprep.subr.bf16.mxu0 %v1687
      %5011 = vmatpush2.bf16.msra.mxu0 %v1686
      %5012 = vmatprep.subr.bf16.mxu0 %v1679
      %5013 = vmatpush2.bf16.msra.mxu0 %v1678
      %5014 = vmatprep.subr.bf16.mxu0 %v1671
      %5015 = vmatpush2.bf16.msra.mxu0 %v1670
      %5016 = vmatprep.mubr.bf16.mxu0 %v4940
      %5017 = vmatmul.mubr.bf16.gmra.mxu0 %v4939
      %v5018 = vpop.f32.mrf.mxu0
      %v5019 = vadd.f32 0.0, %v5018
      %v5020 = vpop.f32.mrf.mxu0
      %v5021 = vadd.f32 0.0, %v5020
      %v5022 = vpop.f32.mrf.mxu0
      %v5023 = vadd.f32 0.0, %v5022
      %v5024 = vpop.f32.mrf.mxu0
      %v5025 = vadd.f32 0.0, %v5024
      %5026 = vdwg.mxu0
      %5027 = vmatprep.subr.bf16.mxu0 %v1665
      %5028 = vmatpush1.bf16.msra.mxu0 %v1664
      %5029 = vmatprep.subr.bf16.mxu0 %v1657
      %5030 = vmatpush1.bf16.msra.mxu0 %v1656
      %5031 = vmatprep.subr.bf16.mxu0 %v1649
      %5032 = vmatpush1.bf16.msra.mxu0 %v1648
      %5033 = vmatprep.subr.bf16.mxu0 %v1641
      %5034 = vmatpush1.bf16.msra.mxu0 %v1640
      %5035 = vmatprep.subr.bf16.mxu0 %v1633
      %5036 = vmatpush1.bf16.msra.mxu0 %v1632
      %5037 = vmatprep.subr.bf16.mxu0 %v1625
      %5038 = vmatpush1.bf16.msra.mxu0 %v1624
      %5039 = vmatprep.subr.bf16.mxu0 %v1617
      %5040 = vmatpush1.bf16.msra.mxu0 %v1616
      %5041 = vmatprep.subr.bf16.mxu0 %v1609
      %5042 = vmatpush1.bf16.msra.mxu0 %v1608
      %5043 = vmatprep.subr.bf16.mxu0 %v1729
      %5044 = vmatpush2.bf16.msra.mxu0 %v1728
      %5045 = vmatprep.subr.bf16.mxu0 %v1721
      %5046 = vmatpush2.bf16.msra.mxu0 %v1720
      %5047 = vmatprep.subr.bf16.mxu0 %v1713
      %5048 = vmatpush2.bf16.msra.mxu0 %v1712
      %5049 = vmatprep.subr.bf16.mxu0 %v1705
      %5050 = vmatpush2.bf16.msra.mxu0 %v1704
      %5051 = vmatprep.subr.bf16.mxu0 %v1697
      %5052 = vmatpush2.bf16.msra.mxu0 %v1696
      %5053 = vmatprep.subr.bf16.mxu0 %v1689
      %5054 = vmatpush2.bf16.msra.mxu0 %v1688
      %5055 = vmatprep.subr.bf16.mxu0 %v1681
      %5056 = vmatpush2.bf16.msra.mxu0 %v1680
      %5057 = vmatprep.subr.bf16.mxu0 %v1673
      %5058 = vmatpush2.bf16.msra.mxu0 %v1672
      %5059 = vmatprep.mubr.bf16.mxu0 %v4940
      %5060 = vmatmul.mubr.bf16.gmra.mxu0 %v4939
      %v5061 = vpop.f32.mrf.mxu0
      %v5062 = vadd.f32 0.0, %v5061
      %v5063 = vpop.f32.mrf.mxu0
      %v5064 = vadd.f32 0.0, %v5063
      %v5065 = vpop.f32.mrf.mxu0
      %v5066 = vadd.f32 0.0, %v5065
      %v5067 = vpop.f32.mrf.mxu0
      %v5068 = vadd.f32 0.0, %v5067
      %5069 = vdwg.mxu0
      %5070 = vmatprep.subr.bf16.mxu0 %v1667
      %5071 = vmatpush1.bf16.msra.mxu0 %v1666
      %5072 = vmatprep.subr.bf16.mxu0 %v1659
      %5073 = vmatpush1.bf16.msra.mxu0 %v1658
      %5074 = vmatprep.subr.bf16.mxu0 %v1651
      %5075 = vmatpush1.bf16.msra.mxu0 %v1650
      %5076 = vmatprep.subr.bf16.mxu0 %v1643
      %5077 = vmatpush1.bf16.msra.mxu0 %v1642
      %5078 = vmatprep.subr.bf16.mxu0 %v1635
      %5079 = vmatpush1.bf16.msra.mxu0 %v1634
      %5080 = vmatprep.subr.bf16.mxu0 %v1627
      %5081 = vmatpush1.bf16.msra.mxu0 %v1626
      %5082 = vmatprep.subr.bf16.mxu0 %v1619
      %5083 = vmatpush1.bf16.msra.mxu0 %v1618
      %5084 = vmatprep.subr.bf16.mxu0 %v1611
      %5085 = vmatpush1.bf16.msra.mxu0 %v1610
      %5086 = vmatprep.subr.bf16.mxu0 %v1731
      %5087 = vmatpush2.bf16.msra.mxu0 %v1730
      %5088 = vmatprep.subr.bf16.mxu0 %v1723
      %5089 = vmatpush2.bf16.msra.mxu0 %v1722
      %5090 = vmatprep.subr.bf16.mxu0 %v1715
      %5091 = vmatpush2.bf16.msra.mxu0 %v1714
      %5092 = vmatprep.subr.bf16.mxu0 %v1707
      %5093 = vmatpush2.bf16.msra.mxu0 %v1706
      %5094 = vmatprep.subr.bf16.mxu0 %v1699
      %5095 = vmatpush2.bf16.msra.mxu0 %v1698
      %5096 = vmatprep.subr.bf16.mxu0 %v1691
      %5097 = vmatpush2.bf16.msra.mxu0 %v1690
      %5098 = vmatprep.subr.bf16.mxu0 %v1683
      %5099 = vmatpush2.bf16.msra.mxu0 %v1682
      %5100 = vmatprep.subr.bf16.mxu0 %v1675
      %5101 = vmatpush2.bf16.msra.mxu0 %v1674
      %5102 = vmatprep.mubr.bf16.mxu0 %v4940
      %5103 = vmatmul.mubr.bf16.gmra.mxu0 %v4939
      %v5104 = vpop.f32.mrf.mxu0
      %v5105 = vadd.f32 0.0, %v5104
      %v5106 = vpop.f32.mrf.mxu0
      %v5107 = vadd.f32 0.0, %v5106
      %v5108 = vpop.f32.mrf.mxu0
      %v5109 = vadd.f32 0.0, %v5108
      %v5110 = vpop.f32.mrf.mxu0
      %v5111 = vadd.f32 0.0, %v5110
      %5112 = vdwg.mxu0
      %v5113 = vadd.f32 %v5062, %v2037
      %v5114 = vadd.f32 %v5064, %v2041
      %v5115 = vadd.f32 %v5105, %v2045
      %v5116 = vadd.f32 %v5107, %v2049
      %v5117 = vadd.f32 %v5066, %v2037
      %v5118 = vadd.f32 %v5068, %v2041
      %v5119 = vadd.f32 %v5109, %v2045
      %v5120 = vadd.f32 %v5111, %v2049
      %v5121 = vxor.u32 %v5113, 2147483648
      %v5122 = vxor.u32 %v5117, 2147483648
      %v5123 = vmul.f32 %v5121, 1.442695
      %v5124 = vpow.pop %v5123
      %v5125 = vmul.f32 %v5122, 1.442695
      %v5126 = vpow.pop %v5125
      %v5127 = vadd.f32 %v5124, 1.0
      %v5128 = vadd.f32 %v5126, 1.0
      %v5129 = vrcp.pop %v5127
      %v5130 = vmul.f32 1.0, %v5129
      %v5131 = vrcp.pop %v5128
      %v5132 = vmul.f32 1.0, %v5131
      %v5133 = vxor.u32 %v5114, 2147483648
      %v5134 = vxor.u32 %v5118, 2147483648
      %v5135 = vmul.f32 %v5133, 1.442695
      %v5136 = vpow.pop %v5135
      %v5137 = vmul.f32 %v5134, 1.442695
      %v5138 = vpow.pop %v5137
      %v5139 = vadd.f32 %v5136, 1.0
      %v5140 = vadd.f32 %v5138, 1.0
      %v5141 = vrcp.pop %v5139
      %v5142 = vmul.f32 1.0, %v5141
      %v5143 = vrcp.pop %v5140
      %v5144 = vmul.f32 1.0, %v5143
      %v5145 = vtanh.pop %v5115
      %v5146 = vtanh.pop %v5119
      %v5147 = vxor.u32 %v5116, 2147483648
      %v5148 = vxor.u32 %v5120, 2147483648
      %v5149 = vmul.f32 %v5147, 1.442695
      %v5150 = vpow.pop %v5149
      %v5151 = vmul.f32 %v5148, 1.442695
      %v5152 = vpow.pop %v5151
      %v5153 = vadd.f32 %v5150, 1.0
      %v5154 = vadd.f32 %v5152, 1.0
      %v5155 = vrcp.pop %v5153
      %v5156 = vmul.f32 1.0, %v5155
      %v5157 = vrcp.pop %v5154
      %v5158 = vmul.f32 1.0, %v5157
      %v5159 = vmul.f32 %v5142, %v4870
      %v5160 = vmul.f32 %v5144, %v4871
      %v5161 = vmul.f32 %v5130, %v5145
      %v5162 = vmul.f32 %v5132, %v5146
      %v5163 = vadd.f32 %v5159, %v5161
      %v5164 = vadd.f32 %v5160, %v5162
      %v5165 = vtanh.pop %v5163
      %v5166 = vtanh.pop %v5164
      %v5167 = vmul.f32 %v5156, %v5165
      %v5168 = vmul.f32 %v5158, %v5166
      %s5169 = sadd.s32 %s1081, 10
      %p5170 = scmp.gt.s32.totalorder %s5169, 0
      %s5171 = scalar_select %p5170, 1, 0
      %v5172 = vstv %s5171
      %vm5173 = vcmp.eq.s32.totalorder %v5172, 1
      %v5174 = vsel %vm5173, %v5167, %v4868
      %v5175 = vsel %vm5173, %v5168, %v4869
      %v5176 = vsel %vm5173, %v5163, %v4870
      %v5177 = vsel %vm5173, %v5164, %v4871
      %s5178 = smul.u32 20, 4
      %s5179 = smul.addr %s5178, 8
      %s5180 = scalar_lea.vmem [#allocation2], %s5179
      %v5181 = vld [vmem:[%s5180] sm:$0xff]
      %v5182 = vld [vmem:[%s5180 + $0x8] sm:$0xff]
      %v5183 = vld [vmem:[%s5180 + $0x10] sm:$0xff]
      %v5184 = vld [vmem:[%s5180 + $0x18] sm:$0xff]
      %v5185 = vld [vmem:[%s5180 + $0x20] sm:$0xff]
      %v5186 = vld [vmem:[%s5180 + $0x28] sm:$0xff]
      %v5187 = vld [vmem:[%s5180 + $0x30] sm:$0xff]
      %v5188 = vld [vmem:[%s5180 + $0x38] sm:$0xff]
      %v5189 = vadd.f32 %v5181, %v4976
      %v5190 = vadd.f32 %v5182, %v4978
      %v5191 = vadd.f32 %v5183, %v5019
      %v5192 = vadd.f32 %v5184, %v5021
      %v5193 = vadd.f32 %v5185, %v4980
      %v5194 = vadd.f32 %v5186, %v4982
      %v5195 = vadd.f32 %v5187, %v5023
      %v5196 = vadd.f32 %v5188, %v5025
      %v5197 = vxor.u32 %v5189, 2147483648
      %v5198 = vxor.u32 %v5193, 2147483648
      %v5199 = vmul.f32 %v5197, 1.442695
      %v5200 = vpow.pop %v5199
      %v5201 = vmul.f32 %v5198, 1.442695
      %v5202 = vpow.pop %v5201
      %v5203 = vadd.f32 %v5200, 1.0
      %v5204 = vadd.f32 %v5202, 1.0
      %v5205 = vrcp.pop %v5203
      %v5206 = vmul.f32 1.0, %v5205
      %v5207 = vrcp.pop %v5204
      %v5208 = vmul.f32 1.0, %v5207
      %v5209 = vxor.u32 %v5190, 2147483648
      %v5210 = vxor.u32 %v5194, 2147483648
      %v5211 = vmul.f32 %v5209, 1.442695
      %v5212 = vpow.pop %v5211
      %v5213 = vmul.f32 %v5210, 1.442695
      %v5214 = vpow.pop %v5213
      %v5215 = vadd.f32 %v5212, 1.0
      %v5216 = vadd.f32 %v5214, 1.0
      %v5217 = vrcp.pop %v5215
      %v5218 = vmul.f32 1.0, %v5217
      %v5219 = vrcp.pop %v5216
      %v5220 = vmul.f32 1.0, %v5219
      %v5221 = vtanh.pop %v5191
      %v5222 = vtanh.pop %v5195
      %v5223 = vxor.u32 %v5192, 2147483648
      %v5224 = vxor.u32 %v5196, 2147483648
      %v5225 = vmul.f32 %v5223, 1.442695
      %v5226 = vpow.pop %v5225
      %v5227 = vmul.f32 %v5224, 1.442695
      %v5228 = vpow.pop %v5227
      %v5229 = vadd.f32 %v5226, 1.0
      %v5230 = vadd.f32 %v5228, 1.0
      %v5231 = vrcp.pop %v5229
      %v5232 = vmul.f32 1.0, %v5231
      %v5233 = vrcp.pop %v5230
      %v5234 = vmul.f32 1.0, %v5233
      %v5235 = vmul.f32 %v5218, %v4933
      %v5236 = vmul.f32 %v5220, %v4934
      %v5237 = vmul.f32 %v5206, %v5221
      %v5238 = vmul.f32 %v5208, %v5222
      %v5239 = vadd.f32 %v5235, %v5237
      %v5240 = vadd.f32 %v5236, %v5238
      %v5241 = vtanh.pop %v5239
      %v5242 = vtanh.pop %v5240
      %v5243 = vmul.f32 %v5232, %v5241
      %v5244 = vmul.f32 %v5234, %v5242
      %v5245 = vpack.c.bf16 %v5244, %v5243
      %v5246 = vpack.c.bf16 %v5175, %v5174
      %5247 = vmatprep.subr.bf16.mxu0 %v1661
      %5248 = vmatpush1.bf16.msra.mxu0 %v1660
      %5249 = vmatprep.subr.bf16.mxu0 %v1653
      %5250 = vmatpush1.bf16.msra.mxu0 %v1652
      %5251 = vmatprep.subr.bf16.mxu0 %v1645
      %5252 = vmatpush1.bf16.msra.mxu0 %v1644
      %5253 = vmatprep.subr.bf16.mxu0 %v1637
      %5254 = vmatpush1.bf16.msra.mxu0 %v1636
      %5255 = vmatprep.subr.bf16.mxu0 %v1629
      %5256 = vmatpush1.bf16.msra.mxu0 %v1628
      %5257 = vmatprep.subr.bf16.mxu0 %v1621
      %5258 = vmatpush1.bf16.msra.mxu0 %v1620
      %5259 = vmatprep.subr.bf16.mxu0 %v1613
      %5260 = vmatpush1.bf16.msra.mxu0 %v1612
      %5261 = vmatprep.subr.bf16.mxu0 %v1605
      %5262 = vmatpush1.bf16.msra.mxu0 %v1604
      %5263 = vmatprep.subr.bf16.mxu0 %v1725
      %5264 = vmatpush2.bf16.msra.mxu0 %v1724
      %5265 = vmatprep.subr.bf16.mxu0 %v1717
      %5266 = vmatpush2.bf16.msra.mxu0 %v1716
      %5267 = vmatprep.subr.bf16.mxu0 %v1709
      %5268 = vmatpush2.bf16.msra.mxu0 %v1708
      %5269 = vmatprep.subr.bf16.mxu0 %v1701
      %5270 = vmatpush2.bf16.msra.mxu0 %v1700
      %5271 = vmatprep.subr.bf16.mxu0 %v1693
      %5272 = vmatpush2.bf16.msra.mxu0 %v1692
      %5273 = vmatprep.subr.bf16.mxu0 %v1685
      %5274 = vmatpush2.bf16.msra.mxu0 %v1684
      %5275 = vmatprep.subr.bf16.mxu0 %v1677
      %5276 = vmatpush2.bf16.msra.mxu0 %v1676
      %5277 = vmatprep.subr.bf16.mxu0 %v1669
      %5278 = vmatpush2.bf16.msra.mxu0 %v1668
      %5279 = vmatprep.mubr.bf16.mxu0 %v5246
      %5280 = vmatmul.mubr.bf16.gmra.mxu0 %v5245
      %v5281 = vpop.f32.mrf.mxu0
      %v5282 = vadd.f32 0.0, %v5281
      %v5283 = vpop.f32.mrf.mxu0
      %v5284 = vadd.f32 0.0, %v5283
      %v5285 = vpop.f32.mrf.mxu0
      %v5286 = vadd.f32 0.0, %v5285
      %v5287 = vpop.f32.mrf.mxu0
      %v5288 = vadd.f32 0.0, %v5287
      %5289 = vdwg.mxu0
      %5290 = vmatprep.subr.bf16.mxu0 %v1663
      %5291 = vmatpush1.bf16.msra.mxu0 %v1662
      %5292 = vmatprep.subr.bf16.mxu0 %v1655
      %5293 = vmatpush1.bf16.msra.mxu0 %v1654
      %5294 = vmatprep.subr.bf16.mxu0 %v1647
      %5295 = vmatpush1.bf16.msra.mxu0 %v1646
      %5296 = vmatprep.subr.bf16.mxu0 %v1639
      %5297 = vmatpush1.bf16.msra.mxu0 %v1638
      %5298 = vmatprep.subr.bf16.mxu0 %v1631
      %5299 = vmatpush1.bf16.msra.mxu0 %v1630
      %5300 = vmatprep.subr.bf16.mxu0 %v1623
      %5301 = vmatpush1.bf16.msra.mxu0 %v1622
      %5302 = vmatprep.subr.bf16.mxu0 %v1615
      %5303 = vmatpush1.bf16.msra.mxu0 %v1614
      %5304 = vmatprep.subr.bf16.mxu0 %v1607
      %5305 = vmatpush1.bf16.msra.mxu0 %v1606
      %5306 = vmatprep.subr.bf16.mxu0 %v1727
      %5307 = vmatpush2.bf16.msra.mxu0 %v1726
      %5308 = vmatprep.subr.bf16.mxu0 %v1719
      %5309 = vmatpush2.bf16.msra.mxu0 %v1718
      %5310 = vmatprep.subr.bf16.mxu0 %v1711
      %5311 = vmatpush2.bf16.msra.mxu0 %v1710
      %5312 = vmatprep.subr.bf16.mxu0 %v1703
      %5313 = vmatpush2.bf16.msra.mxu0 %v1702
      %5314 = vmatprep.subr.bf16.mxu0 %v1695
      %5315 = vmatpush2.bf16.msra.mxu0 %v1694
      %5316 = vmatprep.subr.bf16.mxu0 %v1687
      %5317 = vmatpush2.bf16.msra.mxu0 %v1686
      %5318 = vmatprep.subr.bf16.mxu0 %v1679
      %5319 = vmatpush2.bf16.msra.mxu0 %v1678
      %5320 = vmatprep.subr.bf16.mxu0 %v1671
      %5321 = vmatpush2.bf16.msra.mxu0 %v1670
      %5322 = vmatprep.mubr.bf16.mxu0 %v5246
      %5323 = vmatmul.mubr.bf16.gmra.mxu0 %v5245
      %v5324 = vpop.f32.mrf.mxu0
      %v5325 = vadd.f32 0.0, %v5324
      %v5326 = vpop.f32.mrf.mxu0
      %v5327 = vadd.f32 0.0, %v5326
      %v5328 = vpop.f32.mrf.mxu0
      %v5329 = vadd.f32 0.0, %v5328
      %v5330 = vpop.f32.mrf.mxu0
      %v5331 = vadd.f32 0.0, %v5330
      %5332 = vdwg.mxu0
      %5333 = vmatprep.subr.bf16.mxu0 %v1665
      %5334 = vmatpush1.bf16.msra.mxu0 %v1664
      %5335 = vmatprep.subr.bf16.mxu0 %v1657
      %5336 = vmatpush1.bf16.msra.mxu0 %v1656
      %5337 = vmatprep.subr.bf16.mxu0 %v1649
      %5338 = vmatpush1.bf16.msra.mxu0 %v1648
      %5339 = vmatprep.subr.bf16.mxu0 %v1641
      %5340 = vmatpush1.bf16.msra.mxu0 %v1640
      %5341 = vmatprep.subr.bf16.mxu0 %v1633
      %5342 = vmatpush1.bf16.msra.mxu0 %v1632
      %5343 = vmatprep.subr.bf16.mxu0 %v1625
      %5344 = vmatpush1.bf16.msra.mxu0 %v1624
      %5345 = vmatprep.subr.bf16.mxu0 %v1617
      %5346 = vmatpush1.bf16.msra.mxu0 %v1616
      %5347 = vmatprep.subr.bf16.mxu0 %v1609
      %5348 = vmatpush1.bf16.msra.mxu0 %v1608
      %5349 = vmatprep.subr.bf16.mxu0 %v1729
      %5350 = vmatpush2.bf16.msra.mxu0 %v1728
      %5351 = vmatprep.subr.bf16.mxu0 %v1721
      %5352 = vmatpush2.bf16.msra.mxu0 %v1720
      %5353 = vmatprep.subr.bf16.mxu0 %v1713
      %5354 = vmatpush2.bf16.msra.mxu0 %v1712
      %5355 = vmatprep.subr.bf16.mxu0 %v1705
      %5356 = vmatpush2.bf16.msra.mxu0 %v1704
      %5357 = vmatprep.subr.bf16.mxu0 %v1697
      %5358 = vmatpush2.bf16.msra.mxu0 %v1696
      %5359 = vmatprep.subr.bf16.mxu0 %v1689
      %5360 = vmatpush2.bf16.msra.mxu0 %v1688
      %5361 = vmatprep.subr.bf16.mxu0 %v1681
      %5362 = vmatpush2.bf16.msra.mxu0 %v1680
      %5363 = vmatprep.subr.bf16.mxu0 %v1673
      %5364 = vmatpush2.bf16.msra.mxu0 %v1672
      %5365 = vmatprep.mubr.bf16.mxu0 %v5246
      %5366 = vmatmul.mubr.bf16.gmra.mxu0 %v5245
      %v5367 = vpop.f32.mrf.mxu0
      %v5368 = vadd.f32 0.0, %v5367
      %v5369 = vpop.f32.mrf.mxu0
      %v5370 = vadd.f32 0.0, %v5369
      %v5371 = vpop.f32.mrf.mxu0
      %v5372 = vadd.f32 0.0, %v5371
      %v5373 = vpop.f32.mrf.mxu0
      %v5374 = vadd.f32 0.0, %v5373
      %5375 = vdwg.mxu0
      %5376 = vmatprep.subr.bf16.mxu0 %v1667
      %5377 = vmatpush1.bf16.msra.mxu0 %v1666
      %5378 = vmatprep.subr.bf16.mxu0 %v1659
      %5379 = vmatpush1.bf16.msra.mxu0 %v1658
      %5380 = vmatprep.subr.bf16.mxu0 %v1651
      %5381 = vmatpush1.bf16.msra.mxu0 %v1650
      %5382 = vmatprep.subr.bf16.mxu0 %v1643
      %5383 = vmatpush1.bf16.msra.mxu0 %v1642
      %5384 = vmatprep.subr.bf16.mxu0 %v1635
      %5385 = vmatpush1.bf16.msra.mxu0 %v1634
      %5386 = vmatprep.subr.bf16.mxu0 %v1627
      %5387 = vmatpush1.bf16.msra.mxu0 %v1626
      %5388 = vmatprep.subr.bf16.mxu0 %v1619
      %5389 = vmatpush1.bf16.msra.mxu0 %v1618
      %5390 = vmatprep.subr.bf16.mxu0 %v1611
      %5391 = vmatpush1.bf16.msra.mxu0 %v1610
      %5392 = vmatprep.subr.bf16.mxu0 %v1731
      %5393 = vmatpush2.bf16.msra.mxu0 %v1730
      %5394 = vmatprep.subr.bf16.mxu0 %v1723
      %5395 = vmatpush2.bf16.msra.mxu0 %v1722
      %5396 = vmatprep.subr.bf16.mxu0 %v1715
      %5397 = vmatpush2.bf16.msra.mxu0 %v1714
      %5398 = vmatprep.subr.bf16.mxu0 %v1707
      %5399 = vmatpush2.bf16.msra.mxu0 %v1706
      %5400 = vmatprep.subr.bf16.mxu0 %v1699
      %5401 = vmatpush2.bf16.msra.mxu0 %v1698
      %5402 = vmatprep.subr.bf16.mxu0 %v1691
      %5403 = vmatpush2.bf16.msra.mxu0 %v1690
      %5404 = vmatprep.subr.bf16.mxu0 %v1683
      %5405 = vmatpush2.bf16.msra.mxu0 %v1682
      %5406 = vmatprep.subr.bf16.mxu0 %v1675
      %5407 = vmatpush2.bf16.msra.mxu0 %v1674
      %5408 = vmatprep.mubr.bf16.mxu0 %v5246
      %5409 = vmatmul.mubr.bf16.gmra.mxu0 %v5245
      %v5410 = vpop.f32.mrf.mxu0
      %v5411 = vadd.f32 0.0, %v5410
      %v5412 = vpop.f32.mrf.mxu0
      %v5413 = vadd.f32 0.0, %v5412
      %v5414 = vpop.f32.mrf.mxu0
      %v5415 = vadd.f32 0.0, %v5414
      %v5416 = vpop.f32.mrf.mxu0
      %v5417 = vadd.f32 0.0, %v5416
      %5418 = vdwg.mxu0
      %v5419 = vadd.f32 %v5368, %v2037
      %v5420 = vadd.f32 %v5370, %v2041
      %v5421 = vadd.f32 %v5411, %v2045
      %v5422 = vadd.f32 %v5413, %v2049
      %v5423 = vadd.f32 %v5372, %v2037
      %v5424 = vadd.f32 %v5374, %v2041
      %v5425 = vadd.f32 %v5415, %v2045
      %v5426 = vadd.f32 %v5417, %v2049
      %v5427 = vxor.u32 %v5419, 2147483648
      %v5428 = vxor.u32 %v5423, 2147483648
      %v5429 = vmul.f32 %v5427, 1.442695
      %v5430 = vpow.pop %v5429
      %v5431 = vmul.f32 %v5428, 1.442695
      %v5432 = vpow.pop %v5431
      %v5433 = vadd.f32 %v5430, 1.0
      %v5434 = vadd.f32 %v5432, 1.0
      %v5435 = vrcp.pop %v5433
      %v5436 = vmul.f32 1.0, %v5435
      %v5437 = vrcp.pop %v5434
      %v5438 = vmul.f32 1.0, %v5437
      %v5439 = vxor.u32 %v5420, 2147483648
      %v5440 = vxor.u32 %v5424, 2147483648
      %v5441 = vmul.f32 %v5439, 1.442695
      %v5442 = vpow.pop %v5441
      %v5443 = vmul.f32 %v5440, 1.442695
      %v5444 = vpow.pop %v5443
      %v5445 = vadd.f32 %v5442, 1.0
      %v5446 = vadd.f32 %v5444, 1.0
      %v5447 = vrcp.pop %v5445
      %v5448 = vmul.f32 1.0, %v5447
      %v5449 = vrcp.pop %v5446
      %v5450 = vmul.f32 1.0, %v5449
      %v5451 = vtanh.pop %v5421
      %v5452 = vtanh.pop %v5425
      %v5453 = vxor.u32 %v5422, 2147483648
      %v5454 = vxor.u32 %v5426, 2147483648
      %v5455 = vmul.f32 %v5453, 1.442695
      %v5456 = vpow.pop %v5455
      %v5457 = vmul.f32 %v5454, 1.442695
      %v5458 = vpow.pop %v5457
      %v5459 = vadd.f32 %v5456, 1.0
      %v5460 = vadd.f32 %v5458, 1.0
      %v5461 = vrcp.pop %v5459
      %v5462 = vmul.f32 1.0, %v5461
      %v5463 = vrcp.pop %v5460
      %v5464 = vmul.f32 1.0, %v5463
      %v5465 = vmul.f32 %v5448, %v5176
      %v5466 = vmul.f32 %v5450, %v5177
      %v5467 = vmul.f32 %v5436, %v5451
      %v5468 = vmul.f32 %v5438, %v5452
      %v5469 = vadd.f32 %v5465, %v5467
      %v5470 = vadd.f32 %v5466, %v5468
      %v5471 = vtanh.pop %v5469
      %v5472 = vtanh.pop %v5470
      %v5473 = vmul.f32 %v5462, %v5471
      %v5474 = vmul.f32 %v5464, %v5472
      %s5475 = sadd.s32 %s1081, 11
      %p5476 = scmp.gt.s32.totalorder %s5475, 0
      %s5477 = scalar_select %p5476, 1, 0
      %v5478 = vstv %s5477
      %vm5479 = vcmp.eq.s32.totalorder %v5478, 1
      %v5480 = vsel %vm5479, %v5473, %v5174
      %v5481 = vsel %vm5479, %v5474, %v5175
      %v5482 = vsel %vm5479, %v5469, %v5176
      %v5483 = vsel %vm5479, %v5470, %v5177
      %s5484 = smul.u32 22, 4
      %s5485 = smul.addr %s5484, 8
      %s5486 = scalar_lea.vmem [#allocation2], %s5485
      %v5487 = vld [vmem:[%s5486] sm:$0xff]
      %v5488 = vld [vmem:[%s5486 + $0x8] sm:$0xff]
      %v5489 = vld [vmem:[%s5486 + $0x10] sm:$0xff]
      %v5490 = vld [vmem:[%s5486 + $0x18] sm:$0xff]
      %v5491 = vld [vmem:[%s5486 + $0x20] sm:$0xff]
      %v5492 = vld [vmem:[%s5486 + $0x28] sm:$0xff]
      %v5493 = vld [vmem:[%s5486 + $0x30] sm:$0xff]
      %v5494 = vld [vmem:[%s5486 + $0x38] sm:$0xff]
      %v5495 = vadd.f32 %v5487, %v5282
      %v5496 = vadd.f32 %v5488, %v5284
      %v5497 = vadd.f32 %v5489, %v5325
      %v5498 = vadd.f32 %v5490, %v5327
      %v5499 = vadd.f32 %v5491, %v5286
      %v5500 = vadd.f32 %v5492, %v5288
      %v5501 = vadd.f32 %v5493, %v5329
      %v5502 = vadd.f32 %v5494, %v5331
      %v5503 = vxor.u32 %v5495, 2147483648
      %v5504 = vxor.u32 %v5499, 2147483648
      %v5505 = vmul.f32 %v5503, 1.442695
      %v5506 = vpow.pop %v5505
      %v5507 = vmul.f32 %v5504, 1.442695
      %v5508 = vpow.pop %v5507
      %v5509 = vadd.f32 %v5506, 1.0
      %v5510 = vadd.f32 %v5508, 1.0
      %v5511 = vrcp.pop %v5509
      %v5512 = vmul.f32 1.0, %v5511
      %v5513 = vrcp.pop %v5510
      %v5514 = vmul.f32 1.0, %v5513
      %v5515 = vxor.u32 %v5496, 2147483648
      %v5516 = vxor.u32 %v5500, 2147483648
      %v5517 = vmul.f32 %v5515, 1.442695
      %v5518 = vpow.pop %v5517
      %v5519 = vmul.f32 %v5516, 1.442695
      %v5520 = vpow.pop %v5519
      %v5521 = vadd.f32 %v5518, 1.0
      %v5522 = vadd.f32 %v5520, 1.0
      %v5523 = vrcp.pop %v5521
      %v5524 = vmul.f32 1.0, %v5523
      %v5525 = vrcp.pop %v5522
      %v5526 = vmul.f32 1.0, %v5525
      %v5527 = vtanh.pop %v5497
      %v5528 = vtanh.pop %v5501
      %v5529 = vxor.u32 %v5498, 2147483648
      %v5530 = vxor.u32 %v5502, 2147483648
      %v5531 = vmul.f32 %v5529, 1.442695
      %v5532 = vpow.pop %v5531
      %v5533 = vmul.f32 %v5530, 1.442695
      %v5534 = vpow.pop %v5533
      %v5535 = vadd.f32 %v5532, 1.0
      %v5536 = vadd.f32 %v5534, 1.0
      %v5537 = vrcp.pop %v5535
      %v5538 = vmul.f32 1.0, %v5537
      %v5539 = vrcp.pop %v5536
      %v5540 = vmul.f32 1.0, %v5539
      %v5541 = vmul.f32 %v5524, %v5239
      %v5542 = vmul.f32 %v5526, %v5240
      %v5543 = vmul.f32 %v5512, %v5527
      %v5544 = vmul.f32 %v5514, %v5528
      %v5545 = vadd.f32 %v5541, %v5543
      %v5546 = vadd.f32 %v5542, %v5544
      %v5547 = vtanh.pop %v5545
      %v5548 = vtanh.pop %v5546
      %v5549 = vmul.f32 %v5538, %v5547
      %v5550 = vmul.f32 %v5540, %v5548
      %v5551 = vpack.c.bf16 %v5550, %v5549
      %v5552 = vpack.c.bf16 %v5481, %v5480
      %5553 = vmatprep.subr.bf16.mxu0 %v1661
      %5554 = vmatpush1.bf16.msra.mxu0 %v1660
      %5555 = vmatprep.subr.bf16.mxu0 %v1653
      %5556 = vmatpush1.bf16.msra.mxu0 %v1652
      %5557 = vmatprep.subr.bf16.mxu0 %v1645
      %5558 = vmatpush1.bf16.msra.mxu0 %v1644
      %5559 = vmatprep.subr.bf16.mxu0 %v1637
      %5560 = vmatpush1.bf16.msra.mxu0 %v1636
      %5561 = vmatprep.subr.bf16.mxu0 %v1629
      %5562 = vmatpush1.bf16.msra.mxu0 %v1628
      %5563 = vmatprep.subr.bf16.mxu0 %v1621
      %5564 = vmatpush1.bf16.msra.mxu0 %v1620
      %5565 = vmatprep.subr.bf16.mxu0 %v1613
      %5566 = vmatpush1.bf16.msra.mxu0 %v1612
      %5567 = vmatprep.subr.bf16.mxu0 %v1605
      %5568 = vmatpush1.bf16.msra.mxu0 %v1604
      %5569 = vmatprep.subr.bf16.mxu0 %v1725
      %5570 = vmatpush2.bf16.msra.mxu0 %v1724
      %5571 = vmatprep.subr.bf16.mxu0 %v1717
      %5572 = vmatpush2.bf16.msra.mxu0 %v1716
      %5573 = vmatprep.subr.bf16.mxu0 %v1709
      %5574 = vmatpush2.bf16.msra.mxu0 %v1708
      %5575 = vmatprep.subr.bf16.mxu0 %v1701
      %5576 = vmatpush2.bf16.msra.mxu0 %v1700
      %5577 = vmatprep.subr.bf16.mxu0 %v1693
      %5578 = vmatpush2.bf16.msra.mxu0 %v1692
      %5579 = vmatprep.subr.bf16.mxu0 %v1685
      %5580 = vmatpush2.bf16.msra.mxu0 %v1684
      %5581 = vmatprep.subr.bf16.mxu0 %v1677
      %5582 = vmatpush2.bf16.msra.mxu0 %v1676
      %5583 = vmatprep.subr.bf16.mxu0 %v1669
      %5584 = vmatpush2.bf16.msra.mxu0 %v1668
      %5585 = vmatprep.mubr.bf16.mxu0 %v5552
      %5586 = vmatmul.mubr.bf16.gmra.mxu0 %v5551
      %v5587 = vpop.f32.mrf.mxu0
      %v5588 = vadd.f32 0.0, %v5587
      %v5589 = vpop.f32.mrf.mxu0
      %v5590 = vadd.f32 0.0, %v5589
      %v5591 = vpop.f32.mrf.mxu0
      %v5592 = vadd.f32 0.0, %v5591
      %v5593 = vpop.f32.mrf.mxu0
      %v5594 = vadd.f32 0.0, %v5593
      %5595 = vdwg.mxu0
      %5596 = vmatprep.subr.bf16.mxu0 %v1663
      %5597 = vmatpush1.bf16.msra.mxu0 %v1662
      %5598 = vmatprep.subr.bf16.mxu0 %v1655
      %5599 = vmatpush1.bf16.msra.mxu0 %v1654
      %5600 = vmatprep.subr.bf16.mxu0 %v1647
      %5601 = vmatpush1.bf16.msra.mxu0 %v1646
      %5602 = vmatprep.subr.bf16.mxu0 %v1639
      %5603 = vmatpush1.bf16.msra.mxu0 %v1638
      %5604 = vmatprep.subr.bf16.mxu0 %v1631
      %5605 = vmatpush1.bf16.msra.mxu0 %v1630
      %5606 = vmatprep.subr.bf16.mxu0 %v1623
      %5607 = vmatpush1.bf16.msra.mxu0 %v1622
      %5608 = vmatprep.subr.bf16.mxu0 %v1615
      %5609 = vmatpush1.bf16.msra.mxu0 %v1614
      %5610 = vmatprep.subr.bf16.mxu0 %v1607
      %5611 = vmatpush1.bf16.msra.mxu0 %v1606
      %5612 = vmatprep.subr.bf16.mxu0 %v1727
      %5613 = vmatpush2.bf16.msra.mxu0 %v1726
      %5614 = vmatprep.subr.bf16.mxu0 %v1719
      %5615 = vmatpush2.bf16.msra.mxu0 %v1718
      %5616 = vmatprep.subr.bf16.mxu0 %v1711
      %5617 = vmatpush2.bf16.msra.mxu0 %v1710
      %5618 = vmatprep.subr.bf16.mxu0 %v1703
      %5619 = vmatpush2.bf16.msra.mxu0 %v1702
      %5620 = vmatprep.subr.bf16.mxu0 %v1695
      %5621 = vmatpush2.bf16.msra.mxu0 %v1694
      %5622 = vmatprep.subr.bf16.mxu0 %v1687
      %5623 = vmatpush2.bf16.msra.mxu0 %v1686
      %5624 = vmatprep.subr.bf16.mxu0 %v1679
      %5625 = vmatpush2.bf16.msra.mxu0 %v1678
      %5626 = vmatprep.subr.bf16.mxu0 %v1671
      %5627 = vmatpush2.bf16.msra.mxu0 %v1670
      %5628 = vmatprep.mubr.bf16.mxu0 %v5552
      %5629 = vmatmul.mubr.bf16.gmra.mxu0 %v5551
      %v5630 = vpop.f32.mrf.mxu0
      %v5631 = vadd.f32 0.0, %v5630
      %v5632 = vpop.f32.mrf.mxu0
      %v5633 = vadd.f32 0.0, %v5632
      %v5634 = vpop.f32.mrf.mxu0
      %v5635 = vadd.f32 0.0, %v5634
      %v5636 = vpop.f32.mrf.mxu0
      %v5637 = vadd.f32 0.0, %v5636
      %5638 = vdwg.mxu0
      %5639 = vmatprep.subr.bf16.mxu0 %v1665
      %5640 = vmatpush1.bf16.msra.mxu0 %v1664
      %5641 = vmatprep.subr.bf16.mxu0 %v1657
      %5642 = vmatpush1.bf16.msra.mxu0 %v1656
      %5643 = vmatprep.subr.bf16.mxu0 %v1649
      %5644 = vmatpush1.bf16.msra.mxu0 %v1648
      %5645 = vmatprep.subr.bf16.mxu0 %v1641
      %5646 = vmatpush1.bf16.msra.mxu0 %v1640
      %5647 = vmatprep.subr.bf16.mxu0 %v1633
      %5648 = vmatpush1.bf16.msra.mxu0 %v1632
      %5649 = vmatprep.subr.bf16.mxu0 %v1625
      %5650 = vmatpush1.bf16.msra.mxu0 %v1624
      %5651 = vmatprep.subr.bf16.mxu0 %v1617
      %5652 = vmatpush1.bf16.msra.mxu0 %v1616
      %5653 = vmatprep.subr.bf16.mxu0 %v1609
      %5654 = vmatpush1.bf16.msra.mxu0 %v1608
      %5655 = vmatprep.subr.bf16.mxu0 %v1729
      %5656 = vmatpush2.bf16.msra.mxu0 %v1728
      %5657 = vmatprep.subr.bf16.mxu0 %v1721
      %5658 = vmatpush2.bf16.msra.mxu0 %v1720
      %5659 = vmatprep.subr.bf16.mxu0 %v1713
      %5660 = vmatpush2.bf16.msra.mxu0 %v1712
      %5661 = vmatprep.subr.bf16.mxu0 %v1705
      %5662 = vmatpush2.bf16.msra.mxu0 %v1704
      %5663 = vmatprep.subr.bf16.mxu0 %v1697
      %5664 = vmatpush2.bf16.msra.mxu0 %v1696
      %5665 = vmatprep.subr.bf16.mxu0 %v1689
      %5666 = vmatpush2.bf16.msra.mxu0 %v1688
      %5667 = vmatprep.subr.bf16.mxu0 %v1681
      %5668 = vmatpush2.bf16.msra.mxu0 %v1680
      %5669 = vmatprep.subr.bf16.mxu0 %v1673
      %5670 = vmatpush2.bf16.msra.mxu0 %v1672
      %5671 = vmatprep.mubr.bf16.mxu0 %v5552
      %5672 = vmatmul.mubr.bf16.gmra.mxu0 %v5551
      %v5673 = vpop.f32.mrf.mxu0
      %v5674 = vadd.f32 0.0, %v5673
      %v5675 = vpop.f32.mrf.mxu0
      %v5676 = vadd.f32 0.0, %v5675
      %v5677 = vpop.f32.mrf.mxu0
      %v5678 = vadd.f32 0.0, %v5677
      %v5679 = vpop.f32.mrf.mxu0
      %v5680 = vadd.f32 0.0, %v5679
      %5681 = vdwg.mxu0
      %5682 = vmatprep.subr.bf16.mxu0 %v1667
      %5683 = vmatpush1.bf16.msra.mxu0 %v1666
      %5684 = vmatprep.subr.bf16.mxu0 %v1659
      %5685 = vmatpush1.bf16.msra.mxu0 %v1658
      %5686 = vmatprep.subr.bf16.mxu0 %v1651
      %5687 = vmatpush1.bf16.msra.mxu0 %v1650
      %5688 = vmatprep.subr.bf16.mxu0 %v1643
      %5689 = vmatpush1.bf16.msra.mxu0 %v1642
      %5690 = vmatprep.subr.bf16.mxu0 %v1635
      %5691 = vmatpush1.bf16.msra.mxu0 %v1634
      %5692 = vmatprep.subr.bf16.mxu0 %v1627
      %5693 = vmatpush1.bf16.msra.mxu0 %v1626
      %5694 = vmatprep.subr.bf16.mxu0 %v1619
      %5695 = vmatpush1.bf16.msra.mxu0 %v1618
      %5696 = vmatprep.subr.bf16.mxu0 %v1611
      %5697 = vmatpush1.bf16.msra.mxu0 %v1610
      %5698 = vmatprep.subr.bf16.mxu0 %v1731
      %5699 = vmatpush2.bf16.msra.mxu0 %v1730
      %5700 = vmatprep.subr.bf16.mxu0 %v1723
      %5701 = vmatpush2.bf16.msra.mxu0 %v1722
      %5702 = vmatprep.subr.bf16.mxu0 %v1715
      %5703 = vmatpush2.bf16.msra.mxu0 %v1714
      %5704 = vmatprep.subr.bf16.mxu0 %v1707
      %5705 = vmatpush2.bf16.msra.mxu0 %v1706
      %5706 = vmatprep.subr.bf16.mxu0 %v1699
      %5707 = vmatpush2.bf16.msra.mxu0 %v1698
      %5708 = vmatprep.subr.bf16.mxu0 %v1691
      %5709 = vmatpush2.bf16.msra.mxu0 %v1690
      %5710 = vmatprep.subr.bf16.mxu0 %v1683
      %5711 = vmatpush2.bf16.msra.mxu0 %v1682
      %5712 = vmatprep.subr.bf16.mxu0 %v1675
      %5713 = vmatpush2.bf16.msra.mxu0 %v1674
      %5714 = vmatprep.mubr.bf16.mxu0 %v5552
      %5715 = vmatmul.mubr.bf16.gmra.mxu0 %v5551
      %v5716 = vpop.f32.mrf.mxu0
      %v5717 = vadd.f32 0.0, %v5716
      %v5718 = vpop.f32.mrf.mxu0
      %v5719 = vadd.f32 0.0, %v5718
      %v5720 = vpop.f32.mrf.mxu0
      %v5721 = vadd.f32 0.0, %v5720
      %v5722 = vpop.f32.mrf.mxu0
      %v5723 = vadd.f32 0.0, %v5722
      %5724 = vdwg.mxu0
      %v5725 = vadd.f32 %v5674, %v2037
      %v5726 = vadd.f32 %v5676, %v2041
      %v5727 = vadd.f32 %v5717, %v2045
      %v5728 = vadd.f32 %v5719, %v2049
      %v5729 = vadd.f32 %v5678, %v2037
      %v5730 = vadd.f32 %v5680, %v2041
      %v5731 = vadd.f32 %v5721, %v2045
      %v5732 = vadd.f32 %v5723, %v2049
      %v5733 = vxor.u32 %v5725, 2147483648
      %v5734 = vxor.u32 %v5729, 2147483648
      %v5735 = vmul.f32 %v5733, 1.442695
      %v5736 = vpow.pop %v5735
      %v5737 = vmul.f32 %v5734, 1.442695
      %v5738 = vpow.pop %v5737
      %v5739 = vadd.f32 %v5736, 1.0
      %v5740 = vadd.f32 %v5738, 1.0
      %v5741 = vrcp.pop %v5739
      %v5742 = vmul.f32 1.0, %v5741
      %v5743 = vrcp.pop %v5740
      %v5744 = vmul.f32 1.0, %v5743
      %v5745 = vxor.u32 %v5726, 2147483648
      %v5746 = vxor.u32 %v5730, 2147483648
      %v5747 = vmul.f32 %v5745, 1.442695
      %v5748 = vpow.pop %v5747
      %v5749 = vmul.f32 %v5746, 1.442695
      %v5750 = vpow.pop %v5749
      %v5751 = vadd.f32 %v5748, 1.0
      %v5752 = vadd.f32 %v5750, 1.0
      %v5753 = vrcp.pop %v5751
      %v5754 = vmul.f32 1.0, %v5753
      %v5755 = vrcp.pop %v5752
      %v5756 = vmul.f32 1.0, %v5755
      %v5757 = vtanh.pop %v5727
      %v5758 = vtanh.pop %v5731
      %v5759 = vxor.u32 %v5728, 2147483648
      %v5760 = vxor.u32 %v5732, 2147483648
      %v5761 = vmul.f32 %v5759, 1.442695
      %v5762 = vpow.pop %v5761
      %v5763 = vmul.f32 %v5760, 1.442695
      %v5764 = vpow.pop %v5763
      %v5765 = vadd.f32 %v5762, 1.0
      %v5766 = vadd.f32 %v5764, 1.0
      %v5767 = vrcp.pop %v5765
      %v5768 = vmul.f32 1.0, %v5767
      %v5769 = vrcp.pop %v5766
      %v5770 = vmul.f32 1.0, %v5769
      %v5771 = vmul.f32 %v5754, %v5482
      %v5772 = vmul.f32 %v5756, %v5483
      %v5773 = vmul.f32 %v5742, %v5757
      %v5774 = vmul.f32 %v5744, %v5758
      %v5775 = vadd.f32 %v5771, %v5773
      %v5776 = vadd.f32 %v5772, %v5774
      %v5777 = vtanh.pop %v5775
      %v5778 = vtanh.pop %v5776
      %v5779 = vmul.f32 %v5768, %v5777
      %v5780 = vmul.f32 %v5770, %v5778
      %s5781 = sadd.s32 %s1081, 12
      %p5782 = scmp.gt.s32.totalorder %s5781, 0
      %s5783 = scalar_select %p5782, 1, 0
      %v5784 = vstv %s5783
      %vm5785 = vcmp.eq.s32.totalorder %v5784, 1
      %v5786 = vsel %vm5785, %v5779, %v5480
      %v5787 = vsel %vm5785, %v5780, %v5481
      %v5788 = vsel %vm5785, %v5775, %v5482
      %v5789 = vsel %vm5785, %v5776, %v5483
      %s5790 = smul.u32 24, 4
      %s5791 = smul.addr %s5790, 8
      %s5792 = scalar_lea.vmem [#allocation2], %s5791
      %v5793 = vld [vmem:[%s5792] sm:$0xff]
      %v5794 = vld [vmem:[%s5792 + $0x8] sm:$0xff]
      %v5795 = vld [vmem:[%s5792 + $0x10] sm:$0xff]
      %v5796 = vld [vmem:[%s5792 + $0x18] sm:$0xff]
      %v5797 = vld [vmem:[%s5792 + $0x20] sm:$0xff]
      %v5798 = vld [vmem:[%s5792 + $0x28] sm:$0xff]
      %v5799 = vld [vmem:[%s5792 + $0x30] sm:$0xff]
      %v5800 = vld [vmem:[%s5792 + $0x38] sm:$0xff]
      %v5801 = vadd.f32 %v5793, %v5588
      %v5802 = vadd.f32 %v5794, %v5590
      %v5803 = vadd.f32 %v5795, %v5631
      %v5804 = vadd.f32 %v5796, %v5633
      %v5805 = vadd.f32 %v5797, %v5592
      %v5806 = vadd.f32 %v5798, %v5594
      %v5807 = vadd.f32 %v5799, %v5635
      %v5808 = vadd.f32 %v5800, %v5637
      %v5809 = vxor.u32 %v5801, 2147483648
      %v5810 = vxor.u32 %v5805, 2147483648
      %v5811 = vmul.f32 %v5809, 1.442695
      %v5812 = vpow.pop %v5811
      %v5813 = vmul.f32 %v5810, 1.442695
      %v5814 = vpow.pop %v5813
      %v5815 = vadd.f32 %v5812, 1.0
      %v5816 = vadd.f32 %v5814, 1.0
      %v5817 = vrcp.pop %v5815
      %v5818 = vmul.f32 1.0, %v5817
      %v5819 = vrcp.pop %v5816
      %v5820 = vmul.f32 1.0, %v5819
      %v5821 = vxor.u32 %v5802, 2147483648
      %v5822 = vxor.u32 %v5806, 2147483648
      %v5823 = vmul.f32 %v5821, 1.442695
      %v5824 = vpow.pop %v5823
      %v5825 = vmul.f32 %v5822, 1.442695
      %v5826 = vpow.pop %v5825
      %v5827 = vadd.f32 %v5824, 1.0
      %v5828 = vadd.f32 %v5826, 1.0
      %v5829 = vrcp.pop %v5827
      %v5830 = vmul.f32 1.0, %v5829
      %v5831 = vrcp.pop %v5828
      %v5832 = vmul.f32 1.0, %v5831
      %v5833 = vtanh.pop %v5803
      %v5834 = vtanh.pop %v5807
      %v5835 = vxor.u32 %v5804, 2147483648
      %v5836 = vxor.u32 %v5808, 2147483648
      %v5837 = vmul.f32 %v5835, 1.442695
      %v5838 = vpow.pop %v5837
      %v5839 = vmul.f32 %v5836, 1.442695
      %v5840 = vpow.pop %v5839
      %v5841 = vadd.f32 %v5838, 1.0
      %v5842 = vadd.f32 %v5840, 1.0
      %v5843 = vrcp.pop %v5841
      %v5844 = vmul.f32 1.0, %v5843
      %v5845 = vrcp.pop %v5842
      %v5846 = vmul.f32 1.0, %v5845
      %v5847 = vmul.f32 %v5830, %v5545
      %v5848 = vmul.f32 %v5832, %v5546
      %v5849 = vmul.f32 %v5818, %v5833
      %v5850 = vmul.f32 %v5820, %v5834
      %v5851 = vadd.f32 %v5847, %v5849
      %v5852 = vadd.f32 %v5848, %v5850
      %v5853 = vtanh.pop %v5851
      %v5854 = vtanh.pop %v5852
      %v5855 = vmul.f32 %v5844, %v5853
      %v5856 = vmul.f32 %v5846, %v5854
      %v5857 = vpack.c.bf16 %v5856, %v5855
      %v5858 = vpack.c.bf16 %v5787, %v5786
      %5859 = vmatprep.subr.bf16.mxu0 %v1661
      %5860 = vmatpush1.bf16.msra.mxu0 %v1660
      %5861 = vmatprep.subr.bf16.mxu0 %v1653
      %5862 = vmatpush1.bf16.msra.mxu0 %v1652
      %5863 = vmatprep.subr.bf16.mxu0 %v1645
      %5864 = vmatpush1.bf16.msra.mxu0 %v1644
      %5865 = vmatprep.subr.bf16.mxu0 %v1637
      %5866 = vmatpush1.bf16.msra.mxu0 %v1636
      %5867 = vmatprep.subr.bf16.mxu0 %v1629
      %5868 = vmatpush1.bf16.msra.mxu0 %v1628
      %5869 = vmatprep.subr.bf16.mxu0 %v1621
      %5870 = vmatpush1.bf16.msra.mxu0 %v1620
      %5871 = vmatprep.subr.bf16.mxu0 %v1613
      %5872 = vmatpush1.bf16.msra.mxu0 %v1612
      %5873 = vmatprep.subr.bf16.mxu0 %v1605
      %5874 = vmatpush1.bf16.msra.mxu0 %v1604
      %5875 = vmatprep.subr.bf16.mxu0 %v1725
      %5876 = vmatpush2.bf16.msra.mxu0 %v1724
      %5877 = vmatprep.subr.bf16.mxu0 %v1717
      %5878 = vmatpush2.bf16.msra.mxu0 %v1716
      %5879 = vmatprep.subr.bf16.mxu0 %v1709
      %5880 = vmatpush2.bf16.msra.mxu0 %v1708
      %5881 = vmatprep.subr.bf16.mxu0 %v1701
      %5882 = vmatpush2.bf16.msra.mxu0 %v1700
      %5883 = vmatprep.subr.bf16.mxu0 %v1693
      %5884 = vmatpush2.bf16.msra.mxu0 %v1692
      %5885 = vmatprep.subr.bf16.mxu0 %v1685
      %5886 = vmatpush2.bf16.msra.mxu0 %v1684
      %5887 = vmatprep.subr.bf16.mxu0 %v1677
      %5888 = vmatpush2.bf16.msra.mxu0 %v1676
      %5889 = vmatprep.subr.bf16.mxu0 %v1669
      %5890 = vmatpush2.bf16.msra.mxu0 %v1668
      %5891 = vmatprep.mubr.bf16.mxu0 %v5858
      %5892 = vmatmul.mubr.bf16.gmra.mxu0 %v5857
      %v5893 = vpop.f32.mrf.mxu0
      %v5894 = vadd.f32 0.0, %v5893
      %v5895 = vpop.f32.mrf.mxu0
      %v5896 = vadd.f32 0.0, %v5895
      %v5897 = vpop.f32.mrf.mxu0
      %v5898 = vadd.f32 0.0, %v5897
      %v5899 = vpop.f32.mrf.mxu0
      %v5900 = vadd.f32 0.0, %v5899
      %5901 = vdwg.mxu0
      %5902 = vmatprep.subr.bf16.mxu0 %v1663
      %5903 = vmatpush1.bf16.msra.mxu0 %v1662
      %5904 = vmatprep.subr.bf16.mxu0 %v1655
      %5905 = vmatpush1.bf16.msra.mxu0 %v1654
      %5906 = vmatprep.subr.bf16.mxu0 %v1647
      %5907 = vmatpush1.bf16.msra.mxu0 %v1646
      %5908 = vmatprep.subr.bf16.mxu0 %v1639
      %5909 = vmatpush1.bf16.msra.mxu0 %v1638
      %5910 = vmatprep.subr.bf16.mxu0 %v1631
      %5911 = vmatpush1.bf16.msra.mxu0 %v1630
      %5912 = vmatprep.subr.bf16.mxu0 %v1623
      %5913 = vmatpush1.bf16.msra.mxu0 %v1622
      %5914 = vmatprep.subr.bf16.mxu0 %v1615
      %5915 = vmatpush1.bf16.msra.mxu0 %v1614
      %5916 = vmatprep.subr.bf16.mxu0 %v1607
      %5917 = vmatpush1.bf16.msra.mxu0 %v1606
      %5918 = vmatprep.subr.bf16.mxu0 %v1727
      %5919 = vmatpush2.bf16.msra.mxu0 %v1726
      %5920 = vmatprep.subr.bf16.mxu0 %v1719
      %5921 = vmatpush2.bf16.msra.mxu0 %v1718
      %5922 = vmatprep.subr.bf16.mxu0 %v1711
      %5923 = vmatpush2.bf16.msra.mxu0 %v1710
      %5924 = vmatprep.subr.bf16.mxu0 %v1703
      %5925 = vmatpush2.bf16.msra.mxu0 %v1702
      %5926 = vmatprep.subr.bf16.mxu0 %v1695
      %5927 = vmatpush2.bf16.msra.mxu0 %v1694
      %5928 = vmatprep.subr.bf16.mxu0 %v1687
      %5929 = vmatpush2.bf16.msra.mxu0 %v1686
      %5930 = vmatprep.subr.bf16.mxu0 %v1679
      %5931 = vmatpush2.bf16.msra.mxu0 %v1678
      %5932 = vmatprep.subr.bf16.mxu0 %v1671
      %5933 = vmatpush2.bf16.msra.mxu0 %v1670
      %5934 = vmatprep.mubr.bf16.mxu0 %v5858
      %5935 = vmatmul.mubr.bf16.gmra.mxu0 %v5857
      %v5936 = vpop.f32.mrf.mxu0
      %v5937 = vadd.f32 0.0, %v5936
      %v5938 = vpop.f32.mrf.mxu0
      %v5939 = vadd.f32 0.0, %v5938
      %v5940 = vpop.f32.mrf.mxu0
      %v5941 = vadd.f32 0.0, %v5940
      %v5942 = vpop.f32.mrf.mxu0
      %v5943 = vadd.f32 0.0, %v5942
      %5944 = vdwg.mxu0
      %5945 = vmatprep.subr.bf16.mxu0 %v1665
      %5946 = vmatpush1.bf16.msra.mxu0 %v1664
      %5947 = vmatprep.subr.bf16.mxu0 %v1657
      %5948 = vmatpush1.bf16.msra.mxu0 %v1656
      %5949 = vmatprep.subr.bf16.mxu0 %v1649
      %5950 = vmatpush1.bf16.msra.mxu0 %v1648
      %5951 = vmatprep.subr.bf16.mxu0 %v1641
      %5952 = vmatpush1.bf16.msra.mxu0 %v1640
      %5953 = vmatprep.subr.bf16.mxu0 %v1633
      %5954 = vmatpush1.bf16.msra.mxu0 %v1632
      %5955 = vmatprep.subr.bf16.mxu0 %v1625
      %5956 = vmatpush1.bf16.msra.mxu0 %v1624
      %5957 = vmatprep.subr.bf16.mxu0 %v1617
      %5958 = vmatpush1.bf16.msra.mxu0 %v1616
      %5959 = vmatprep.subr.bf16.mxu0 %v1609
      %5960 = vmatpush1.bf16.msra.mxu0 %v1608
      %5961 = vmatprep.subr.bf16.mxu0 %v1729
      %5962 = vmatpush2.bf16.msra.mxu0 %v1728
      %5963 = vmatprep.subr.bf16.mxu0 %v1721
      %5964 = vmatpush2.bf16.msra.mxu0 %v1720
      %5965 = vmatprep.subr.bf16.mxu0 %v1713
      %5966 = vmatpush2.bf16.msra.mxu0 %v1712
      %5967 = vmatprep.subr.bf16.mxu0 %v1705
      %5968 = vmatpush2.bf16.msra.mxu0 %v1704
      %5969 = vmatprep.subr.bf16.mxu0 %v1697
      %5970 = vmatpush2.bf16.msra.mxu0 %v1696
      %5971 = vmatprep.subr.bf16.mxu0 %v1689
      %5972 = vmatpush2.bf16.msra.mxu0 %v1688
      %5973 = vmatprep.subr.bf16.mxu0 %v1681
      %5974 = vmatpush2.bf16.msra.mxu0 %v1680
      %5975 = vmatprep.subr.bf16.mxu0 %v1673
      %5976 = vmatpush2.bf16.msra.mxu0 %v1672
      %5977 = vmatprep.mubr.bf16.mxu0 %v5858
      %5978 = vmatmul.mubr.bf16.gmra.mxu0 %v5857
      %v5979 = vpop.f32.mrf.mxu0
      %v5980 = vadd.f32 0.0, %v5979
      %v5981 = vpop.f32.mrf.mxu0
      %v5982 = vadd.f32 0.0, %v5981
      %v5983 = vpop.f32.mrf.mxu0
      %v5984 = vadd.f32 0.0, %v5983
      %v5985 = vpop.f32.mrf.mxu0
      %v5986 = vadd.f32 0.0, %v5985
      %5987 = vdwg.mxu0
      %5988 = vmatprep.subr.bf16.mxu0 %v1667
      %5989 = vmatpush1.bf16.msra.mxu0 %v1666
      %5990 = vmatprep.subr.bf16.mxu0 %v1659
      %5991 = vmatpush1.bf16.msra.mxu0 %v1658
      %5992 = vmatprep.subr.bf16.mxu0 %v1651
      %5993 = vmatpush1.bf16.msra.mxu0 %v1650
      %5994 = vmatprep.subr.bf16.mxu0 %v1643
      %5995 = vmatpush1.bf16.msra.mxu0 %v1642
      %5996 = vmatprep.subr.bf16.mxu0 %v1635
      %5997 = vmatpush1.bf16.msra.mxu0 %v1634
      %5998 = vmatprep.subr.bf16.mxu0 %v1627
      %5999 = vmatpush1.bf16.msra.mxu0 %v1626
      %6000 = vmatprep.subr.bf16.mxu0 %v1619
      %6001 = vmatpush1.bf16.msra.mxu0 %v1618
      %6002 = vmatprep.subr.bf16.mxu0 %v1611
      %6003 = vmatpush1.bf16.msra.mxu0 %v1610
      %6004 = vmatprep.subr.bf16.mxu0 %v1731
      %6005 = vmatpush2.bf16.msra.mxu0 %v1730
      %6006 = vmatprep.subr.bf16.mxu0 %v1723
      %6007 = vmatpush2.bf16.msra.mxu0 %v1722
      %6008 = vmatprep.subr.bf16.mxu0 %v1715
      %6009 = vmatpush2.bf16.msra.mxu0 %v1714
      %6010 = vmatprep.subr.bf16.mxu0 %v1707
      %6011 = vmatpush2.bf16.msra.mxu0 %v1706
      %6012 = vmatprep.subr.bf16.mxu0 %v1699
      %6013 = vmatpush2.bf16.msra.mxu0 %v1698
      %6014 = vmatprep.subr.bf16.mxu0 %v1691
      %6015 = vmatpush2.bf16.msra.mxu0 %v1690
      %6016 = vmatprep.subr.bf16.mxu0 %v1683
      %6017 = vmatpush2.bf16.msra.mxu0 %v1682
      %6018 = vmatprep.subr.bf16.mxu0 %v1675
      %6019 = vmatpush2.bf16.msra.mxu0 %v1674
      %6020 = vmatprep.mubr.bf16.mxu0 %v5858
      %6021 = vmatmul.mubr.bf16.gmra.mxu0 %v5857
      %v6022 = vpop.f32.mrf.mxu0
      %v6023 = vadd.f32 0.0, %v6022
      %v6024 = vpop.f32.mrf.mxu0
      %v6025 = vadd.f32 0.0, %v6024
      %v6026 = vpop.f32.mrf.mxu0
      %v6027 = vadd.f32 0.0, %v6026
      %v6028 = vpop.f32.mrf.mxu0
      %v6029 = vadd.f32 0.0, %v6028
      %6030 = vdwg.mxu0
      %v6031 = vadd.f32 %v5980, %v2037
      %v6032 = vadd.f32 %v5982, %v2041
      %v6033 = vadd.f32 %v6023, %v2045
      %v6034 = vadd.f32 %v6025, %v2049
      %v6035 = vadd.f32 %v5984, %v2037
      %v6036 = vadd.f32 %v5986, %v2041
      %v6037 = vadd.f32 %v6027, %v2045
      %v6038 = vadd.f32 %v6029, %v2049
      %v6039 = vxor.u32 %v6031, 2147483648
      %v6040 = vxor.u32 %v6035, 2147483648
      %v6041 = vmul.f32 %v6039, 1.442695
      %v6042 = vpow.pop %v6041
      %v6043 = vmul.f32 %v6040, 1.442695
      %v6044 = vpow.pop %v6043
      %v6045 = vadd.f32 %v6042, 1.0
      %v6046 = vadd.f32 %v6044, 1.0
      %v6047 = vrcp.pop %v6045
      %v6048 = vmul.f32 1.0, %v6047
      %v6049 = vrcp.pop %v6046
      %v6050 = vmul.f32 1.0, %v6049
      %v6051 = vxor.u32 %v6032, 2147483648
      %v6052 = vxor.u32 %v6036, 2147483648
      %v6053 = vmul.f32 %v6051, 1.442695
      %v6054 = vpow.pop %v6053
      %v6055 = vmul.f32 %v6052, 1.442695
      %v6056 = vpow.pop %v6055
      %v6057 = vadd.f32 %v6054, 1.0
      %v6058 = vadd.f32 %v6056, 1.0
      %v6059 = vrcp.pop %v6057
      %v6060 = vmul.f32 1.0, %v6059
      %v6061 = vrcp.pop %v6058
      %v6062 = vmul.f32 1.0, %v6061
      %v6063 = vtanh.pop %v6033
      %v6064 = vtanh.pop %v6037
      %v6065 = vxor.u32 %v6034, 2147483648
      %v6066 = vxor.u32 %v6038, 2147483648
      %v6067 = vmul.f32 %v6065, 1.442695
      %v6068 = vpow.pop %v6067
      %v6069 = vmul.f32 %v6066, 1.442695
      %v6070 = vpow.pop %v6069
      %v6071 = vadd.f32 %v6068, 1.0
      %v6072 = vadd.f32 %v6070, 1.0
      %v6073 = vrcp.pop %v6071
      %v6074 = vmul.f32 1.0, %v6073
      %v6075 = vrcp.pop %v6072
      %v6076 = vmul.f32 1.0, %v6075
      %v6077 = vmul.f32 %v6060, %v5788
      %v6078 = vmul.f32 %v6062, %v5789
      %v6079 = vmul.f32 %v6048, %v6063
      %v6080 = vmul.f32 %v6050, %v6064
      %v6081 = vadd.f32 %v6077, %v6079
      %v6082 = vadd.f32 %v6078, %v6080
      %v6083 = vtanh.pop %v6081
      %v6084 = vtanh.pop %v6082
      %v6085 = vmul.f32 %v6074, %v6083
      %v6086 = vmul.f32 %v6076, %v6084
      %s6087 = sadd.s32 %s1081, 13
      %p6088 = scmp.gt.s32.totalorder %s6087, 0
      %s6089 = scalar_select %p6088, 1, 0
      %v6090 = vstv %s6089
      %vm6091 = vcmp.eq.s32.totalorder %v6090, 1
      %v6092 = vsel %vm6091, %v6085, %v5786
      %v6093 = vsel %vm6091, %v6086, %v5787
      %v6094 = vsel %vm6091, %v6081, %v5788
      %v6095 = vsel %vm6091, %v6082, %v5789
      %s6096 = smul.u32 26, 4
      %s6097 = smul.addr %s6096, 8
      %s6098 = scalar_lea.vmem [#allocation2], %s6097
      %v6099 = vld [vmem:[%s6098] sm:$0xff]
      %v6100 = vld [vmem:[%s6098 + $0x8] sm:$0xff]
      %v6101 = vld [vmem:[%s6098 + $0x10] sm:$0xff]
      %v6102 = vld [vmem:[%s6098 + $0x18] sm:$0xff]
      %v6103 = vld [vmem:[%s6098 + $0x20] sm:$0xff]
      %v6104 = vld [vmem:[%s6098 + $0x28] sm:$0xff]
      %v6105 = vld [vmem:[%s6098 + $0x30] sm:$0xff]
      %v6106 = vld [vmem:[%s6098 + $0x38] sm:$0xff]
      %v6107 = vadd.f32 %v6099, %v5894
      %v6108 = vadd.f32 %v6100, %v5896
      %v6109 = vadd.f32 %v6101, %v5937
      %v6110 = vadd.f32 %v6102, %v5939
      %v6111 = vadd.f32 %v6103, %v5898
      %v6112 = vadd.f32 %v6104, %v5900
      %v6113 = vadd.f32 %v6105, %v5941
      %v6114 = vadd.f32 %v6106, %v5943
      %v6115 = vxor.u32 %v6107, 2147483648
      %v6116 = vxor.u32 %v6111, 2147483648
      %v6117 = vmul.f32 %v6115, 1.442695
      %v6118 = vpow.pop %v6117
      %v6119 = vmul.f32 %v6116, 1.442695
      %v6120 = vpow.pop %v6119
      %v6121 = vadd.f32 %v6118, 1.0
      %v6122 = vadd.f32 %v6120, 1.0
      %v6123 = vrcp.pop %v6121
      %v6124 = vmul.f32 1.0, %v6123
      %v6125 = vrcp.pop %v6122
      %v6126 = vmul.f32 1.0, %v6125
      %v6127 = vxor.u32 %v6108, 2147483648
      %v6128 = vxor.u32 %v6112, 2147483648
      %v6129 = vmul.f32 %v6127, 1.442695
      %v6130 = vpow.pop %v6129
      %v6131 = vmul.f32 %v6128, 1.442695
      %v6132 = vpow.pop %v6131
      %v6133 = vadd.f32 %v6130, 1.0
      %v6134 = vadd.f32 %v6132, 1.0
      %v6135 = vrcp.pop %v6133
      %v6136 = vmul.f32 1.0, %v6135
      %v6137 = vrcp.pop %v6134
      %v6138 = vmul.f32 1.0, %v6137
      %v6139 = vtanh.pop %v6109
      %v6140 = vtanh.pop %v6113
      %v6141 = vxor.u32 %v6110, 2147483648
      %v6142 = vxor.u32 %v6114, 2147483648
      %v6143 = vmul.f32 %v6141, 1.442695
      %v6144 = vpow.pop %v6143
      %v6145 = vmul.f32 %v6142, 1.442695
      %v6146 = vpow.pop %v6145
      %v6147 = vadd.f32 %v6144, 1.0
      %v6148 = vadd.f32 %v6146, 1.0
      %v6149 = vrcp.pop %v6147
      %v6150 = vmul.f32 1.0, %v6149
      %v6151 = vrcp.pop %v6148
      %v6152 = vmul.f32 1.0, %v6151
      %v6153 = vmul.f32 %v6136, %v5851
      %v6154 = vmul.f32 %v6138, %v5852
      %v6155 = vmul.f32 %v6124, %v6139
      %v6156 = vmul.f32 %v6126, %v6140
      %v6157 = vadd.f32 %v6153, %v6155
      %v6158 = vadd.f32 %v6154, %v6156
      %v6159 = vtanh.pop %v6157
      %v6160 = vtanh.pop %v6158
      %v6161 = vmul.f32 %v6150, %v6159
      %v6162 = vmul.f32 %v6152, %v6160
      %v6163 = vpack.c.bf16 %v6162, %v6161
      %v6164 = vpack.c.bf16 %v6093, %v6092
      %6165 = vmatprep.subr.bf16.mxu0 %v1661
      %6166 = vmatpush1.bf16.msra.mxu0 %v1660
      %6167 = vmatprep.subr.bf16.mxu0 %v1653
      %6168 = vmatpush1.bf16.msra.mxu0 %v1652
      %6169 = vmatprep.subr.bf16.mxu0 %v1645
      %6170 = vmatpush1.bf16.msra.mxu0 %v1644
      %6171 = vmatprep.subr.bf16.mxu0 %v1637
      %6172 = vmatpush1.bf16.msra.mxu0 %v1636
      %6173 = vmatprep.subr.bf16.mxu0 %v1629
      %6174 = vmatpush1.bf16.msra.mxu0 %v1628
      %6175 = vmatprep.subr.bf16.mxu0 %v1621
      %6176 = vmatpush1.bf16.msra.mxu0 %v1620
      %6177 = vmatprep.subr.bf16.mxu0 %v1613
      %6178 = vmatpush1.bf16.msra.mxu0 %v1612
      %6179 = vmatprep.subr.bf16.mxu0 %v1605
      %6180 = vmatpush1.bf16.msra.mxu0 %v1604
      %6181 = vmatprep.subr.bf16.mxu0 %v1725
      %6182 = vmatpush2.bf16.msra.mxu0 %v1724
      %6183 = vmatprep.subr.bf16.mxu0 %v1717
      %6184 = vmatpush2.bf16.msra.mxu0 %v1716
      %6185 = vmatprep.subr.bf16.mxu0 %v1709
      %6186 = vmatpush2.bf16.msra.mxu0 %v1708
      %6187 = vmatprep.subr.bf16.mxu0 %v1701
      %6188 = vmatpush2.bf16.msra.mxu0 %v1700
      %6189 = vmatprep.subr.bf16.mxu0 %v1693
      %6190 = vmatpush2.bf16.msra.mxu0 %v1692
      %6191 = vmatprep.subr.bf16.mxu0 %v1685
      %6192 = vmatpush2.bf16.msra.mxu0 %v1684
      %6193 = vmatprep.subr.bf16.mxu0 %v1677
      %6194 = vmatpush2.bf16.msra.mxu0 %v1676
      %6195 = vmatprep.subr.bf16.mxu0 %v1669
      %6196 = vmatpush2.bf16.msra.mxu0 %v1668
      %6197 = vmatprep.mubr.bf16.mxu0 %v6164
      %6198 = vmatmul.mubr.bf16.gmra.mxu0 %v6163
      %v6199 = vpop.f32.mrf.mxu0
      %v6200 = vadd.f32 0.0, %v6199
      %v6201 = vpop.f32.mrf.mxu0
      %v6202 = vadd.f32 0.0, %v6201
      %v6203 = vpop.f32.mrf.mxu0
      %v6204 = vadd.f32 0.0, %v6203
      %v6205 = vpop.f32.mrf.mxu0
      %v6206 = vadd.f32 0.0, %v6205
      %6207 = vdwg.mxu0
      %6208 = vmatprep.subr.bf16.mxu0 %v1663
      %6209 = vmatpush1.bf16.msra.mxu0 %v1662
      %6210 = vmatprep.subr.bf16.mxu0 %v1655
      %6211 = vmatpush1.bf16.msra.mxu0 %v1654
      %6212 = vmatprep.subr.bf16.mxu0 %v1647
      %6213 = vmatpush1.bf16.msra.mxu0 %v1646
      %6214 = vmatprep.subr.bf16.mxu0 %v1639
      %6215 = vmatpush1.bf16.msra.mxu0 %v1638
      %6216 = vmatprep.subr.bf16.mxu0 %v1631
      %6217 = vmatpush1.bf16.msra.mxu0 %v1630
      %6218 = vmatprep.subr.bf16.mxu0 %v1623
      %6219 = vmatpush1.bf16.msra.mxu0 %v1622
      %6220 = vmatprep.subr.bf16.mxu0 %v1615
      %6221 = vmatpush1.bf16.msra.mxu0 %v1614
      %6222 = vmatprep.subr.bf16.mxu0 %v1607
      %6223 = vmatpush1.bf16.msra.mxu0 %v1606
      %6224 = vmatprep.subr.bf16.mxu0 %v1727
      %6225 = vmatpush2.bf16.msra.mxu0 %v1726
      %6226 = vmatprep.subr.bf16.mxu0 %v1719
      %6227 = vmatpush2.bf16.msra.mxu0 %v1718
      %6228 = vmatprep.subr.bf16.mxu0 %v1711
      %6229 = vmatpush2.bf16.msra.mxu0 %v1710
      %6230 = vmatprep.subr.bf16.mxu0 %v1703
      %6231 = vmatpush2.bf16.msra.mxu0 %v1702
      %6232 = vmatprep.subr.bf16.mxu0 %v1695
      %6233 = vmatpush2.bf16.msra.mxu0 %v1694
      %6234 = vmatprep.subr.bf16.mxu0 %v1687
      %6235 = vmatpush2.bf16.msra.mxu0 %v1686
      %6236 = vmatprep.subr.bf16.mxu0 %v1679
      %6237 = vmatpush2.bf16.msra.mxu0 %v1678
      %6238 = vmatprep.subr.bf16.mxu0 %v1671
      %6239 = vmatpush2.bf16.msra.mxu0 %v1670
      %6240 = vmatprep.mubr.bf16.mxu0 %v6164
      %6241 = vmatmul.mubr.bf16.gmra.mxu0 %v6163
      %v6242 = vpop.f32.mrf.mxu0
      %v6243 = vadd.f32 0.0, %v6242
      %v6244 = vpop.f32.mrf.mxu0
      %v6245 = vadd.f32 0.0, %v6244
      %v6246 = vpop.f32.mrf.mxu0
      %v6247 = vadd.f32 0.0, %v6246
      %v6248 = vpop.f32.mrf.mxu0
      %v6249 = vadd.f32 0.0, %v6248
      %6250 = vdwg.mxu0
      %6251 = vmatprep.subr.bf16.mxu0 %v1665
      %6252 = vmatpush1.bf16.msra.mxu0 %v1664
      %6253 = vmatprep.subr.bf16.mxu0 %v1657
      %6254 = vmatpush1.bf16.msra.mxu0 %v1656
      %6255 = vmatprep.subr.bf16.mxu0 %v1649
      %6256 = vmatpush1.bf16.msra.mxu0 %v1648
      %6257 = vmatprep.subr.bf16.mxu0 %v1641
      %6258 = vmatpush1.bf16.msra.mxu0 %v1640
      %6259 = vmatprep.subr.bf16.mxu0 %v1633
      %6260 = vmatpush1.bf16.msra.mxu0 %v1632
      %6261 = vmatprep.subr.bf16.mxu0 %v1625
      %6262 = vmatpush1.bf16.msra.mxu0 %v1624
      %6263 = vmatprep.subr.bf16.mxu0 %v1617
      %6264 = vmatpush1.bf16.msra.mxu0 %v1616
      %6265 = vmatprep.subr.bf16.mxu0 %v1609
      %6266 = vmatpush1.bf16.msra.mxu0 %v1608
      %6267 = vmatprep.subr.bf16.mxu0 %v1729
      %6268 = vmatpush2.bf16.msra.mxu0 %v1728
      %6269 = vmatprep.subr.bf16.mxu0 %v1721
      %6270 = vmatpush2.bf16.msra.mxu0 %v1720
      %6271 = vmatprep.subr.bf16.mxu0 %v1713
      %6272 = vmatpush2.bf16.msra.mxu0 %v1712
      %6273 = vmatprep.subr.bf16.mxu0 %v1705
      %6274 = vmatpush2.bf16.msra.mxu0 %v1704
      %6275 = vmatprep.subr.bf16.mxu0 %v1697
      %6276 = vmatpush2.bf16.msra.mxu0 %v1696
      %6277 = vmatprep.subr.bf16.mxu0 %v1689
      %6278 = vmatpush2.bf16.msra.mxu0 %v1688
      %6279 = vmatprep.subr.bf16.mxu0 %v1681
      %6280 = vmatpush2.bf16.msra.mxu0 %v1680
      %6281 = vmatprep.subr.bf16.mxu0 %v1673
      %6282 = vmatpush2.bf16.msra.mxu0 %v1672
      %6283 = vmatprep.mubr.bf16.mxu0 %v6164
      %6284 = vmatmul.mubr.bf16.gmra.mxu0 %v6163
      %v6285 = vpop.f32.mrf.mxu0
      %v6286 = vadd.f32 0.0, %v6285
      %v6287 = vpop.f32.mrf.mxu0
      %v6288 = vadd.f32 0.0, %v6287
      %v6289 = vpop.f32.mrf.mxu0
      %v6290 = vadd.f32 0.0, %v6289
      %v6291 = vpop.f32.mrf.mxu0
      %v6292 = vadd.f32 0.0, %v6291
      %6293 = vdwg.mxu0
      %6294 = vmatprep.subr.bf16.mxu0 %v1667
      %6295 = vmatpush1.bf16.msra.mxu0 %v1666
      %6296 = vmatprep.subr.bf16.mxu0 %v1659
      %6297 = vmatpush1.bf16.msra.mxu0 %v1658
      %6298 = vmatprep.subr.bf16.mxu0 %v1651
      %6299 = vmatpush1.bf16.msra.mxu0 %v1650
      %6300 = vmatprep.subr.bf16.mxu0 %v1643
      %6301 = vmatpush1.bf16.msra.mxu0 %v1642
      %6302 = vmatprep.subr.bf16.mxu0 %v1635
      %6303 = vmatpush1.bf16.msra.mxu0 %v1634
      %6304 = vmatprep.subr.bf16.mxu0 %v1627
      %6305 = vmatpush1.bf16.msra.mxu0 %v1626
      %6306 = vmatprep.subr.bf16.mxu0 %v1619
      %6307 = vmatpush1.bf16.msra.mxu0 %v1618
      %6308 = vmatprep.subr.bf16.mxu0 %v1611
      %6309 = vmatpush1.bf16.msra.mxu0 %v1610
      %6310 = vmatprep.subr.bf16.mxu0 %v1731
      %6311 = vmatpush2.bf16.msra.mxu0 %v1730
      %6312 = vmatprep.subr.bf16.mxu0 %v1723
      %6313 = vmatpush2.bf16.msra.mxu0 %v1722
      %6314 = vmatprep.subr.bf16.mxu0 %v1715
      %6315 = vmatpush2.bf16.msra.mxu0 %v1714
      %6316 = vmatprep.subr.bf16.mxu0 %v1707
      %6317 = vmatpush2.bf16.msra.mxu0 %v1706
      %6318 = vmatprep.subr.bf16.mxu0 %v1699
      %6319 = vmatpush2.bf16.msra.mxu0 %v1698
      %6320 = vmatprep.subr.bf16.mxu0 %v1691
      %6321 = vmatpush2.bf16.msra.mxu0 %v1690
      %6322 = vmatprep.subr.bf16.mxu0 %v1683
      %6323 = vmatpush2.bf16.msra.mxu0 %v1682
      %6324 = vmatprep.subr.bf16.mxu0 %v1675
      %6325 = vmatpush2.bf16.msra.mxu0 %v1674
      %6326 = vmatprep.mubr.bf16.mxu0 %v6164
      %6327 = vmatmul.mubr.bf16.gmra.mxu0 %v6163
      %v6328 = vpop.f32.mrf.mxu0
      %v6329 = vadd.f32 0.0, %v6328
      %v6330 = vpop.f32.mrf.mxu0
      %v6331 = vadd.f32 0.0, %v6330
      %v6332 = vpop.f32.mrf.mxu0
      %v6333 = vadd.f32 0.0, %v6332
      %v6334 = vpop.f32.mrf.mxu0
      %v6335 = vadd.f32 0.0, %v6334
      %6336 = vdwg.mxu0
      %v6337 = vadd.f32 %v6286, %v2037
      %v6338 = vadd.f32 %v6288, %v2041
      %v6339 = vadd.f32 %v6329, %v2045
      %v6340 = vadd.f32 %v6331, %v2049
      %v6341 = vadd.f32 %v6290, %v2037
      %v6342 = vadd.f32 %v6292, %v2041
      %v6343 = vadd.f32 %v6333, %v2045
      %v6344 = vadd.f32 %v6335, %v2049
      %v6345 = vxor.u32 %v6337, 2147483648
      %v6346 = vxor.u32 %v6341, 2147483648
      %v6347 = vmul.f32 %v6345, 1.442695
      %v6348 = vpow.pop %v6347
      %v6349 = vmul.f32 %v6346, 1.442695
      %v6350 = vpow.pop %v6349
      %v6351 = vadd.f32 %v6348, 1.0
      %v6352 = vadd.f32 %v6350, 1.0
      %v6353 = vrcp.pop %v6351
      %v6354 = vmul.f32 1.0, %v6353
      %v6355 = vrcp.pop %v6352
      %v6356 = vmul.f32 1.0, %v6355
      %v6357 = vxor.u32 %v6338, 2147483648
      %v6358 = vxor.u32 %v6342, 2147483648
      %v6359 = vmul.f32 %v6357, 1.442695
      %v6360 = vpow.pop %v6359
      %v6361 = vmul.f32 %v6358, 1.442695
      %v6362 = vpow.pop %v6361
      %v6363 = vadd.f32 %v6360, 1.0
      %v6364 = vadd.f32 %v6362, 1.0
      %v6365 = vrcp.pop %v6363
      %v6366 = vmul.f32 1.0, %v6365
      %v6367 = vrcp.pop %v6364
      %v6368 = vmul.f32 1.0, %v6367
      %v6369 = vtanh.pop %v6339
      %v6370 = vtanh.pop %v6343
      %v6371 = vxor.u32 %v6340, 2147483648
      %v6372 = vxor.u32 %v6344, 2147483648
      %v6373 = vmul.f32 %v6371, 1.442695
      %v6374 = vpow.pop %v6373
      %v6375 = vmul.f32 %v6372, 1.442695
      %v6376 = vpow.pop %v6375
      %v6377 = vadd.f32 %v6374, 1.0
      %v6378 = vadd.f32 %v6376, 1.0
      %v6379 = vrcp.pop %v6377
      %v6380 = vmul.f32 1.0, %v6379
      %v6381 = vrcp.pop %v6378
      %v6382 = vmul.f32 1.0, %v6381
      %v6383 = vmul.f32 %v6366, %v6094
      %v6384 = vmul.f32 %v6368, %v6095
      %v6385 = vmul.f32 %v6354, %v6369
      %v6386 = vmul.f32 %v6356, %v6370
      %v6387 = vadd.f32 %v6383, %v6385
      %v6388 = vadd.f32 %v6384, %v6386
      %v6389 = vtanh.pop %v6387
      %v6390 = vtanh.pop %v6388
      %v6391 = vmul.f32 %v6380, %v6389
      %v6392 = vmul.f32 %v6382, %v6390
      %s6393 = sadd.s32 %s1081, 14
      %p6394 = scmp.gt.s32.totalorder %s6393, 0
      %s6395 = scalar_select %p6394, 1, 0
      %v6396 = vstv %s6395
      %vm6397 = vcmp.eq.s32.totalorder %v6396, 1
      %v6398 = vsel %vm6397, %v6391, %v6092
      %v6399 = vsel %vm6397, %v6392, %v6093
      %v6400 = vsel %vm6397, %v6387, %v6094
      %v6401 = vsel %vm6397, %v6388, %v6095
      %s6402 = smul.u32 28, 4
      %s6403 = smul.addr %s6402, 8
      %s6404 = scalar_lea.vmem [#allocation2], %s6403
      %v6405 = vld [vmem:[%s6404] sm:$0xff]
      %v6406 = vld [vmem:[%s6404 + $0x8] sm:$0xff]
      %v6407 = vld [vmem:[%s6404 + $0x10] sm:$0xff]
      %v6408 = vld [vmem:[%s6404 + $0x18] sm:$0xff]
      %v6409 = vld [vmem:[%s6404 + $0x20] sm:$0xff]
      %v6410 = vld [vmem:[%s6404 + $0x28] sm:$0xff]
      %v6411 = vld [vmem:[%s6404 + $0x30] sm:$0xff]
      %v6412 = vld [vmem:[%s6404 + $0x38] sm:$0xff]
      %v6413 = vadd.f32 %v6405, %v6200
      %v6414 = vadd.f32 %v6406, %v6202
      %v6415 = vadd.f32 %v6407, %v6243
      %v6416 = vadd.f32 %v6408, %v6245
      %v6417 = vadd.f32 %v6409, %v6204
      %v6418 = vadd.f32 %v6410, %v6206
      %v6419 = vadd.f32 %v6411, %v6247
      %v6420 = vadd.f32 %v6412, %v6249
      %v6421 = vxor.u32 %v6413, 2147483648
      %v6422 = vxor.u32 %v6417, 2147483648
      %v6423 = vmul.f32 %v6421, 1.442695
      %v6424 = vpow.pop %v6423
      %v6425 = vmul.f32 %v6422, 1.442695
      %v6426 = vpow.pop %v6425
      %v6427 = vadd.f32 %v6424, 1.0
      %v6428 = vadd.f32 %v6426, 1.0
      %v6429 = vrcp.pop %v6427
      %v6430 = vmul.f32 1.0, %v6429
      %v6431 = vrcp.pop %v6428
      %v6432 = vmul.f32 1.0, %v6431
      %v6433 = vxor.u32 %v6414, 2147483648
      %v6434 = vxor.u32 %v6418, 2147483648
      %v6435 = vmul.f32 %v6433, 1.442695
      %v6436 = vpow.pop %v6435
      %v6437 = vmul.f32 %v6434, 1.442695
      %v6438 = vpow.pop %v6437
      %v6439 = vadd.f32 %v6436, 1.0
      %v6440 = vadd.f32 %v6438, 1.0
      %v6441 = vrcp.pop %v6439
      %v6442 = vmul.f32 1.0, %v6441
      %v6443 = vrcp.pop %v6440
      %v6444 = vmul.f32 1.0, %v6443
      %v6445 = vtanh.pop %v6415
      %v6446 = vtanh.pop %v6419
      %v6447 = vxor.u32 %v6416, 2147483648
      %v6448 = vxor.u32 %v6420, 2147483648
      %v6449 = vmul.f32 %v6447, 1.442695
      %v6450 = vpow.pop %v6449
      %v6451 = vmul.f32 %v6448, 1.442695
      %v6452 = vpow.pop %v6451
      %v6453 = vadd.f32 %v6450, 1.0
      %v6454 = vadd.f32 %v6452, 1.0
      %v6455 = vrcp.pop %v6453
      %v6456 = vmul.f32 1.0, %v6455
      %v6457 = vrcp.pop %v6454
      %v6458 = vmul.f32 1.0, %v6457
      %v6459 = vmul.f32 %v6442, %v6157
      %v6460 = vmul.f32 %v6444, %v6158
      %v6461 = vmul.f32 %v6430, %v6445
      %v6462 = vmul.f32 %v6432, %v6446
      %v6463 = vadd.f32 %v6459, %v6461
      %v6464 = vadd.f32 %v6460, %v6462
      %v6465 = vtanh.pop %v6463
      %v6466 = vtanh.pop %v6464
      %v6467 = vmul.f32 %v6456, %v6465
      %v6468 = vmul.f32 %v6458, %v6466
      %v6469 = vpack.c.bf16 %v6468, %v6467
      %v6470 = vpack.c.bf16 %v6399, %v6398
      %6471 = vmatprep.subr.bf16.mxu0 %v1661
      %6472 = vmatpush1.bf16.msra.mxu0 %v1660
      %6473 = vmatprep.subr.bf16.mxu0 %v1653
      %6474 = vmatpush1.bf16.msra.mxu0 %v1652
      %6475 = vmatprep.subr.bf16.mxu0 %v1645
      %6476 = vmatpush1.bf16.msra.mxu0 %v1644
      %6477 = vmatprep.subr.bf16.mxu0 %v1637
      %6478 = vmatpush1.bf16.msra.mxu0 %v1636
      %6479 = vmatprep.subr.bf16.mxu0 %v1629
      %6480 = vmatpush1.bf16.msra.mxu0 %v1628
      %6481 = vmatprep.subr.bf16.mxu0 %v1621
      %6482 = vmatpush1.bf16.msra.mxu0 %v1620
      %6483 = vmatprep.subr.bf16.mxu0 %v1613
      %6484 = vmatpush1.bf16.msra.mxu0 %v1612
      %6485 = vmatprep.subr.bf16.mxu0 %v1605
      %6486 = vmatpush1.bf16.msra.mxu0 %v1604
      %6487 = vmatprep.subr.bf16.mxu0 %v1725
      %6488 = vmatpush2.bf16.msra.mxu0 %v1724
      %6489 = vmatprep.subr.bf16.mxu0 %v1717
      %6490 = vmatpush2.bf16.msra.mxu0 %v1716
      %6491 = vmatprep.subr.bf16.mxu0 %v1709
      %6492 = vmatpush2.bf16.msra.mxu0 %v1708
      %6493 = vmatprep.subr.bf16.mxu0 %v1701
      %6494 = vmatpush2.bf16.msra.mxu0 %v1700
      %6495 = vmatprep.subr.bf16.mxu0 %v1693
      %6496 = vmatpush2.bf16.msra.mxu0 %v1692
      %6497 = vmatprep.subr.bf16.mxu0 %v1685
      %6498 = vmatpush2.bf16.msra.mxu0 %v1684
      %6499 = vmatprep.subr.bf16.mxu0 %v1677
      %6500 = vmatpush2.bf16.msra.mxu0 %v1676
      %6501 = vmatprep.subr.bf16.mxu0 %v1669
      %6502 = vmatpush2.bf16.msra.mxu0 %v1668
      %6503 = vmatprep.mubr.bf16.mxu0 %v6470
      %6504 = vmatmul.mubr.bf16.gmra.mxu0 %v6469
      %v6505 = vpop.f32.mrf.mxu0
      %v6506 = vadd.f32 0.0, %v6505
      %v6507 = vpop.f32.mrf.mxu0
      %v6508 = vadd.f32 0.0, %v6507
      %v6509 = vpop.f32.mrf.mxu0
      %v6510 = vadd.f32 0.0, %v6509
      %v6511 = vpop.f32.mrf.mxu0
      %v6512 = vadd.f32 0.0, %v6511
      %6513 = vdwg.mxu0
      %6514 = vmatprep.subr.bf16.mxu0 %v1663
      %6515 = vmatpush1.bf16.msra.mxu0 %v1662
      %6516 = vmatprep.subr.bf16.mxu0 %v1655
      %6517 = vmatpush1.bf16.msra.mxu0 %v1654
      %6518 = vmatprep.subr.bf16.mxu0 %v1647
      %6519 = vmatpush1.bf16.msra.mxu0 %v1646
      %6520 = vmatprep.subr.bf16.mxu0 %v1639
      %6521 = vmatpush1.bf16.msra.mxu0 %v1638
      %6522 = vmatprep.subr.bf16.mxu0 %v1631
      %6523 = vmatpush1.bf16.msra.mxu0 %v1630
      %6524 = vmatprep.subr.bf16.mxu0 %v1623
      %6525 = vmatpush1.bf16.msra.mxu0 %v1622
      %6526 = vmatprep.subr.bf16.mxu0 %v1615
      %6527 = vmatpush1.bf16.msra.mxu0 %v1614
      %6528 = vmatprep.subr.bf16.mxu0 %v1607
      %6529 = vmatpush1.bf16.msra.mxu0 %v1606
      %6530 = vmatprep.subr.bf16.mxu0 %v1727
      %6531 = vmatpush2.bf16.msra.mxu0 %v1726
      %6532 = vmatprep.subr.bf16.mxu0 %v1719
      %6533 = vmatpush2.bf16.msra.mxu0 %v1718
      %6534 = vmatprep.subr.bf16.mxu0 %v1711
      %6535 = vmatpush2.bf16.msra.mxu0 %v1710
      %6536 = vmatprep.subr.bf16.mxu0 %v1703
      %6537 = vmatpush2.bf16.msra.mxu0 %v1702
      %6538 = vmatprep.subr.bf16.mxu0 %v1695
      %6539 = vmatpush2.bf16.msra.mxu0 %v1694
      %6540 = vmatprep.subr.bf16.mxu0 %v1687
      %6541 = vmatpush2.bf16.msra.mxu0 %v1686
      %6542 = vmatprep.subr.bf16.mxu0 %v1679
      %6543 = vmatpush2.bf16.msra.mxu0 %v1678
      %6544 = vmatprep.subr.bf16.mxu0 %v1671
      %6545 = vmatpush2.bf16.msra.mxu0 %v1670
      %6546 = vmatprep.mubr.bf16.mxu0 %v6470
      %6547 = vmatmul.mubr.bf16.gmra.mxu0 %v6469
      %v6548 = vpop.f32.mrf.mxu0
      %v6549 = vadd.f32 0.0, %v6548
      %v6550 = vpop.f32.mrf.mxu0
      %v6551 = vadd.f32 0.0, %v6550
      %v6552 = vpop.f32.mrf.mxu0
      %v6553 = vadd.f32 0.0, %v6552
      %v6554 = vpop.f32.mrf.mxu0
      %v6555 = vadd.f32 0.0, %v6554
      %6556 = vdwg.mxu0
      %6557 = vmatprep.subr.bf16.mxu0 %v1665
      %6558 = vmatpush1.bf16.msra.mxu0 %v1664
      %6559 = vmatprep.subr.bf16.mxu0 %v1657
      %6560 = vmatpush1.bf16.msra.mxu0 %v1656
      %6561 = vmatprep.subr.bf16.mxu0 %v1649
      %6562 = vmatpush1.bf16.msra.mxu0 %v1648
      %6563 = vmatprep.subr.bf16.mxu0 %v1641
      %6564 = vmatpush1.bf16.msra.mxu0 %v1640
      %6565 = vmatprep.subr.bf16.mxu0 %v1633
      %6566 = vmatpush1.bf16.msra.mxu0 %v1632
      %6567 = vmatprep.subr.bf16.mxu0 %v1625
      %6568 = vmatpush1.bf16.msra.mxu0 %v1624
      %6569 = vmatprep.subr.bf16.mxu0 %v1617
      %6570 = vmatpush1.bf16.msra.mxu0 %v1616
      %6571 = vmatprep.subr.bf16.mxu0 %v1609
      %6572 = vmatpush1.bf16.msra.mxu0 %v1608
      %6573 = vmatprep.subr.bf16.mxu0 %v1729
      %6574 = vmatpush2.bf16.msra.mxu0 %v1728
      %6575 = vmatprep.subr.bf16.mxu0 %v1721
      %6576 = vmatpush2.bf16.msra.mxu0 %v1720
      %6577 = vmatprep.subr.bf16.mxu0 %v1713
      %6578 = vmatpush2.bf16.msra.mxu0 %v1712
      %6579 = vmatprep.subr.bf16.mxu0 %v1705
      %6580 = vmatpush2.bf16.msra.mxu0 %v1704
      %6581 = vmatprep.subr.bf16.mxu0 %v1697
      %6582 = vmatpush2.bf16.msra.mxu0 %v1696
      %6583 = vmatprep.subr.bf16.mxu0 %v1689
      %6584 = vmatpush2.bf16.msra.mxu0 %v1688
      %6585 = vmatprep.subr.bf16.mxu0 %v1681
      %6586 = vmatpush2.bf16.msra.mxu0 %v1680
      %6587 = vmatprep.subr.bf16.mxu0 %v1673
      %6588 = vmatpush2.bf16.msra.mxu0 %v1672
      %6589 = vmatprep.mubr.bf16.mxu0 %v6470
      %6590 = vmatmul.mubr.bf16.gmra.mxu0 %v6469
      %v6591 = vpop.f32.mrf.mxu0
      %v6592 = vadd.f32 0.0, %v6591
      %v6593 = vpop.f32.mrf.mxu0
      %v6594 = vadd.f32 0.0, %v6593
      %v6595 = vpop.f32.mrf.mxu0
      %v6596 = vadd.f32 0.0, %v6595
      %v6597 = vpop.f32.mrf.mxu0
      %v6598 = vadd.f32 0.0, %v6597
      %6599 = vdwg.mxu0
      %6600 = vmatprep.subr.bf16.mxu0 %v1667
      %6601 = vmatpush1.bf16.msra.mxu0 %v1666
      %6602 = vmatprep.subr.bf16.mxu0 %v1659
      %6603 = vmatpush1.bf16.msra.mxu0 %v1658
      %6604 = vmatprep.subr.bf16.mxu0 %v1651
      %6605 = vmatpush1.bf16.msra.mxu0 %v1650
      %6606 = vmatprep.subr.bf16.mxu0 %v1643
      %6607 = vmatpush1.bf16.msra.mxu0 %v1642
      %6608 = vmatprep.subr.bf16.mxu0 %v1635
      %6609 = vmatpush1.bf16.msra.mxu0 %v1634
      %6610 = vmatprep.subr.bf16.mxu0 %v1627
      %6611 = vmatpush1.bf16.msra.mxu0 %v1626
      %6612 = vmatprep.subr.bf16.mxu0 %v1619
      %6613 = vmatpush1.bf16.msra.mxu0 %v1618
      %6614 = vmatprep.subr.bf16.mxu0 %v1611
      %6615 = vmatpush1.bf16.msra.mxu0 %v1610
      %6616 = vmatprep.subr.bf16.mxu0 %v1731
      %6617 = vmatpush2.bf16.msra.mxu0 %v1730
      %6618 = vmatprep.subr.bf16.mxu0 %v1723
      %6619 = vmatpush2.bf16.msra.mxu0 %v1722
      %6620 = vmatprep.subr.bf16.mxu0 %v1715
      %6621 = vmatpush2.bf16.msra.mxu0 %v1714
      %6622 = vmatprep.subr.bf16.mxu0 %v1707
      %6623 = vmatpush2.bf16.msra.mxu0 %v1706
      %6624 = vmatprep.subr.bf16.mxu0 %v1699
      %6625 = vmatpush2.bf16.msra.mxu0 %v1698
      %6626 = vmatprep.subr.bf16.mxu0 %v1691
      %6627 = vmatpush2.bf16.msra.mxu0 %v1690
      %6628 = vmatprep.subr.bf16.mxu0 %v1683
      %6629 = vmatpush2.bf16.msra.mxu0 %v1682
      %6630 = vmatprep.subr.bf16.mxu0 %v1675
      %6631 = vmatpush2.bf16.msra.mxu0 %v1674
      %6632 = vmatprep.mubr.bf16.mxu0 %v6470
      %6633 = vmatmul.mubr.bf16.gmra.mxu0 %v6469
      %v6634 = vpop.f32.mrf.mxu0
      %v6635 = vadd.f32 0.0, %v6634
      %v6636 = vpop.f32.mrf.mxu0
      %v6637 = vadd.f32 0.0, %v6636
      %v6638 = vpop.f32.mrf.mxu0
      %v6639 = vadd.f32 0.0, %v6638
      %v6640 = vpop.f32.mrf.mxu0
      %v6641 = vadd.f32 0.0, %v6640
      %6642 = vdwg.mxu0
      %v6643 = vadd.f32 %v6592, %v2037
      %v6644 = vadd.f32 %v6594, %v2041
      %v6645 = vadd.f32 %v6635, %v2045
      %v6646 = vadd.f32 %v6637, %v2049
      %v6647 = vadd.f32 %v6596, %v2037
      %v6648 = vadd.f32 %v6598, %v2041
      %v6649 = vadd.f32 %v6639, %v2045
      %v6650 = vadd.f32 %v6641, %v2049
      %v6651 = vxor.u32 %v6643, 2147483648
      %v6652 = vxor.u32 %v6647, 2147483648
      %v6653 = vmul.f32 %v6651, 1.442695
      %v6654 = vpow.pop %v6653
      %v6655 = vmul.f32 %v6652, 1.442695
      %v6656 = vpow.pop %v6655
      %v6657 = vadd.f32 %v6654, 1.0
      %v6658 = vadd.f32 %v6656, 1.0
      %v6659 = vrcp.pop %v6657
      %v6660 = vmul.f32 1.0, %v6659
      %v6661 = vrcp.pop %v6658
      %v6662 = vmul.f32 1.0, %v6661
      %v6663 = vxor.u32 %v6644, 2147483648
      %v6664 = vxor.u32 %v6648, 2147483648
      %v6665 = vmul.f32 %v6663, 1.442695
      %v6666 = vpow.pop %v6665
      %v6667 = vmul.f32 %v6664, 1.442695
      %v6668 = vpow.pop %v6667
      %v6669 = vadd.f32 %v6666, 1.0
      %v6670 = vadd.f32 %v6668, 1.0
      %v6671 = vrcp.pop %v6669
      %v6672 = vmul.f32 1.0, %v6671
      %v6673 = vrcp.pop %v6670
      %v6674 = vmul.f32 1.0, %v6673
      %v6675 = vtanh.pop %v6645
      %v6676 = vtanh.pop %v6649
      %v6677 = vxor.u32 %v6646, 2147483648
      %v6678 = vxor.u32 %v6650, 2147483648
      %v6679 = vmul.f32 %v6677, 1.442695
      %v6680 = vpow.pop %v6679
      %v6681 = vmul.f32 %v6678, 1.442695
      %v6682 = vpow.pop %v6681
      %v6683 = vadd.f32 %v6680, 1.0
      %v6684 = vadd.f32 %v6682, 1.0
      %v6685 = vrcp.pop %v6683
      %v6686 = vmul.f32 1.0, %v6685
      %v6687 = vrcp.pop %v6684
      %v6688 = vmul.f32 1.0, %v6687
      %v6689 = vmul.f32 %v6672, %v6400
      %v6690 = vmul.f32 %v6674, %v6401
      %v6691 = vmul.f32 %v6660, %v6675
      %v6692 = vmul.f32 %v6662, %v6676
      %v6693 = vadd.f32 %v6689, %v6691
      %v6694 = vadd.f32 %v6690, %v6692
      %v6695 = vtanh.pop %v6693
      %v6696 = vtanh.pop %v6694
      %v6697 = vmul.f32 %v6686, %v6695
      %v6698 = vmul.f32 %v6688, %v6696
      %s6699 = sadd.s32 %s1081, 15
      %p6700 = scmp.gt.s32.totalorder %s6699, 0
      %s6701 = scalar_select %p6700, 1, 0
      %v6702 = vstv %s6701
      %vm6703 = vcmp.eq.s32.totalorder %v6702, 1
      %v6704 = vsel %vm6703, %v6697, %v6398
      %v6705 = vsel %vm6703, %v6698, %v6399
      %v6706 = vsel %vm6703, %v6693, %v6400
      %v6707 = vsel %vm6703, %v6694, %v6401
      %s6708 = smul.u32 30, 4
      %s6709 = smul.addr %s6708, 8
      %s6710 = scalar_lea.vmem [#allocation2], %s6709
      %v6711 = vld [vmem:[%s6710] sm:$0xff]
      %v6712 = vld [vmem:[%s6710 + $0x8] sm:$0xff]
      %v6713 = vld [vmem:[%s6710 + $0x10] sm:$0xff]
      %v6714 = vld [vmem:[%s6710 + $0x18] sm:$0xff]
      %v6715 = vld [vmem:[%s6710 + $0x20] sm:$0xff]
      %v6716 = vld [vmem:[%s6710 + $0x28] sm:$0xff]
      %v6717 = vld [vmem:[%s6710 + $0x30] sm:$0xff]
      %v6718 = vld [vmem:[%s6710 + $0x38] sm:$0xff]
      %v6719 = vadd.f32 %v6711, %v6506
      %v6720 = vadd.f32 %v6712, %v6508
      %v6721 = vadd.f32 %v6713, %v6549
      %v6722 = vadd.f32 %v6714, %v6551
      %v6723 = vadd.f32 %v6715, %v6510
      %v6724 = vadd.f32 %v6716, %v6512
      %v6725 = vadd.f32 %v6717, %v6553
      %v6726 = vadd.f32 %v6718, %v6555
      %v6727 = vxor.u32 %v6719, 2147483648
      %v6728 = vxor.u32 %v6723, 2147483648
      %v6729 = vmul.f32 %v6727, 1.442695
      %v6730 = vpow.pop %v6729
      %v6731 = vmul.f32 %v6728, 1.442695
      %v6732 = vpow.pop %v6731
      %v6733 = vadd.f32 %v6730, 1.0
      %v6734 = vadd.f32 %v6732, 1.0
      %v6735 = vrcp.pop %v6733
      %v6736 = vmul.f32 1.0, %v6735
      %v6737 = vrcp.pop %v6734
      %v6738 = vmul.f32 1.0, %v6737
      %v6739 = vxor.u32 %v6720, 2147483648
      %v6740 = vxor.u32 %v6724, 2147483648
      %v6741 = vmul.f32 %v6739, 1.442695
      %v6742 = vpow.pop %v6741
      %v6743 = vmul.f32 %v6740, 1.442695
      %v6744 = vpow.pop %v6743
      %v6745 = vadd.f32 %v6742, 1.0
      %v6746 = vadd.f32 %v6744, 1.0
      %v6747 = vrcp.pop %v6745
      %v6748 = vmul.f32 1.0, %v6747
      %v6749 = vrcp.pop %v6746
      %v6750 = vmul.f32 1.0, %v6749
      %v6751 = vtanh.pop %v6721
      %v6752 = vtanh.pop %v6725
      %v6753 = vxor.u32 %v6722, 2147483648
      %v6754 = vxor.u32 %v6726, 2147483648
      %v6755 = vmul.f32 %v6753, 1.442695
      %v6756 = vpow.pop %v6755
      %v6757 = vmul.f32 %v6754, 1.442695
      %v6758 = vpow.pop %v6757
      %v6759 = vadd.f32 %v6756, 1.0
      %v6760 = vadd.f32 %v6758, 1.0
      %v6761 = vrcp.pop %v6759
      %v6762 = vmul.f32 1.0, %v6761
      %v6763 = vrcp.pop %v6760
      %v6764 = vmul.f32 1.0, %v6763
      %v6765 = vmul.f32 %v6748, %v6463
      %v6766 = vmul.f32 %v6750, %v6464
      %v6767 = vmul.f32 %v6736, %v6751
      %v6768 = vmul.f32 %v6738, %v6752
      %v6769 = vadd.f32 %v6765, %v6767
      %v6770 = vadd.f32 %v6766, %v6768
      %v6771 = vtanh.pop %v6769
      %v6772 = vtanh.pop %v6770
      %v6773 = vmul.f32 %v6762, %v6771
      %v6774 = vmul.f32 %v6764, %v6772
      %6775 = vst [vmem:[#allocation3] sm:$0xff] %v6773
      %6776 = vst [vmem:[#allocation3 + $0x8] sm:$0xff] %v6774
      %6777 = vst [vmem:[#allocation4] sm:$0xff] %v6769
      %6778 = vst [vmem:[#allocation4 + $0x8] sm:$0xff] %v6770
      %6779 = vst [vmem:[#allocation5] sm:$0xff] %v6704
      %6780 = vst [vmem:[#allocation5 + $0x8] sm:$0xff] %v6705
      %6781 = vst [vmem:[#allocation6] sm:$0xff] %v6706
      %6782 = vst [vmem:[#allocation6 + $0x8] sm:$0xff] %v6707
      %p6783 = scmp.eq.s32.totalorder %s16, 2
      // Predicated region
      $region45: #{product_prediction_forward.2} parent=39 // pred_check
        %p6784 = pneg %p6783
      $region46: #{product_prediction_forward.2} parent=39 // pred_check_branch
        %6786 = sbr.rel (%p6784) target = $region48
      $region47: #{product_prediction_forward.2} parent=39 // pred_region
        %v6787 = vpack.c.bf16 %v6774, %v6773
        %v6788 = vpack.c.bf16 %v6705, %v6704
        %v6789 = vld [vmem:[%s3 + $0x10] sm:$0xff]
        %v6790 = vld [vmem:[%s3 + $0x18] sm:$0xff]
        %v6791 = vld [vmem:[%s3 + $0x30] sm:$0xff]
        %v6792 = vld [vmem:[%s3 + $0x38] sm:$0xff]
        %v6793 = vld [vmem:[%s3 + $0x50] sm:$0xff]
        %v6794 = vld [vmem:[%s3 + $0x58] sm:$0xff]
        %v6795 = vld [vmem:[%s3 + $0x70] sm:$0xff]
        %v6796 = vld [vmem:[%s3 + $0x78] sm:$0xff]
        %v6797 = vld [vmem:[%s3 + $0x90] sm:$0xff]
        %v6798 = vld [vmem:[%s3 + $0x98] sm:$0xff]
        %v6799 = vld [vmem:[%s3 + $0xb0] sm:$0xff]
        %v6800 = vld [vmem:[%s3 + $0xb8] sm:$0xff]
        %v6801 = vld [vmem:[%s3 + $0xd0] sm:$0xff]
        %v6802 = vld [vmem:[%s3 + $0xd8] sm:$0xff]
        %v6803 = vld [vmem:[%s3 + $0xf0] sm:$0xff]
        %v6804 = vld [vmem:[%s3 + $0xf8] sm:$0xff]
        %v6805 = vld [vmem:[%s3 + $0x110] sm:$0xff]
        %v6806 = vld [vmem:[%s3 + $0x118] sm:$0xff]
        %v6807 = vld [vmem:[%s3 + $0x130] sm:$0xff]
        %v6808 = vld [vmem:[%s3 + $0x138] sm:$0xff]
        %v6809 = vld [vmem:[%s3 + $0x150] sm:$0xff]
        %v6810 = vld [vmem:[%s3 + $0x158] sm:$0xff]
        %v6811 = vld [vmem:[%s3 + $0x170] sm:$0xff]
        %v6812 = vld [vmem:[%s3 + $0x178] sm:$0xff]
        %v6813 = vld [vmem:[%s3 + $0x190] sm:$0xff]
        %v6814 = vld [vmem:[%s3 + $0x198] sm:$0xff]
        %v6815 = vld [vmem:[%s3 + $0x1b0] sm:$0xff]
        %v6816 = vld [vmem:[%s3 + $0x1b8] sm:$0xff]
        %v6817 = vld [vmem:[%s3 + $0x1d0] sm:$0xff]
        %v6818 = vld [vmem:[%s3 + $0x1d8] sm:$0xff]
        %v6819 = vld [vmem:[%s3 + $0x1f0] sm:$0xff]
        %v6820 = vld [vmem:[%s3 + $0x1f8] sm:$0xff]
        %v6821 = vld [vmem:[%s3 + $0x210] sm:$0xff]
        %v6822 = vld [vmem:[%s3 + $0x218] sm:$0xff]
        %v6823 = vld [vmem:[%s3 + $0x230] sm:$0xff]
        %v6824 = vld [vmem:[%s3 + $0x238] sm:$0xff]
        %v6825 = vld [vmem:[%s3 + $0x250] sm:$0xff]
        %v6826 = vld [vmem:[%s3 + $0x258] sm:$0xff]
        %v6827 = vld [vmem:[%s3 + $0x270] sm:$0xff]
        %v6828 = vld [vmem:[%s3 + $0x278] sm:$0xff]
        %v6829 = vld [vmem:[%s3 + $0x290] sm:$0xff]
        %v6830 = vld [vmem:[%s3 + $0x298] sm:$0xff]
        %v6831 = vld [vmem:[%s3 + $0x2b0] sm:$0xff]
        %v6832 = vld [vmem:[%s3 + $0x2b8] sm:$0xff]
        %v6833 = vld [vmem:[%s3 + $0x2d0] sm:$0xff]
        %v6834 = vld [vmem:[%s3 + $0x2d8] sm:$0xff]
        %v6835 = vld [vmem:[%s3 + $0x2f0] sm:$0xff]
        %v6836 = vld [vmem:[%s3 + $0x2f8] sm:$0xff]
        %v6837 = vld [vmem:[%s3 + $0x310] sm:$0xff]
        %v6838 = vld [vmem:[%s3 + $0x318] sm:$0xff]
        %v6839 = vld [vmem:[%s3 + $0x330] sm:$0xff]
        %v6840 = vld [vmem:[%s3 + $0x338] sm:$0xff]
        %v6841 = vld [vmem:[%s3 + $0x350] sm:$0xff]
        %v6842 = vld [vmem:[%s3 + $0x358] sm:$0xff]
        %v6843 = vld [vmem:[%s3 + $0x370] sm:$0xff]
        %v6844 = vld [vmem:[%s3 + $0x378] sm:$0xff]
        %v6845 = vld [vmem:[%s3 + $0x390] sm:$0xff]
        %v6846 = vld [vmem:[%s3 + $0x398] sm:$0xff]
        %v6847 = vld [vmem:[%s3 + $0x3b0] sm:$0xff]
        %v6848 = vld [vmem:[%s3 + $0x3b8] sm:$0xff]
        %v6849 = vld [vmem:[%s3 + $0x3d0] sm:$0xff]
        %v6850 = vld [vmem:[%s3 + $0x3d8] sm:$0xff]
        %v6851 = vld [vmem:[%s3 + $0x3f0] sm:$0xff]
        %v6852 = vld [vmem:[%s3 + $0x3f8] sm:$0xff]
        %v6917 = vunpack.c.l.b16 %v6789
        %v6918 = vunpack.c.h.b16 %v6789
        %v6919 = vunpack.c.l.b16 %v6790
        %v6920 = vunpack.c.h.b16 %v6790
        %v6921 = vunpack.c.l.b16 %v6791
        %v6922 = vunpack.c.h.b16 %v6791
        %v6923 = vunpack.c.l.b16 %v6792
        %v6924 = vunpack.c.h.b16 %v6792
        %v6925 = vunpack.c.l.b16 %v6793
        %v6926 = vunpack.c.h.b16 %v6793
        %v6927 = vunpack.c.l.b16 %v6794
        %v6928 = vunpack.c.h.b16 %v6794
        %v6929 = vunpack.c.l.b16 %v6795
        %v6930 = vunpack.c.h.b16 %v6795
        %v6931 = vunpack.c.l.b16 %v6796
        %v6932 = vunpack.c.h.b16 %v6796
        %v6933 = vunpack.c.l.b16 %v6797
        %v6934 = vunpack.c.h.b16 %v6797
        %v6935 = vunpack.c.l.b16 %v6798
        %v6936 = vunpack.c.h.b16 %v6798
        %v6937 = vunpack.c.l.b16 %v6799
        %v6938 = vunpack.c.h.b16 %v6799
        %v6939 = vunpack.c.l.b16 %v6800
        %v6940 = vunpack.c.h.b16 %v6800
        %v6941 = vunpack.c.l.b16 %v6801
        %v6942 = vunpack.c.h.b16 %v6801
        %v6943 = vunpack.c.l.b16 %v6802
        %v6944 = vunpack.c.h.b16 %v6802
        %v6945 = vunpack.c.l.b16 %v6803
        %v6946 = vunpack.c.h.b16 %v6803
        %v6947 = vunpack.c.l.b16 %v6804
        %v6948 = vunpack.c.h.b16 %v6804
        %v6949 = vunpack.c.l.b16 %v6805
        %v6950 = vunpack.c.h.b16 %v6805
        %v6951 = vunpack.c.l.b16 %v6806
        %v6952 = vunpack.c.h.b16 %v6806
        %v6953 = vunpack.c.l.b16 %v6807
        %v6954 = vunpack.c.h.b16 %v6807
        %v6955 = vunpack.c.l.b16 %v6808
        %v6956 = vunpack.c.h.b16 %v6808
        %v6957 = vunpack.c.l.b16 %v6809
        %v6958 = vunpack.c.h.b16 %v6809
        %v6959 = vunpack.c.l.b16 %v6810
        %v6960 = vunpack.c.h.b16 %v6810
        %v6961 = vunpack.c.l.b16 %v6811
        %v6962 = vunpack.c.h.b16 %v6811
        %v6963 = vunpack.c.l.b16 %v6812
        %v6964 = vunpack.c.h.b16 %v6812
        %v6965 = vunpack.c.l.b16 %v6813
        %v6966 = vunpack.c.h.b16 %v6813
        %v6967 = vunpack.c.l.b16 %v6814
        %v6968 = vunpack.c.h.b16 %v6814
        %v6969 = vunpack.c.l.b16 %v6815
        %v6970 = vunpack.c.h.b16 %v6815
        %v6971 = vunpack.c.l.b16 %v6816
        %v6972 = vunpack.c.h.b16 %v6816
        %v6973 = vunpack.c.l.b16 %v6817
        %v6974 = vunpack.c.h.b16 %v6817
        %v6975 = vunpack.c.l.b16 %v6818
        %v6976 = vunpack.c.h.b16 %v6818
        %v6977 = vunpack.c.l.b16 %v6819
        %v6978 = vunpack.c.h.b16 %v6819
        %v6979 = vunpack.c.l.b16 %v6820
        %v6980 = vunpack.c.h.b16 %v6820
        %v6981 = vunpack.c.l.b16 %v6821
        %v6982 = vunpack.c.h.b16 %v6821
        %v6983 = vunpack.c.l.b16 %v6822
        %v6984 = vunpack.c.h.b16 %v6822
        %v6985 = vunpack.c.l.b16 %v6823
        %v6986 = vunpack.c.h.b16 %v6823
        %v6987 = vunpack.c.l.b16 %v6824
        %v6988 = vunpack.c.h.b16 %v6824
        %v6989 = vunpack.c.l.b16 %v6825
        %v6990 = vunpack.c.h.b16 %v6825
        %v6991 = vunpack.c.l.b16 %v6826
        %v6992 = vunpack.c.h.b16 %v6826
        %v6993 = vunpack.c.l.b16 %v6827
        %v6994 = vunpack.c.h.b16 %v6827
        %v6995 = vunpack.c.l.b16 %v6828
        %v6996 = vunpack.c.h.b16 %v6828
        %v6997 = vunpack.c.l.b16 %v6829
        %v6998 = vunpack.c.h.b16 %v6829
        %v6999 = vunpack.c.l.b16 %v6830
        %v7000 = vunpack.c.h.b16 %v6830
        %v7001 = vunpack.c.l.b16 %v6831
        %v7002 = vunpack.c.h.b16 %v6831
        %v7003 = vunpack.c.l.b16 %v6832
        %v7004 = vunpack.c.h.b16 %v6832
        %v7005 = vunpack.c.l.b16 %v6833
        %v7006 = vunpack.c.h.b16 %v6833
        %v7007 = vunpack.c.l.b16 %v6834
        %v7008 = vunpack.c.h.b16 %v6834
        %v7009 = vunpack.c.l.b16 %v6835
        %v7010 = vunpack.c.h.b16 %v6835
        %v7011 = vunpack.c.l.b16 %v6836
        %v7012 = vunpack.c.h.b16 %v6836
        %v7013 = vunpack.c.l.b16 %v6837
        %v7014 = vunpack.c.h.b16 %v6837
        %v7015 = vunpack.c.l.b16 %v6838
        %v7016 = vunpack.c.h.b16 %v6838
        %v7017 = vunpack.c.l.b16 %v6839
        %v7018 = vunpack.c.h.b16 %v6839
        %v7019 = vunpack.c.l.b16 %v6840
        %v7020 = vunpack.c.h.b16 %v6840
        %v7021 = vunpack.c.l.b16 %v6841
        %v7022 = vunpack.c.h.b16 %v6841
        %v7023 = vunpack.c.l.b16 %v6842
        %v7024 = vunpack.c.h.b16 %v6842
        %v7025 = vunpack.c.l.b16 %v6843
        %v7026 = vunpack.c.h.b16 %v6843
        %v7027 = vunpack.c.l.b16 %v6844
        %v7028 = vunpack.c.h.b16 %v6844
        %v7029 = vunpack.c.l.b16 %v6845
        %v7030 = vunpack.c.h.b16 %v6845
        %v7031 = vunpack.c.l.b16 %v6846
        %v7032 = vunpack.c.h.b16 %v6846
        %v7033 = vunpack.c.l.b16 %v6847
        %v7034 = vunpack.c.h.b16 %v6847
        %v7035 = vunpack.c.l.b16 %v6848
        %v7036 = vunpack.c.h.b16 %v6848
        %v7037 = vunpack.c.l.b16 %v6849
        %v7038 = vunpack.c.h.b16 %v6849
        %v7039 = vunpack.c.l.b16 %v6850
        %v7040 = vunpack.c.h.b16 %v6850
        %v7041 = vunpack.c.l.b16 %v6851
        %v7042 = vunpack.c.h.b16 %v6851
        %v7043 = vunpack.c.l.b16 %v6852
        %v7044 = vunpack.c.h.b16 %v6852
        %v7045 = vpack.c.b16 %v6921, %v6917
        %v7046 = vpack.c.b16 %v6922, %v6918
        %v7047 = vpack.c.b16 %v6923, %v6919
        %v7048 = vpack.c.b16 %v6924, %v6920
        %v7049 = vpack.c.b16 %v6929, %v6925
        %v7050 = vpack.c.b16 %v6930, %v6926
        %v7051 = vpack.c.b16 %v6931, %v6927
        %v7052 = vpack.c.b16 %v6932, %v6928
        %v7053 = vpack.c.b16 %v6937, %v6933
        %v7054 = vpack.c.b16 %v6938, %v6934
        %v7055 = vpack.c.b16 %v6939, %v6935
        %v7056 = vpack.c.b16 %v6940, %v6936
        %v7057 = vpack.c.b16 %v6945, %v6941
        %v7058 = vpack.c.b16 %v6946, %v6942
        %v7059 = vpack.c.b16 %v6947, %v6943
        %v7060 = vpack.c.b16 %v6948, %v6944
        %v7061 = vpack.c.b16 %v6953, %v6949
        %v7062 = vpack.c.b16 %v6954, %v6950
        %v7063 = vpack.c.b16 %v6955, %v6951
        %v7064 = vpack.c.b16 %v6956, %v6952
        %v7065 = vpack.c.b16 %v6961, %v6957
        %v7066 = vpack.c.b16 %v6962, %v6958
        %v7067 = vpack.c.b16 %v6963, %v6959
        %v7068 = vpack.c.b16 %v6964, %v6960
        %v7069 = vpack.c.b16 %v6969, %v6965
        %v7070 = vpack.c.b16 %v6970, %v6966
        %v7071 = vpack.c.b16 %v6971, %v6967
        %v7072 = vpack.c.b16 %v6972, %v6968
        %v7073 = vpack.c.b16 %v6977, %v6973
        %v7074 = vpack.c.b16 %v6978, %v6974
        %v7075 = vpack.c.b16 %v6979, %v6975
        %v7076 = vpack.c.b16 %v6980, %v6976
        %v7077 = vpack.c.b16 %v6985, %v6981
        %v7078 = vpack.c.b16 %v6986, %v6982
        %v7079 = vpack.c.b16 %v6987, %v6983
        %v7080 = vpack.c.b16 %v6988, %v6984
        %v7081 = vpack.c.b16 %v6993, %v6989
        %v7082 = vpack.c.b16 %v6994, %v6990
        %v7083 = vpack.c.b16 %v6995, %v6991
        %v7084 = vpack.c.b16 %v6996, %v6992
        %v7085 = vpack.c.b16 %v7001, %v6997
        %v7086 = vpack.c.b16 %v7002, %v6998
        %v7087 = vpack.c.b16 %v7003, %v6999
        %v7088 = vpack.c.b16 %v7004, %v7000
        %v7089 = vpack.c.b16 %v7009, %v7005
        %v7090 = vpack.c.b16 %v7010, %v7006
        %v7091 = vpack.c.b16 %v7011, %v7007
        %v7092 = vpack.c.b16 %v7012, %v7008
        %v7093 = vpack.c.b16 %v7017, %v7013
        %v7094 = vpack.c.b16 %v7018, %v7014
        %v7095 = vpack.c.b16 %v7019, %v7015
        %v7096 = vpack.c.b16 %v7020, %v7016
        %v7097 = vpack.c.b16 %v7025, %v7021
        %v7098 = vpack.c.b16 %v7026, %v7022
        %v7099 = vpack.c.b16 %v7027, %v7023
        %v7100 = vpack.c.b16 %v7028, %v7024
        %v7101 = vpack.c.b16 %v7033, %v7029
        %v7102 = vpack.c.b16 %v7034, %v7030
        %v7103 = vpack.c.b16 %v7035, %v7031
        %v7104 = vpack.c.b16 %v7036, %v7032
        %v7105 = vpack.c.b16 %v7041, %v7037
        %v7106 = vpack.c.b16 %v7042, %v7038
        %v7107 = vpack.c.b16 %v7043, %v7039
        %v7108 = vpack.c.b16 %v7044, %v7040
        %7173 = vmatprep.subr.bf16.mxu0 %v7074
        %7174 = vmatpush1.bf16.msra.mxu0 %v7073
        %7175 = vmatprep.subr.bf16.mxu0 %v7070
        %7176 = vmatpush1.bf16.msra.mxu0 %v7069
        %7177 = vmatprep.subr.bf16.mxu0 %v7066
        %7178 = vmatpush1.bf16.msra.mxu0 %v7065
        %7179 = vmatprep.subr.bf16.mxu0 %v7062
        %7180 = vmatpush1.bf16.msra.mxu0 %v7061
        %7181 = vmatprep.subr.bf16.mxu0 %v7058
        %7182 = vmatpush1.bf16.msra.mxu0 %v7057
        %7183 = vmatprep.subr.bf16.mxu0 %v7054
        %7184 = vmatpush1.bf16.msra.mxu0 %v7053
        %7185 = vmatprep.subr.bf16.mxu0 %v7050
        %7186 = vmatpush1.bf16.msra.mxu0 %v7049
        %7187 = vmatprep.subr.bf16.mxu0 %v7046
        %7188 = vmatpush1.bf16.msra.mxu0 %v7045
        %7189 = vmatprep.subr.bf16.mxu0 %v7106
        %7190 = vmatpush2.bf16.msra.mxu0 %v7105
        %7191 = vmatprep.subr.bf16.mxu0 %v7102
        %7192 = vmatpush2.bf16.msra.mxu0 %v7101
        %7193 = vmatprep.subr.bf16.mxu0 %v7098
        %7194 = vmatpush2.bf16.msra.mxu0 %v7097
        %7195 = vmatprep.subr.bf16.mxu0 %v7094
        %7196 = vmatpush2.bf16.msra.mxu0 %v7093
        %7197 = vmatprep.subr.bf16.mxu0 %v7090
        %7198 = vmatpush2.bf16.msra.mxu0 %v7089
        %7199 = vmatprep.subr.bf16.mxu0 %v7086
        %7200 = vmatpush2.bf16.msra.mxu0 %v7085
        %7201 = vmatprep.subr.bf16.mxu0 %v7082
        %7202 = vmatpush2.bf16.msra.mxu0 %v7081
        %7203 = vmatprep.subr.bf16.mxu0 %v7078
        %7204 = vmatpush2.bf16.msra.mxu0 %v7077
        %7205 = vmatprep.mubr.bf16.mxu0 %v6788
        %7206 = vmatmul.mubr.bf16.gmra.mxu0 %v6787
        %v7207 = vpop.f32.mrf.mxu0
        %v7208 = vadd.f32 0.0, %v7207
        %v7209 = vpop.f32.mrf.mxu0
        %v7210 = vadd.f32 0.0, %v7209
        %v7211 = vpop.f32.mrf.mxu0
        %v7212 = vadd.f32 0.0, %v7211
        %v7213 = vpop.f32.mrf.mxu0
        %v7214 = vadd.f32 0.0, %v7213
        %7215 = vdwg.mxu0
        %7216 = vmatprep.subr.bf16.mxu0 %v7076
        %7217 = vmatpush1.bf16.msra.mxu0 %v7075
        %7218 = vmatprep.subr.bf16.mxu0 %v7072
        %7219 = vmatpush1.bf16.msra.mxu0 %v7071
        %7220 = vmatprep.subr.bf16.mxu0 %v7068
        %7221 = vmatpush1.bf16.msra.mxu0 %v7067
        %7222 = vmatprep.subr.bf16.mxu0 %v7064
        %7223 = vmatpush1.bf16.msra.mxu0 %v7063
        %7224 = vmatprep.subr.bf16.mxu0 %v7060
        %7225 = vmatpush1.bf16.msra.mxu0 %v7059
        %7226 = vmatprep.subr.bf16.mxu0 %v7056
        %7227 = vmatpush1.bf16.msra.mxu0 %v7055
        %7228 = vmatprep.subr.bf16.mxu0 %v7052
        %7229 = vmatpush1.bf16.msra.mxu0 %v7051
        %7230 = vmatprep.subr.bf16.mxu0 %v7048
        %7231 = vmatpush1.bf16.msra.mxu0 %v7047
        %7232 = vmatprep.subr.bf16.mxu0 %v7108
        %7233 = vmatpush2.bf16.msra.mxu0 %v7107
        %7234 = vmatprep.subr.bf16.mxu0 %v7104
        %7235 = vmatpush2.bf16.msra.mxu0 %v7103
        %7236 = vmatprep.subr.bf16.mxu0 %v7100
        %7237 = vmatpush2.bf16.msra.mxu0 %v7099
        %7238 = vmatprep.subr.bf16.mxu0 %v7096
        %7239 = vmatpush2.bf16.msra.mxu0 %v7095
        %7240 = vmatprep.subr.bf16.mxu0 %v7092
        %7241 = vmatpush2.bf16.msra.mxu0 %v7091
        %7242 = vmatprep.subr.bf16.mxu0 %v7088
        %7243 = vmatpush2.bf16.msra.mxu0 %v7087
        %7244 = vmatprep.subr.bf16.mxu0 %v7084
        %7245 = vmatpush2.bf16.msra.mxu0 %v7083
        %7246 = vmatprep.subr.bf16.mxu0 %v7080
        %7247 = vmatpush2.bf16.msra.mxu0 %v7079
        %7248 = vmatprep.mubr.bf16.mxu0 %v6788
        %7249 = vmatmul.mubr.bf16.gmra.mxu0 %v6787
        %v7250 = vpop.f32.mrf.mxu0
        %v7251 = vadd.f32 0.0, %v7250
        %v7252 = vpop.f32.mrf.mxu0
        %v7253 = vadd.f32 0.0, %v7252
        %v7254 = vpop.f32.mrf.mxu0
        %v7255 = vadd.f32 0.0, %v7254
        %v7256 = vpop.f32.mrf.mxu0
        %v7257 = vadd.f32 0.0, %v7256
        %7258 = vdwg.mxu0
        %v7259 = vld [vmem:[%s4] sm:$0xf]
        %v7261 = vlaneseq
        %v7262 = vshrl.u32 %v7261, 7
        %v7263 = vsub.s32 0, %v7262
        %v7264 = vrot.slane %v7259, %v7263
        %v7265 = vlaneseq
        %v7266 = vshrl.u32 %v7265, 7
        %v7267 = vsub.s32 1, %v7266
        %v7268 = vrot.slane %v7259, %v7267
        %v7269 = vlaneseq
        %v7270 = vshrl.u32 %v7269, 7
        %v7271 = vsub.s32 2, %v7270
        %v7272 = vrot.slane %v7259, %v7271
        %v7273 = vlaneseq
        %v7274 = vshrl.u32 %v7273, 7
        %v7275 = vsub.s32 3, %v7274
        %v7276 = vrot.slane %v7259, %v7275
        %v7281 = vadd.f32 %v7208, %v7264
        %v7282 = vadd.f32 %v7210, %v7268
        %v7283 = vadd.f32 %v7251, %v7272
        %v7284 = vadd.f32 %v7253, %v7276
        %v7285 = vadd.f32 %v7212, %v7264
        %v7286 = vadd.f32 %v7214, %v7268
        %v7287 = vadd.f32 %v7255, %v7272
        %v7288 = vadd.f32 %v7257, %v7276
        %v7289 = vxor.u32 %v7281, 2147483648
        %v7290 = vxor.u32 %v7285, 2147483648
        %v7291 = vmul.f32 %v7289, 1.442695
        %v7292 = vpow.pop %v7291
        %v7293 = vmul.f32 %v7290, 1.442695
        %v7294 = vpow.pop %v7293
        %v7295 = vadd.f32 %v7292, 1.0
        %v7296 = vadd.f32 %v7294, 1.0
        %v7297 = vrcp.pop %v7295
        %v7298 = vmul.f32 1.0, %v7297
        %v7299 = vrcp.pop %v7296
        %v7300 = vmul.f32 1.0, %v7299
        %v7301 = vxor.u32 %v7282, 2147483648
        %v7302 = vxor.u32 %v7286, 2147483648
        %v7303 = vmul.f32 %v7301, 1.442695
        %v7304 = vpow.pop %v7303
        %v7305 = vmul.f32 %v7302, 1.442695
        %v7306 = vpow.pop %v7305
        %v7307 = vadd.f32 %v7304, 1.0
        %v7308 = vadd.f32 %v7306, 1.0
        %v7309 = vrcp.pop %v7307
        %v7310 = vmul.f32 1.0, %v7309
        %v7311 = vrcp.pop %v7308
        %v7312 = vmul.f32 1.0, %v7311
        %v7313 = vtanh.pop %v7283
        %v7314 = vtanh.pop %v7287
        %v7315 = vxor.u32 %v7284, 2147483648
        %v7316 = vxor.u32 %v7288, 2147483648
        %v7317 = vmul.f32 %v7315, 1.442695
        %v7318 = vpow.pop %v7317
        %v7319 = vmul.f32 %v7316, 1.442695
        %v7320 = vpow.pop %v7319
        %v7321 = vadd.f32 %v7318, 1.0
        %v7322 = vadd.f32 %v7320, 1.0
        %v7323 = vrcp.pop %v7321
        %v7324 = vmul.f32 1.0, %v7323
        %v7325 = vrcp.pop %v7322
        %v7326 = vmul.f32 1.0, %v7325
        %v7327 = vmul.f32 %v7310, %v6706
        %v7328 = vmul.f32 %v7312, %v6707
        %v7329 = vmul.f32 %v7298, %v7313
        %v7330 = vmul.f32 %v7300, %v7314
        %v7331 = vadd.f32 %v7327, %v7329
        %v7332 = vadd.f32 %v7328, %v7330
        %v7333 = vtanh.pop %v7331
        %v7334 = vtanh.pop %v7332
        %v7335 = vmul.f32 %v7324, %v7333
        %v7336 = vmul.f32 %v7326, %v7334
        %v7337 = vpack.c.bf16 %v7336, %v7335
        %v7339 = vunpack.c.l.b16 %v7337
        %v7340 = vunpack.c.h.b16 %v7337
        %v7341 = vpack.c.b16 %v7339, %v7339
        %v7342 = vpack.c.b16 %v7340, %v7340
        %7345 = vst [vmem:[%s5] sm:$0xf] %v7341
        %7346 = vst [vmem:[%s5 + $0x4] sm:$0xf] %v7342
      $region48: #{product_prediction_forward.2} parent=39 // pred_fallthru
        _
      // Predicated region
      $region49: #{product_prediction_forward.2} parent=39 // pred_check
        %p7347 = pneg %p139
      $region50: #{product_prediction_forward.2} parent=39 // pred_check_branch
        %7349 = sbr.rel (%p7347) target = $region52
      $region51: #{product_prediction_forward.2} parent=39 // pred_region
        _
      $region52: #{product_prediction_forward.2} parent=39 // pred_fallthru
        _
      // Predicated region
      $region53: #{product_prediction_forward.2} parent=39 // pred_check
        %p7350 = pneg %p139
      $region54: #{product_prediction_forward.2} parent=39 // pred_check_branch
        %7352 = sbr.rel (%p7350) target = $region56
      $region55: #{product_prediction_forward.2} parent=39 // pred_region
        _
      $region56: #{product_prediction_forward.2} parent=39 // pred_fallthru
        _
    $region40: #{product_prediction_forward.2} parent=5 // pred_fallthru
      _
    %p7353 = scmp.le.s32.totalorder 2, %s11
    // Predicated region
    $region57: #{product_prediction_forward.2} parent=5 // pred_check
      %p7354 = pneg %p7353
    $region58: #{product_prediction_forward.2} parent=5 // pred_check_branch
      %7356 = sbr.rel (%p7354) target = $region60
    $region59: #{product_prediction_forward.2} parent=5 // pred_region
      %s7357 = ssub.s32 %s11, 2
    $region60: #{product_prediction_forward.2} parent=5 // pred_fallthru
      _
  $region6: #{product_prediction_forward.2} parent=0 // loop_footer
    %s15 = sadd.s32 1, %s11
  $region7: #{product_prediction_forward.2} parent=0 // loop_footer_branch
    %10 = sbr.rel target = $region3
  $region8: #{product_prediction_forward.2} parent=0 // loop_exit
    _

</llo_original>
